<compile_context>
chip_gen: v6e
topology: v6e:2x2x1
jax: 0.10.0
libtpu: 0.0.40
codegen_flags: <defaults>
</compile_context>

<pallas_src>
import numpy as np
import jax
import jax.numpy as jnp
from jax import lax
from jax.experimental import pallas as pl
from jax.experimental.pallas import tpu as pltpu  # noqa: F401  (TPU backend assumed)

# ----------------------------- model configuration -----------------------------
B           = 2          # batch
N_NODES     = 16         # grid elements (nodes of the element graph)
N_SUB       = 8          # substations
F_IN        = 6          # features per node (output of vectorize_obs)
F_PAD       = 8          # F_IN padded to sublane multiple
HIDDEN      = 32         # hidden_dim
NHEADS      = 4
DK          = HIDDEN // NHEADS          # 8
NUM_LAYERS  = 2                          # per StackedGATs
NUM_CLASSES = 8
SUB_IDS_FOR_ACTION = [1, 2, 3, 4, 5, 6, 7]   # 1 + 7 actionable subs -> 8 logits
TEMPERATURE = float(np.power(DK, 0.5))


# ----------------------------- in-kernel building blocks ------------------------
def _head_masks():
    """(1, HIDDEN) f32 lane masks selecting each head's column slice (compile-time consts)."""
    lane = lax.broadcasted_iota(jnp.int32, (1, HIDDEN), 1)
    return [((lane >= h * DK) & (lane < (h + 1) * DK)).astype(jnp.float32)
            for h in range(NHEADS)]


def _gat_layer(x, adj, w, a_src_p, a_dst_p, head_masks):
    """Fused multi-head GAT layer on a single graph.

    x: (n, H), adj: (n, n), w: (H, H),
    a_src_p / a_dst_p: (NHEADS, H) packed attention vectors (head h occupies cols h*DK:(h+1)*DK).
    """
    wh = jnp.dot(x, w, preferred_element_type=jnp.float32)                       # (n, H)
    # Packed per-head score projections: two matmuls instead of 2*NHEADS tiny ones.
    src = lax.dot_general(wh, a_src_p, (((1,), (1,)), ((), ())),
                          preferred_element_type=jnp.float32)                    # (n, NHEADS)
    dst = lax.dot_general(a_dst_p, wh, (((1,), (1,)), ((), ())),
                          preferred_element_type=jnp.float32)                    # (NHEADS, n)
    out = jnp.zeros(wh.shape, jnp.float32)                                       # (n, H)
    for h in range(NHEADS):
        e = src[:, h:h + 1] + dst[h:h + 1, :]                                    # (n, n)
        e = jnp.where(e > 0, e, 0.2 * e)                                         # LeakyReLU(0.2)
        e = jnp.where(adj > 0, e, -9e15)                                         # adjacency mask
        e = e - jnp.max(e, axis=-1, keepdims=True)
        p = jnp.exp(e)
        p = p * pl.reciprocal(jnp.sum(p, axis=-1, keepdims=True), approx=True)
        # lane-masked full-width matmul -> head result lands directly in its lane slice
        out = out + jnp.dot(p, wh * head_masks[h], preferred_element_type=jnp.float32)
    # ELU (overflow-safe: exp only sees non-positive arguments)
    return jnp.where(out > 0, out, jnp.exp(jnp.minimum(out, 0.0)) - 1.0)


def _mha_context(x, wq, wk, wv, wo, head_masks):
    """MultiHeadAttention with query_context=True: query = mean node embedding. x: (n, H)."""
    n = x.shape[0]
    q_in = jnp.sum(x, axis=0, keepdims=True) * (1.0 / float(n))                  # (1, H)
    q = jnp.dot(q_in, wq, preferred_element_type=jnp.float32)                    # (1, H)
    k = jnp.dot(x, wk, preferred_element_type=jnp.float32)                       # (n, H)
    v = jnp.dot(x, wv, preferred_element_type=jnp.float32)                       # (n, H)
    scale = 1.0 / float(np.sqrt(DK))
    ctx = jnp.zeros((1, NHEADS * DK), jnp.float32)
    for h in range(NHEADS):
        # masking q to head h's lanes makes the full-width contraction a per-head dot product
        s = lax.dot_general(q * head_masks[h], k, (((1,), (1,)), ((), ())),
                            preferred_element_type=jnp.float32) * scale          # (1, n)
        s = s - jnp.max(s, axis=-1, keepdims=True)
        p = jnp.exp(s)
        p = p * pl.reciprocal(jnp.sum(p, axis=-1, keepdims=True), approx=True)
        ctx = ctx + jnp.dot(p, v * head_masks[h], preferred_element_type=jnp.float32)
    return jnp.dot(ctx, wo, preferred_element_type=jnp.float32)                  # (1, H)


# ----------------------------- fused Pallas kernels -----------------------------
def _forward_kernel(obs_ref, adj_node_ref, adj_sub_ref,
                    lin_w_ref, lin_b_ref, pool_ref,
                    nw_ref, nas_ref, nad_ref,
                    sw_ref, sas_ref, sad_ref,
                    aw_ref, aas_ref, aad_ref,
                    wq_ref, wk_ref, wv_ref, wo_ref,
                    scores_ref, shared_ref):
    head_masks = _head_masks()
    # load all weights once (VMEM -> vregs), reused across the batch loop
    lin_w, lin_b, pool = lin_w_ref[...], lin_b_ref[...], pool_ref[...]
    nw, nas, nad = nw_ref[...], nas_ref[...], nad_ref[...]
    sw, sas, sad = sw_ref[...], sas_ref[...], sad_ref[...]
    aw, aas, aad = aw_ref[...], aas_ref[...], aad_ref[...]
    wq, wk, wv, wo = wq_ref[...], wk_ref[...], wv_ref[...], wo_ref[...]
    inv_temp = 1.0 / TEMPERATURE

    for b in range(obs_ref.shape[0]):                        # B is tiny -> unrolled
        ob   = obs_ref[b, :, :]                              # (N_NODES, F_PAD)
        adjn = adj_node_ref[b, :, :]                         # (N_NODES, N_NODES)
        adjs = adj_sub_ref[b, :, :]                          # (N_SUB, N_SUB)

        # SharedGraphModelling
        x0 = jnp.dot(ob, lin_w, preferred_element_type=jnp.float32) + lin_b      # (N_NODES, H)
        x1 = _gat_layer(x0, adjn, nw, nas, nad, head_masks)                      # node StackedGATs (last layer)
        xp = jnp.dot(pool, x1, preferred_element_type=jnp.float32)               # (N_SUB, H) mean pool
        sh = _gat_layer(xp, adjs, sw, sas, sad, head_masks)                      # substation StackedGATs (last layer)

        # ActorHead
        ax  = _gat_layer(sh, adjs, aw, aas, aad, head_masks)                     # actor StackedGATs (last layer)
        ctx = _mha_context(ax, wq, wk, wv, wo, head_masks)                       # (1, H)
        s   = lax.dot_general(ctx, ax, (((1,), (1,)), ((), ())),
                              preferred_element_type=jnp.float32) * inv_temp     # (1, N_SUB)

        shared_ref[b, :, :] = sh
        scores_ref[b, :, :] = s


def _value_kernel(shared_ref, logits_ref, adj_sub_ref,
                  cw_ref, cas_ref, cad_ref,
                  cq_ref, ck_ref, cv_ref, co_ref,
                  crit_wh_ref, crit_wl_ref, crit_b_ref,
                  value_ref):
    head_masks = _head_masks()
    cw, cas, cad = cw_ref[...], cas_ref[...], cad_ref[...]
    cq, ck, cv, co = cq_ref[...], ck_ref[...], cv_ref[...], co_ref[...]
    crit_wh, crit_wl, crit_b = crit_wh_ref[...], crit_wl_ref[...], crit_b_ref[...]

    for b in range(shared_ref.shape[0]):
        x    = shared_ref[b, :, :]                           # (N_SUB, H)
        adjs = adj_sub_ref[b, :, :]
        lg   = logits_ref[b, :, :]                           # (1, NUM_CLASSES) pre-guard logits

        cx  = _gat_layer(x, adjs, cw, cas, cad, head_masks)  # critic StackedGATs (last layer)
        ctx = _mha_context(cx, cq, ck, cv, co, head_masks)   # (1, H)
        # Linear on concat(ctx, logits) == ctx.w_hid + logits.w_log + b  (no concat needed)
        v = (jnp.sum(ctx * crit_wh, axis=-1, keepdims=True)
             + jnp.sum(lg * crit_wl, axis=-1, keepdims=True)
             + crit_b)                                       # (1, 1)
        value_ref[b, :, :] = v


# ----------------------------- parameter packing (glue) -------------------------
def _pack_attn(a):
    """(NHEADS, DK) -> (NHEADS, HIDDEN): head h's vector placed at cols h*DK:(h+1)*DK."""
    m = jnp.zeros((NHEADS, HIDDEN), jnp.float32)
    for h in range(NHEADS):
        m = m.at[h, h * DK:(h + 1) * DK].set(a[h])
    return m


def _last_gat(stack):
    # StackedGATs bug (faithful): every layer reads the ORIGINAL x and only the last
    # layer's output is returned -> only the last layer's params matter.
    w, a_s, a_d = stack[-1]
    return w, _pack_attn(a_s), _pack_attn(a_d)


# ----------------------------- model composition --------------------------------
def rllib_substation_forward(params, obs, adj_node, adj_sub):
    Bv = obs.shape[0]
    obs_pad = jnp.pad(obs, ((0, 0), (0, 0), (0, F_PAD - F_IN)))
    lin_w_pad = jnp.pad(params["lin_w"], ((0, F_PAD - F_IN), (0, 0)))
    nw, nas, nad = _last_gat(params["node_gats"])
    sw, sas, sad = _last_gat(params["sub_gats"])
    aw, aas, aad = _last_gat(params["actor_gats"])
    wq, wk, wv, wo = params["actor_mha"]

    scores, shared_out = pl.pallas_call(
        _forward_kernel,
        out_shape=(jax.ShapeDtypeStruct((Bv, 1, N_SUB), jnp.float32),
                   jax.ShapeDtypeStruct((Bv, N_SUB, HIDDEN), jnp.float32)),
    )(obs_pad, adj_node, adj_sub,
      lin_w_pad, params["lin_b"], params["pool_mat"],
      nw, nas, nad, sw, sas, sad, aw, aas, aad,
      wq, wk, wv, wo)

    cols = jnp.asarray([0] + SUB_IDS_FOR_ACTION, dtype=jnp.int32)
    logits = scores[:, 0, :][:, cols]                       # (B, num_classes)

    # NaN guard (torch: if not (logits == logits).all(): logits = zeros_like)
    logits_out = jnp.where(jnp.all(logits == logits), logits, jnp.zeros_like(logits))
    # note: self.logits (used by the critic) is the PRE-guard value
    return logits_out, logits, shared_out


def rllib_substation_value(params, shared_out, logits_pre_guard, adj_sub):
    Bv = shared_out.shape[0]
    cw, cas, cad = _last_gat(params["critic_gats"])
    cq, ck, cv, co = params["critic_mha"]
    crit_wh = params["crit_w"][:HIDDEN, 0][None, :]          # (1, H)
    crit_wl = params["crit_w"][HIDDEN:, 0][None, :]          # (1, NUM_CLASSES)

    val = pl.pallas_call(
        _value_kernel,
        out_shape=jax.ShapeDtypeStruct((Bv, 1, 1), jnp.float32),
    )(shared_out, logits_pre_guard[:, None, :], adj_sub,
      cw, cas, cad, cq, ck, cv, co, crit_wh, crit_wl, params["crit_b"])
    return val[:, 0, 0]


# ----------------------------- deterministic params -----------------------------
def _glorot(key, shape):
    fan_in, fan_out = shape[0], shape[-1]
    lim = float(np.sqrt(6.0 / (fan_in + fan_out)))
    return jax.random.uniform(key, shape, jnp.float32, -lim, lim)


def make_gat_stack(key, num_layers):
    layers = []
    for _ in range(num_layers):
        key, kw, ks, kd = jax.random.split(key, 4)
        layers.append((
            _glorot(kw, (HIDDEN, HIDDEN)),       # per-head W, concatenated along output
            _glorot(ks, (NHEADS, DK)),           # attention vector (source part)
            _glorot(kd, (NHEADS, DK)),           # attention vector (dest part)
        ))
    return layers


def make_mha(key):
    kq, kk, kv, ko = jax.random.split(key, 4)
    return (
        _glorot(kq, (HIDDEN, NHEADS * DK)),
        _glorot(kk, (HIDDEN, NHEADS * DK)),
        _glorot(kv, (HIDDEN, NHEADS * DK)),
        _glorot(ko, (NHEADS * DK, HIDDEN)),
    )


def make_params():
    key = jax.random.PRNGKey(42)
    keys = jax.random.split(key, 10)
    # sub_id_to_elem_id: substation s owns elements [2s, 2s+1]; mean pooling matrix
    pool = np.zeros((N_SUB, N_NODES), dtype=np.float32)
    for s in range(N_SUB):
        pool[s, 2 * s] = 0.5
        pool[s, 2 * s + 1] = 0.5
    return {
        "lin_w": _glorot(keys[0], (F_IN, HIDDEN)),
        "lin_b": jnp.zeros((1, HIDDEN), jnp.float32),
        "node_gats": make_gat_stack(keys[1], NUM_LAYERS),
        "sub_gats": make_gat_stack(keys[2], NUM_LAYERS),
        "actor_gats": make_gat_stack(keys[3], NUM_LAYERS),
        "critic_gats": make_gat_stack(keys[4], NUM_LAYERS),
        "actor_mha": make_mha(keys[5]),
        "critic_mha": make_mha(keys[6]),
        "crit_w": _glorot(keys[7], (HIDDEN + NUM_CLASSES, 1)),
        "crit_b": jnp.zeros((1, 1), jnp.float32),
        "pool_mat": jnp.asarray(pool),
    }


# ----------------------------- main ----------------------------------------------
if __name__ == "__main__":
    params = make_params()

    k_obs, k_adj = jax.random.split(jax.random.PRNGKey(0))
    # obs == vectorize_obs(input_dict['obs']) -> (B, N_nodes, num_features)   (glue, built directly)
    obs = jax.random.normal(k_obs, (B, N_NODES, F_IN), dtype=jnp.float32)

    # adj_node == input_dict['obs']['connectivity_matrix']
    rnd = (jax.random.uniform(k_adj, (B, N_NODES, N_NODES)) > 0.5).astype(jnp.float32)
    adj_node = jnp.clip(rnd + jnp.transpose(rnd, (0, 2, 1)) + jnp.eye(N_NODES)[None], 0.0, 1.0)

    # adj_substation == cached_sub_adj repeated over batch (fixed ring topology + self loops)
    sub_adj = np.eye(N_SUB, dtype=np.float32)
    for s in range(N_SUB):
        sub_adj[s, (s + 1) % N_SUB] = 1.0
        sub_adj[(s + 1) % N_SUB, s] = 1.0
    adj_sub = jnp.tile(jnp.asarray(sub_adj)[None], (B, 1, 1))

    fwd = jax.jit(rllib_substation_forward)
    val = jax.jit(rllib_substation_value)

    logits, logits_pre, shared_out = fwd(params, obs, adj_node, adj_sub)
    value = val(params, shared_out, logits_pre, adj_sub)

    jax.block_until_ready((logits, value))
    assert logits.shape == (B, NUM_CLASSES)
    assert value.shape == (B,)
    print("KERNEL_OK")
</pallas_src>

<mosaic_0001>
module attributes {stable_mosaic.version = 11 : i64} {
  func.func @_forward_kernel(%arg0: memref<2x16x8xf32, #tpu.memory_space<vmem>>, %arg1: memref<2x16x16xf32, #tpu.memory_space<vmem>>, %arg2: memref<2x8x8xf32, #tpu.memory_space<vmem>>, %arg3: memref<8x32xf32, #tpu.memory_space<vmem>>, %arg4: memref<1x32xf32, #tpu.memory_space<vmem>>, %arg5: memref<8x16xf32, #tpu.memory_space<vmem>>, %arg6: memref<32x32xf32, #tpu.memory_space<vmem>>, %arg7: memref<4x32xf32, #tpu.memory_space<vmem>>, %arg8: memref<4x32xf32, #tpu.memory_space<vmem>>, %arg9: memref<32x32xf32, #tpu.memory_space<vmem>>, %arg10: memref<4x32xf32, #tpu.memory_space<vmem>>, %arg11: memref<4x32xf32, #tpu.memory_space<vmem>>, %arg12: memref<32x32xf32, #tpu.memory_space<vmem>>, %arg13: memref<4x32xf32, #tpu.memory_space<vmem>>, %arg14: memref<4x32xf32, #tpu.memory_space<vmem>>, %arg15: memref<32x32xf32, #tpu.memory_space<vmem>>, %arg16: memref<32x32xf32, #tpu.memory_space<vmem>>, %arg17: memref<32x32xf32, #tpu.memory_space<vmem>>, %arg18: memref<32x32xf32, #tpu.memory_space<vmem>>, %arg19: memref<2x1x8xf32, #tpu.memory_space<vmem>>, %arg20: memref<2x8x32xf32, #tpu.memory_space<vmem>>) attributes {dimension_semantics = [], scalar_prefetch = 0 : i64, scratch_operands = 0 : i64, tpu.core_type = #tpu.core_type<tc>} {
    %0 = tpu.iota {dimensions = array<i32: 1>} : vector<1x32xi32>
    %c0_i32 = arith.constant 0 : i32
    %1 = vector.broadcast %c0_i32 : i32 to vector<1x32xi32>
    %2 = arith.cmpi sge, %0, %1 : vector<1x32xi32>
    %c8_i32 = arith.constant 8 : i32
    %3 = vector.broadcast %c8_i32 : i32 to vector<1x32xi32>
    %4 = arith.cmpi slt, %0, %3 : vector<1x32xi32>
    %5 = arith.andi %2, %4 : vector<1x32xi1>
    %6 = arith.extui %5 : vector<1x32xi1> to vector<1x32xi32>
    %7 = arith.sitofp %6 : vector<1x32xi32> to vector<1x32xf32>
    %c8_i32_0 = arith.constant 8 : i32
    %8 = vector.broadcast %c8_i32_0 : i32 to vector<1x32xi32>
    %9 = arith.cmpi sge, %0, %8 : vector<1x32xi32>
    %c16_i32 = arith.constant 16 : i32
    %10 = vector.broadcast %c16_i32 : i32 to vector<1x32xi32>
    %11 = arith.cmpi slt, %0, %10 : vector<1x32xi32>
    %12 = arith.andi %9, %11 : vector<1x32xi1>
    %13 = arith.extui %12 : vector<1x32xi1> to vector<1x32xi32>
    %14 = arith.sitofp %13 : vector<1x32xi32> to vector<1x32xf32>
    %c16_i32_1 = arith.constant 16 : i32
    %15 = vector.broadcast %c16_i32_1 : i32 to vector<1x32xi32>
    %16 = arith.cmpi sge, %0, %15 : vector<1x32xi32>
    %c24_i32 = arith.constant 24 : i32
    %17 = vector.broadcast %c24_i32 : i32 to vector<1x32xi32>
    %18 = arith.cmpi slt, %0, %17 : vector<1x32xi32>
    %19 = arith.andi %16, %18 : vector<1x32xi1>
    %20 = arith.extui %19 : vector<1x32xi1> to vector<1x32xi32>
    %21 = arith.sitofp %20 : vector<1x32xi32> to vector<1x32xf32>
    %c24_i32_2 = arith.constant 24 : i32
    %22 = vector.broadcast %c24_i32_2 : i32 to vector<1x32xi32>
    %23 = arith.cmpi sge, %0, %22 : vector<1x32xi32>
    %c32_i32 = arith.constant 32 : i32
    %24 = vector.broadcast %c32_i32 : i32 to vector<1x32xi32>
    %25 = arith.cmpi slt, %0, %24 : vector<1x32xi32>
    %26 = arith.andi %23, %25 : vector<1x32xi1>
    %27 = arith.extui %26 : vector<1x32xi1> to vector<1x32xi32>
    %28 = arith.sitofp %27 : vector<1x32xi32> to vector<1x32xf32>
    %c0 = arith.constant 0 : index
    %c0_3 = arith.constant 0 : index
    %29 = vector.load %arg3[%c0, %c0_3] : memref<8x32xf32, #tpu.memory_space<vmem>>, vector<8x32xf32>
    %c0_4 = arith.constant 0 : index
    %c0_5 = arith.constant 0 : index
    %30 = vector.load %arg4[%c0_4, %c0_5] : memref<1x32xf32, #tpu.memory_space<vmem>>, vector<1x32xf32>
    %c0_6 = arith.constant 0 : index
    %c0_7 = arith.constant 0 : index
    %31 = vector.load %arg5[%c0_6, %c0_7] : memref<8x16xf32, #tpu.memory_space<vmem>>, vector<8x16xf32>
    %c0_8 = arith.constant 0 : index
    %c0_9 = arith.constant 0 : index
    %32 = vector.load %arg6[%c0_8, %c0_9] : memref<32x32xf32, #tpu.memory_space<vmem>>, vector<32x32xf32>
    %c0_10 = arith.constant 0 : index
    %c0_11 = arith.constant 0 : index
    %33 = vector.load %arg7[%c0_10, %c0_11] : memref<4x32xf32, #tpu.memory_space<vmem>>, vector<4x32xf32>
    %c0_12 = arith.constant 0 : index
    %c0_13 = arith.constant 0 : index
    %34 = vector.load %arg8[%c0_12, %c0_13] : memref<4x32xf32, #tpu.memory_space<vmem>>, vector<4x32xf32>
    %c0_14 = arith.constant 0 : index
    %c0_15 = arith.constant 0 : index
    %35 = vector.load %arg9[%c0_14, %c0_15] : memref<32x32xf32, #tpu.memory_space<vmem>>, vector<32x32xf32>
    %c0_16 = arith.constant 0 : index
    %c0_17 = arith.constant 0 : index
    %36 = vector.load %arg10[%c0_16, %c0_17] : memref<4x32xf32, #tpu.memory_space<vmem>>, vector<4x32xf32>
    %c0_18 = arith.constant 0 : index
    %c0_19 = arith.constant 0 : index
    %37 = vector.load %arg11[%c0_18, %c0_19] : memref<4x32xf32, #tpu.memory_space<vmem>>, vector<4x32xf32>
    %c0_20 = arith.constant 0 : index
    %c0_21 = arith.constant 0 : index
    %38 = vector.load %arg12[%c0_20, %c0_21] : memref<32x32xf32, #tpu.memory_space<vmem>>, vector<32x32xf32>
    %c0_22 = arith.constant 0 : index
    %c0_23 = arith.constant 0 : index
    %39 = vector.load %arg13[%c0_22, %c0_23] : memref<4x32xf32, #tpu.memory_space<vmem>>, vector<4x32xf32>
    %c0_24 = arith.constant 0 : index
    %c0_25 = arith.constant 0 : index
    %40 = vector.load %arg14[%c0_24, %c0_25] : memref<4x32xf32, #tpu.memory_space<vmem>>, vector<4x32xf32>
    %c0_26 = arith.constant 0 : index
    %c0_27 = arith.constant 0 : index
    %41 = vector.load %arg15[%c0_26, %c0_27] : memref<32x32xf32, #tpu.memory_space<vmem>>, vector<32x32xf32>
    %c0_28 = arith.constant 0 : index
    %c0_29 = arith.constant 0 : index
    %42 = vector.load %arg16[%c0_28, %c0_29] : memref<32x32xf32, #tpu.memory_space<vmem>>, vector<32x32xf32>
    %c0_30 = arith.constant 0 : index
    %c0_31 = arith.constant 0 : index
    %43 = vector.load %arg17[%c0_30, %c0_31] : memref<32x32xf32, #tpu.memory_space<vmem>>, vector<32x32xf32>
    %c0_32 = arith.constant 0 : index
    %c0_33 = arith.constant 0 : index
    %44 = vector.load %arg18[%c0_32, %c0_33] : memref<32x32xf32, #tpu.memory_space<vmem>>, vector<32x32xf32>
    %c0_34 = arith.constant 0 : index
    %c0_35 = arith.constant 0 : index
    %c0_36 = arith.constant 0 : index
    %45 = vector.load %arg0[%c0_34, %c0_35, %c0_36] : memref<2x16x8xf32, #tpu.memory_space<vmem>>, vector<1x16x8xf32>
    %46 = vector.shape_cast %45 : vector<1x16x8xf32> to vector<16x8xf32>
    %c0_37 = arith.constant 0 : index
    %c0_38 = arith.constant 0 : index
    %c0_39 = arith.constant 0 : index
    %47 = vector.load %arg1[%c0_37, %c0_38, %c0_39] : memref<2x16x16xf32, #tpu.memory_space<vmem>>, vector<1x16x16xf32>
    %48 = vector.shape_cast %47 : vector<1x16x16xf32> to vector<16x16xf32>
    %c0_40 = arith.constant 0 : index
    %c0_41 = arith.constant 0 : index
    %c0_42 = arith.constant 0 : index
    %49 = vector.load %arg2[%c0_40, %c0_41, %c0_42] : memref<2x8x8xf32, #tpu.memory_space<vmem>>, vector<1x8x8xf32>
    %50 = vector.shape_cast %49 : vector<1x8x8xf32> to vector<8x8xf32>
    %cst = arith.constant dense<0.000000e+00> : vector<16x32xf32>
    %51 = tpu.matmul %46, %29, %cst {dimension_numbers = #tpu.dot_dimension_numbers<[1], [0], [0], [1], [0, 0, 1, 1], [], []>} : vector<16x8xf32>, vector<8x32xf32>, vector<16x32xf32> -> vector<16x32xf32>
    %52 = vector.broadcast %30 : vector<1x32xf32> to vector<16x32xf32>
    %53 = arith.addf %51, %52 : vector<16x32xf32>
    %cst_43 = arith.constant dense<0.000000e+00> : vector<16x32xf32>
    %54 = tpu.matmul %53, %32, %cst_43 {dimension_numbers = #tpu.dot_dimension_numbers<[1], [0], [0], [1], [0, 0, 1, 1], [], []>} : vector<16x32xf32>, vector<32x32xf32>, vector<16x32xf32> -> vector<16x32xf32>
    %cst_44 = arith.constant dense<0.000000e+00> : vector<16x4xf32>
    %55 = tpu.matmul %54, %33, %cst_44 {dimension_numbers = #tpu.dot_dimension_numbers<[1], [1], [0], [0], [0, 0, 1, 0], [], []>} : vector<16x32xf32>, vector<4x32xf32>, vector<16x4xf32> -> vector<16x4xf32>
    %cst_45 = arith.constant dense<0.000000e+00> : vector<4x16xf32>
    %56 = tpu.matmul %34, %54, %cst_45 {dimension_numbers = #tpu.dot_dimension_numbers<[1], [1], [0], [0], [0, 0, 1, 0], [], []>} : vector<4x32xf32>, vector<16x32xf32>, vector<4x16xf32> -> vector<4x16xf32>
    %cst_46 = arith.constant 0.000000e+00 : f32
    %57 = vector.broadcast %cst_46 : f32 to vector<16x32xf32>
    %58 = vector.extract_strided_slice %55 {offsets = [0, 0], sizes = [16, 1], strides = [1, 1]} : vector<16x4xf32> to vector<16x1xf32>
    %59 = vector.extract_strided_slice %56 {offsets = [0, 0], sizes = [1, 16], strides = [1, 1]} : vector<4x16xf32> to vector<1x16xf32>
    %60 = vector.broadcast %58 : vector<16x1xf32> to vector<16x16xf32>
    %61 = vector.broadcast %59 : vector<1x16xf32> to vector<16x16xf32>
    %62 = arith.addf %60, %61 : vector<16x16xf32>
    %cst_47 = arith.constant 0.000000e+00 : f32
    %63 = vector.broadcast %cst_47 : f32 to vector<16x16xf32>
    %64 = arith.cmpf ogt, %62, %63 : vector<16x16xf32>
    %cst_48 = arith.constant 2.000000e-01 : f32
    %65 = vector.broadcast %cst_48 : f32 to vector<16x16xf32>
    %66 = arith.mulf %65, %62 : vector<16x16xf32>
    %67 = arith.select %64, %62, %66 : vector<16x16xi1>, vector<16x16xf32>
    %cst_49 = arith.constant 0.000000e+00 : f32
    %68 = vector.broadcast %cst_49 : f32 to vector<16x16xf32>
    %69 = arith.cmpf ogt, %48, %68 : vector<16x16xf32>
    %cst_50 = arith.constant -9.000000e+15 : f32
    %70 = vector.broadcast %cst_50 : f32 to vector<16x16xf32>
    %71 = arith.select %69, %67, %70 : vector<16x16xi1>, vector<16x16xf32>
    %cst_51 = arith.constant dense<0xFF800000> : vector<16xf32>
    %72 = vector.multi_reduction <maximumf>, %71, %cst_51 [1] : vector<16x16xf32> to vector<16xf32>
    %73 = vector.shape_cast %72 : vector<16xf32> to vector<16x1xf32>
    %74 = vector.broadcast %73 : vector<16x1xf32> to vector<16x16xf32>
    %75 = arith.subf %71, %74 : vector<16x16xf32>
    %76 = math.exp %75 : vector<16x16xf32>
    %cst_52 = arith.constant dense<0.000000e+00> : vector<16xf32>
    %77 = vector.multi_reduction <add>, %76, %cst_52 [1] : vector<16x16xf32> to vector<16xf32>
    %78 = vector.shape_cast %77 : vector<16xf32> to vector<16x1xf32>
    %79 = tpu.reciprocal %78 {approx = true} : vector<16x1xf32> -> vector<16x1xf32>
    %80 = vector.broadcast %79 : vector<16x1xf32> to vector<16x16xf32>
    %81 = arith.mulf %76, %80 : vector<16x16xf32>
    %82 = vector.broadcast %7 : vector<1x32xf32> to vector<16x32xf32>
    %83 = arith.mulf %54, %82 : vector<16x32xf32>
    %cst_53 = arith.constant dense<0.000000e+00> : vector<16x32xf32>
    %84 = tpu.matmul %81, %83, %cst_53 {dimension_numbers = #tpu.dot_dimension_numbers<[1], [0], [0], [1], [0, 0, 1, 1], [], []>} : vector<16x16xf32>, vector<16x32xf32>, vector<16x32xf32> -> vector<16x32xf32>
    %85 = arith.addf %57, %84 : vector<16x32xf32>
    %86 = vector.extract_strided_slice %55 {offsets = [0, 1], sizes = [16, 1], strides = [1, 1]} : vector<16x4xf32> to vector<16x1xf32>
    %87 = vector.extract_strided_slice %56 {offsets = [1, 0], sizes = [1, 16], strides = [1, 1]} : vector<4x16xf32> to vector<1x16xf32>
    %88 = vector.broadcast %86 : vector<16x1xf32> to vector<16x16xf32>
    %89 = vector.broadcast %87 : vector<1x16xf32> to vector<16x16xf32>
    %90 = arith.addf %88, %89 : vector<16x16xf32>
    %cst_54 = arith.constant 0.000000e+00 : f32
    %91 = vector.broadcast %cst_54 : f32 to vector<16x16xf32>
    %92 = arith.cmpf ogt, %90, %91 : vector<16x16xf32>
    %cst_55 = arith.constant 2.000000e-01 : f32
    %93 = vector.broadcast %cst_55 : f32 to vector<16x16xf32>
    %94 = arith.mulf %93, %90 : vector<16x16xf32>
    %95 = arith.select %92, %90, %94 : vector<16x16xi1>, vector<16x16xf32>
    %cst_56 = arith.constant 0.000000e+00 : f32
    %96 = vector.broadcast %cst_56 : f32 to vector<16x16xf32>
    %97 = arith.cmpf ogt, %48, %96 : vector<16x16xf32>
    %cst_57 = arith.constant -9.000000e+15 : f32
    %98 = vector.broadcast %cst_57 : f32 to vector<16x16xf32>
    %99 = arith.select %97, %95, %98 : vector<16x16xi1>, vector<16x16xf32>
    %cst_58 = arith.constant dense<0xFF800000> : vector<16xf32>
    %100 = vector.multi_reduction <maximumf>, %99, %cst_58 [1] : vector<16x16xf32> to vector<16xf32>
    %101 = vector.shape_cast %100 : vector<16xf32> to vector<16x1xf32>
    %102 = vector.broadcast %101 : vector<16x1xf32> to vector<16x16xf32>
    %103 = arith.subf %99, %102 : vector<16x16xf32>
    %104 = math.exp %103 : vector<16x16xf32>
    %cst_59 = arith.constant dense<0.000000e+00> : vector<16xf32>
    %105 = vector.multi_reduction <add>, %104, %cst_59 [1] : vector<16x16xf32> to vector<16xf32>
    %106 = vector.shape_cast %105 : vector<16xf32> to vector<16x1xf32>
    %107 = tpu.reciprocal %106 {approx = true} : vector<16x1xf32> -> vector<16x1xf32>
    %108 = vector.broadcast %107 : vector<16x1xf32> to vector<16x16xf32>
    %109 = arith.mulf %104, %108 : vector<16x16xf32>
    %110 = vector.broadcast %14 : vector<1x32xf32> to vector<16x32xf32>
    %111 = arith.mulf %54, %110 : vector<16x32xf32>
    %cst_60 = arith.constant dense<0.000000e+00> : vector<16x32xf32>
    %112 = tpu.matmul %109, %111, %cst_60 {dimension_numbers = #tpu.dot_dimension_numbers<[1], [0], [0], [1], [0, 0, 1, 1], [], []>} : vector<16x16xf32>, vector<16x32xf32>, vector<16x32xf32> -> vector<16x32xf32>
    %113 = arith.addf %85, %112 : vector<16x32xf32>
    %114 = vector.extract_strided_slice %55 {offsets = [0, 2], sizes = [16, 1], strides = [1, 1]} : vector<16x4xf32> to vector<16x1xf32>
    %115 = vector.extract_strided_slice %56 {offsets = [2, 0], sizes = [1, 16], strides = [1, 1]} : vector<4x16xf32> to vector<1x16xf32>
    %116 = vector.broadcast %114 : vector<16x1xf32> to vector<16x16xf32>
    %117 = vector.broadcast %115 : vector<1x16xf32> to vector<16x16xf32>
    %118 = arith.addf %116, %117 : vector<16x16xf32>
    %cst_61 = arith.constant 0.000000e+00 : f32
    %119 = vector.broadcast %cst_61 : f32 to vector<16x16xf32>
    %120 = arith.cmpf ogt, %118, %119 : vector<16x16xf32>
    %cst_62 = arith.constant 2.000000e-01 : f32
    %121 = vector.broadcast %cst_62 : f32 to vector<16x16xf32>
    %122 = arith.mulf %121, %118 : vector<16x16xf32>
    %123 = arith.select %120, %118, %122 : vector<16x16xi1>, vector<16x16xf32>
    %cst_63 = arith.constant 0.000000e+00 : f32
    %124 = vector.broadcast %cst_63 : f32 to vector<16x16xf32>
    %125 = arith.cmpf ogt, %48, %124 : vector<16x16xf32>
    %cst_64 = arith.constant -9.000000e+15 : f32
    %126 = vector.broadcast %cst_64 : f32 to vector<16x16xf32>
    %127 = arith.select %125, %123, %126 : vector<16x16xi1>, vector<16x16xf32>
    %cst_65 = arith.constant dense<0xFF800000> : vector<16xf32>
    %128 = vector.multi_reduction <maximumf>, %127, %cst_65 [1] : vector<16x16xf32> to vector<16xf32>
    %129 = vector.shape_cast %128 : vector<16xf32> to vector<16x1xf32>
    %130 = vector.broadcast %129 : vector<16x1xf32> to vector<16x16xf32>
    %131 = arith.subf %127, %130 : vector<16x16xf32>
    %132 = math.exp %131 : vector<16x16xf32>
    %cst_66 = arith.constant dense<0.000000e+00> : vector<16xf32>
    %133 = vector.multi_reduction <add>, %132, %cst_66 [1] : vector<16x16xf32> to vector<16xf32>
    %134 = vector.shape_cast %133 : vector<16xf32> to vector<16x1xf32>
    %135 = tpu.reciprocal %134 {approx = true} : vector<16x1xf32> -> vector<16x1xf32>
    %136 = vector.broadcast %135 : vector<16x1xf32> to vector<16x16xf32>
    %137 = arith.mulf %132, %136 : vector<16x16xf32>
    %138 = vector.broadcast %21 : vector<1x32xf32> to vector<16x32xf32>
    %139 = arith.mulf %54, %138 : vector<16x32xf32>
    %cst_67 = arith.constant dense<0.000000e+00> : vector<16x32xf32>
    %140 = tpu.matmul %137, %139, %cst_67 {dimension_numbers = #tpu.dot_dimension_numbers<[1], [0], [0], [1], [0, 0, 1, 1], [], []>} : vector<16x16xf32>, vector<16x32xf32>, vector<16x32xf32> -> vector<16x32xf32>
    %141 = arith.addf %113, %140 : vector<16x32xf32>
    %142 = vector.extract_strided_slice %55 {offsets = [0, 3], sizes = [16, 1], strides = [1, 1]} : vector<16x4xf32> to vector<16x1xf32>
    %143 = vector.extract_strided_slice %56 {offsets = [3, 0], sizes = [1, 16], strides = [1, 1]} : vector<4x16xf32> to vector<1x16xf32>
    %144 = vector.broadcast %142 : vector<16x1xf32> to vector<16x16xf32>
    %145 = vector.broadcast %143 : vector<1x16xf32> to vector<16x16xf32>
    %146 = arith.addf %144, %145 : vector<16x16xf32>
    %cst_68 = arith.constant 0.000000e+00 : f32
    %147 = vector.broadcast %cst_68 : f32 to vector<16x16xf32>
    %148 = arith.cmpf ogt, %146, %147 : vector<16x16xf32>
    %cst_69 = arith.constant 2.000000e-01 : f32
    %149 = vector.broadcast %cst_69 : f32 to vector<16x16xf32>
    %150 = arith.mulf %149, %146 : vector<16x16xf32>
    %151 = arith.select %148, %146, %150 : vector<16x16xi1>, vector<16x16xf32>
    %cst_70 = arith.constant 0.000000e+00 : f32
    %152 = vector.broadcast %cst_70 : f32 to vector<16x16xf32>
    %153 = arith.cmpf ogt, %48, %152 : vector<16x16xf32>
    %cst_71 = arith.constant -9.000000e+15 : f32
    %154 = vector.broadcast %cst_71 : f32 to vector<16x16xf32>
    %155 = arith.select %153, %151, %154 : vector<16x16xi1>, vector<16x16xf32>
    %cst_72 = arith.constant dense<0xFF800000> : vector<16xf32>
    %156 = vector.multi_reduction <maximumf>, %155, %cst_72 [1] : vector<16x16xf32> to vector<16xf32>
    %157 = vector.shape_cast %156 : vector<16xf32> to vector<16x1xf32>
    %158 = vector.broadcast %157 : vector<16x1xf32> to vector<16x16xf32>
    %159 = arith.subf %155, %158 : vector<16x16xf32>
    %160 = math.exp %159 : vector<16x16xf32>
    %cst_73 = arith.constant dense<0.000000e+00> : vector<16xf32>
    %161 = vector.multi_reduction <add>, %160, %cst_73 [1] : vector<16x16xf32> to vector<16xf32>
    %162 = vector.shape_cast %161 : vector<16xf32> to vector<16x1xf32>
    %163 = tpu.reciprocal %162 {approx = true} : vector<16x1xf32> -> vector<16x1xf32>
    %164 = vector.broadcast %163 : vector<16x1xf32> to vector<16x16xf32>
    %165 = arith.mulf %160, %164 : vector<16x16xf32>
    %166 = vector.broadcast %28 : vector<1x32xf32> to vector<16x32xf32>
    %167 = arith.mulf %54, %166 : vector<16x32xf32>
    %cst_74 = arith.constant dense<0.000000e+00> : vector<16x32xf32>
    %168 = tpu.matmul %165, %167, %cst_74 {dimension_numbers = #tpu.dot_dimension_numbers<[1], [0], [0], [1], [0, 0, 1, 1], [], []>} : vector<16x16xf32>, vector<16x32xf32>, vector<16x32xf32> -> vector<16x32xf32>
    %169 = arith.addf %141, %168 : vector<16x32xf32>
    %cst_75 = arith.constant 0.000000e+00 : f32
    %170 = vector.broadcast %cst_75 : f32 to vector<16x32xf32>
    %171 = arith.cmpf ogt, %169, %170 : vector<16x32xf32>
    %cst_76 = arith.constant 0.000000e+00 : f32
    %172 = vector.broadcast %cst_76 : f32 to vector<16x32xf32>
    %173 = arith.minimumf %169, %172 : vector<16x32xf32>
    %174 = math.exp %173 : vector<16x32xf32>
    %cst_77 = arith.constant 1.000000e+00 : f32
    %175 = vector.broadcast %cst_77 : f32 to vector<16x32xf32>
    %176 = arith.subf %174, %175 : vector<16x32xf32>
    %177 = arith.select %171, %169, %176 : vector<16x32xi1>, vector<16x32xf32>
    %cst_78 = arith.constant dense<0.000000e+00> : vector<8x32xf32>
    %178 = tpu.matmul %31, %177, %cst_78 {dimension_numbers = #tpu.dot_dimension_numbers<[1], [0], [0], [1], [0, 0, 1, 1], [], []>} : vector<8x16xf32>, vector<16x32xf32>, vector<8x32xf32> -> vector<8x32xf32>
    %cst_79 = arith.constant dense<0.000000e+00> : vector<8x32xf32>
    %179 = tpu.matmul %178, %35, %cst_79 {dimension_numbers = #tpu.dot_dimension_numbers<[1], [0], [0], [1], [0, 0, 1, 1], [], []>} : vector<8x32xf32>, vector<32x32xf32>, vector<8x32xf32> -> vector<8x32xf32>
    %cst_80 = arith.constant dense<0.000000e+00> : vector<8x4xf32>
    %180 = tpu.matmul %179, %36, %cst_80 {dimension_numbers = #tpu.dot_dimension_numbers<[1], [1], [0], [0], [0, 0, 1, 0], [], []>} : vector<8x32xf32>, vector<4x32xf32>, vector<8x4xf32> -> vector<8x4xf32>
    %cst_81 = arith.constant dense<0.000000e+00> : vector<4x8xf32>
    %181 = tpu.matmul %37, %179, %cst_81 {dimension_numbers = #tpu.dot_dimension_numbers<[1], [1], [0], [0], [0, 0, 1, 0], [], []>} : vector<4x32xf32>, vector<8x32xf32>, vector<4x8xf32> -> vector<4x8xf32>
    %cst_82 = arith.constant 0.000000e+00 : f32
    %182 = vector.broadcast %cst_82 : f32 to vector<8x32xf32>
    %183 = vector.extract_strided_slice %180 {offsets = [0, 0], sizes = [8, 1], strides = [1, 1]} : vector<8x4xf32> to vector<8x1xf32>
    %184 = vector.extract_strided_slice %181 {offsets = [0, 0], sizes = [1, 8], strides = [1, 1]} : vector<4x8xf32> to vector<1x8xf32>
    %185 = vector.broadcast %183 : vector<8x1xf32> to vector<8x8xf32>
    %186 = vector.broadcast %184 : vector<1x8xf32> to vector<8x8xf32>
    %187 = arith.addf %185, %186 : vector<8x8xf32>
    %cst_83 = arith.constant 0.000000e+00 : f32
    %188 = vector.broadcast %cst_83 : f32 to vector<8x8xf32>
    %189 = arith.cmpf ogt, %187, %188 : vector<8x8xf32>
    %cst_84 = arith.constant 2.000000e-01 : f32
    %190 = vector.broadcast %cst_84 : f32 to vector<8x8xf32>
    %191 = arith.mulf %190, %187 : vector<8x8xf32>
    %192 = arith.select %189, %187, %191 : vector<8x8xi1>, vector<8x8xf32>
    %cst_85 = arith.constant 0.000000e+00 : f32
    %193 = vector.broadcast %cst_85 : f32 to vector<8x8xf32>
    %194 = arith.cmpf ogt, %50, %193 : vector<8x8xf32>
    %cst_86 = arith.constant -9.000000e+15 : f32
    %195 = vector.broadcast %cst_86 : f32 to vector<8x8xf32>
    %196 = arith.select %194, %192, %195 : vector<8x8xi1>, vector<8x8xf32>
    %cst_87 = arith.constant dense<0xFF800000> : vector<8xf32>
    %197 = vector.multi_reduction <maximumf>, %196, %cst_87 [1] : vector<8x8xf32> to vector<8xf32>
    %198 = vector.shape_cast %197 : vector<8xf32> to vector<8x1xf32>
    %199 = vector.broadcast %198 : vector<8x1xf32> to vector<8x8xf32>
    %200 = arith.subf %196, %199 : vector<8x8xf32>
    %201 = math.exp %200 : vector<8x8xf32>
    %cst_88 = arith.constant dense<0.000000e+00> : vector<8xf32>
    %202 = vector.multi_reduction <add>, %201, %cst_88 [1] : vector<8x8xf32> to vector<8xf32>
    %203 = vector.shape_cast %202 : vector<8xf32> to vector<8x1xf32>
    %204 = tpu.reciprocal %203 {approx = true} : vector<8x1xf32> -> vector<8x1xf32>
    %205 = vector.broadcast %204 : vector<8x1xf32> to vector<8x8xf32>
    %206 = arith.mulf %201, %205 : vector<8x8xf32>
    %207 = vector.broadcast %7 : vector<1x32xf32> to vector<8x32xf32>
    %208 = arith.mulf %179, %207 : vector<8x32xf32>
    %cst_89 = arith.constant dense<0.000000e+00> : vector<8x32xf32>
    %209 = tpu.matmul %206, %208, %cst_89 {dimension_numbers = #tpu.dot_dimension_numbers<[1], [0], [0], [1], [0, 0, 1, 1], [], []>} : vector<8x8xf32>, vector<8x32xf32>, vector<8x32xf32> -> vector<8x32xf32>
    %210 = arith.addf %182, %209 : vector<8x32xf32>
    %211 = vector.extract_strided_slice %180 {offsets = [0, 1], sizes = [8, 1], strides = [1, 1]} : vector<8x4xf32> to vector<8x1xf32>
    %212 = vector.extract_strided_slice %181 {offsets = [1, 0], sizes = [1, 8], strides = [1, 1]} : vector<4x8xf32> to vector<1x8xf32>
    %213 = vector.broadcast %211 : vector<8x1xf32> to vector<8x8xf32>
    %214 = vector.broadcast %212 : vector<1x8xf32> to vector<8x8xf32>
    %215 = arith.addf %213, %214 : vector<8x8xf32>
    %cst_90 = arith.constant 0.000000e+00 : f32
    %216 = vector.broadcast %cst_90 : f32 to vector<8x8xf32>
    %217 = arith.cmpf ogt, %215, %216 : vector<8x8xf32>
    %cst_91 = arith.constant 2.000000e-01 : f32
    %218 = vector.broadcast %cst_91 : f32 to vector<8x8xf32>
    %219 = arith.mulf %218, %215 : vector<8x8xf32>
    %220 = arith.select %217, %215, %219 : vector<8x8xi1>, vector<8x8xf32>
    %cst_92 = arith.constant 0.000000e+00 : f32
    %221 = vector.broadcast %cst_92 : f32 to vector<8x8xf32>
    %222 = arith.cmpf ogt, %50, %221 : vector<8x8xf32>
    %cst_93 = arith.constant -9.000000e+15 : f32
    %223 = vector.broadcast %cst_93 : f32 to vector<8x8xf32>
    %224 = arith.select %222, %220, %223 : vector<8x8xi1>, vector<8x8xf32>
    %cst_94 = arith.constant dense<0xFF800000> : vector<8xf32>
    %225 = vector.multi_reduction <maximumf>, %224, %cst_94 [1] : vector<8x8xf32> to vector<8xf32>
    %226 = vector.shape_cast %225 : vector<8xf32> to vector<8x1xf32>
    %227 = vector.broadcast %226 : vector<8x1xf32> to vector<8x8xf32>
    %228 = arith.subf %224, %227 : vector<8x8xf32>
    %229 = math.exp %228 : vector<8x8xf32>
    %cst_95 = arith.constant dense<0.000000e+00> : vector<8xf32>
    %230 = vector.multi_reduction <add>, %229, %cst_95 [1] : vector<8x8xf32> to vector<8xf32>
    %231 = vector.shape_cast %230 : vector<8xf32> to vector<8x1xf32>
    %232 = tpu.reciprocal %231 {approx = true} : vector<8x1xf32> -> vector<8x1xf32>
    %233 = vector.broadcast %232 : vector<8x1xf32> to vector<8x8xf32>
    %234 = arith.mulf %229, %233 : vector<8x8xf32>
    %235 = vector.broadcast %14 : vector<1x32xf32> to vector<8x32xf32>
    %236 = arith.mulf %179, %235 : vector<8x32xf32>
    %cst_96 = arith.constant dense<0.000000e+00> : vector<8x32xf32>
    %237 = tpu.matmul %234, %236, %cst_96 {dimension_numbers = #tpu.dot_dimension_numbers<[1], [0], [0], [1], [0, 0, 1, 1], [], []>} : vector<8x8xf32>, vector<8x32xf32>, vector<8x32xf32> -> vector<8x32xf32>
    %238 = arith.addf %210, %237 : vector<8x32xf32>
    %239 = vector.extract_strided_slice %180 {offsets = [0, 2], sizes = [8, 1], strides = [1, 1]} : vector<8x4xf32> to vector<8x1xf32>
    %240 = vector.extract_strided_slice %181 {offsets = [2, 0], sizes = [1, 8], strides = [1, 1]} : vector<4x8xf32> to vector<1x8xf32>
    %241 = vector.broadcast %239 : vector<8x1xf32> to vector<8x8xf32>
    %242 = vector.broadcast %240 : vector<1x8xf32> to vector<8x8xf32>
    %243 = arith.addf %241, %242 : vector<8x8xf32>
    %cst_97 = arith.constant 0.000000e+00 : f32
    %244 = vector.broadcast %cst_97 : f32 to vector<8x8xf32>
    %245 = arith.cmpf ogt, %243, %244 : vector<8x8xf32>
    %cst_98 = arith.constant 2.000000e-01 : f32
    %246 = vector.broadcast %cst_98 : f32 to vector<8x8xf32>
    %247 = arith.mulf %246, %243 : vector<8x8xf32>
    %248 = arith.select %245, %243, %247 : vector<8x8xi1>, vector<8x8xf32>
    %cst_99 = arith.constant 0.000000e+00 : f32
    %249 = vector.broadcast %cst_99 : f32 to vector<8x8xf32>
    %250 = arith.cmpf ogt, %50, %249 : vector<8x8xf32>
    %cst_100 = arith.constant -9.000000e+15 : f32
    %251 = vector.broadcast %cst_100 : f32 to vector<8x8xf32>
    %252 = arith.select %250, %248, %251 : vector<8x8xi1>, vector<8x8xf32>
    %cst_101 = arith.constant dense<0xFF800000> : vector<8xf32>
    %253 = vector.multi_reduction <maximumf>, %252, %cst_101 [1] : vector<8x8xf32> to vector<8xf32>
    %254 = vector.shape_cast %253 : vector<8xf32> to vector<8x1xf32>
    %255 = vector.broadcast %254 : vector<8x1xf32> to vector<8x8xf32>
    %256 = arith.subf %252, %255 : vector<8x8xf32>
    %257 = math.exp %256 : vector<8x8xf32>
    %cst_102 = arith.constant dense<0.000000e+00> : vector<8xf32>
    %258 = vector.multi_reduction <add>, %257, %cst_102 [1] : vector<8x8xf32> to vector<8xf32>
    %259 = vector.shape_cast %258 : vector<8xf32> to vector<8x1xf32>
    %260 = tpu.reciprocal %259 {approx = true} : vector<8x1xf32> -> vector<8x1xf32>
    %261 = vector.broadcast %260 : vector<8x1xf32> to vector<8x8xf32>
    %262 = arith.mulf %257, %261 : vector<8x8xf32>
    %263 = vector.broadcast %21 : vector<1x32xf32> to vector<8x32xf32>
    %264 = arith.mulf %179, %263 : vector<8x32xf32>
    %cst_103 = arith.constant dense<0.000000e+00> : vector<8x32xf32>
    %265 = tpu.matmul %262, %264, %cst_103 {dimension_numbers = #tpu.dot_dimension_numbers<[1], [0], [0], [1], [0, 0, 1, 1], [], []>} : vector<8x8xf32>, vector<8x32xf32>, vector<8x32xf32> -> vector<8x32xf32>
    %266 = arith.addf %238, %265 : vector<8x32xf32>
    %267 = vector.extract_strided_slice %180 {offsets = [0, 3], sizes = [8, 1], strides = [1, 1]} : vector<8x4xf32> to vector<8x1xf32>
    %268 = vector.extract_strided_slice %181 {offsets = [3, 0], sizes = [1, 8], strides = [1, 1]} : vector<4x8xf32> to vector<1x8xf32>
    %269 = vector.broadcast %267 : vector<8x1xf32> to vector<8x8xf32>
    %270 = vector.broadcast %268 : vector<1x8xf32> to vector<8x8xf32>
    %271 = arith.addf %269, %270 : vector<8x8xf32>
    %cst_104 = arith.constant 0.000000e+00 : f32
    %272 = vector.broadcast %cst_104 : f32 to vector<8x8xf32>
    %273 = arith.cmpf ogt, %271, %272 : vector<8x8xf32>
    %cst_105 = arith.constant 2.000000e-01 : f32
    %274 = vector.broadcast %cst_105 : f32 to vector<8x8xf32>
    %275 = arith.mulf %274, %271 : vector<8x8xf32>
    %276 = arith.select %273, %271, %275 : vector<8x8xi1>, vector<8x8xf32>
    %cst_106 = arith.constant 0.000000e+00 : f32
    %277 = vector.broadcast %cst_106 : f32 to vector<8x8xf32>
    %278 = arith.cmpf ogt, %50, %277 : vector<8x8xf32>
    %cst_107 = arith.constant -9.000000e+15 : f32
    %279 = vector.broadcast %cst_107 : f32 to vector<8x8xf32>
    %280 = arith.select %278, %276, %279 : vector<8x8xi1>, vector<8x8xf32>
    %cst_108 = arith.constant dense<0xFF800000> : vector<8xf32>
    %281 = vector.multi_reduction <maximumf>, %280, %cst_108 [1] : vector<8x8xf32> to vector<8xf32>
    %282 = vector.shape_cast %281 : vector<8xf32> to vector<8x1xf32>
    %283 = vector.broadcast %282 : vector<8x1xf32> to vector<8x8xf32>
    %284 = arith.subf %280, %283 : vector<8x8xf32>
    %285 = math.exp %284 : vector<8x8xf32>
    %cst_109 = arith.constant dense<0.000000e+00> : vector<8xf32>
    %286 = vector.multi_reduction <add>, %285, %cst_109 [1] : vector<8x8xf32> to vector<8xf32>
    %287 = vector.shape_cast %286 : vector<8xf32> to vector<8x1xf32>
    %288 = tpu.reciprocal %287 {approx = true} : vector<8x1xf32> -> vector<8x1xf32>
    %289 = vector.broadcast %288 : vector<8x1xf32> to vector<8x8xf32>
    %290 = arith.mulf %285, %289 : vector<8x8xf32>
    %291 = vector.broadcast %28 : vector<1x32xf32> to vector<8x32xf32>
    %292 = arith.mulf %179, %291 : vector<8x32xf32>
    %cst_110 = arith.constant dense<0.000000e+00> : vector<8x32xf32>
    %293 = tpu.matmul %290, %292, %cst_110 {dimension_numbers = #tpu.dot_dimension_numbers<[1], [0], [0], [1], [0, 0, 1, 1], [], []>} : vector<8x8xf32>, vector<8x32xf32>, vector<8x32xf32> -> vector<8x32xf32>
    %294 = arith.addf %266, %293 : vector<8x32xf32>
    %cst_111 = arith.constant 0.000000e+00 : f32
    %295 = vector.broadcast %cst_111 : f32 to vector<8x32xf32>
    %296 = arith.cmpf ogt, %294, %295 : vector<8x32xf32>
    %cst_112 = arith.constant 0.000000e+00 : f32
    %297 = vector.broadcast %cst_112 : f32 to vector<8x32xf32>
    %298 = arith.minimumf %294, %297 : vector<8x32xf32>
    %299 = math.exp %298 : vector<8x32xf32>
    %cst_113 = arith.constant 1.000000e+00 : f32
    %300 = vector.broadcast %cst_113 : f32 to vector<8x32xf32>
    %301 = arith.subf %299, %300 : vector<8x32xf32>
    %302 = arith.select %296, %294, %301 : vector<8x32xi1>, vector<8x32xf32>
    %cst_114 = arith.constant dense<0.000000e+00> : vector<8x32xf32>
    %303 = tpu.matmul %302, %38, %cst_114 {dimension_numbers = #tpu.dot_dimension_numbers<[1], [0], [0], [1], [0, 0, 1, 1], [], []>} : vector<8x32xf32>, vector<32x32xf32>, vector<8x32xf32> -> vector<8x32xf32>
    %cst_115 = arith.constant dense<0.000000e+00> : vector<8x4xf32>
    %304 = tpu.matmul %303, %39, %cst_115 {dimension_numbers = #tpu.dot_dimension_numbers<[1], [1], [0], [0], [0, 0, 1, 0], [], []>} : vector<8x32xf32>, vector<4x32xf32>, vector<8x4xf32> -> vector<8x4xf32>
    %cst_116 = arith.constant dense<0.000000e+00> : vector<4x8xf32>
    %305 = tpu.matmul %40, %303, %cst_116 {dimension_numbers = #tpu.dot_dimension_numbers<[1], [1], [0], [0], [0, 0, 1, 0], [], []>} : vector<4x32xf32>, vector<8x32xf32>, vector<4x8xf32> -> vector<4x8xf32>
    %cst_117 = arith.constant 0.000000e+00 : f32
    %306 = vector.broadcast %cst_117 : f32 to vector<8x32xf32>
    %307 = vector.extract_strided_slice %304 {offsets = [0, 0], sizes = [8, 1], strides = [1, 1]} : vector<8x4xf32> to vector<8x1xf32>
    %308 = vector.extract_strided_slice %305 {offsets = [0, 0], sizes = [1, 8], strides = [1, 1]} : vector<4x8xf32> to vector<1x8xf32>
    %309 = vector.broadcast %307 : vector<8x1xf32> to vector<8x8xf32>
    %310 = vector.broadcast %308 : vector<1x8xf32> to vector<8x8xf32>
    %311 = arith.addf %309, %310 : vector<8x8xf32>
    %cst_118 = arith.constant 0.000000e+00 : f32
    %312 = vector.broadcast %cst_118 : f32 to vector<8x8xf32>
    %313 = arith.cmpf ogt, %311, %312 : vector<8x8xf32>
    %cst_119 = arith.constant 2.000000e-01 : f32
    %314 = vector.broadcast %cst_119 : f32 to vector<8x8xf32>
    %315 = arith.mulf %314, %311 : vector<8x8xf32>
    %316 = arith.select %313, %311, %315 : vector<8x8xi1>, vector<8x8xf32>
    %cst_120 = arith.constant 0.000000e+00 : f32
    %317 = vector.broadcast %cst_120 : f32 to vector<8x8xf32>
    %318 = arith.cmpf ogt, %50, %317 : vector<8x8xf32>
    %cst_121 = arith.constant -9.000000e+15 : f32
    %319 = vector.broadcast %cst_121 : f32 to vector<8x8xf32>
    %320 = arith.select %318, %316, %319 : vector<8x8xi1>, vector<8x8xf32>
    %cst_122 = arith.constant dense<0xFF800000> : vector<8xf32>
    %321 = vector.multi_reduction <maximumf>, %320, %cst_122 [1] : vector<8x8xf32> to vector<8xf32>
    %322 = vector.shape_cast %321 : vector<8xf32> to vector<8x1xf32>
    %323 = vector.broadcast %322 : vector<8x1xf32> to vector<8x8xf32>
    %324 = arith.subf %320, %323 : vector<8x8xf32>
    %325 = math.exp %324 : vector<8x8xf32>
    %cst_123 = arith.constant dense<0.000000e+00> : vector<8xf32>
    %326 = vector.multi_reduction <add>, %325, %cst_123 [1] : vector<8x8xf32> to vector<8xf32>
    %327 = vector.shape_cast %326 : vector<8xf32> to vector<8x1xf32>
    %328 = tpu.reciprocal %327 {approx = true} : vector<8x1xf32> -> vector<8x1xf32>
    %329 = vector.broadcast %328 : vector<8x1xf32> to vector<8x8xf32>
    %330 = arith.mulf %325, %329 : vector<8x8xf32>
    %331 = vector.broadcast %7 : vector<1x32xf32> to vector<8x32xf32>
    %332 = arith.mulf %303, %331 : vector<8x32xf32>
    %cst_124 = arith.constant dense<0.000000e+00> : vector<8x32xf32>
    %333 = tpu.matmul %330, %332, %cst_124 {dimension_numbers = #tpu.dot_dimension_numbers<[1], [0], [0], [1], [0, 0, 1, 1], [], []>} : vector<8x8xf32>, vector<8x32xf32>, vector<8x32xf32> -> vector<8x32xf32>
    %334 = arith.addf %306, %333 : vector<8x32xf32>
    %335 = vector.extract_strided_slice %304 {offsets = [0, 1], sizes = [8, 1], strides = [1, 1]} : vector<8x4xf32> to vector<8x1xf32>
    %336 = vector.extract_strided_slice %305 {offsets = [1, 0], sizes = [1, 8], strides = [1, 1]} : vector<4x8xf32> to vector<1x8xf32>
    %337 = vector.broadcast %335 : vector<8x1xf32> to vector<8x8xf32>
    %338 = vector.broadcast %336 : vector<1x8xf32> to vector<8x8xf32>
    %339 = arith.addf %337, %338 : vector<8x8xf32>
    %cst_125 = arith.constant 0.000000e+00 : f32
    %340 = vector.broadcast %cst_125 : f32 to vector<8x8xf32>
    %341 = arith.cmpf ogt, %339, %340 : vector<8x8xf32>
    %cst_126 = arith.constant 2.000000e-01 : f32
    %342 = vector.broadcast %cst_126 : f32 to vector<8x8xf32>
    %343 = arith.mulf %342, %339 : vector<8x8xf32>
    %344 = arith.select %341, %339, %343 : vector<8x8xi1>, vector<8x8xf32>
    %cst_127 = arith.constant 0.000000e+00 : f32
    %345 = vector.broadcast %cst_127 : f32 to vector<8x8xf32>
    %346 = arith.cmpf ogt, %50, %345 : vector<8x8xf32>
    %cst_128 = arith.constant -9.000000e+15 : f32
    %347 = vector.broadcast %cst_128 : f32 to vector<8x8xf32>
    %348 = arith.select %346, %344, %347 : vector<8x8xi1>, vector<8x8xf32>
    %cst_129 = arith.constant dense<0xFF800000> : vector<8xf32>
    %349 = vector.multi_reduction <maximumf>, %348, %cst_129 [1] : vector<8x8xf32> to vector<8xf32>
    %350 = vector.shape_cast %349 : vector<8xf32> to vector<8x1xf32>
    %351 = vector.broadcast %350 : vector<8x1xf32> to vector<8x8xf32>
    %352 = arith.subf %348, %351 : vector<8x8xf32>
    %353 = math.exp %352 : vector<8x8xf32>
    %cst_130 = arith.constant dense<0.000000e+00> : vector<8xf32>
    %354 = vector.multi_reduction <add>, %353, %cst_130 [1] : vector<8x8xf32> to vector<8xf32>
    %355 = vector.shape_cast %354 : vector<8xf32> to vector<8x1xf32>
    %356 = tpu.reciprocal %355 {approx = true} : vector<8x1xf32> -> vector<8x1xf32>
    %357 = vector.broadcast %356 : vector<8x1xf32> to vector<8x8xf32>
    %358 = arith.mulf %353, %357 : vector<8x8xf32>
    %359 = vector.broadcast %14 : vector<1x32xf32> to vector<8x32xf32>
    %360 = arith.mulf %303, %359 : vector<8x32xf32>
    %cst_131 = arith.constant dense<0.000000e+00> : vector<8x32xf32>
    %361 = tpu.matmul %358, %360, %cst_131 {dimension_numbers = #tpu.dot_dimension_numbers<[1], [0], [0], [1], [0, 0, 1, 1], [], []>} : vector<8x8xf32>, vector<8x32xf32>, vector<8x32xf32> -> vector<8x32xf32>
    %362 = arith.addf %334, %361 : vector<8x32xf32>
    %363 = vector.extract_strided_slice %304 {offsets = [0, 2], sizes = [8, 1], strides = [1, 1]} : vector<8x4xf32> to vector<8x1xf32>
    %364 = vector.extract_strided_slice %305 {offsets = [2, 0], sizes = [1, 8], strides = [1, 1]} : vector<4x8xf32> to vector<1x8xf32>
    %365 = vector.broadcast %363 : vector<8x1xf32> to vector<8x8xf32>
    %366 = vector.broadcast %364 : vector<1x8xf32> to vector<8x8xf32>
    %367 = arith.addf %365, %366 : vector<8x8xf32>
    %cst_132 = arith.constant 0.000000e+00 : f32
    %368 = vector.broadcast %cst_132 : f32 to vector<8x8xf32>
    %369 = arith.cmpf ogt, %367, %368 : vector<8x8xf32>
    %cst_133 = arith.constant 2.000000e-01 : f32
    %370 = vector.broadcast %cst_133 : f32 to vector<8x8xf32>
    %371 = arith.mulf %370, %367 : vector<8x8xf32>
    %372 = arith.select %369, %367, %371 : vector<8x8xi1>, vector<8x8xf32>
    %cst_134 = arith.constant 0.000000e+00 : f32
    %373 = vector.broadcast %cst_134 : f32 to vector<8x8xf32>
    %374 = arith.cmpf ogt, %50, %373 : vector<8x8xf32>
    %cst_135 = arith.constant -9.000000e+15 : f32
    %375 = vector.broadcast %cst_135 : f32 to vector<8x8xf32>
    %376 = arith.select %374, %372, %375 : vector<8x8xi1>, vector<8x8xf32>
    %cst_136 = arith.constant dense<0xFF800000> : vector<8xf32>
    %377 = vector.multi_reduction <maximumf>, %376, %cst_136 [1] : vector<8x8xf32> to vector<8xf32>
    %378 = vector.shape_cast %377 : vector<8xf32> to vector<8x1xf32>
    %379 = vector.broadcast %378 : vector<8x1xf32> to vector<8x8xf32>
    %380 = arith.subf %376, %379 : vector<8x8xf32>
    %381 = math.exp %380 : vector<8x8xf32>
    %cst_137 = arith.constant dense<0.000000e+00> : vector<8xf32>
    %382 = vector.multi_reduction <add>, %381, %cst_137 [1] : vector<8x8xf32> to vector<8xf32>
    %383 = vector.shape_cast %382 : vector<8xf32> to vector<8x1xf32>
    %384 = tpu.reciprocal %383 {approx = true} : vector<8x1xf32> -> vector<8x1xf32>
    %385 = vector.broadcast %384 : vector<8x1xf32> to vector<8x8xf32>
    %386 = arith.mulf %381, %385 : vector<8x8xf32>
    %387 = vector.broadcast %21 : vector<1x32xf32> to vector<8x32xf32>
    %388 = arith.mulf %303, %387 : vector<8x32xf32>
    %cst_138 = arith.constant dense<0.000000e+00> : vector<8x32xf32>
    %389 = tpu.matmul %386, %388, %cst_138 {dimension_numbers = #tpu.dot_dimension_numbers<[1], [0], [0], [1], [0, 0, 1, 1], [], []>} : vector<8x8xf32>, vector<8x32xf32>, vector<8x32xf32> -> vector<8x32xf32>
    %390 = arith.addf %362, %389 : vector<8x32xf32>
    %391 = vector.extract_strided_slice %304 {offsets = [0, 3], sizes = [8, 1], strides = [1, 1]} : vector<8x4xf32> to vector<8x1xf32>
    %392 = vector.extract_strided_slice %305 {offsets = [3, 0], sizes = [1, 8], strides = [1, 1]} : vector<4x8xf32> to vector<1x8xf32>
    %393 = vector.broadcast %391 : vector<8x1xf32> to vector<8x8xf32>
    %394 = vector.broadcast %392 : vector<1x8xf32> to vector<8x8xf32>
    %395 = arith.addf %393, %394 : vector<8x8xf32>
    %cst_139 = arith.constant 0.000000e+00 : f32
    %396 = vector.broadcast %cst_139 : f32 to vector<8x8xf32>
    %397 = arith.cmpf ogt, %395, %396 : vector<8x8xf32>
    %cst_140 = arith.constant 2.000000e-01 : f32
    %398 = vector.broadcast %cst_140 : f32 to vector<8x8xf32>
    %399 = arith.mulf %398, %395 : vector<8x8xf32>
    %400 = arith.select %397, %395, %399 : vector<8x8xi1>, vector<8x8xf32>
    %cst_141 = arith.constant 0.000000e+00 : f32
    %401 = vector.broadcast %cst_141 : f32 to vector<8x8xf32>
    %402 = arith.cmpf ogt, %50, %401 : vector<8x8xf32>
    %cst_142 = arith.constant -9.000000e+15 : f32
    %403 = vector.broadcast %cst_142 : f32 to vector<8x8xf32>
    %404 = arith.select %402, %400, %403 : vector<8x8xi1>, vector<8x8xf32>
    %cst_143 = arith.constant dense<0xFF800000> : vector<8xf32>
    %405 = vector.multi_reduction <maximumf>, %404, %cst_143 [1] : vector<8x8xf32> to vector<8xf32>
    %406 = vector.shape_cast %405 : vector<8xf32> to vector<8x1xf32>
    %407 = vector.broadcast %406 : vector<8x1xf32> to vector<8x8xf32>
    %408 = arith.subf %404, %407 : vector<8x8xf32>
    %409 = math.exp %408 : vector<8x8xf32>
    %cst_144 = arith.constant dense<0.000000e+00> : vector<8xf32>
    %410 = vector.multi_reduction <add>, %409, %cst_144 [1] : vector<8x8xf32> to vector<8xf32>
    %411 = vector.shape_cast %410 : vector<8xf32> to vector<8x1xf32>
    %412 = tpu.reciprocal %411 {approx = true} : vector<8x1xf32> -> vector<8x1xf32>
    %413 = vector.broadcast %412 : vector<8x1xf32> to vector<8x8xf32>
    %414 = arith.mulf %409, %413 : vector<8x8xf32>
    %415 = vector.broadcast %28 : vector<1x32xf32> to vector<8x32xf32>
    %416 = arith.mulf %303, %415 : vector<8x32xf32>
    %cst_145 = arith.constant dense<0.000000e+00> : vector<8x32xf32>
    %417 = tpu.matmul %414, %416, %cst_145 {dimension_numbers = #tpu.dot_dimension_numbers<[1], [0], [0], [1], [0, 0, 1, 1], [], []>} : vector<8x8xf32>, vector<8x32xf32>, vector<8x32xf32> -> vector<8x32xf32>
    %418 = arith.addf %390, %417 : vector<8x32xf32>
    %cst_146 = arith.constant 0.000000e+00 : f32
    %419 = vector.broadcast %cst_146 : f32 to vector<8x32xf32>
    %420 = arith.cmpf ogt, %418, %419 : vector<8x32xf32>
    %cst_147 = arith.constant 0.000000e+00 : f32
    %421 = vector.broadcast %cst_147 : f32 to vector<8x32xf32>
    %422 = arith.minimumf %418, %421 : vector<8x32xf32>
    %423 = math.exp %422 : vector<8x32xf32>
    %cst_148 = arith.constant 1.000000e+00 : f32
    %424 = vector.broadcast %cst_148 : f32 to vector<8x32xf32>
    %425 = arith.subf %423, %424 : vector<8x32xf32>
    %426 = arith.select %420, %418, %425 : vector<8x32xi1>, vector<8x32xf32>
    %cst_149 = arith.constant dense<0.000000e+00> : vector<32xf32>
    %427 = vector.multi_reduction <add>, %426, %cst_149 [0] : vector<8x32xf32> to vector<32xf32>
    %428 = vector.shape_cast %427 : vector<32xf32> to vector<1x32xf32>
    %cst_150 = arith.constant 1.250000e-01 : f32
    %429 = vector.broadcast %cst_150 : f32 to vector<1x32xf32>
    %430 = arith.mulf %428, %429 : vector<1x32xf32>
    %cst_151 = arith.constant dense<0.000000e+00> : vector<1x32xf32>
    %431 = tpu.matmul %430, %41, %cst_151 {dimension_numbers = #tpu.dot_dimension_numbers<[1], [0], [0], [1], [0, 0, 1, 1], [], []>} : vector<1x32xf32>, vector<32x32xf32>, vector<1x32xf32> -> vector<1x32xf32>
    %cst_152 = arith.constant dense<0.000000e+00> : vector<8x32xf32>
    %432 = tpu.matmul %426, %42, %cst_152 {dimension_numbers = #tpu.dot_dimension_numbers<[1], [0], [0], [1], [0, 0, 1, 1], [], []>} : vector<8x32xf32>, vector<32x32xf32>, vector<8x32xf32> -> vector<8x32xf32>
    %cst_153 = arith.constant dense<0.000000e+00> : vector<8x32xf32>
    %433 = tpu.matmul %426, %43, %cst_153 {dimension_numbers = #tpu.dot_dimension_numbers<[1], [0], [0], [1], [0, 0, 1, 1], [], []>} : vector<8x32xf32>, vector<32x32xf32>, vector<8x32xf32> -> vector<8x32xf32>
    %cst_154 = arith.constant 0.000000e+00 : f32
    %434 = vector.broadcast %cst_154 : f32 to vector<1x32xf32>
    %435 = arith.mulf %431, %7 : vector<1x32xf32>
    %cst_155 = arith.constant dense<0.000000e+00> : vector<1x8xf32>
    %436 = tpu.matmul %435, %432, %cst_155 {dimension_numbers = #tpu.dot_dimension_numbers<[1], [1], [0], [0], [0, 0, 1, 0], [], []>} : vector<1x32xf32>, vector<8x32xf32>, vector<1x8xf32> -> vector<1x8xf32>
    %cst_156 = arith.constant 0.353553385 : f32
    %437 = vector.broadcast %cst_156 : f32 to vector<1x8xf32>
    %438 = arith.mulf %436, %437 : vector<1x8xf32>
    %cst_157 = arith.constant dense<0xFF800000> : vector<1xf32>
    %439 = vector.multi_reduction <maximumf>, %438, %cst_157 [1] : vector<1x8xf32> to vector<1xf32>
    %440 = vector.shape_cast %439 : vector<1xf32> to vector<1x1xf32>
    %441 = vector.broadcast %440 : vector<1x1xf32> to vector<1x8xf32>
    %442 = arith.subf %438, %441 : vector<1x8xf32>
    %443 = math.exp %442 : vector<1x8xf32>
    %cst_158 = arith.constant dense<0.000000e+00> : vector<1xf32>
    %444 = vector.multi_reduction <add>, %443, %cst_158 [1] : vector<1x8xf32> to vector<1xf32>
    %445 = vector.shape_cast %444 : vector<1xf32> to vector<1x1xf32>
    %446 = tpu.reciprocal %445 {approx = true} : vector<1x1xf32> -> vector<1x1xf32>
    %447 = vector.broadcast %446 : vector<1x1xf32> to vector<1x8xf32>
    %448 = arith.mulf %443, %447 : vector<1x8xf32>
    %449 = vector.broadcast %7 : vector<1x32xf32> to vector<8x32xf32>
    %450 = arith.mulf %433, %449 : vector<8x32xf32>
    %cst_159 = arith.constant dense<0.000000e+00> : vector<1x32xf32>
    %451 = tpu.matmul %448, %450, %cst_159 {dimension_numbers = #tpu.dot_dimension_numbers<[1], [0], [0], [1], [0, 0, 1, 1], [], []>} : vector<1x8xf32>, vector<8x32xf32>, vector<1x32xf32> -> vector<1x32xf32>
    %452 = arith.addf %434, %451 : vector<1x32xf32>
    %453 = arith.mulf %431, %14 : vector<1x32xf32>
    %cst_160 = arith.constant dense<0.000000e+00> : vector<1x8xf32>
    %454 = tpu.matmul %453, %432, %cst_160 {dimension_numbers = #tpu.dot_dimension_numbers<[1], [1], [0], [0], [0, 0, 1, 0], [], []>} : vector<1x32xf32>, vector<8x32xf32>, vector<1x8xf32> -> vector<1x8xf32>
    %cst_161 = arith.constant 0.353553385 : f32
    %455 = vector.broadcast %cst_161 : f32 to vector<1x8xf32>
    %456 = arith.mulf %454, %455 : vector<1x8xf32>
    %cst_162 = arith.constant dense<0xFF800000> : vector<1xf32>
    %457 = vector.multi_reduction <maximumf>, %456, %cst_162 [1] : vector<1x8xf32> to vector<1xf32>
    %458 = vector.shape_cast %457 : vector<1xf32> to vector<1x1xf32>
    %459 = vector.broadcast %458 : vector<1x1xf32> to vector<1x8xf32>
    %460 = arith.subf %456, %459 : vector<1x8xf32>
    %461 = math.exp %460 : vector<1x8xf32>
    %cst_163 = arith.constant dense<0.000000e+00> : vector<1xf32>
    %462 = vector.multi_reduction <add>, %461, %cst_163 [1] : vector<1x8xf32> to vector<1xf32>
    %463 = vector.shape_cast %462 : vector<1xf32> to vector<1x1xf32>
    %464 = tpu.reciprocal %463 {approx = true} : vector<1x1xf32> -> vector<1x1xf32>
    %465 = vector.broadcast %464 : vector<1x1xf32> to vector<1x8xf32>
    %466 = arith.mulf %461, %465 : vector<1x8xf32>
    %467 = vector.broadcast %14 : vector<1x32xf32> to vector<8x32xf32>
    %468 = arith.mulf %433, %467 : vector<8x32xf32>
    %cst_164 = arith.constant dense<0.000000e+00> : vector<1x32xf32>
    %469 = tpu.matmul %466, %468, %cst_164 {dimension_numbers = #tpu.dot_dimension_numbers<[1], [0], [0], [1], [0, 0, 1, 1], [], []>} : vector<1x8xf32>, vector<8x32xf32>, vector<1x32xf32> -> vector<1x32xf32>
    %470 = arith.addf %452, %469 : vector<1x32xf32>
    %471 = arith.mulf %431, %21 : vector<1x32xf32>
    %cst_165 = arith.constant dense<0.000000e+00> : vector<1x8xf32>
    %472 = tpu.matmul %471, %432, %cst_165 {dimension_numbers = #tpu.dot_dimension_numbers<[1], [1], [0], [0], [0, 0, 1, 0], [], []>} : vector<1x32xf32>, vector<8x32xf32>, vector<1x8xf32> -> vector<1x8xf32>
    %cst_166 = arith.constant 0.353553385 : f32
    %473 = vector.broadcast %cst_166 : f32 to vector<1x8xf32>
    %474 = arith.mulf %472, %473 : vector<1x8xf32>
    %cst_167 = arith.constant dense<0xFF800000> : vector<1xf32>
    %475 = vector.multi_reduction <maximumf>, %474, %cst_167 [1] : vector<1x8xf32> to vector<1xf32>
    %476 = vector.shape_cast %475 : vector<1xf32> to vector<1x1xf32>
    %477 = vector.broadcast %476 : vector<1x1xf32> to vector<1x8xf32>
    %478 = arith.subf %474, %477 : vector<1x8xf32>
    %479 = math.exp %478 : vector<1x8xf32>
    %cst_168 = arith.constant dense<0.000000e+00> : vector<1xf32>
    %480 = vector.multi_reduction <add>, %479, %cst_168 [1] : vector<1x8xf32> to vector<1xf32>
    %481 = vector.shape_cast %480 : vector<1xf32> to vector<1x1xf32>
    %482 = tpu.reciprocal %481 {approx = true} : vector<1x1xf32> -> vector<1x1xf32>
    %483 = vector.broadcast %482 : vector<1x1xf32> to vector<1x8xf32>
    %484 = arith.mulf %479, %483 : vector<1x8xf32>
    %485 = vector.broadcast %21 : vector<1x32xf32> to vector<8x32xf32>
    %486 = arith.mulf %433, %485 : vector<8x32xf32>
    %cst_169 = arith.constant dense<0.000000e+00> : vector<1x32xf32>
    %487 = tpu.matmul %484, %486, %cst_169 {dimension_numbers = #tpu.dot_dimension_numbers<[1], [0], [0], [1], [0, 0, 1, 1], [], []>} : vector<1x8xf32>, vector<8x32xf32>, vector<1x32xf32> -> vector<1x32xf32>
    %488 = arith.addf %470, %487 : vector<1x32xf32>
    %489 = arith.mulf %431, %28 : vector<1x32xf32>
    %cst_170 = arith.constant dense<0.000000e+00> : vector<1x8xf32>
    %490 = tpu.matmul %489, %432, %cst_170 {dimension_numbers = #tpu.dot_dimension_numbers<[1], [1], [0], [0], [0, 0, 1, 0], [], []>} : vector<1x32xf32>, vector<8x32xf32>, vector<1x8xf32> -> vector<1x8xf32>
    %cst_171 = arith.constant 0.353553385 : f32
    %491 = vector.broadcast %cst_171 : f32 to vector<1x8xf32>
    %492 = arith.mulf %490, %491 : vector<1x8xf32>
    %cst_172 = arith.constant dense<0xFF800000> : vector<1xf32>
    %493 = vector.multi_reduction <maximumf>, %492, %cst_172 [1] : vector<1x8xf32> to vector<1xf32>
    %494 = vector.shape_cast %493 : vector<1xf32> to vector<1x1xf32>
    %495 = vector.broadcast %494 : vector<1x1xf32> to vector<1x8xf32>
    %496 = arith.subf %492, %495 : vector<1x8xf32>
    %497 = math.exp %496 : vector<1x8xf32>
    %cst_173 = arith.constant dense<0.000000e+00> : vector<1xf32>
    %498 = vector.multi_reduction <add>, %497, %cst_173 [1] : vector<1x8xf32> to vector<1xf32>
    %499 = vector.shape_cast %498 : vector<1xf32> to vector<1x1xf32>
    %500 = tpu.reciprocal %499 {approx = true} : vector<1x1xf32> -> vector<1x1xf32>
    %501 = vector.broadcast %500 : vector<1x1xf32> to vector<1x8xf32>
    %502 = arith.mulf %497, %501 : vector<1x8xf32>
    %503 = vector.broadcast %28 : vector<1x32xf32> to vector<8x32xf32>
    %504 = arith.mulf %433, %503 : vector<8x32xf32>
    %cst_174 = arith.constant dense<0.000000e+00> : vector<1x32xf32>
    %505 = tpu.matmul %502, %504, %cst_174 {dimension_numbers = #tpu.dot_dimension_numbers<[1], [0], [0], [1], [0, 0, 1, 1], [], []>} : vector<1x8xf32>, vector<8x32xf32>, vector<1x32xf32> -> vector<1x32xf32>
    %506 = arith.addf %488, %505 : vector<1x32xf32>
    %cst_175 = arith.constant dense<0.000000e+00> : vector<1x32xf32>
    %507 = tpu.matmul %506, %44, %cst_175 {dimension_numbers = #tpu.dot_dimension_numbers<[1], [0], [0], [1], [0, 0, 1, 1], [], []>} : vector<1x32xf32>, vector<32x32xf32>, vector<1x32xf32> -> vector<1x32xf32>
    %cst_176 = arith.constant dense<0.000000e+00> : vector<1x8xf32>
    %508 = tpu.matmul %507, %426, %cst_176 {dimension_numbers = #tpu.dot_dimension_numbers<[1], [1], [0], [0], [0, 0, 1, 0], [], []>} : vector<1x32xf32>, vector<8x32xf32>, vector<1x8xf32> -> vector<1x8xf32>
    %cst_177 = arith.constant 0.353553385 : f32
    %509 = vector.broadcast %cst_177 : f32 to vector<1x8xf32>
    %510 = arith.mulf %508, %509 : vector<1x8xf32>
    %c0_178 = arith.constant 0 : index
    %c0_179 = arith.constant 0 : index
    %c0_180 = arith.constant 0 : index
    %511 = vector.load %arg20[%c0_178, %c0_179, %c0_180] : memref<2x8x32xf32, #tpu.memory_space<vmem>>, vector<1x8x32xf32>
    %512 = vector.shape_cast %511 : vector<1x8x32xf32> to vector<8x32xf32>
    %513 = vector.shape_cast %302 : vector<8x32xf32> to vector<1x8x32xf32>
    tpu.vector_store %arg20[%c0_178, %c0_179, %c0_180], %513 {strides = array<i32>} : memref<2x8x32xf32, #tpu.memory_space<vmem>>, vector<1x8x32xf32>,
    %c0_181 = arith.constant 0 : index
    %c0_182 = arith.constant 0 : index
    %c0_183 = arith.constant 0 : index
    %514 = vector.load %arg19[%c0_181, %c0_182, %c0_183] : memref<2x1x8xf32, #tpu.memory_space<vmem>>, vector<1x1x8xf32>
    %515 = vector.shape_cast %514 : vector<1x1x8xf32> to vector<1x8xf32>
    %516 = vector.shape_cast %510 : vector<1x8xf32> to vector<1x1x8xf32>
    tpu.vector_store %arg19[%c0_181, %c0_182, %c0_183], %516 {strides = array<i32>} : memref<2x1x8xf32, #tpu.memory_space<vmem>>, vector<1x1x8xf32>,
    %c1 = arith.constant 1 : index
    %c0_184 = arith.constant 0 : index
    %c0_185 = arith.constant 0 : index
    %517 = vector.load %arg0[%c1, %c0_184, %c0_185] : memref<2x16x8xf32, #tpu.memory_space<vmem>>, vector<1x16x8xf32>
    %518 = vector.shape_cast %517 : vector<1x16x8xf32> to vector<16x8xf32>
    %c1_186 = arith.constant 1 : index
    %c0_187 = arith.constant 0 : index
    %c0_188 = arith.constant 0 : index
    %519 = vector.load %arg1[%c1_186, %c0_187, %c0_188] : memref<2x16x16xf32, #tpu.memory_space<vmem>>, vector<1x16x16xf32>
    %520 = vector.shape_cast %519 : vector<1x16x16xf32> to vector<16x16xf32>
    %c1_189 = arith.constant 1 : index
    %c0_190 = arith.constant 0 : index
    %c0_191 = arith.constant 0 : index
    %521 = vector.load %arg2[%c1_189, %c0_190, %c0_191] : memref<2x8x8xf32, #tpu.memory_space<vmem>>, vector<1x8x8xf32>
    %522 = vector.shape_cast %521 : vector<1x8x8xf32> to vector<8x8xf32>
    %cst_192 = arith.constant dense<0.000000e+00> : vector<16x32xf32>
    %523 = tpu.matmul %518, %29, %cst_192 {dimension_numbers = #tpu.dot_dimension_numbers<[1], [0], [0], [1], [0, 0, 1, 1], [], []>} : vector<16x8xf32>, vector<8x32xf32>, vector<16x32xf32> -> vector<16x32xf32>
    %524 = vector.broadcast %30 : vector<1x32xf32> to vector<16x32xf32>
    %525 = arith.addf %523, %524 : vector<16x32xf32>
    %cst_193 = arith.constant dense<0.000000e+00> : vector<16x32xf32>
    %526 = tpu.matmul %525, %32, %cst_193 {dimension_numbers = #tpu.dot_dimension_numbers<[1], [0], [0], [1], [0, 0, 1, 1], [], []>} : vector<16x32xf32>, vector<32x32xf32>, vector<16x32xf32> -> vector<16x32xf32>
    %cst_194 = arith.constant dense<0.000000e+00> : vector<16x4xf32>
    %527 = tpu.matmul %526, %33, %cst_194 {dimension_numbers = #tpu.dot_dimension_numbers<[1], [1], [0], [0], [0, 0, 1, 0], [], []>} : vector<16x32xf32>, vector<4x32xf32>, vector<16x4xf32> -> vector<16x4xf32>
    %cst_195 = arith.constant dense<0.000000e+00> : vector<4x16xf32>
    %528 = tpu.matmul %34, %526, %cst_195 {dimension_numbers = #tpu.dot_dimension_numbers<[1], [1], [0], [0], [0, 0, 1, 0], [], []>} : vector<4x32xf32>, vector<16x32xf32>, vector<4x16xf32> -> vector<4x16xf32>
    %cst_196 = arith.constant 0.000000e+00 : f32
    %529 = vector.broadcast %cst_196 : f32 to vector<16x32xf32>
    %530 = vector.extract_strided_slice %527 {offsets = [0, 0], sizes = [16, 1], strides = [1, 1]} : vector<16x4xf32> to vector<16x1xf32>
    %531 = vector.extract_strided_slice %528 {offsets = [0, 0], sizes = [1, 16], strides = [1, 1]} : vector<4x16xf32> to vector<1x16xf32>
    %532 = vector.broadcast %530 : vector<16x1xf32> to vector<16x16xf32>
    %533 = vector.broadcast %531 : vector<1x16xf32> to vector<16x16xf32>
    %534 = arith.addf %532, %533 : vector<16x16xf32>
    %cst_197 = arith.constant 0.000000e+00 : f32
    %535 = vector.broadcast %cst_197 : f32 to vector<16x16xf32>
    %536 = arith.cmpf ogt, %534, %535 : vector<16x16xf32>
    %cst_198 = arith.constant 2.000000e-01 : f32
    %537 = vector.broadcast %cst_198 : f32 to vector<16x16xf32>
    %538 = arith.mulf %537, %534 : vector<16x16xf32>
    %539 = arith.select %536, %534, %538 : vector<16x16xi1>, vector<16x16xf32>
    %cst_199 = arith.constant 0.000000e+00 : f32
    %540 = vector.broadcast %cst_199 : f32 to vector<16x16xf32>
    %541 = arith.cmpf ogt, %520, %540 : vector<16x16xf32>
    %cst_200 = arith.constant -9.000000e+15 : f32
    %542 = vector.broadcast %cst_200 : f32 to vector<16x16xf32>
    %543 = arith.select %541, %539, %542 : vector<16x16xi1>, vector<16x16xf32>
    %cst_201 = arith.constant dense<0xFF800000> : vector<16xf32>
    %544 = vector.multi_reduction <maximumf>, %543, %cst_201 [1] : vector<16x16xf32> to vector<16xf32>
    %545 = vector.shape_cast %544 : vector<16xf32> to vector<16x1xf32>
    %546 = vector.broadcast %545 : vector<16x1xf32> to vector<16x16xf32>
    %547 = arith.subf %543, %546 : vector<16x16xf32>
    %548 = math.exp %547 : vector<16x16xf32>
    %cst_202 = arith.constant dense<0.000000e+00> : vector<16xf32>
    %549 = vector.multi_reduction <add>, %548, %cst_202 [1] : vector<16x16xf32> to vector<16xf32>
    %550 = vector.shape_cast %549 : vector<16xf32> to vector<16x1xf32>
    %551 = tpu.reciprocal %550 {approx = true} : vector<16x1xf32> -> vector<16x1xf32>
    %552 = vector.broadcast %551 : vector<16x1xf32> to vector<16x16xf32>
    %553 = arith.mulf %548, %552 : vector<16x16xf32>
    %554 = vector.broadcast %7 : vector<1x32xf32> to vector<16x32xf32>
    %555 = arith.mulf %526, %554 : vector<16x32xf32>
    %cst_203 = arith.constant dense<0.000000e+00> : vector<16x32xf32>
    %556 = tpu.matmul %553, %555, %cst_203 {dimension_numbers = #tpu.dot_dimension_numbers<[1], [0], [0], [1], [0, 0, 1, 1], [], []>} : vector<16x16xf32>, vector<16x32xf32>, vector<16x32xf32> -> vector<16x32xf32>
    %557 = arith.addf %529, %556 : vector<16x32xf32>
    %558 = vector.extract_strided_slice %527 {offsets = [0, 1], sizes = [16, 1], strides = [1, 1]} : vector<16x4xf32> to vector<16x1xf32>
    %559 = vector.extract_strided_slice %528 {offsets = [1, 0], sizes = [1, 16], strides = [1, 1]} : vector<4x16xf32> to vector<1x16xf32>
    %560 = vector.broadcast %558 : vector<16x1xf32> to vector<16x16xf32>
    %561 = vector.broadcast %559 : vector<1x16xf32> to vector<16x16xf32>
    %562 = arith.addf %560, %561 : vector<16x16xf32>
    %cst_204 = arith.constant 0.000000e+00 : f32
    %563 = vector.broadcast %cst_204 : f32 to vector<16x16xf32>
    %564 = arith.cmpf ogt, %562, %563 : vector<16x16xf32>
    %cst_205 = arith.constant 2.000000e-01 : f32
    %565 = vector.broadcast %cst_205 : f32 to vector<16x16xf32>
    %566 = arith.mulf %565, %562 : vector<16x16xf32>
    %567 = arith.select %564, %562, %566 : vector<16x16xi1>, vector<16x16xf32>
    %cst_206 = arith.constant 0.000000e+00 : f32
    %568 = vector.broadcast %cst_206 : f32 to vector<16x16xf32>
    %569 = arith.cmpf ogt, %520, %568 : vector<16x16xf32>
    %cst_207 = arith.constant -9.000000e+15 : f32
    %570 = vector.broadcast %cst_207 : f32 to vector<16x16xf32>
    %571 = arith.select %569, %567, %570 : vector<16x16xi1>, vector<16x16xf32>
    %cst_208 = arith.constant dense<0xFF800000> : vector<16xf32>
    %572 = vector.multi_reduction <maximumf>, %571, %cst_208 [1] : vector<16x16xf32> to vector<16xf32>
    %573 = vector.shape_cast %572 : vector<16xf32> to vector<16x1xf32>
    %574 = vector.broadcast %573 : vector<16x1xf32> to vector<16x16xf32>
    %575 = arith.subf %571, %574 : vector<16x16xf32>
    %576 = math.exp %575 : vector<16x16xf32>
    %cst_209 = arith.constant dense<0.000000e+00> : vector<16xf32>
    %577 = vector.multi_reduction <add>, %576, %cst_209 [1] : vector<16x16xf32> to vector<16xf32>
    %578 = vector.shape_cast %577 : vector<16xf32> to vector<16x1xf32>
    %579 = tpu.reciprocal %578 {approx = true} : vector<16x1xf32> -> vector<16x1xf32>
    %580 = vector.broadcast %579 : vector<16x1xf32> to vector<16x16xf32>
    %581 = arith.mulf %576, %580 : vector<16x16xf32>
    %582 = vector.broadcast %14 : vector<1x32xf32> to vector<16x32xf32>
    %583 = arith.mulf %526, %582 : vector<16x32xf32>
    %cst_210 = arith.constant dense<0.000000e+00> : vector<16x32xf32>
    %584 = tpu.matmul %581, %583, %cst_210 {dimension_numbers = #tpu.dot_dimension_numbers<[1], [0], [0], [1], [0, 0, 1, 1], [], []>} : vector<16x16xf32>, vector<16x32xf32>, vector<16x32xf32> -> vector<16x32xf32>
    %585 = arith.addf %557, %584 : vector<16x32xf32>
    %586 = vector.extract_strided_slice %527 {offsets = [0, 2], sizes = [16, 1], strides = [1, 1]} : vector<16x4xf32> to vector<16x1xf32>
    %587 = vector.extract_strided_slice %528 {offsets = [2, 0], sizes = [1, 16], strides = [1, 1]} : vector<4x16xf32> to vector<1x16xf32>
    %588 = vector.broadcast %586 : vector<16x1xf32> to vector<16x16xf32>
    %589 = vector.broadcast %587 : vector<1x16xf32> to vector<16x16xf32>
    %590 = arith.addf %588, %589 : vector<16x16xf32>
    %cst_211 = arith.constant 0.000000e+00 : f32
    %591 = vector.broadcast %cst_211 : f32 to vector<16x16xf32>
    %592 = arith.cmpf ogt, %590, %591 : vector<16x16xf32>
    %cst_212 = arith.constant 2.000000e-01 : f32
    %593 = vector.broadcast %cst_212 : f32 to vector<16x16xf32>
    %594 = arith.mulf %593, %590 : vector<16x16xf32>
    %595 = arith.select %592, %590, %594 : vector<16x16xi1>, vector<16x16xf32>
    %cst_213 = arith.constant 0.000000e+00 : f32
    %596 = vector.broadcast %cst_213 : f32 to vector<16x16xf32>
    %597 = arith.cmpf ogt, %520, %596 : vector<16x16xf32>
    %cst_214 = arith.constant -9.000000e+15 : f32
    %598 = vector.broadcast %cst_214 : f32 to vector<16x16xf32>
    %599 = arith.select %597, %595, %598 : vector<16x16xi1>, vector<16x16xf32>
    %cst_215 = arith.constant dense<0xFF800000> : vector<16xf32>
    %600 = vector.multi_reduction <maximumf>, %599, %cst_215 [1] : vector<16x16xf32> to vector<16xf32>
    %601 = vector.shape_cast %600 : vector<16xf32> to vector<16x1xf32>
    %602 = vector.broadcast %601 : vector<16x1xf32> to vector<16x16xf32>
    %603 = arith.subf %599, %602 : vector<16x16xf32>
    %604 = math.exp %603 : vector<16x16xf32>
    %cst_216 = arith.constant dense<0.000000e+00> : vector<16xf32>
    %605 = vector.multi_reduction <add>, %604, %cst_216 [1] : vector<16x16xf32> to vector<16xf32>
    %606 = vector.shape_cast %605 : vector<16xf32> to vector<16x1xf32>
    %607 = tpu.reciprocal %606 {approx = true} : vector<16x1xf32> -> vector<16x1xf32>
    %608 = vector.broadcast %607 : vector<16x1xf32> to vector<16x16xf32>
    %609 = arith.mulf %604, %608 : vector<16x16xf32>
    %610 = vector.broadcast %21 : vector<1x32xf32> to vector<16x32xf32>
    %611 = arith.mulf %526, %610 : vector<16x32xf32>
    %cst_217 = arith.constant dense<0.000000e+00> : vector<16x32xf32>
    %612 = tpu.matmul %609, %611, %cst_217 {dimension_numbers = #tpu.dot_dimension_numbers<[1], [0], [0], [1], [0, 0, 1, 1], [], []>} : vector<16x16xf32>, vector<16x32xf32>, vector<16x32xf32> -> vector<16x32xf32>
    %613 = arith.addf %585, %612 : vector<16x32xf32>
    %614 = vector.extract_strided_slice %527 {offsets = [0, 3], sizes = [16, 1], strides = [1, 1]} : vector<16x4xf32> to vector<16x1xf32>
    %615 = vector.extract_strided_slice %528 {offsets = [3, 0], sizes = [1, 16], strides = [1, 1]} : vector<4x16xf32> to vector<1x16xf32>
    %616 = vector.broadcast %614 : vector<16x1xf32> to vector<16x16xf32>
    %617 = vector.broadcast %615 : vector<1x16xf32> to vector<16x16xf32>
    %618 = arith.addf %616, %617 : vector<16x16xf32>
    %cst_218 = arith.constant 0.000000e+00 : f32
    %619 = vector.broadcast %cst_218 : f32 to vector<16x16xf32>
    %620 = arith.cmpf ogt, %618, %619 : vector<16x16xf32>
    %cst_219 = arith.constant 2.000000e-01 : f32
    %621 = vector.broadcast %cst_219 : f32 to vector<16x16xf32>
    %622 = arith.mulf %621, %618 : vector<16x16xf32>
    %623 = arith.select %620, %618, %622 : vector<16x16xi1>, vector<16x16xf32>
    %cst_220 = arith.constant 0.000000e+00 : f32
    %624 = vector.broadcast %cst_220 : f32 to vector<16x16xf32>
    %625 = arith.cmpf ogt, %520, %624 : vector<16x16xf32>
    %cst_221 = arith.constant -9.000000e+15 : f32
    %626 = vector.broadcast %cst_221 : f32 to vector<16x16xf32>
    %627 = arith.select %625, %623, %626 : vector<16x16xi1>, vector<16x16xf32>
    %cst_222 = arith.constant dense<0xFF800000> : vector<16xf32>
    %628 = vector.multi_reduction <maximumf>, %627, %cst_222 [1] : vector<16x16xf32> to vector<16xf32>
    %629 = vector.shape_cast %628 : vector<16xf32> to vector<16x1xf32>
    %630 = vector.broadcast %629 : vector<16x1xf32> to vector<16x16xf32>
    %631 = arith.subf %627, %630 : vector<16x16xf32>
    %632 = math.exp %631 : vector<16x16xf32>
    %cst_223 = arith.constant dense<0.000000e+00> : vector<16xf32>
    %633 = vector.multi_reduction <add>, %632, %cst_223 [1] : vector<16x16xf32> to vector<16xf32>
    %634 = vector.shape_cast %633 : vector<16xf32> to vector<16x1xf32>
    %635 = tpu.reciprocal %634 {approx = true} : vector<16x1xf32> -> vector<16x1xf32>
    %636 = vector.broadcast %635 : vector<16x1xf32> to vector<16x16xf32>
    %637 = arith.mulf %632, %636 : vector<16x16xf32>
    %638 = vector.broadcast %28 : vector<1x32xf32> to vector<16x32xf32>
    %639 = arith.mulf %526, %638 : vector<16x32xf32>
    %cst_224 = arith.constant dense<0.000000e+00> : vector<16x32xf32>
    %640 = tpu.matmul %637, %639, %cst_224 {dimension_numbers = #tpu.dot_dimension_numbers<[1], [0], [0], [1], [0, 0, 1, 1], [], []>} : vector<16x16xf32>, vector<16x32xf32>, vector<16x32xf32> -> vector<16x32xf32>
    %641 = arith.addf %613, %640 : vector<16x32xf32>
    %cst_225 = arith.constant 0.000000e+00 : f32
    %642 = vector.broadcast %cst_225 : f32 to vector<16x32xf32>
    %643 = arith.cmpf ogt, %641, %642 : vector<16x32xf32>
    %cst_226 = arith.constant 0.000000e+00 : f32
    %644 = vector.broadcast %cst_226 : f32 to vector<16x32xf32>
    %645 = arith.minimumf %641, %644 : vector<16x32xf32>
    %646 = math.exp %645 : vector<16x32xf32>
    %cst_227 = arith.constant 1.000000e+00 : f32
    %647 = vector.broadcast %cst_227 : f32 to vector<16x32xf32>
    %648 = arith.subf %646, %647 : vector<16x32xf32>
    %649 = arith.select %643, %641, %648 : vector<16x32xi1>, vector<16x32xf32>
    %cst_228 = arith.constant dense<0.000000e+00> : vector<8x32xf32>
    %650 = tpu.matmul %31, %649, %cst_228 {dimension_numbers = #tpu.dot_dimension_numbers<[1], [0], [0], [1], [0, 0, 1, 1], [], []>} : vector<8x16xf32>, vector<16x32xf32>, vector<8x32xf32> -> vector<8x32xf32>
    %cst_229 = arith.constant dense<0.000000e+00> : vector<8x32xf32>
    %651 = tpu.matmul %650, %35, %cst_229 {dimension_numbers = #tpu.dot_dimension_numbers<[1], [0], [0], [1], [0, 0, 1, 1], [], []>} : vector<8x32xf32>, vector<32x32xf32>, vector<8x32xf32> -> vector<8x32xf32>
    %cst_230 = arith.constant dense<0.000000e+00> : vector<8x4xf32>
    %652 = tpu.matmul %651, %36, %cst_230 {dimension_numbers = #tpu.dot_dimension_numbers<[1], [1], [0], [0], [0, 0, 1, 0], [], []>} : vector<8x32xf32>, vector<4x32xf32>, vector<8x4xf32> -> vector<8x4xf32>
    %cst_231 = arith.constant dense<0.000000e+00> : vector<4x8xf32>
    %653 = tpu.matmul %37, %651, %cst_231 {dimension_numbers = #tpu.dot_dimension_numbers<[1], [1], [0], [0], [0, 0, 1, 0], [], []>} : vector<4x32xf32>, vector<8x32xf32>, vector<4x8xf32> -> vector<4x8xf32>
    %cst_232 = arith.constant 0.000000e+00 : f32
    %654 = vector.broadcast %cst_232 : f32 to vector<8x32xf32>
    %655 = vector.extract_strided_slice %652 {offsets = [0, 0], sizes = [8, 1], strides = [1, 1]} : vector<8x4xf32> to vector<8x1xf32>
    %656 = vector.extract_strided_slice %653 {offsets = [0, 0], sizes = [1, 8], strides = [1, 1]} : vector<4x8xf32> to vector<1x8xf32>
    %657 = vector.broadcast %655 : vector<8x1xf32> to vector<8x8xf32>
    %658 = vector.broadcast %656 : vector<1x8xf32> to vector<8x8xf32>
    %659 = arith.addf %657, %658 : vector<8x8xf32>
    %cst_233 = arith.constant 0.000000e+00 : f32
    %660 = vector.broadcast %cst_233 : f32 to vector<8x8xf32>
    %661 = arith.cmpf ogt, %659, %660 : vector<8x8xf32>
    %cst_234 = arith.constant 2.000000e-01 : f32
    %662 = vector.broadcast %cst_234 : f32 to vector<8x8xf32>
    %663 = arith.mulf %662, %659 : vector<8x8xf32>
    %664 = arith.select %661, %659, %663 : vector<8x8xi1>, vector<8x8xf32>
    %cst_235 = arith.constant 0.000000e+00 : f32
    %665 = vector.broadcast %cst_235 : f32 to vector<8x8xf32>
    %666 = arith.cmpf ogt, %522, %665 : vector<8x8xf32>
    %cst_236 = arith.constant -9.000000e+15 : f32
    %667 = vector.broadcast %cst_236 : f32 to vector<8x8xf32>
    %668 = arith.select %666, %664, %667 : vector<8x8xi1>, vector<8x8xf32>
    %cst_237 = arith.constant dense<0xFF800000> : vector<8xf32>
    %669 = vector.multi_reduction <maximumf>, %668, %cst_237 [1] : vector<8x8xf32> to vector<8xf32>
    %670 = vector.shape_cast %669 : vector<8xf32> to vector<8x1xf32>
    %671 = vector.broadcast %670 : vector<8x1xf32> to vector<8x8xf32>
    %672 = arith.subf %668, %671 : vector<8x8xf32>
    %673 = math.exp %672 : vector<8x8xf32>
    %cst_238 = arith.constant dense<0.000000e+00> : vector<8xf32>
    %674 = vector.multi_reduction <add>, %673, %cst_238 [1] : vector<8x8xf32> to vector<8xf32>
    %675 = vector.shape_cast %674 : vector<8xf32> to vector<8x1xf32>
    %676 = tpu.reciprocal %675 {approx = true} : vector<8x1xf32> -> vector<8x1xf32>
    %677 = vector.broadcast %676 : vector<8x1xf32> to vector<8x8xf32>
    %678 = arith.mulf %673, %677 : vector<8x8xf32>
    %679 = vector.broadcast %7 : vector<1x32xf32> to vector<8x32xf32>
    %680 = arith.mulf %651, %679 : vector<8x32xf32>
    %cst_239 = arith.constant dense<0.000000e+00> : vector<8x32xf32>
    %681 = tpu.matmul %678, %680, %cst_239 {dimension_numbers = #tpu.dot_dimension_numbers<[1], [0], [0], [1], [0, 0, 1, 1], [], []>} : vector<8x8xf32>, vector<8x32xf32>, vector<8x32xf32> -> vector<8x32xf32>
    %682 = arith.addf %654, %681 : vector<8x32xf32>
    %683 = vector.extract_strided_slice %652 {offsets = [0, 1], sizes = [8, 1], strides = [1, 1]} : vector<8x4xf32> to vector<8x1xf32>
    %684 = vector.extract_strided_slice %653 {offsets = [1, 0], sizes = [1, 8], strides = [1, 1]} : vector<4x8xf32> to vector<1x8xf32>
    %685 = vector.broadcast %683 : vector<8x1xf32> to vector<8x8xf32>
    %686 = vector.broadcast %684 : vector<1x8xf32> to vector<8x8xf32>
    %687 = arith.addf %685, %686 : vector<8x8xf32>
    %cst_240 = arith.constant 0.000000e+00 : f32
    %688 = vector.broadcast %cst_240 : f32 to vector<8x8xf32>
    %689 = arith.cmpf ogt, %687, %688 : vector<8x8xf32>
    %cst_241 = arith.constant 2.000000e-01 : f32
    %690 = vector.broadcast %cst_241 : f32 to vector<8x8xf32>
    %691 = arith.mulf %690, %687 : vector<8x8xf32>
    %692 = arith.select %689, %687, %691 : vector<8x8xi1>, vector<8x8xf32>
    %cst_242 = arith.constant 0.000000e+00 : f32
    %693 = vector.broadcast %cst_242 : f32 to vector<8x8xf32>
    %694 = arith.cmpf ogt, %522, %693 : vector<8x8xf32>
    %cst_243 = arith.constant -9.000000e+15 : f32
    %695 = vector.broadcast %cst_243 : f32 to vector<8x8xf32>
    %696 = arith.select %694, %692, %695 : vector<8x8xi1>, vector<8x8xf32>
    %cst_244 = arith.constant dense<0xFF800000> : vector<8xf32>
    %697 = vector.multi_reduction <maximumf>, %696, %cst_244 [1] : vector<8x8xf32> to vector<8xf32>
    %698 = vector.shape_cast %697 : vector<8xf32> to vector<8x1xf32>
    %699 = vector.broadcast %698 : vector<8x1xf32> to vector<8x8xf32>
    %700 = arith.subf %696, %699 : vector<8x8xf32>
    %701 = math.exp %700 : vector<8x8xf32>
    %cst_245 = arith.constant dense<0.000000e+00> : vector<8xf32>
    %702 = vector.multi_reduction <add>, %701, %cst_245 [1] : vector<8x8xf32> to vector<8xf32>
    %703 = vector.shape_cast %702 : vector<8xf32> to vector<8x1xf32>
    %704 = tpu.reciprocal %703 {approx = true} : vector<8x1xf32> -> vector<8x1xf32>
    %705 = vector.broadcast %704 : vector<8x1xf32> to vector<8x8xf32>
    %706 = arith.mulf %701, %705 : vector<8x8xf32>
    %707 = vector.broadcast %14 : vector<1x32xf32> to vector<8x32xf32>
    %708 = arith.mulf %651, %707 : vector<8x32xf32>
    %cst_246 = arith.constant dense<0.000000e+00> : vector<8x32xf32>
    %709 = tpu.matmul %706, %708, %cst_246 {dimension_numbers = #tpu.dot_dimension_numbers<[1], [0], [0], [1], [0, 0, 1, 1], [], []>} : vector<8x8xf32>, vector<8x32xf32>, vector<8x32xf32> -> vector<8x32xf32>
    %710 = arith.addf %682, %709 : vector<8x32xf32>
    %711 = vector.extract_strided_slice %652 {offsets = [0, 2], sizes = [8, 1], strides = [1, 1]} : vector<8x4xf32> to vector<8x1xf32>
    %712 = vector.extract_strided_slice %653 {offsets = [2, 0], sizes = [1, 8], strides = [1, 1]} : vector<4x8xf32> to vector<1x8xf32>
    %713 = vector.broadcast %711 : vector<8x1xf32> to vector<8x8xf32>
    %714 = vector.broadcast %712 : vector<1x8xf32> to vector<8x8xf32>
    %715 = arith.addf %713, %714 : vector<8x8xf32>
    %cst_247 = arith.constant 0.000000e+00 : f32
    %716 = vector.broadcast %cst_247 : f32 to vector<8x8xf32>
    %717 = arith.cmpf ogt, %715, %716 : vector<8x8xf32>
    %cst_248 = arith.constant 2.000000e-01 : f32
    %718 = vector.broadcast %cst_248 : f32 to vector<8x8xf32>
    %719 = arith.mulf %718, %715 : vector<8x8xf32>
    %720 = arith.select %717, %715, %719 : vector<8x8xi1>, vector<8x8xf32>
    %cst_249 = arith.constant 0.000000e+00 : f32
    %721 = vector.broadcast %cst_249 : f32 to vector<8x8xf32>
    %722 = arith.cmpf ogt, %522, %721 : vector<8x8xf32>
    %cst_250 = arith.constant -9.000000e+15 : f32
    %723 = vector.broadcast %cst_250 : f32 to vector<8x8xf32>
    %724 = arith.select %722, %720, %723 : vector<8x8xi1>, vector<8x8xf32>
    %cst_251 = arith.constant dense<0xFF800000> : vector<8xf32>
    %725 = vector.multi_reduction <maximumf>, %724, %cst_251 [1] : vector<8x8xf32> to vector<8xf32>
    %726 = vector.shape_cast %725 : vector<8xf32> to vector<8x1xf32>
    %727 = vector.broadcast %726 : vector<8x1xf32> to vector<8x8xf32>
    %728 = arith.subf %724, %727 : vector<8x8xf32>
    %729 = math.exp %728 : vector<8x8xf32>
    %cst_252 = arith.constant dense<0.000000e+00> : vector<8xf32>
    %730 = vector.multi_reduction <add>, %729, %cst_252 [1] : vector<8x8xf32> to vector<8xf32>
    %731 = vector.shape_cast %730 : vector<8xf32> to vector<8x1xf32>
    %732 = tpu.reciprocal %731 {approx = true} : vector<8x1xf32> -> vector<8x1xf32>
    %733 = vector.broadcast %732 : vector<8x1xf32> to vector<8x8xf32>
    %734 = arith.mulf %729, %733 : vector<8x8xf32>
    %735 = vector.broadcast %21 : vector<1x32xf32> to vector<8x32xf32>
    %736 = arith.mulf %651, %735 : vector<8x32xf32>
    %cst_253 = arith.constant dense<0.000000e+00> : vector<8x32xf32>
    %737 = tpu.matmul %734, %736, %cst_253 {dimension_numbers = #tpu.dot_dimension_numbers<[1], [0], [0], [1], [0, 0, 1, 1], [], []>} : vector<8x8xf32>, vector<8x32xf32>, vector<8x32xf32> -> vector<8x32xf32>
    %738 = arith.addf %710, %737 : vector<8x32xf32>
    %739 = vector.extract_strided_slice %652 {offsets = [0, 3], sizes = [8, 1], strides = [1, 1]} : vector<8x4xf32> to vector<8x1xf32>
    %740 = vector.extract_strided_slice %653 {offsets = [3, 0], sizes = [1, 8], strides = [1, 1]} : vector<4x8xf32> to vector<1x8xf32>
    %741 = vector.broadcast %739 : vector<8x1xf32> to vector<8x8xf32>
    %742 = vector.broadcast %740 : vector<1x8xf32> to vector<8x8xf32>
    %743 = arith.addf %741, %742 : vector<8x8xf32>
    %cst_254 = arith.constant 0.000000e+00 : f32
    %744 = vector.broadcast %cst_254 : f32 to vector<8x8xf32>
    %745 = arith.cmpf ogt, %743, %744 : vector<8x8xf32>
    %cst_255 = arith.constant 2.000000e-01 : f32
    %746 = vector.broadcast %cst_255 : f32 to vector<8x8xf32>
    %747 = arith.mulf %746, %743 : vector<8x8xf32>
    %748 = arith.select %745, %743, %747 : vector<8x8xi1>, vector<8x8xf32>
    %cst_256 = arith.constant 0.000000e+00 : f32
    %749 = vector.broadcast %cst_256 : f32 to vector<8x8xf32>
    %750 = arith.cmpf ogt, %522, %749 : vector<8x8xf32>
    %cst_257 = arith.constant -9.000000e+15 : f32
    %751 = vector.broadcast %cst_257 : f32 to vector<8x8xf32>
    %752 = arith.select %750, %748, %751 : vector<8x8xi1>, vector<8x8xf32>
    %cst_258 = arith.constant dense<0xFF800000> : vector<8xf32>
    %753 = vector.multi_reduction <maximumf>, %752, %cst_258 [1] : vector<8x8xf32> to vector<8xf32>
    %754 = vector.shape_cast %753 : vector<8xf32> to vector<8x1xf32>
    %755 = vector.broadcast %754 : vector<8x1xf32> to vector<8x8xf32>
    %756 = arith.subf %752, %755 : vector<8x8xf32>
    %757 = math.exp %756 : vector<8x8xf32>
    %cst_259 = arith.constant dense<0.000000e+00> : vector<8xf32>
    %758 = vector.multi_reduction <add>, %757, %cst_259 [1] : vector<8x8xf32> to vector<8xf32>
    %759 = vector.shape_cast %758 : vector<8xf32> to vector<8x1xf32>
    %760 = tpu.reciprocal %759 {approx = true} : vector<8x1xf32> -> vector<8x1xf32>
    %761 = vector.broadcast %760 : vector<8x1xf32> to vector<8x8xf32>
    %762 = arith.mulf %757, %761 : vector<8x8xf32>
    %763 = vector.broadcast %28 : vector<1x32xf32> to vector<8x32xf32>
    %764 = arith.mulf %651, %763 : vector<8x32xf32>
    %cst_260 = arith.constant dense<0.000000e+00> : vector<8x32xf32>
    %765 = tpu.matmul %762, %764, %cst_260 {dimension_numbers = #tpu.dot_dimension_numbers<[1], [0], [0], [1], [0, 0, 1, 1], [], []>} : vector<8x8xf32>, vector<8x32xf32>, vector<8x32xf32> -> vector<8x32xf32>
    %766 = arith.addf %738, %765 : vector<8x32xf32>
    %cst_261 = arith.constant 0.000000e+00 : f32
    %767 = vector.broadcast %cst_261 : f32 to vector<8x32xf32>
    %768 = arith.cmpf ogt, %766, %767 : vector<8x32xf32>
    %cst_262 = arith.constant 0.000000e+00 : f32
    %769 = vector.broadcast %cst_262 : f32 to vector<8x32xf32>
    %770 = arith.minimumf %766, %769 : vector<8x32xf32>
    %771 = math.exp %770 : vector<8x32xf32>
    %cst_263 = arith.constant 1.000000e+00 : f32
    %772 = vector.broadcast %cst_263 : f32 to vector<8x32xf32>
    %773 = arith.subf %771, %772 : vector<8x32xf32>
    %774 = arith.select %768, %766, %773 : vector<8x32xi1>, vector<8x32xf32>
    %cst_264 = arith.constant dense<0.000000e+00> : vector<8x32xf32>
    %775 = tpu.matmul %774, %38, %cst_264 {dimension_numbers = #tpu.dot_dimension_numbers<[1], [0], [0], [1], [0, 0, 1, 1], [], []>} : vector<8x32xf32>, vector<32x32xf32>, vector<8x32xf32> -> vector<8x32xf32>
    %cst_265 = arith.constant dense<0.000000e+00> : vector<8x4xf32>
    %776 = tpu.matmul %775, %39, %cst_265 {dimension_numbers = #tpu.dot_dimension_numbers<[1], [1], [0], [0], [0, 0, 1, 0], [], []>} : vector<8x32xf32>, vector<4x32xf32>, vector<8x4xf32> -> vector<8x4xf32>
    %cst_266 = arith.constant dense<0.000000e+00> : vector<4x8xf32>
    %777 = tpu.matmul %40, %775, %cst_266 {dimension_numbers = #tpu.dot_dimension_numbers<[1], [1], [0], [0], [0, 0, 1, 0], [], []>} : vector<4x32xf32>, vector<8x32xf32>, vector<4x8xf32> -> vector<4x8xf32>
    %cst_267 = arith.constant 0.000000e+00 : f32
    %778 = vector.broadcast %cst_267 : f32 to vector<8x32xf32>
    %779 = vector.extract_strided_slice %776 {offsets = [0, 0], sizes = [8, 1], strides = [1, 1]} : vector<8x4xf32> to vector<8x1xf32>
    %780 = vector.extract_strided_slice %777 {offsets = [0, 0], sizes = [1, 8], strides = [1, 1]} : vector<4x8xf32> to vector<1x8xf32>
    %781 = vector.broadcast %779 : vector<8x1xf32> to vector<8x8xf32>
    %782 = vector.broadcast %780 : vector<1x8xf32> to vector<8x8xf32>
    %783 = arith.addf %781, %782 : vector<8x8xf32>
    %cst_268 = arith.constant 0.000000e+00 : f32
    %784 = vector.broadcast %cst_268 : f32 to vector<8x8xf32>
    %785 = arith.cmpf ogt, %783, %784 : vector<8x8xf32>
    %cst_269 = arith.constant 2.000000e-01 : f32
    %786 = vector.broadcast %cst_269 : f32 to vector<8x8xf32>
    %787 = arith.mulf %786, %783 : vector<8x8xf32>
    %788 = arith.select %785, %783, %787 : vector<8x8xi1>, vector<8x8xf32>
    %cst_270 = arith.constant 0.000000e+00 : f32
    %789 = vector.broadcast %cst_270 : f32 to vector<8x8xf32>
    %790 = arith.cmpf ogt, %522, %789 : vector<8x8xf32>
    %cst_271 = arith.constant -9.000000e+15 : f32
    %791 = vector.broadcast %cst_271 : f32 to vector<8x8xf32>
    %792 = arith.select %790, %788, %791 : vector<8x8xi1>, vector<8x8xf32>
    %cst_272 = arith.constant dense<0xFF800000> : vector<8xf32>
    %793 = vector.multi_reduction <maximumf>, %792, %cst_272 [1] : vector<8x8xf32> to vector<8xf32>
    %794 = vector.shape_cast %793 : vector<8xf32> to vector<8x1xf32>
    %795 = vector.broadcast %794 : vector<8x1xf32> to vector<8x8xf32>
    %796 = arith.subf %792, %795 : vector<8x8xf32>
    %797 = math.exp %796 : vector<8x8xf32>
    %cst_273 = arith.constant dense<0.000000e+00> : vector<8xf32>
    %798 = vector.multi_reduction <add>, %797, %cst_273 [1] : vector<8x8xf32> to vector<8xf32>
    %799 = vector.shape_cast %798 : vector<8xf32> to vector<8x1xf32>
    %800 = tpu.reciprocal %799 {approx = true} : vector<8x1xf32> -> vector<8x1xf32>
    %801 = vector.broadcast %800 : vector<8x1xf32> to vector<8x8xf32>
    %802 = arith.mulf %797, %801 : vector<8x8xf32>
    %803 = vector.broadcast %7 : vector<1x32xf32> to vector<8x32xf32>
    %804 = arith.mulf %775, %803 : vector<8x32xf32>
    %cst_274 = arith.constant dense<0.000000e+00> : vector<8x32xf32>
    %805 = tpu.matmul %802, %804, %cst_274 {dimension_numbers = #tpu.dot_dimension_numbers<[1], [0], [0], [1], [0, 0, 1, 1], [], []>} : vector<8x8xf32>, vector<8x32xf32>, vector<8x32xf32> -> vector<8x32xf32>
    %806 = arith.addf %778, %805 : vector<8x32xf32>
    %807 = vector.extract_strided_slice %776 {offsets = [0, 1], sizes = [8, 1], strides = [1, 1]} : vector<8x4xf32> to vector<8x1xf32>
    %808 = vector.extract_strided_slice %777 {offsets = [1, 0], sizes = [1, 8], strides = [1, 1]} : vector<4x8xf32> to vector<1x8xf32>
    %809 = vector.broadcast %807 : vector<8x1xf32> to vector<8x8xf32>
    %810 = vector.broadcast %808 : vector<1x8xf32> to vector<8x8xf32>
    %811 = arith.addf %809, %810 : vector<8x8xf32>
    %cst_275 = arith.constant 0.000000e+00 : f32
    %812 = vector.broadcast %cst_275 : f32 to vector<8x8xf32>
    %813 = arith.cmpf ogt, %811, %812 : vector<8x8xf32>
    %cst_276 = arith.constant 2.000000e-01 : f32
    %814 = vector.broadcast %cst_276 : f32 to vector<8x8xf32>
    %815 = arith.mulf %814, %811 : vector<8x8xf32>
    %816 = arith.select %813, %811, %815 : vector<8x8xi1>, vector<8x8xf32>
    %cst_277 = arith.constant 0.000000e+00 : f32
    %817 = vector.broadcast %cst_277 : f32 to vector<8x8xf32>
    %818 = arith.cmpf ogt, %522, %817 : vector<8x8xf32>
    %cst_278 = arith.constant -9.000000e+15 : f32
    %819 = vector.broadcast %cst_278 : f32 to vector<8x8xf32>
    %820 = arith.select %818, %816, %819 : vector<8x8xi1>, vector<8x8xf32>
    %cst_279 = arith.constant dense<0xFF800000> : vector<8xf32>
    %821 = vector.multi_reduction <maximumf>, %820, %cst_279 [1] : vector<8x8xf32> to vector<8xf32>
    %822 = vector.shape_cast %821 : vector<8xf32> to vector<8x1xf32>
    %823 = vector.broadcast %822 : vector<8x1xf32> to vector<8x8xf32>
    %824 = arith.subf %820, %823 : vector<8x8xf32>
    %825 = math.exp %824 : vector<8x8xf32>
    %cst_280 = arith.constant dense<0.000000e+00> : vector<8xf32>
    %826 = vector.multi_reduction <add>, %825, %cst_280 [1] : vector<8x8xf32> to vector<8xf32>
    %827 = vector.shape_cast %826 : vector<8xf32> to vector<8x1xf32>
    %828 = tpu.reciprocal %827 {approx = true} : vector<8x1xf32> -> vector<8x1xf32>
    %829 = vector.broadcast %828 : vector<8x1xf32> to vector<8x8xf32>
    %830 = arith.mulf %825, %829 : vector<8x8xf32>
    %831 = vector.broadcast %14 : vector<1x32xf32> to vector<8x32xf32>
    %832 = arith.mulf %775, %831 : vector<8x32xf32>
    %cst_281 = arith.constant dense<0.000000e+00> : vector<8x32xf32>
    %833 = tpu.matmul %830, %832, %cst_281 {dimension_numbers = #tpu.dot_dimension_numbers<[1], [0], [0], [1], [0, 0, 1, 1], [], []>} : vector<8x8xf32>, vector<8x32xf32>, vector<8x32xf32> -> vector<8x32xf32>
    %834 = arith.addf %806, %833 : vector<8x32xf32>
    %835 = vector.extract_strided_slice %776 {offsets = [0, 2], sizes = [8, 1], strides = [1, 1]} : vector<8x4xf32> to vector<8x1xf32>
    %836 = vector.extract_strided_slice %777 {offsets = [2, 0], sizes = [1, 8], strides = [1, 1]} : vector<4x8xf32> to vector<1x8xf32>
    %837 = vector.broadcast %835 : vector<8x1xf32> to vector<8x8xf32>
    %838 = vector.broadcast %836 : vector<1x8xf32> to vector<8x8xf32>
    %839 = arith.addf %837, %838 : vector<8x8xf32>
    %cst_282 = arith.constant 0.000000e+00 : f32
    %840 = vector.broadcast %cst_282 : f32 to vector<8x8xf32>
    %841 = arith.cmpf ogt, %839, %840 : vector<8x8xf32>
    %cst_283 = arith.constant 2.000000e-01 : f32
    %842 = vector.broadcast %cst_283 : f32 to vector<8x8xf32>
    %843 = arith.mulf %842, %839 : vector<8x8xf32>
    %844 = arith.select %841, %839, %843 : vector<8x8xi1>, vector<8x8xf32>
    %cst_284 = arith.constant 0.000000e+00 : f32
    %845 = vector.broadcast %cst_284 : f32 to vector<8x8xf32>
    %846 = arith.cmpf ogt, %522, %845 : vector<8x8xf32>
    %cst_285 = arith.constant -9.000000e+15 : f32
    %847 = vector.broadcast %cst_285 : f32 to vector<8x8xf32>
    %848 = arith.select %846, %844, %847 : vector<8x8xi1>, vector<8x8xf32>
    %cst_286 = arith.constant dense<0xFF800000> : vector<8xf32>
    %849 = vector.multi_reduction <maximumf>, %848, %cst_286 [1] : vector<8x8xf32> to vector<8xf32>
    %850 = vector.shape_cast %849 : vector<8xf32> to vector<8x1xf32>
    %851 = vector.broadcast %850 : vector<8x1xf32> to vector<8x8xf32>
    %852 = arith.subf %848, %851 : vector<8x8xf32>
    %853 = math.exp %852 : vector<8x8xf32>
    %cst_287 = arith.constant dense<0.000000e+00> : vector<8xf32>
    %854 = vector.multi_reduction <add>, %853, %cst_287 [1] : vector<8x8xf32> to vector<8xf32>
    %855 = vector.shape_cast %854 : vector<8xf32> to vector<8x1xf32>
    %856 = tpu.reciprocal %855 {approx = true} : vector<8x1xf32> -> vector<8x1xf32>
    %857 = vector.broadcast %856 : vector<8x1xf32> to vector<8x8xf32>
    %858 = arith.mulf %853, %857 : vector<8x8xf32>
    %859 = vector.broadcast %21 : vector<1x32xf32> to vector<8x32xf32>
    %860 = arith.mulf %775, %859 : vector<8x32xf32>
    %cst_288 = arith.constant dense<0.000000e+00> : vector<8x32xf32>
    %861 = tpu.matmul %858, %860, %cst_288 {dimension_numbers = #tpu.dot_dimension_numbers<[1], [0], [0], [1], [0, 0, 1, 1], [], []>} : vector<8x8xf32>, vector<8x32xf32>, vector<8x32xf32> -> vector<8x32xf32>
    %862 = arith.addf %834, %861 : vector<8x32xf32>
    %863 = vector.extract_strided_slice %776 {offsets = [0, 3], sizes = [8, 1], strides = [1, 1]} : vector<8x4xf32> to vector<8x1xf32>
    %864 = vector.extract_strided_slice %777 {offsets = [3, 0], sizes = [1, 8], strides = [1, 1]} : vector<4x8xf32> to vector<1x8xf32>
    %865 = vector.broadcast %863 : vector<8x1xf32> to vector<8x8xf32>
    %866 = vector.broadcast %864 : vector<1x8xf32> to vector<8x8xf32>
    %867 = arith.addf %865, %866 : vector<8x8xf32>
    %cst_289 = arith.constant 0.000000e+00 : f32
    %868 = vector.broadcast %cst_289 : f32 to vector<8x8xf32>
    %869 = arith.cmpf ogt, %867, %868 : vector<8x8xf32>
    %cst_290 = arith.constant 2.000000e-01 : f32
    %870 = vector.broadcast %cst_290 : f32 to vector<8x8xf32>
    %871 = arith.mulf %870, %867 : vector<8x8xf32>
    %872 = arith.select %869, %867, %871 : vector<8x8xi1>, vector<8x8xf32>
    %cst_291 = arith.constant 0.000000e+00 : f32
    %873 = vector.broadcast %cst_291 : f32 to vector<8x8xf32>
    %874 = arith.cmpf ogt, %522, %873 : vector<8x8xf32>
    %cst_292 = arith.constant -9.000000e+15 : f32
    %875 = vector.broadcast %cst_292 : f32 to vector<8x8xf32>
    %876 = arith.select %874, %872, %875 : vector<8x8xi1>, vector<8x8xf32>
    %cst_293 = arith.constant dense<0xFF800000> : vector<8xf32>
    %877 = vector.multi_reduction <maximumf>, %876, %cst_293 [1] : vector<8x8xf32> to vector<8xf32>
    %878 = vector.shape_cast %877 : vector<8xf32> to vector<8x1xf32>
    %879 = vector.broadcast %878 : vector<8x1xf32> to vector<8x8xf32>
    %880 = arith.subf %876, %879 : vector<8x8xf32>
    %881 = math.exp %880 : vector<8x8xf32>
    %cst_294 = arith.constant dense<0.000000e+00> : vector<8xf32>
    %882 = vector.multi_reduction <add>, %881, %cst_294 [1] : vector<8x8xf32> to vector<8xf32>
    %883 = vector.shape_cast %882 : vector<8xf32> to vector<8x1xf32>
    %884 = tpu.reciprocal %883 {approx = true} : vector<8x1xf32> -> vector<8x1xf32>
    %885 = vector.broadcast %884 : vector<8x1xf32> to vector<8x8xf32>
    %886 = arith.mulf %881, %885 : vector<8x8xf32>
    %887 = vector.broadcast %28 : vector<1x32xf32> to vector<8x32xf32>
    %888 = arith.mulf %775, %887 : vector<8x32xf32>
    %cst_295 = arith.constant dense<0.000000e+00> : vector<8x32xf32>
    %889 = tpu.matmul %886, %888, %cst_295 {dimension_numbers = #tpu.dot_dimension_numbers<[1], [0], [0], [1], [0, 0, 1, 1], [], []>} : vector<8x8xf32>, vector<8x32xf32>, vector<8x32xf32> -> vector<8x32xf32>
    %890 = arith.addf %862, %889 : vector<8x32xf32>
    %cst_296 = arith.constant 0.000000e+00 : f32
    %891 = vector.broadcast %cst_296 : f32 to vector<8x32xf32>
    %892 = arith.cmpf ogt, %890, %891 : vector<8x32xf32>
    %cst_297 = arith.constant 0.000000e+00 : f32
    %893 = vector.broadcast %cst_297 : f32 to vector<8x32xf32>
    %894 = arith.minimumf %890, %893 : vector<8x32xf32>
    %895 = math.exp %894 : vector<8x32xf32>
    %cst_298 = arith.constant 1.000000e+00 : f32
    %896 = vector.broadcast %cst_298 : f32 to vector<8x32xf32>
    %897 = arith.subf %895, %896 : vector<8x32xf32>
    %898 = arith.select %892, %890, %897 : vector<8x32xi1>, vector<8x32xf32>
    %cst_299 = arith.constant dense<0.000000e+00> : vector<32xf32>
    %899 = vector.multi_reduction <add>, %898, %cst_299 [0] : vector<8x32xf32> to vector<32xf32>
    %900 = vector.shape_cast %899 : vector<32xf32> to vector<1x32xf32>
    %cst_300 = arith.constant 1.250000e-01 : f32
    %901 = vector.broadcast %cst_300 : f32 to vector<1x32xf32>
    %902 = arith.mulf %900, %901 : vector<1x32xf32>
    %cst_301 = arith.constant dense<0.000000e+00> : vector<1x32xf32>
    %903 = tpu.matmul %902, %41, %cst_301 {dimension_numbers = #tpu.dot_dimension_numbers<[1], [0], [0], [1], [0, 0, 1, 1], [], []>} : vector<1x32xf32>, vector<32x32xf32>, vector<1x32xf32> -> vector<1x32xf32>
    %cst_302 = arith.constant dense<0.000000e+00> : vector<8x32xf32>
    %904 = tpu.matmul %898, %42, %cst_302 {dimension_numbers = #tpu.dot_dimension_numbers<[1], [0], [0], [1], [0, 0, 1, 1], [], []>} : vector<8x32xf32>, vector<32x32xf32>, vector<8x32xf32> -> vector<8x32xf32>
    %cst_303 = arith.constant dense<0.000000e+00> : vector<8x32xf32>
    %905 = tpu.matmul %898, %43, %cst_303 {dimension_numbers = #tpu.dot_dimension_numbers<[1], [0], [0], [1], [0, 0, 1, 1], [], []>} : vector<8x32xf32>, vector<32x32xf32>, vector<8x32xf32> -> vector<8x32xf32>
    %cst_304 = arith.constant 0.000000e+00 : f32
    %906 = vector.broadcast %cst_304 : f32 to vector<1x32xf32>
    %907 = arith.mulf %903, %7 : vector<1x32xf32>
    %cst_305 = arith.constant dense<0.000000e+00> : vector<1x8xf32>
    %908 = tpu.matmul %907, %904, %cst_305 {dimension_numbers = #tpu.dot_dimension_numbers<[1], [1], [0], [0], [0, 0, 1, 0], [], []>} : vector<1x32xf32>, vector<8x32xf32>, vector<1x8xf32> -> vector<1x8xf32>
    %cst_306 = arith.constant 0.353553385 : f32
    %909 = vector.broadcast %cst_306 : f32 to vector<1x8xf32>
    %910 = arith.mulf %908, %909 : vector<1x8xf32>
    %cst_307 = arith.constant dense<0xFF800000> : vector<1xf32>
    %911 = vector.multi_reduction <maximumf>, %910, %cst_307 [1] : vector<1x8xf32> to vector<1xf32>
    %912 = vector.shape_cast %911 : vector<1xf32> to vector<1x1xf32>
    %913 = vector.broadcast %912 : vector<1x1xf32> to vector<1x8xf32>
    %914 = arith.subf %910, %913 : vector<1x8xf32>
    %915 = math.exp %914 : vector<1x8xf32>
    %cst_308 = arith.constant dense<0.000000e+00> : vector<1xf32>
    %916 = vector.multi_reduction <add>, %915, %cst_308 [1] : vector<1x8xf32> to vector<1xf32>
    %917 = vector.shape_cast %916 : vector<1xf32> to vector<1x1xf32>
    %918 = tpu.reciprocal %917 {approx = true} : vector<1x1xf32> -> vector<1x1xf32>
    %919 = vector.broadcast %918 : vector<1x1xf32> to vector<1x8xf32>
    %920 = arith.mulf %915, %919 : vector<1x8xf32>
    %921 = vector.broadcast %7 : vector<1x32xf32> to vector<8x32xf32>
    %922 = arith.mulf %905, %921 : vector<8x32xf32>
    %cst_309 = arith.constant dense<0.000000e+00> : vector<1x32xf32>
    %923 = tpu.matmul %920, %922, %cst_309 {dimension_numbers = #tpu.dot_dimension_numbers<[1], [0], [0], [1], [0, 0, 1, 1], [], []>} : vector<1x8xf32>, vector<8x32xf32>, vector<1x32xf32> -> vector<1x32xf32>
    %924 = arith.addf %906, %923 : vector<1x32xf32>
    %925 = arith.mulf %903, %14 : vector<1x32xf32>
    %cst_310 = arith.constant dense<0.000000e+00> : vector<1x8xf32>
    %926 = tpu.matmul %925, %904, %cst_310 {dimension_numbers = #tpu.dot_dimension_numbers<[1], [1], [0], [0], [0, 0, 1, 0], [], []>} : vector<1x32xf32>, vector<8x32xf32>, vector<1x8xf32> -> vector<1x8xf32>
    %cst_311 = arith.constant 0.353553385 : f32
    %927 = vector.broadcast %cst_311 : f32 to vector<1x8xf32>
    %928 = arith.mulf %926, %927 : vector<1x8xf32>
    %cst_312 = arith.constant dense<0xFF800000> : vector<1xf32>
    %929 = vector.multi_reduction <maximumf>, %928, %cst_312 [1] : vector<1x8xf32> to vector<1xf32>
    %930 = vector.shape_cast %929 : vector<1xf32> to vector<1x1xf32>
    %931 = vector.broadcast %930 : vector<1x1xf32> to vector<1x8xf32>
    %932 = arith.subf %928, %931 : vector<1x8xf32>
    %933 = math.exp %932 : vector<1x8xf32>
    %cst_313 = arith.constant dense<0.000000e+00> : vector<1xf32>
    %934 = vector.multi_reduction <add>, %933, %cst_313 [1] : vector<1x8xf32> to vector<1xf32>
    %935 = vector.shape_cast %934 : vector<1xf32> to vector<1x1xf32>
    %936 = tpu.reciprocal %935 {approx = true} : vector<1x1xf32> -> vector<1x1xf32>
    %937 = vector.broadcast %936 : vector<1x1xf32> to vector<1x8xf32>
    %938 = arith.mulf %933, %937 : vector<1x8xf32>
    %939 = vector.broadcast %14 : vector<1x32xf32> to vector<8x32xf32>
    %940 = arith.mulf %905, %939 : vector<8x32xf32>
    %cst_314 = arith.constant dense<0.000000e+00> : vector<1x32xf32>
    %941 = tpu.matmul %938, %940, %cst_314 {dimension_numbers = #tpu.dot_dimension_numbers<[1], [0], [0], [1], [0, 0, 1, 1], [], []>} : vector<1x8xf32>, vector<8x32xf32>, vector<1x32xf32> -> vector<1x32xf32>
    %942 = arith.addf %924, %941 : vector<1x32xf32>
    %943 = arith.mulf %903, %21 : vector<1x32xf32>
    %cst_315 = arith.constant dense<0.000000e+00> : vector<1x8xf32>
    %944 = tpu.matmul %943, %904, %cst_315 {dimension_numbers = #tpu.dot_dimension_numbers<[1], [1], [0], [0], [0, 0, 1, 0], [], []>} : vector<1x32xf32>, vector<8x32xf32>, vector<1x8xf32> -> vector<1x8xf32>
    %cst_316 = arith.constant 0.353553385 : f32
    %945 = vector.broadcast %cst_316 : f32 to vector<1x8xf32>
    %946 = arith.mulf %944, %945 : vector<1x8xf32>
    %cst_317 = arith.constant dense<0xFF800000> : vector<1xf32>
    %947 = vector.multi_reduction <maximumf>, %946, %cst_317 [1] : vector<1x8xf32> to vector<1xf32>
    %948 = vector.shape_cast %947 : vector<1xf32> to vector<1x1xf32>
    %949 = vector.broadcast %948 : vector<1x1xf32> to vector<1x8xf32>
    %950 = arith.subf %946, %949 : vector<1x8xf32>
    %951 = math.exp %950 : vector<1x8xf32>
    %cst_318 = arith.constant dense<0.000000e+00> : vector<1xf32>
    %952 = vector.multi_reduction <add>, %951, %cst_318 [1] : vector<1x8xf32> to vector<1xf32>
    %953 = vector.shape_cast %952 : vector<1xf32> to vector<1x1xf32>
    %954 = tpu.reciprocal %953 {approx = true} : vector<1x1xf32> -> vector<1x1xf32>
    %955 = vector.broadcast %954 : vector<1x1xf32> to vector<1x8xf32>
    %956 = arith.mulf %951, %955 : vector<1x8xf32>
    %957 = vector.broadcast %21 : vector<1x32xf32> to vector<8x32xf32>
    %958 = arith.mulf %905, %957 : vector<8x32xf32>
    %cst_319 = arith.constant dense<0.000000e+00> : vector<1x32xf32>
    %959 = tpu.matmul %956, %958, %cst_319 {dimension_numbers = #tpu.dot_dimension_numbers<[1], [0], [0], [1], [0, 0, 1, 1], [], []>} : vector<1x8xf32>, vector<8x32xf32>, vector<1x32xf32> -> vector<1x32xf32>
    %960 = arith.addf %942, %959 : vector<1x32xf32>
    %961 = arith.mulf %903, %28 : vector<1x32xf32>
    %cst_320 = arith.constant dense<0.000000e+00> : vector<1x8xf32>
    %962 = tpu.matmul %961, %904, %cst_320 {dimension_numbers = #tpu.dot_dimension_numbers<[1], [1], [0], [0], [0, 0, 1, 0], [], []>} : vector<1x32xf32>, vector<8x32xf32>, vector<1x8xf32> -> vector<1x8xf32>
    %cst_321 = arith.constant 0.353553385 : f32
    %963 = vector.broadcast %cst_321 : f32 to vector<1x8xf32>
    %964 = arith.mulf %962, %963 : vector<1x8xf32>
    %cst_322 = arith.constant dense<0xFF800000> : vector<1xf32>
    %965 = vector.multi_reduction <maximumf>, %964, %cst_322 [1] : vector<1x8xf32> to vector<1xf32>
    %966 = vector.shape_cast %965 : vector<1xf32> to vector<1x1xf32>
    %967 = vector.broadcast %966 : vector<1x1xf32> to vector<1x8xf32>
    %968 = arith.subf %964, %967 : vector<1x8xf32>
    %969 = math.exp %968 : vector<1x8xf32>
    %cst_323 = arith.constant dense<0.000000e+00> : vector<1xf32>
    %970 = vector.multi_reduction <add>, %969, %cst_323 [1] : vector<1x8xf32> to vector<1xf32>
    %971 = vector.shape_cast %970 : vector<1xf32> to vector<1x1xf32>
    %972 = tpu.reciprocal %971 {approx = true} : vector<1x1xf32> -> vector<1x1xf32>
    %973 = vector.broadcast %972 : vector<1x1xf32> to vector<1x8xf32>
    %974 = arith.mulf %969, %973 : vector<1x8xf32>
    %975 = vector.broadcast %28 : vector<1x32xf32> to vector<8x32xf32>
    %976 = arith.mulf %905, %975 : vector<8x32xf32>
    %cst_324 = arith.constant dense<0.000000e+00> : vector<1x32xf32>
    %977 = tpu.matmul %974, %976, %cst_324 {dimension_numbers = #tpu.dot_dimension_numbers<[1], [0], [0], [1], [0, 0, 1, 1], [], []>} : vector<1x8xf32>, vector<8x32xf32>, vector<1x32xf32> -> vector<1x32xf32>
    %978 = arith.addf %960, %977 : vector<1x32xf32>
    %cst_325 = arith.constant dense<0.000000e+00> : vector<1x32xf32>
    %979 = tpu.matmul %978, %44, %cst_325 {dimension_numbers = #tpu.dot_dimension_numbers<[1], [0], [0], [1], [0, 0, 1, 1], [], []>} : vector<1x32xf32>, vector<32x32xf32>, vector<1x32xf32> -> vector<1x32xf32>
    %cst_326 = arith.constant dense<0.000000e+00> : vector<1x8xf32>
    %980 = tpu.matmul %979, %898, %cst_326 {dimension_numbers = #tpu.dot_dimension_numbers<[1], [1], [0], [0], [0, 0, 1, 0], [], []>} : vector<1x32xf32>, vector<8x32xf32>, vector<1x8xf32> -> vector<1x8xf32>
    %cst_327 = arith.constant 0.353553385 : f32
    %981 = vector.broadcast %cst_327 : f32 to vector<1x8xf32>
    %982 = arith.mulf %980, %981 : vector<1x8xf32>
    %c1_328 = arith.constant 1 : index
    %c0_329 = arith.constant 0 : index
    %c0_330 = arith.constant 0 : index
    %983 = vector.load %arg20[%c1_328, %c0_329, %c0_330] : memref<2x8x32xf32, #tpu.memory_space<vmem>>, vector<1x8x32xf32>
    %984 = vector.shape_cast %983 : vector<1x8x32xf32> to vector<8x32xf32>
    %985 = vector.shape_cast %774 : vector<8x32xf32> to vector<1x8x32xf32>
    tpu.vector_store %arg20[%c1_328, %c0_329, %c0_330], %985 {strides = array<i32>} : memref<2x8x32xf32, #tpu.memory_space<vmem>>, vector<1x8x32xf32>,
    %c1_331 = arith.constant 1 : index
    %c0_332 = arith.constant 0 : index
    %c0_333 = arith.constant 0 : index
    %986 = vector.load %arg19[%c1_331, %c0_332, %c0_333] : memref<2x1x8xf32, #tpu.memory_space<vmem>>, vector<1x1x8xf32>
    %987 = vector.shape_cast %986 : vector<1x1x8xf32> to vector<1x8xf32>
    %988 = vector.shape_cast %982 : vector<1x8xf32> to vector<1x1x8xf32>
    tpu.vector_store %arg19[%c1_331, %c0_332, %c0_333], %988 {strides = array<i32>} : memref<2x1x8xf32, #tpu.memory_space<vmem>>, vector<1x1x8xf32>,
    return
  }
}

</mosaic_0001>

<llo_original>
// kernel: rllib_substation_forward.1
$region0: #{rllib_substation_forward.1}
  #allocation0 [shape = 'u32[]', space=smem, size = 0x4, offset = 0x4, fixed_abs, tag = 'smem constant byte address 0x4 - core index']
  #allocation1 [shape = 'u32[144,128]{1,0:T(1,128)}', space=vmem, size = 0x12000, scoped, tag = 'internal scratch']
  %s0 = inlined_call_operand.vmem [shape: f32[2,16,8], index: 0, kind: input, shape index: {}]
  %s1 = inlined_call_operand.vmem [shape: f32[2,16,16], index: 1, kind: input, shape index: {}]
  %s2 = inlined_call_operand.vmem [shape: f32[2,8,8], index: 2, kind: input, shape index: {}]
  %s3 = inlined_call_operand.vmem [shape: f32[8,32], index: 3, kind: input, shape index: {}]
  %s4 = inlined_call_operand.vmem [shape: f32[1,32], index: 4, kind: input, shape index: {}]
  %s5 = inlined_call_operand.vmem [shape: f32[8,16], index: 5, kind: input, shape index: {}]
  %s6 = inlined_call_operand.vmem [shape: f32[32,32], index: 6, kind: input, shape index: {}]
  %s7 = inlined_call_operand.vmem [shape: f32[4,32], index: 7, kind: input, shape index: {}]
  %s8 = inlined_call_operand.hbm [shape: f32[4,32], index: 8, kind: input, shape index: {}]
  %s9 = inlined_call_operand.vmem [shape: f32[32,32], index: 9, kind: input, shape index: {}]
  %s10 = inlined_call_operand.hbm [shape: f32[4,32], index: 10, kind: input, shape index: {}]
  %s11 = inlined_call_operand.hbm [shape: f32[4,32], index: 11, kind: input, shape index: {}]
  %s12 = inlined_call_operand.vmem [shape: f32[32,32], index: 12, kind: input, shape index: {}]
  %s13 = inlined_call_operand.hbm [shape: f32[4,32], index: 13, kind: input, shape index: {}]
  %s14 = inlined_call_operand.hbm [shape: f32[4,32], index: 14, kind: input, shape index: {}]
  %s15 = inlined_call_operand.vmem [shape: f32[32,32], index: 15, kind: input, shape index: {}]
  %s16 = inlined_call_operand.vmem [shape: f32[32,32], index: 16, kind: input, shape index: {}]
  %s17 = inlined_call_operand.vmem [shape: f32[32,32], index: 17, kind: input, shape index: {}]
  %s18 = inlined_call_operand.vmem [shape: f32[32,32], index: 18, kind: input, shape index: {}]
  %s19 = inlined_call_operand.vmem [shape: f32[2,1,8], index: 19, kind: output, shape index: {0}]
  %s20 = inlined_call_operand.hbm [shape: f32[2,8,32], index: 20, kind: output, shape index: {1}]
  %21 = xla_tuple %s19, %s20
  %s22 = sld [smem:[#allocation0]]
  $region114: #{rllib_substation_forward.1} parent=0
    _
  %s24 = ssub.s32 1, %s22
  %s25 = scalar_select 0, %s24, %s22
  $region1: #{rllib_substation_forward.1} parent=0
    #allocation2 [shape = 'u8[2048]{0}', space=vmem, size = 0x800, scoped, tag = 'input window, operand 8, single buffered']
    #allocation3 [shape = 's32[1]{0}', space=sflag, size = 0x4, scoped, tag = 'scoped memory for rllib_substation_forward.1']
    #allocation4 [shape = 's32[1]{0}', space=sflag, size = 0x4, scoped, tag = 'scoped memory for rllib_substation_forward.1']
    #allocation5 [shape = 'u8[2048]{0}', space=vmem, size = 0x800, scoped, tag = 'input window, operand 10, single buffered']
    #allocation6 [shape = 's32[1]{0}', space=sflag, size = 0x4, scoped, tag = 'scoped memory for rllib_substation_forward.1']
    #allocation7 [shape = 'u8[2048]{0}', space=vmem, size = 0x800, scoped, tag = 'input window, operand 11, single buffered']
    #allocation8 [shape = 'u8[2048]{0}', space=vmem, size = 0x800, scoped, tag = 'input window, operand 13, single buffered']
    #allocation9 [shape = 's32[1]{0}', space=sflag, size = 0x4, scoped, tag = 'scoped memory for rllib_substation_forward.1']
    #allocation10 [shape = 'u8[2048]{0}', space=vmem, size = 0x800, scoped, tag = 'input window, operand 14, single buffered']
    #allocation11 [shape = 'u8[8192]{0}', space=vmem, size = 0x2000, scoped, tag = 'output window, operand 1, single buffered']
    %26 = vsyncpa [#allocation3], 0
    %27 = vsyncpa [#allocation6], 0
    %28 = vsyncpa [#allocation9], 0
    %29 = vsyncpa [#allocation4], 0
    // Predicated region
    $region2: #{rllib_substation_forward.1} parent=1 // pred_check
      _
    $region3: #{rllib_substation_forward.1} parent=1 // pred_check_branch
      %31 = sbr.rel (0) target = $region5
    $region4: #{rllib_substation_forward.1} parent=1 // pred_region
      _
    $region5: #{rllib_substation_forward.1} parent=1 // pred_fallthru
      _
    // Predicated region
    $region6: #{rllib_substation_forward.1} parent=1 // pred_check
      _
    $region7: #{rllib_substation_forward.1} parent=1 // pred_check_branch
      %33 = sbr.rel (0) target = $region9
    $region8: #{rllib_substation_forward.1} parent=1 // pred_region
      _
    $region9: #{rllib_substation_forward.1} parent=1 // pred_fallthru
      _
    // Predicated region
    $region10: #{rllib_substation_forward.1} parent=1 // pred_check
      _
    $region11: #{rllib_substation_forward.1} parent=1 // pred_check_branch
      %35 = sbr.rel (0) target = $region13
    $region12: #{rllib_substation_forward.1} parent=1 // pred_region
      _
    $region13: #{rllib_substation_forward.1} parent=1 // pred_fallthru
      _
    // Predicated region
    $region14: #{rllib_substation_forward.1} parent=1 // pred_check
      _
    $region15: #{rllib_substation_forward.1} parent=1 // pred_check_branch
      %37 = sbr.rel (0) target = $region17
    $region16: #{rllib_substation_forward.1} parent=1 // pred_region
      _
    $region17: #{rllib_substation_forward.1} parent=1 // pred_fallthru
      _
    // Predicated region
    $region18: #{rllib_substation_forward.1} parent=1 // pred_check
      _
    $region19: #{rllib_substation_forward.1} parent=1 // pred_check_branch
      %39 = sbr.rel (0) target = $region21
    $region20: #{rllib_substation_forward.1} parent=1 // pred_region
      _
    $region21: #{rllib_substation_forward.1} parent=1 // pred_fallthru
      _
    // Predicated region
    $region22: #{rllib_substation_forward.1} parent=1 // pred_check
      _
    $region23: #{rllib_substation_forward.1} parent=1 // pred_check_branch
      %41 = sbr.rel (0) target = $region25
    $region24: #{rllib_substation_forward.1} parent=1 // pred_region
      _
    $region25: #{rllib_substation_forward.1} parent=1 // pred_fallthru
      _
    // Predicated region
    $region26: #{rllib_substation_forward.1} parent=1 // pred_check
      _
    $region27: #{rllib_substation_forward.1} parent=1 // pred_check_branch
      %43 = sbr.rel (0) target = $region29
    $region28: #{rllib_substation_forward.1} parent=1 // pred_region
      _
    $region29: #{rllib_substation_forward.1} parent=1 // pred_fallthru
      _
    // Predicated region
    $region30: #{rllib_substation_forward.1} parent=1 // pred_check
      _
    $region31: #{rllib_substation_forward.1} parent=1 // pred_check_branch
      %45 = sbr.rel (0) target = $region33
    $region32: #{rllib_substation_forward.1} parent=1 // pred_region
      _
    $region33: #{rllib_substation_forward.1} parent=1 // pred_fallthru
      _
    // Predicated region
    $region34: #{rllib_substation_forward.1} parent=1 // pred_check
      _
    $region35: #{rllib_substation_forward.1} parent=1 // pred_check_branch
      %47 = sbr.rel (0) target = $region37
    $region36: #{rllib_substation_forward.1} parent=1 // pred_region
      %s49 = ssub.s32 64, 64
      %50 = vsyncadd [#allocation3], %s49
      %s52 = sshll.u32 [#allocation2], 4
      %s53 = int_to_ptr.vmem [resolvable:$true] %s52
      %55 = dma.hbm_to_vmem [thread:$0]  %s8, 64, %s53, [#allocation3]
    $region37: #{rllib_substation_forward.1} parent=1 // pred_fallthru
      _
    // Predicated region
    $region38: #{rllib_substation_forward.1} parent=1 // pred_check
      _
    $region39: #{rllib_substation_forward.1} parent=1 // pred_check_branch
      %57 = sbr.rel (0) target = $region41
    $region40: #{rllib_substation_forward.1} parent=1 // pred_region
      _
    $region41: #{rllib_substation_forward.1} parent=1 // pred_fallthru
      _
    // Predicated region
    $region42: #{rllib_substation_forward.1} parent=1 // pred_check
      _
    $region43: #{rllib_substation_forward.1} parent=1 // pred_check_branch
      %59 = sbr.rel (0) target = $region45
    $region44: #{rllib_substation_forward.1} parent=1 // pred_region
      %s61 = ssub.s32 64, 64
      %62 = vsyncadd [#allocation6], %s61
      %s64 = sshll.u32 [#allocation5], 4
      %s65 = int_to_ptr.vmem [resolvable:$true] %s64
      %67 = dma.hbm_to_vmem [thread:$0]  %s10, 64, %s65, [#allocation6]
    $region45: #{rllib_substation_forward.1} parent=1 // pred_fallthru
      _
    // Predicated region
    $region46: #{rllib_substation_forward.1} parent=1 // pred_check
      _
    $region47: #{rllib_substation_forward.1} parent=1 // pred_check_branch
      %69 = sbr.rel (0) target = $region49
    $region48: #{rllib_substation_forward.1} parent=1 // pred_region
      %s71 = ssub.s32 64, 64
      %72 = vsyncadd [#allocation6], %s71
      %s74 = sshll.u32 [#allocation7], 4
      %s75 = int_to_ptr.vmem [resolvable:$true] %s74
      %77 = dma.hbm_to_vmem [thread:$0]  %s11, 64, %s75, [#allocation6]
    $region49: #{rllib_substation_forward.1} parent=1 // pred_fallthru
      _
    // Predicated region
    $region50: #{rllib_substation_forward.1} parent=1 // pred_check
      _
    $region51: #{rllib_substation_forward.1} parent=1 // pred_check_branch
      %79 = sbr.rel (0) target = $region53
    $region52: #{rllib_substation_forward.1} parent=1 // pred_region
      _
    $region53: #{rllib_substation_forward.1} parent=1 // pred_fallthru
      _
    // Predicated region
    $region54: #{rllib_substation_forward.1} parent=1 // pred_check
      _
    $region55: #{rllib_substation_forward.1} parent=1 // pred_check_branch
      %81 = sbr.rel (0) target = $region57
    $region56: #{rllib_substation_forward.1} parent=1 // pred_region
      %s83 = ssub.s32 64, 64
      %84 = vsyncadd [#allocation9], %s83
      %s86 = sshll.u32 [#allocation8], 4
      %s87 = int_to_ptr.vmem [resolvable:$true] %s86
      %89 = dma.hbm_to_vmem [thread:$0]  %s13, 64, %s87, [#allocation9]
    $region57: #{rllib_substation_forward.1} parent=1 // pred_fallthru
      _
    // Predicated region
    $region58: #{rllib_substation_forward.1} parent=1 // pred_check
      _
    $region59: #{rllib_substation_forward.1} parent=1 // pred_check_branch
      %91 = sbr.rel (0) target = $region61
    $region60: #{rllib_substation_forward.1} parent=1 // pred_region
      %s93 = ssub.s32 64, 64
      %94 = vsyncadd [#allocation9], %s93
      %s96 = sshll.u32 [#allocation10], 4
      %s97 = int_to_ptr.vmem [resolvable:$true] %s96
      %99 = dma.hbm_to_vmem [thread:$0]  %s14, 64, %s97, [#allocation9]
    $region61: #{rllib_substation_forward.1} parent=1 // pred_fallthru
      _
    // Predicated region
    $region62: #{rllib_substation_forward.1} parent=1 // pred_check
      _
    $region63: #{rllib_substation_forward.1} parent=1 // pred_check_branch
      %101 = sbr.rel (0) target = $region65
    $region64: #{rllib_substation_forward.1} parent=1 // pred_region
      _
    $region65: #{rllib_substation_forward.1} parent=1 // pred_fallthru
      _
    // Predicated region
    $region66: #{rllib_substation_forward.1} parent=1 // pred_check
      _
    $region67: #{rllib_substation_forward.1} parent=1 // pred_check_branch
      %103 = sbr.rel (0) target = $region69
    $region68: #{rllib_substation_forward.1} parent=1 // pred_region
      _
    $region69: #{rllib_substation_forward.1} parent=1 // pred_fallthru
      _
    // Predicated region
    $region70: #{rllib_substation_forward.1} parent=1 // pred_check
      _
    $region71: #{rllib_substation_forward.1} parent=1 // pred_check_branch
      %105 = sbr.rel (0) target = $region73
    $region72: #{rllib_substation_forward.1} parent=1 // pred_region
      _
    $region73: #{rllib_substation_forward.1} parent=1 // pred_fallthru
      _
    // Predicated region
    $region74: #{rllib_substation_forward.1} parent=1 // pred_check
      _
    $region75: #{rllib_substation_forward.1} parent=1 // pred_check_branch
      %107 = sbr.rel (0) target = $region77
    $region76: #{rllib_substation_forward.1} parent=1 // pred_region
      _
    $region77: #{rllib_substation_forward.1} parent=1 // pred_fallthru
      _
    // Predicated region
    $region78: #{rllib_substation_forward.1} parent=1 // pred_check
      _
    $region79: #{rllib_substation_forward.1} parent=1 // pred_check_branch
      %109 = sbr.rel (0) target = $region81
    $region80: #{rllib_substation_forward.1} parent=1 // pred_region
      %110 = dma.done [#allocation3], 64
    $region81: #{rllib_substation_forward.1} parent=1 // pred_fallthru
      _
    // Predicated region
    $region82: #{rllib_substation_forward.1} parent=1 // pred_check
      _
    $region83: #{rllib_substation_forward.1} parent=1 // pred_check_branch
      %112 = sbr.rel (0) target = $region85
    $region84: #{rllib_substation_forward.1} parent=1 // pred_region
      %113 = dma.done [#allocation6], 64
    $region85: #{rllib_substation_forward.1} parent=1 // pred_fallthru
      _
    // Predicated region
    $region86: #{rllib_substation_forward.1} parent=1 // pred_check
      _
    $region87: #{rllib_substation_forward.1} parent=1 // pred_check_branch
      %115 = sbr.rel (0) target = $region89
    $region88: #{rllib_substation_forward.1} parent=1 // pred_region
      %116 = dma.done [#allocation6], 64
    $region89: #{rllib_substation_forward.1} parent=1 // pred_fallthru
      _
    // Predicated region
    $region90: #{rllib_substation_forward.1} parent=1 // pred_check
      _
    $region91: #{rllib_substation_forward.1} parent=1 // pred_check_branch
      %118 = sbr.rel (0) target = $region93
    $region92: #{rllib_substation_forward.1} parent=1 // pred_region
      %119 = dma.done [#allocation9], 64
    $region93: #{rllib_substation_forward.1} parent=1 // pred_fallthru
      _
    // Predicated region
    $region94: #{rllib_substation_forward.1} parent=1 // pred_check
      _
    $region95: #{rllib_substation_forward.1} parent=1 // pred_check_branch
      %121 = sbr.rel (0) target = $region97
    $region96: #{rllib_substation_forward.1} parent=1 // pred_region
      %122 = dma.done [#allocation9], 64
    $region97: #{rllib_substation_forward.1} parent=1 // pred_fallthru
      _
    %v123 = vlaneseq
    %v124 = vand.u32 %v123, 127
    %vm125 = vcmp.ge.s32.totalorder %v124, 0
    %vm126 = vcmp.lt.s32.totalorder %v124, 8
    %vm127 = vmand %vm125, %vm126
    %v128 = vsel %vm127, 1, 0
    %v129 = vcvt.s32.f32 %v128
    %vm130 = vcmp.ge.s32.totalorder %v124, 8
    %vm131 = vcmp.lt.s32.totalorder %v124, 16
    %vm132 = vmand %vm130, %vm131
    %v133 = vsel %vm132, 1, 0
    %v134 = vcvt.s32.f32 %v133
    %vm135 = vcmp.ge.s32.totalorder %v124, 16
    %vm136 = vcmp.lt.s32.totalorder %v124, 24
    %vm137 = vmand %vm135, %vm136
    %v138 = vsel %vm137, 1, 0
    %v139 = vcvt.s32.f32 %v138
    %vm140 = vcmp.ge.s32.totalorder %v124, 24
    %vm141 = vcmp.lt.s32.totalorder %v124, 32
    %vm142 = vmand %vm140, %vm141
    %v143 = vsel %vm142, 1, 0
    %v144 = vcvt.s32.f32 %v143
    %v145 = vld [vmem:[%s3] sm:$0xff]
    %v146 = vld [vmem:[%s4] sm:$0x1]
    %v147 = vld [vmem:[%s5] sm:$0xff]
    %v148 = vld [vmem:[%s6] sm:$0xff]
    %v149 = vld [vmem:[%s6 + $0x8] sm:$0xff]
    %v150 = vld [vmem:[%s6 + $0x10] sm:$0xff]
    %v151 = vld [vmem:[%s6 + $0x18] sm:$0xff]
    %v152 = vld [vmem:[%s7] sm:$0xf]
    %v153 = vld [vmem:[#allocation2] sm:$0xf]
    %v154 = vld [vmem:[%s9] sm:$0xff]
    %v155 = vld [vmem:[%s9 + $0x8] sm:$0xff]
    %v156 = vld [vmem:[%s9 + $0x10] sm:$0xff]
    %v157 = vld [vmem:[%s9 + $0x18] sm:$0xff]
    %v158 = vld [vmem:[#allocation5] sm:$0xf]
    %v159 = vld [vmem:[#allocation7] sm:$0xf]
    %v160 = vld [vmem:[%s12] sm:$0xff]
    %v161 = vld [vmem:[%s12 + $0x8] sm:$0xff]
    %v162 = vld [vmem:[%s12 + $0x10] sm:$0xff]
    %v163 = vld [vmem:[%s12 + $0x18] sm:$0xff]
    %v164 = vld [vmem:[#allocation8] sm:$0xf]
    %v165 = vld [vmem:[#allocation10] sm:$0xf]
    %v166 = vld [vmem:[%s15] sm:$0xff]
    %v167 = vld [vmem:[%s15 + $0x8] sm:$0xff]
    %v168 = vld [vmem:[%s15 + $0x10] sm:$0xff]
    %v169 = vld [vmem:[%s15 + $0x18] sm:$0xff]
    %v170 = vld [vmem:[%s16] sm:$0xff]
    %v171 = vld [vmem:[%s16 + $0x8] sm:$0xff]
    %v172 = vld [vmem:[%s16 + $0x10] sm:$0xff]
    %v173 = vld [vmem:[%s16 + $0x18] sm:$0xff]
    %v174 = vld [vmem:[%s17] sm:$0xff]
    %v175 = vld [vmem:[%s17 + $0x8] sm:$0xff]
    %v176 = vld [vmem:[%s17 + $0x10] sm:$0xff]
    %v177 = vld [vmem:[%s17 + $0x18] sm:$0xff]
    %v178 = vld [vmem:[%s18] sm:$0xff]
    %v179 = vld [vmem:[%s18 + $0x8] sm:$0xff]
    %v180 = vld [vmem:[%s18 + $0x10] sm:$0xff]
    %v181 = vld [vmem:[%s18 + $0x18] sm:$0xff]
    %v182 = vld [vmem:[%s0] sm:$0xff]
    %v183 = vld [vmem:[%s0 + $0x8] sm:$0xff]
    %v184 = vld [vmem:[%s1] sm:$0xff]
    %v185 = vld [vmem:[%s1 + $0x8] sm:$0xff]
    %v186 = vld [vmem:[%s2] sm:$0xff]
    %v188 = vlaneseq
    %v189 = vshrl.u32 %v188, 7
    %v190 = vsub.s32 0, %v189
    %v191 = vrot.slane %v146, %v190
    %vm193 = vcmask 64512
    %v195 = vsel %vm193, %v182, 0
    %v198 = vsel %vm193, %v183, 0
    %200 = vmatprep.subr.mxu0 0.0
    %201 = vmatpush1.msra.mxu0 0.0
    %202 = vmatprep.subr.mxu0 0.0
    %203 = vmatpush1.msra.mxu0 0.0
    %204 = vmatprep.subr.mxu0 0.0
    %205 = vmatpush1.msra.mxu0 0.0
    %206 = vmatprep.subr.mxu0 0.0
    %207 = vmatpush1.msra.mxu0 0.0
    %208 = vmatprep.subr.mxu0 0.0
    %209 = vmatpush1.msra.mxu0 0.0
    %210 = vmatprep.subr.mxu0 0.0
    %211 = vmatpush1.msra.mxu0 0.0
    %212 = vmatprep.subr.mxu0 0.0
    %213 = vmatpush1.msra.mxu0 0.0
    %214 = vmatprep.subr.mxu0 0.0
    %215 = vmatpush1.msra.mxu0 0.0
    %216 = vmatprep.subr.mxu0 0.0
    %217 = vmatpush1.msra.mxu0 0.0
    %218 = vmatprep.subr.mxu0 0.0
    %219 = vmatpush1.msra.mxu0 0.0
    %220 = vmatprep.subr.mxu0 0.0
    %221 = vmatpush1.msra.mxu0 0.0
    %222 = vmatprep.subr.mxu0 0.0
    %223 = vmatpush1.msra.mxu0 0.0
    %224 = vmatprep.subr.mxu0 0.0
    %225 = vmatpush1.msra.mxu0 0.0
    %226 = vmatprep.subr.mxu0 0.0
    %227 = vmatpush1.msra.mxu0 0.0
    %228 = vmatprep.subr.mxu0 0.0
    %229 = vmatpush1.msra.mxu0 0.0
    %230 = vmatprep.subr.mxu0 0.0
    %231 = vmatpush1.msra.mxu0 %v145
    %232 = vmatprep.subr.mxu0 0.0
    %233 = vmatpush2.msra.mxu0 0.0
    %234 = vmatprep.subr.mxu0 0.0
    %235 = vmatpush2.msra.mxu0 0.0
    %236 = vmatprep.subr.mxu0 0.0
    %237 = vmatpush2.msra.mxu0 0.0
    %238 = vmatprep.subr.mxu0 0.0
    %239 = vmatpush2.msra.mxu0 0.0
    %240 = vmatprep.subr.mxu0 0.0
    %241 = vmatpush2.msra.mxu0 0.0
    %242 = vmatprep.subr.mxu0 0.0
    %243 = vmatpush2.msra.mxu0 0.0
    %244 = vmatprep.subr.mxu0 0.0
    %245 = vmatpush2.msra.mxu0 0.0
    %246 = vmatprep.subr.mxu0 0.0
    %247 = vmatpush2.msra.mxu0 0.0
    %248 = vmatprep.subr.mxu0 0.0
    %249 = vmatpush2.msra.mxu0 0.0
    %250 = vmatprep.subr.mxu0 0.0
    %251 = vmatpush2.msra.mxu0 0.0
    %252 = vmatprep.subr.mxu0 0.0
    %253 = vmatpush2.msra.mxu0 0.0
    %254 = vmatprep.subr.mxu0 0.0
    %255 = vmatpush2.msra.mxu0 0.0
    %256 = vmatprep.subr.mxu0 0.0
    %257 = vmatpush2.msra.mxu0 0.0
    %258 = vmatprep.subr.mxu0 0.0
    %259 = vmatpush2.msra.mxu0 0.0
    %260 = vmatprep.subr.mxu0 0.0
    %261 = vmatpush2.msra.mxu0 0.0
    %262 = vmatprep.subr.mxu0 0.0
    %263 = vmatpush2.msra.mxu0 0.0
    %264 = vmatprep.mubr.f32.mxu0 0.0
    %265 = vmatmul.mubr.f32.gmra.mxu0 %v195
    %v266 = vpop.f32.mrf.mxu0
    %v267 = vadd.f32 %v191, %v266
    %v268 = vpop.f32.mrf.mxu0
    %269 = vmatprep.mubr.f32.mxu0 0.0
    %270 = vmatmul.mubr.f32.gmra.mxu0 %v198
    %v271 = vpop.f32.mrf.mxu0
    %v272 = vadd.f32 %v191, %v271
    %v273 = vpop.f32.mrf.mxu0
    %274 = vdwg.mxu0
    %vm275 = vcmask 261120
    %v277 = vsel %vm275, %v267, 0
    %v280 = vsel %vm275, %v272, 0
    %282 = vmatprep.subr.mxu0 0.0
    %283 = vmatpush1.msra.mxu0 0.0
    %284 = vmatprep.subr.mxu0 0.0
    %285 = vmatpush1.msra.mxu0 0.0
    %286 = vmatprep.subr.mxu0 0.0
    %287 = vmatpush1.msra.mxu0 0.0
    %288 = vmatprep.subr.mxu0 0.0
    %289 = vmatpush1.msra.mxu0 0.0
    %290 = vmatprep.subr.mxu0 0.0
    %291 = vmatpush1.msra.mxu0 0.0
    %292 = vmatprep.subr.mxu0 0.0
    %293 = vmatpush1.msra.mxu0 0.0
    %294 = vmatprep.subr.mxu0 0.0
    %295 = vmatpush1.msra.mxu0 0.0
    %296 = vmatprep.subr.mxu0 0.0
    %297 = vmatpush1.msra.mxu0 0.0
    %298 = vmatprep.subr.mxu0 0.0
    %299 = vmatpush1.msra.mxu0 0.0
    %300 = vmatprep.subr.mxu0 0.0
    %301 = vmatpush1.msra.mxu0 0.0
    %302 = vmatprep.subr.mxu0 0.0
    %303 = vmatpush1.msra.mxu0 0.0
    %304 = vmatprep.subr.mxu0 0.0
    %305 = vmatpush1.msra.mxu0 0.0
    %306 = vmatprep.subr.mxu0 0.0
    %307 = vmatpush1.msra.mxu0 %v151
    %308 = vmatprep.subr.mxu0 0.0
    %309 = vmatpush1.msra.mxu0 %v150
    %310 = vmatprep.subr.mxu0 0.0
    %311 = vmatpush1.msra.mxu0 %v149
    %312 = vmatprep.subr.mxu0 0.0
    %313 = vmatpush1.msra.mxu0 %v148
    %314 = vmatprep.subr.mxu0 0.0
    %315 = vmatpush2.msra.mxu0 0.0
    %316 = vmatprep.subr.mxu0 0.0
    %317 = vmatpush2.msra.mxu0 0.0
    %318 = vmatprep.subr.mxu0 0.0
    %319 = vmatpush2.msra.mxu0 0.0
    %320 = vmatprep.subr.mxu0 0.0
    %321 = vmatpush2.msra.mxu0 0.0
    %322 = vmatprep.subr.mxu0 0.0
    %323 = vmatpush2.msra.mxu0 0.0
    %324 = vmatprep.subr.mxu0 0.0
    %325 = vmatpush2.msra.mxu0 0.0
    %326 = vmatprep.subr.mxu0 0.0
    %327 = vmatpush2.msra.mxu0 0.0
    %328 = vmatprep.subr.mxu0 0.0
    %329 = vmatpush2.msra.mxu0 0.0
    %330 = vmatprep.subr.mxu0 0.0
    %331 = vmatpush2.msra.mxu0 0.0
    %332 = vmatprep.subr.mxu0 0.0
    %333 = vmatpush2.msra.mxu0 0.0
    %334 = vmatprep.subr.mxu0 0.0
    %335 = vmatpush2.msra.mxu0 0.0
    %336 = vmatprep.subr.mxu0 0.0
    %337 = vmatpush2.msra.mxu0 0.0
    %338 = vmatprep.subr.mxu0 0.0
    %339 = vmatpush2.msra.mxu0 0.0
    %340 = vmatprep.subr.mxu0 0.0
    %341 = vmatpush2.msra.mxu0 0.0
    %342 = vmatprep.subr.mxu0 0.0
    %343 = vmatpush2.msra.mxu0 0.0
    %344 = vmatprep.subr.mxu0 0.0
    %345 = vmatpush2.msra.mxu0 0.0
    %346 = vmatprep.mubr.f32.mxu0 0.0
    %347 = vmatmul.mubr.f32.gmra.mxu0 %v277
    %v348 = vpop.f32.mrf.mxu0
    %v349 = vadd.f32 0.0, %v348
    %v350 = vpop.f32.mrf.mxu0
    %351 = vmatprep.mubr.f32.mxu0 0.0
    %352 = vmatmul.mubr.f32.gmra.mxu0 %v280
    %v353 = vpop.f32.mrf.mxu0
    %v354 = vadd.f32 0.0, %v353
    %v355 = vpop.f32.mrf.mxu0
    %356 = vdwg.mxu0
    %v358 = vsel %vm275, %v349, 0
    %v361 = vsel %vm275, %v354, 0
    %v364 = vsel %vm275, %v152, 0
    %366 = vmatprep.subr.mxu0 0.0
    %367 = vmatpush1.xpose.msra.mxu0 0.0
    %368 = vmatprep.subr.mxu0 0.0
    %369 = vmatpush1.xpose.msra.mxu0 0.0
    %370 = vmatprep.subr.mxu0 0.0
    %371 = vmatpush1.xpose.msra.mxu0 0.0
    %372 = vmatprep.subr.mxu0 0.0
    %373 = vmatpush1.xpose.msra.mxu0 0.0
    %374 = vmatprep.subr.mxu0 0.0
    %375 = vmatpush1.xpose.msra.mxu0 0.0
    %376 = vmatprep.subr.mxu0 0.0
    %377 = vmatpush1.xpose.msra.mxu0 0.0
    %378 = vmatprep.subr.mxu0 0.0
    %379 = vmatpush1.xpose.msra.mxu0 0.0
    %380 = vmatprep.subr.mxu0 0.0
    %381 = vmatpush1.xpose.msra.mxu0 0.0
    %382 = vmatprep.subr.mxu0 0.0
    %383 = vmatpush1.xpose.msra.mxu0 0.0
    %384 = vmatprep.subr.mxu0 0.0
    %385 = vmatpush1.xpose.msra.mxu0 0.0
    %386 = vmatprep.subr.mxu0 0.0
    %387 = vmatpush1.xpose.msra.mxu0 0.0
    %388 = vmatprep.subr.mxu0 0.0
    %389 = vmatpush1.xpose.msra.mxu0 0.0
    %390 = vmatprep.subr.mxu0 0.0
    %391 = vmatpush1.xpose.msra.mxu0 0.0
    %392 = vmatprep.subr.mxu0 0.0
    %393 = vmatpush1.xpose.msra.mxu0 0.0
    %394 = vmatprep.subr.mxu0 0.0
    %395 = vmatpush1.xpose.msra.mxu0 0.0
    %396 = vmatprep.subr.mxu0 0.0
    %397 = vmatpush1.xpose.msra.mxu0 %v364
    %398 = vmatprep.subr.mxu0 0.0
    %399 = vmatpush2.xpose.msra.mxu0 0.0
    %400 = vmatprep.subr.mxu0 0.0
    %401 = vmatpush2.xpose.msra.mxu0 0.0
    %402 = vmatprep.subr.mxu0 0.0
    %403 = vmatpush2.xpose.msra.mxu0 0.0
    %404 = vmatprep.subr.mxu0 0.0
    %405 = vmatpush2.xpose.msra.mxu0 0.0
    %406 = vmatprep.subr.mxu0 0.0
    %407 = vmatpush2.xpose.msra.mxu0 0.0
    %408 = vmatprep.subr.mxu0 0.0
    %409 = vmatpush2.xpose.msra.mxu0 0.0
    %410 = vmatprep.subr.mxu0 0.0
    %411 = vmatpush2.xpose.msra.mxu0 0.0
    %412 = vmatprep.subr.mxu0 0.0
    %413 = vmatpush2.xpose.msra.mxu0 0.0
    %414 = vmatprep.subr.mxu0 0.0
    %415 = vmatpush2.xpose.msra.mxu0 0.0
    %416 = vmatprep.subr.mxu0 0.0
    %417 = vmatpush2.xpose.msra.mxu0 0.0
    %418 = vmatprep.subr.mxu0 0.0
    %419 = vmatpush2.xpose.msra.mxu0 0.0
    %420 = vmatprep.subr.mxu0 0.0
    %421 = vmatpush2.xpose.msra.mxu0 0.0
    %422 = vmatprep.subr.mxu0 0.0
    %423 = vmatpush2.xpose.msra.mxu0 0.0
    %424 = vmatprep.subr.mxu0 0.0
    %425 = vmatpush2.xpose.msra.mxu0 0.0
    %426 = vmatprep.subr.mxu0 0.0
    %427 = vmatpush2.xpose.msra.mxu0 0.0
    %428 = vmatprep.subr.mxu0 0.0
    %429 = vmatpush2.xpose.msra.mxu0 0.0
    %430 = vmatprep.mubr.f32.mxu0 0.0
    %431 = vmatmul.mubr.f32.gmra.mxu0 %v358
    %v432 = vpop.f32.mrf.mxu0
    %v433 = vadd.f32 0.0, %v432
    %v434 = vpop.f32.mrf.mxu0
    %435 = vmatprep.mubr.f32.mxu0 0.0
    %436 = vmatmul.mubr.f32.gmra.mxu0 %v361
    %v437 = vpop.f32.mrf.mxu0
    %v438 = vadd.f32 0.0, %v437
    %v439 = vpop.f32.mrf.mxu0
    %440 = vdwg.mxu0
    %v442 = vsel %vm275, %v153, 0
    %444 = vmatprep.subr.mxu0 0.0
    %445 = vmatpush1.xpose.msra.mxu0 0.0
    %446 = vmatprep.subr.mxu0 0.0
    %447 = vmatpush1.xpose.msra.mxu0 0.0
    %448 = vmatprep.subr.mxu0 0.0
    %449 = vmatpush1.xpose.msra.mxu0 0.0
    %450 = vmatprep.subr.mxu0 0.0
    %451 = vmatpush1.xpose.msra.mxu0 0.0
    %452 = vmatprep.subr.mxu0 0.0
    %453 = vmatpush1.xpose.msra.mxu0 0.0
    %454 = vmatprep.subr.mxu0 0.0
    %455 = vmatpush1.xpose.msra.mxu0 0.0
    %456 = vmatprep.subr.mxu0 0.0
    %457 = vmatpush1.xpose.msra.mxu0 0.0
    %458 = vmatprep.subr.mxu0 0.0
    %459 = vmatpush1.xpose.msra.mxu0 0.0
    %460 = vmatprep.subr.mxu0 0.0
    %461 = vmatpush1.xpose.msra.mxu0 0.0
    %462 = vmatprep.subr.mxu0 0.0
    %463 = vmatpush1.xpose.msra.mxu0 0.0
    %464 = vmatprep.subr.mxu0 0.0
    %465 = vmatpush1.xpose.msra.mxu0 0.0
    %466 = vmatprep.subr.mxu0 0.0
    %467 = vmatpush1.xpose.msra.mxu0 0.0
    %468 = vmatprep.subr.mxu0 0.0
    %469 = vmatpush1.xpose.msra.mxu0 0.0
    %470 = vmatprep.subr.mxu0 0.0
    %471 = vmatpush1.xpose.msra.mxu0 0.0
    %472 = vmatprep.subr.mxu0 0.0
    %473 = vmatpush1.xpose.msra.mxu0 %v361
    %474 = vmatprep.subr.mxu0 0.0
    %475 = vmatpush1.xpose.msra.mxu0 %v358
    %476 = vmatprep.subr.mxu0 0.0
    %477 = vmatpush2.xpose.msra.mxu0 0.0
    %478 = vmatprep.subr.mxu0 0.0
    %479 = vmatpush2.xpose.msra.mxu0 0.0
    %480 = vmatprep.subr.mxu0 0.0
    %481 = vmatpush2.xpose.msra.mxu0 0.0
    %482 = vmatprep.subr.mxu0 0.0
    %483 = vmatpush2.xpose.msra.mxu0 0.0
    %484 = vmatprep.subr.mxu0 0.0
    %485 = vmatpush2.xpose.msra.mxu0 0.0
    %486 = vmatprep.subr.mxu0 0.0
    %487 = vmatpush2.xpose.msra.mxu0 0.0
    %488 = vmatprep.subr.mxu0 0.0
    %489 = vmatpush2.xpose.msra.mxu0 0.0
    %490 = vmatprep.subr.mxu0 0.0
    %491 = vmatpush2.xpose.msra.mxu0 0.0
    %492 = vmatprep.subr.mxu0 0.0
    %493 = vmatpush2.xpose.msra.mxu0 0.0
    %494 = vmatprep.subr.mxu0 0.0
    %495 = vmatpush2.xpose.msra.mxu0 0.0
    %496 = vmatprep.subr.mxu0 0.0
    %497 = vmatpush2.xpose.msra.mxu0 0.0
    %498 = vmatprep.subr.mxu0 0.0
    %499 = vmatpush2.xpose.msra.mxu0 0.0
    %500 = vmatprep.subr.mxu0 0.0
    %501 = vmatpush2.xpose.msra.mxu0 0.0
    %502 = vmatprep.subr.mxu0 0.0
    %503 = vmatpush2.xpose.msra.mxu0 0.0
    %504 = vmatprep.subr.mxu0 0.0
    %505 = vmatpush2.xpose.msra.mxu0 0.0
    %506 = vmatprep.subr.mxu0 0.0
    %507 = vmatpush2.xpose.msra.mxu0 0.0
    %508 = vmatprep.mubr.f32.mxu0 0.0
    %509 = vmatmul.mubr.f32.gmra.mxu0 %v442
    %v510 = vpop.f32.mrf.mxu0
    %v511 = vadd.f32 0.0, %v510
    %v512 = vpop.f32.mrf.mxu0
    %513 = vdwg.mxu0
    %515 = vset.pattern.permute.xlu0 0
    %516 = vperm.xlu0 %515, %v433
    %v517 = vpop.permute.xlu0 %516
    %520 = vset.pattern.permute.xlu0 0
    %521 = vperm.xlu0 %520, %v438
    %v522 = vpop.permute.xlu0 %521
    %v524 = vlaneseq
    %v525 = vshrl.u32 %v524, 7
    %v526 = vsub.s32 0, %v525
    %v527 = vrot.slane %v511, %v526
    %v528 = vadd.f32 %v517, %v527
    %v529 = vadd.f32 %v522, %v527
    %vm530 = vcmp.gt.f32.partialorder %v528, 0.0
    %vm531 = vcmp.gt.f32.partialorder %v529, 0.0
    %v532 = vmul.f32 %v528, 0.2
    %v533 = vmul.f32 %v529, 0.2
    %v534 = vsel %vm530, %v528, %v532
    %v535 = vsel %vm531, %v529, %v533
    %vm536 = vcmp.gt.f32.partialorder %v184, 0.0
    %vm537 = vcmp.gt.f32.partialorder %v185, 0.0
    %v538 = vsel %vm536, %v534, -9e+15
    %v539 = vsel %vm537, %v535, -9e+15
    %vm540 = vcmask 130048
    %v541 = vsel %vm540, %v538, -inf
    %542 = vmax.xlane.f32.xlu0 %v541
    %v543 = vpop.xlane.xlu0 %542
    %v544 = vsel %vm540, %v539, -inf
    %545 = vmax.xlane.f32.xlu0 %v544
    %v546 = vpop.xlane.xlu0 %545
    %v547 = vsub.f32 %v538, %v543
    %v548 = vsub.f32 %v539, %v546
    %v549 = vmul.f32 %v547, 1.442695
    %v550 = vpow.pop %v549
    %v551 = vmul.f32 %v548, 1.442695
    %v552 = vpow.pop %v551
    %v553 = vsel %vm540, %v550, 0.0
    %554 = vadd.xlane.f32.xlu0 %v553
    %v555 = vpop.xlane.xlu0 %554
    %v556 = vsel %vm540, %v552, 0.0
    %557 = vadd.xlane.f32.xlu0 %v556
    %v558 = vpop.xlane.xlu0 %557
    %v559 = vrcp.pop %v555
    %v560 = vrcp.pop %v558
    %v561 = vmul.f32 %v550, %v559
    %v562 = vmul.f32 %v552, %v560
    %v563 = vmul.f32 %v349, %v129
    %v564 = vmul.f32 %v354, %v129
    %565 = vset.pattern.permute.xlu0 1
    %566 = vperm.xlu0 %565, %v433
    %v567 = vpop.permute.xlu0 %566
    %569 = vset.pattern.permute.xlu0 1
    %570 = vperm.xlu0 %569, %v438
    %v571 = vpop.permute.xlu0 %570
    %v573 = vlaneseq
    %v574 = vshrl.u32 %v573, 7
    %v575 = vsub.s32 1, %v574
    %v576 = vrot.slane %v511, %v575
    %v577 = vadd.f32 %v567, %v576
    %v578 = vadd.f32 %v571, %v576
    %vm579 = vcmp.gt.f32.partialorder %v577, 0.0
    %vm580 = vcmp.gt.f32.partialorder %v578, 0.0
    %v581 = vmul.f32 %v577, 0.2
    %v582 = vmul.f32 %v578, 0.2
    %v583 = vsel %vm579, %v577, %v581
    %v584 = vsel %vm580, %v578, %v582
    %v585 = vsel %vm536, %v583, -9e+15
    %v586 = vsel %vm537, %v584, -9e+15
    %v587 = vsel %vm540, %v585, -inf
    %588 = vmax.xlane.f32.xlu0 %v587
    %v589 = vpop.xlane.xlu0 %588
    %v590 = vsel %vm540, %v586, -inf
    %591 = vmax.xlane.f32.xlu0 %v590
    %v592 = vpop.xlane.xlu0 %591
    %v593 = vsub.f32 %v585, %v589
    %v594 = vsub.f32 %v586, %v592
    %v595 = vmul.f32 %v593, 1.442695
    %v596 = vpow.pop %v595
    %v597 = vmul.f32 %v594, 1.442695
    %v598 = vpow.pop %v597
    %v599 = vsel %vm540, %v596, 0.0
    %600 = vadd.xlane.f32.xlu0 %v599
    %v601 = vpop.xlane.xlu0 %600
    %v602 = vsel %vm540, %v598, 0.0
    %603 = vadd.xlane.f32.xlu0 %v602
    %v604 = vpop.xlane.xlu0 %603
    %v605 = vrcp.pop %v601
    %v606 = vrcp.pop %v604
    %v607 = vmul.f32 %v596, %v605
    %v608 = vmul.f32 %v598, %v606
    %v609 = vmul.f32 %v349, %v134
    %v610 = vmul.f32 %v354, %v134
    %v612 = vsel %vm540, %v607, 0
    %v615 = vsel %vm540, %v608, 0
    %617 = vmatprep.subr.mxu0 0.0
    %618 = vmatpush1.msra.mxu0 0.0
    %619 = vmatprep.subr.mxu0 0.0
    %620 = vmatpush1.msra.mxu0 0.0
    %621 = vmatprep.subr.mxu0 0.0
    %622 = vmatpush1.msra.mxu0 0.0
    %623 = vmatprep.subr.mxu0 0.0
    %624 = vmatpush1.msra.mxu0 0.0
    %625 = vmatprep.subr.mxu0 0.0
    %626 = vmatpush1.msra.mxu0 0.0
    %627 = vmatprep.subr.mxu0 0.0
    %628 = vmatpush1.msra.mxu0 0.0
    %629 = vmatprep.subr.mxu0 0.0
    %630 = vmatpush1.msra.mxu0 0.0
    %631 = vmatprep.subr.mxu0 0.0
    %632 = vmatpush1.msra.mxu0 0.0
    %633 = vmatprep.subr.mxu0 0.0
    %634 = vmatpush1.msra.mxu0 0.0
    %635 = vmatprep.subr.mxu0 0.0
    %636 = vmatpush1.msra.mxu0 0.0
    %637 = vmatprep.subr.mxu0 0.0
    %638 = vmatpush1.msra.mxu0 0.0
    %639 = vmatprep.subr.mxu0 0.0
    %640 = vmatpush1.msra.mxu0 0.0
    %641 = vmatprep.subr.mxu0 0.0
    %642 = vmatpush1.msra.mxu0 0.0
    %643 = vmatprep.subr.mxu0 0.0
    %644 = vmatpush1.msra.mxu0 0.0
    %645 = vmatprep.subr.mxu0 0.0
    %646 = vmatpush1.msra.mxu0 %v610
    %647 = vmatprep.subr.mxu0 0.0
    %648 = vmatpush1.msra.mxu0 %v609
    %649 = vmatprep.subr.mxu0 0.0
    %650 = vmatpush2.msra.mxu0 0.0
    %651 = vmatprep.subr.mxu0 0.0
    %652 = vmatpush2.msra.mxu0 0.0
    %653 = vmatprep.subr.mxu0 0.0
    %654 = vmatpush2.msra.mxu0 0.0
    %655 = vmatprep.subr.mxu0 0.0
    %656 = vmatpush2.msra.mxu0 0.0
    %657 = vmatprep.subr.mxu0 0.0
    %658 = vmatpush2.msra.mxu0 0.0
    %659 = vmatprep.subr.mxu0 0.0
    %660 = vmatpush2.msra.mxu0 0.0
    %661 = vmatprep.subr.mxu0 0.0
    %662 = vmatpush2.msra.mxu0 0.0
    %663 = vmatprep.subr.mxu0 0.0
    %664 = vmatpush2.msra.mxu0 0.0
    %665 = vmatprep.subr.mxu0 0.0
    %666 = vmatpush2.msra.mxu0 0.0
    %667 = vmatprep.subr.mxu0 0.0
    %668 = vmatpush2.msra.mxu0 0.0
    %669 = vmatprep.subr.mxu0 0.0
    %670 = vmatpush2.msra.mxu0 0.0
    %671 = vmatprep.subr.mxu0 0.0
    %672 = vmatpush2.msra.mxu0 0.0
    %673 = vmatprep.subr.mxu0 0.0
    %674 = vmatpush2.msra.mxu0 0.0
    %675 = vmatprep.subr.mxu0 0.0
    %676 = vmatpush2.msra.mxu0 0.0
    %677 = vmatprep.subr.mxu0 0.0
    %678 = vmatpush2.msra.mxu0 0.0
    %679 = vmatprep.subr.mxu0 0.0
    %680 = vmatpush2.msra.mxu0 0.0
    %681 = vmatprep.mubr.f32.mxu0 0.0
    %682 = vmatmul.mubr.f32.gmra.mxu0 %v612
    %v683 = vpop.f32.mrf.mxu0
    %v684 = vadd.f32 0.0, %v683
    %v685 = vpop.f32.mrf.mxu0
    %686 = vmatprep.mubr.f32.mxu0 0.0
    %687 = vmatmul.mubr.f32.gmra.mxu0 %v615
    %v688 = vpop.f32.mrf.mxu0
    %v689 = vadd.f32 0.0, %v688
    %v690 = vpop.f32.mrf.mxu0
    %691 = vdwg.mxu0
    %v693 = vsel %vm540, %v561, 0
    %v696 = vsel %vm540, %v562, 0
    %698 = vmatprep.subr.mxu0 0.0
    %699 = vmatpush1.msra.mxu0 0.0
    %700 = vmatprep.subr.mxu0 0.0
    %701 = vmatpush1.msra.mxu0 0.0
    %702 = vmatprep.subr.mxu0 0.0
    %703 = vmatpush1.msra.mxu0 0.0
    %704 = vmatprep.subr.mxu0 0.0
    %705 = vmatpush1.msra.mxu0 0.0
    %706 = vmatprep.subr.mxu0 0.0
    %707 = vmatpush1.msra.mxu0 0.0
    %708 = vmatprep.subr.mxu0 0.0
    %709 = vmatpush1.msra.mxu0 0.0
    %710 = vmatprep.subr.mxu0 0.0
    %711 = vmatpush1.msra.mxu0 0.0
    %712 = vmatprep.subr.mxu0 0.0
    %713 = vmatpush1.msra.mxu0 0.0
    %714 = vmatprep.subr.mxu0 0.0
    %715 = vmatpush1.msra.mxu0 0.0
    %716 = vmatprep.subr.mxu0 0.0
    %717 = vmatpush1.msra.mxu0 0.0
    %718 = vmatprep.subr.mxu0 0.0
    %719 = vmatpush1.msra.mxu0 0.0
    %720 = vmatprep.subr.mxu0 0.0
    %721 = vmatpush1.msra.mxu0 0.0
    %722 = vmatprep.subr.mxu0 0.0
    %723 = vmatpush1.msra.mxu0 0.0
    %724 = vmatprep.subr.mxu0 0.0
    %725 = vmatpush1.msra.mxu0 0.0
    %726 = vmatprep.subr.mxu0 0.0
    %727 = vmatpush1.msra.mxu0 %v564
    %728 = vmatprep.subr.mxu0 0.0
    %729 = vmatpush1.msra.mxu0 %v563
    %730 = vmatprep.subr.mxu0 0.0
    %731 = vmatpush2.msra.mxu0 0.0
    %732 = vmatprep.subr.mxu0 0.0
    %733 = vmatpush2.msra.mxu0 0.0
    %734 = vmatprep.subr.mxu0 0.0
    %735 = vmatpush2.msra.mxu0 0.0
    %736 = vmatprep.subr.mxu0 0.0
    %737 = vmatpush2.msra.mxu0 0.0
    %738 = vmatprep.subr.mxu0 0.0
    %739 = vmatpush2.msra.mxu0 0.0
    %740 = vmatprep.subr.mxu0 0.0
    %741 = vmatpush2.msra.mxu0 0.0
    %742 = vmatprep.subr.mxu0 0.0
    %743 = vmatpush2.msra.mxu0 0.0
    %744 = vmatprep.subr.mxu0 0.0
    %745 = vmatpush2.msra.mxu0 0.0
    %746 = vmatprep.subr.mxu0 0.0
    %747 = vmatpush2.msra.mxu0 0.0
    %748 = vmatprep.subr.mxu0 0.0
    %749 = vmatpush2.msra.mxu0 0.0
    %750 = vmatprep.subr.mxu0 0.0
    %751 = vmatpush2.msra.mxu0 0.0
    %752 = vmatprep.subr.mxu0 0.0
    %753 = vmatpush2.msra.mxu0 0.0
    %754 = vmatprep.subr.mxu0 0.0
    %755 = vmatpush2.msra.mxu0 0.0
    %756 = vmatprep.subr.mxu0 0.0
    %757 = vmatpush2.msra.mxu0 0.0
    %758 = vmatprep.subr.mxu0 0.0
    %759 = vmatpush2.msra.mxu0 0.0
    %760 = vmatprep.subr.mxu0 0.0
    %761 = vmatpush2.msra.mxu0 0.0
    %762 = vmatprep.mubr.f32.mxu0 0.0
    %763 = vmatmul.mubr.f32.gmra.mxu0 %v693
    %v764 = vpop.f32.mrf.mxu0
    %v765 = vadd.f32 %v684, %v764
    %v766 = vpop.f32.mrf.mxu0
    %767 = vmatprep.mubr.f32.mxu0 0.0
    %768 = vmatmul.mubr.f32.gmra.mxu0 %v696
    %v769 = vpop.f32.mrf.mxu0
    %v770 = vadd.f32 %v689, %v769
    %v771 = vpop.f32.mrf.mxu0
    %772 = vdwg.mxu0
    %773 = vset.pattern.permute.xlu0 2
    %774 = vperm.xlu0 %773, %v433
    %v775 = vpop.permute.xlu0 %774
    %777 = vset.pattern.permute.xlu0 2
    %778 = vperm.xlu0 %777, %v438
    %v779 = vpop.permute.xlu0 %778
    %v781 = vlaneseq
    %v782 = vshrl.u32 %v781, 7
    %v783 = vsub.s32 2, %v782
    %v784 = vrot.slane %v511, %v783
    %v785 = vadd.f32 %v775, %v784
    %v786 = vadd.f32 %v779, %v784
    %vm787 = vcmp.gt.f32.partialorder %v785, 0.0
    %vm788 = vcmp.gt.f32.partialorder %v786, 0.0
    %v789 = vmul.f32 %v785, 0.2
    %v790 = vmul.f32 %v786, 0.2
    %v791 = vsel %vm787, %v785, %v789
    %v792 = vsel %vm788, %v786, %v790
    %v793 = vsel %vm536, %v791, -9e+15
    %v794 = vsel %vm537, %v792, -9e+15
    %v795 = vsel %vm540, %v793, -inf
    %796 = vmax.xlane.f32.xlu0 %v795
    %v797 = vpop.xlane.xlu0 %796
    %v798 = vsel %vm540, %v794, -inf
    %799 = vmax.xlane.f32.xlu0 %v798
    %v800 = vpop.xlane.xlu0 %799
    %v801 = vsub.f32 %v793, %v797
    %v802 = vsub.f32 %v794, %v800
    %v803 = vmul.f32 %v801, 1.442695
    %v804 = vpow.pop %v803
    %v805 = vmul.f32 %v802, 1.442695
    %v806 = vpow.pop %v805
    %v807 = vsel %vm540, %v804, 0.0
    %808 = vadd.xlane.f32.xlu0 %v807
    %v809 = vpop.xlane.xlu0 %808
    %v810 = vsel %vm540, %v806, 0.0
    %811 = vadd.xlane.f32.xlu0 %v810
    %v812 = vpop.xlane.xlu0 %811
    %v813 = vrcp.pop %v809
    %v814 = vrcp.pop %v812
    %v815 = vmul.f32 %v804, %v813
    %v816 = vmul.f32 %v806, %v814
    %v817 = vmul.f32 %v349, %v139
    %v818 = vmul.f32 %v354, %v139
    %v820 = vsel %vm540, %v815, 0
    %v823 = vsel %vm540, %v816, 0
    %825 = vmatprep.subr.mxu0 0.0
    %826 = vmatpush1.msra.mxu0 0.0
    %827 = vmatprep.subr.mxu0 0.0
    %828 = vmatpush1.msra.mxu0 0.0
    %829 = vmatprep.subr.mxu0 0.0
    %830 = vmatpush1.msra.mxu0 0.0
    %831 = vmatprep.subr.mxu0 0.0
    %832 = vmatpush1.msra.mxu0 0.0
    %833 = vmatprep.subr.mxu0 0.0
    %834 = vmatpush1.msra.mxu0 0.0
    %835 = vmatprep.subr.mxu0 0.0
    %836 = vmatpush1.msra.mxu0 0.0
    %837 = vmatprep.subr.mxu0 0.0
    %838 = vmatpush1.msra.mxu0 0.0
    %839 = vmatprep.subr.mxu0 0.0
    %840 = vmatpush1.msra.mxu0 0.0
    %841 = vmatprep.subr.mxu0 0.0
    %842 = vmatpush1.msra.mxu0 0.0
    %843 = vmatprep.subr.mxu0 0.0
    %844 = vmatpush1.msra.mxu0 0.0
    %845 = vmatprep.subr.mxu0 0.0
    %846 = vmatpush1.msra.mxu0 0.0
    %847 = vmatprep.subr.mxu0 0.0
    %848 = vmatpush1.msra.mxu0 0.0
    %849 = vmatprep.subr.mxu0 0.0
    %850 = vmatpush1.msra.mxu0 0.0
    %851 = vmatprep.subr.mxu0 0.0
    %852 = vmatpush1.msra.mxu0 0.0
    %853 = vmatprep.subr.mxu0 0.0
    %854 = vmatpush1.msra.mxu0 %v818
    %855 = vmatprep.subr.mxu0 0.0
    %856 = vmatpush1.msra.mxu0 %v817
    %857 = vmatprep.subr.mxu0 0.0
    %858 = vmatpush2.msra.mxu0 0.0
    %859 = vmatprep.subr.mxu0 0.0
    %860 = vmatpush2.msra.mxu0 0.0
    %861 = vmatprep.subr.mxu0 0.0
    %862 = vmatpush2.msra.mxu0 0.0
    %863 = vmatprep.subr.mxu0 0.0
    %864 = vmatpush2.msra.mxu0 0.0
    %865 = vmatprep.subr.mxu0 0.0
    %866 = vmatpush2.msra.mxu0 0.0
    %867 = vmatprep.subr.mxu0 0.0
    %868 = vmatpush2.msra.mxu0 0.0
    %869 = vmatprep.subr.mxu0 0.0
    %870 = vmatpush2.msra.mxu0 0.0
    %871 = vmatprep.subr.mxu0 0.0
    %872 = vmatpush2.msra.mxu0 0.0
    %873 = vmatprep.subr.mxu0 0.0
    %874 = vmatpush2.msra.mxu0 0.0
    %875 = vmatprep.subr.mxu0 0.0
    %876 = vmatpush2.msra.mxu0 0.0
    %877 = vmatprep.subr.mxu0 0.0
    %878 = vmatpush2.msra.mxu0 0.0
    %879 = vmatprep.subr.mxu0 0.0
    %880 = vmatpush2.msra.mxu0 0.0
    %881 = vmatprep.subr.mxu0 0.0
    %882 = vmatpush2.msra.mxu0 0.0
    %883 = vmatprep.subr.mxu0 0.0
    %884 = vmatpush2.msra.mxu0 0.0
    %885 = vmatprep.subr.mxu0 0.0
    %886 = vmatpush2.msra.mxu0 0.0
    %887 = vmatprep.subr.mxu0 0.0
    %888 = vmatpush2.msra.mxu0 0.0
    %889 = vmatprep.mubr.f32.mxu0 0.0
    %890 = vmatmul.mubr.f32.gmra.mxu0 %v820
    %v891 = vpop.f32.mrf.mxu0
    %v892 = vadd.f32 0.0, %v891
    %v893 = vpop.f32.mrf.mxu0
    %894 = vmatprep.mubr.f32.mxu0 0.0
    %895 = vmatmul.mubr.f32.gmra.mxu0 %v823
    %v896 = vpop.f32.mrf.mxu0
    %v897 = vadd.f32 0.0, %v896
    %v898 = vpop.f32.mrf.mxu0
    %899 = vdwg.mxu0
    %v900 = vadd.f32 %v765, %v892
    %v901 = vadd.f32 %v770, %v897
    %902 = vset.pattern.permute.xlu0 3
    %903 = vperm.xlu0 %902, %v433
    %v904 = vpop.permute.xlu0 %903
    %906 = vset.pattern.permute.xlu0 3
    %907 = vperm.xlu0 %906, %v438
    %v908 = vpop.permute.xlu0 %907
    %v910 = vlaneseq
    %v911 = vshrl.u32 %v910, 7
    %v912 = vsub.s32 3, %v911
    %v913 = vrot.slane %v511, %v912
    %v914 = vadd.f32 %v904, %v913
    %v915 = vadd.f32 %v908, %v913
    %vm916 = vcmp.gt.f32.partialorder %v914, 0.0
    %vm917 = vcmp.gt.f32.partialorder %v915, 0.0
    %v918 = vmul.f32 %v914, 0.2
    %v919 = vmul.f32 %v915, 0.2
    %v920 = vsel %vm916, %v914, %v918
    %v921 = vsel %vm917, %v915, %v919
    %v922 = vsel %vm536, %v920, -9e+15
    %v923 = vsel %vm537, %v921, -9e+15
    %v924 = vsel %vm540, %v922, -inf
    %925 = vmax.xlane.f32.xlu0 %v924
    %v926 = vpop.xlane.xlu0 %925
    %v927 = vsel %vm540, %v923, -inf
    %928 = vmax.xlane.f32.xlu0 %v927
    %v929 = vpop.xlane.xlu0 %928
    %v930 = vsub.f32 %v922, %v926
    %v931 = vsub.f32 %v923, %v929
    %v932 = vmul.f32 %v930, 1.442695
    %v933 = vpow.pop %v932
    %v934 = vmul.f32 %v931, 1.442695
    %v935 = vpow.pop %v934
    %v936 = vsel %vm540, %v933, 0.0
    %937 = vadd.xlane.f32.xlu0 %v936
    %v938 = vpop.xlane.xlu0 %937
    %v939 = vsel %vm540, %v935, 0.0
    %940 = vadd.xlane.f32.xlu0 %v939
    %v941 = vpop.xlane.xlu0 %940
    %v942 = vrcp.pop %v938
    %v943 = vrcp.pop %v941
    %v944 = vmul.f32 %v933, %v942
    %v945 = vmul.f32 %v935, %v943
    %v946 = vmul.f32 %v349, %v144
    %v947 = vmul.f32 %v354, %v144
    %v949 = vsel %vm540, %v944, 0
    %v952 = vsel %vm540, %v945, 0
    %954 = vmatprep.subr.mxu0 0.0
    %955 = vmatpush1.msra.mxu0 0.0
    %956 = vmatprep.subr.mxu0 0.0
    %957 = vmatpush1.msra.mxu0 0.0
    %958 = vmatprep.subr.mxu0 0.0
    %959 = vmatpush1.msra.mxu0 0.0
    %960 = vmatprep.subr.mxu0 0.0
    %961 = vmatpush1.msra.mxu0 0.0
    %962 = vmatprep.subr.mxu0 0.0
    %963 = vmatpush1.msra.mxu0 0.0
    %964 = vmatprep.subr.mxu0 0.0
    %965 = vmatpush1.msra.mxu0 0.0
    %966 = vmatprep.subr.mxu0 0.0
    %967 = vmatpush1.msra.mxu0 0.0
    %968 = vmatprep.subr.mxu0 0.0
    %969 = vmatpush1.msra.mxu0 0.0
    %970 = vmatprep.subr.mxu0 0.0
    %971 = vmatpush1.msra.mxu0 0.0
    %972 = vmatprep.subr.mxu0 0.0
    %973 = vmatpush1.msra.mxu0 0.0
    %974 = vmatprep.subr.mxu0 0.0
    %975 = vmatpush1.msra.mxu0 0.0
    %976 = vmatprep.subr.mxu0 0.0
    %977 = vmatpush1.msra.mxu0 0.0
    %978 = vmatprep.subr.mxu0 0.0
    %979 = vmatpush1.msra.mxu0 0.0
    %980 = vmatprep.subr.mxu0 0.0
    %981 = vmatpush1.msra.mxu0 0.0
    %982 = vmatprep.subr.mxu0 0.0
    %983 = vmatpush1.msra.mxu0 %v947
    %984 = vmatprep.subr.mxu0 0.0
    %985 = vmatpush1.msra.mxu0 %v946
    %986 = vmatprep.subr.mxu0 0.0
    %987 = vmatpush2.msra.mxu0 0.0
    %988 = vmatprep.subr.mxu0 0.0
    %989 = vmatpush2.msra.mxu0 0.0
    %990 = vmatprep.subr.mxu0 0.0
    %991 = vmatpush2.msra.mxu0 0.0
    %992 = vmatprep.subr.mxu0 0.0
    %993 = vmatpush2.msra.mxu0 0.0
    %994 = vmatprep.subr.mxu0 0.0
    %995 = vmatpush2.msra.mxu0 0.0
    %996 = vmatprep.subr.mxu0 0.0
    %997 = vmatpush2.msra.mxu0 0.0
    %998 = vmatprep.subr.mxu0 0.0
    %999 = vmatpush2.msra.mxu0 0.0
    %1000 = vmatprep.subr.mxu0 0.0
    %1001 = vmatpush2.msra.mxu0 0.0
    %1002 = vmatprep.subr.mxu0 0.0
    %1003 = vmatpush2.msra.mxu0 0.0
    %1004 = vmatprep.subr.mxu0 0.0
    %1005 = vmatpush2.msra.mxu0 0.0
    %1006 = vmatprep.subr.mxu0 0.0
    %1007 = vmatpush2.msra.mxu0 0.0
    %1008 = vmatprep.subr.mxu0 0.0
    %1009 = vmatpush2.msra.mxu0 0.0
    %1010 = vmatprep.subr.mxu0 0.0
    %1011 = vmatpush2.msra.mxu0 0.0
    %1012 = vmatprep.subr.mxu0 0.0
    %1013 = vmatpush2.msra.mxu0 0.0
    %1014 = vmatprep.subr.mxu0 0.0
    %1015 = vmatpush2.msra.mxu0 0.0
    %1016 = vmatprep.subr.mxu0 0.0
    %1017 = vmatpush2.msra.mxu0 0.0
    %1018 = vmatprep.mubr.f32.mxu0 0.0
    %1019 = vmatmul.mubr.f32.gmra.mxu0 %v949
    %v1020 = vpop.f32.mrf.mxu0
    %v1021 = vadd.f32 0.0, %v1020
    %v1022 = vpop.f32.mrf.mxu0
    %1023 = vmatprep.mubr.f32.mxu0 0.0
    %1024 = vmatmul.mubr.f32.gmra.mxu0 %v952
    %v1025 = vpop.f32.mrf.mxu0
    %v1026 = vadd.f32 0.0, %v1025
    %v1027 = vpop.f32.mrf.mxu0
    %1028 = vdwg.mxu0
    %v1029 = vadd.f32 %v900, %v1021
    %v1030 = vadd.f32 %v901, %v1026
    %vm1031 = vcmp.gt.f32.partialorder %v1029, 0.0
    %vm1032 = vcmp.gt.f32.partialorder %v1030, 0.0
    %v1033 = vmin.f32 %v1029, 0.0
    %v1034 = vmin.f32 %v1030, 0.0
    %v1035 = vmul.f32 %v1033, 1.442695
    %v1036 = vpow.pop %v1035
    %v1037 = vmul.f32 %v1034, 1.442695
    %v1038 = vpow.pop %v1037
    %v1039 = vsub.f32 %v1036, 1.0
    %v1040 = vsub.f32 %v1038, 1.0
    %v1041 = vsel %vm1031, %v1029, %v1039
    %v1042 = vsel %vm1032, %v1030, %v1040
    %v1044 = vsel %vm540, %v147, 0
    %1046 = vmatprep.subr.mxu0 0.0
    %1047 = vmatpush1.msra.mxu0 0.0
    %1048 = vmatprep.subr.mxu0 0.0
    %1049 = vmatpush1.msra.mxu0 0.0
    %1050 = vmatprep.subr.mxu0 0.0
    %1051 = vmatpush1.msra.mxu0 0.0
    %1052 = vmatprep.subr.mxu0 0.0
    %1053 = vmatpush1.msra.mxu0 0.0
    %1054 = vmatprep.subr.mxu0 0.0
    %1055 = vmatpush1.msra.mxu0 0.0
    %1056 = vmatprep.subr.mxu0 0.0
    %1057 = vmatpush1.msra.mxu0 0.0
    %1058 = vmatprep.subr.mxu0 0.0
    %1059 = vmatpush1.msra.mxu0 0.0
    %1060 = vmatprep.subr.mxu0 0.0
    %1061 = vmatpush1.msra.mxu0 0.0
    %1062 = vmatprep.subr.mxu0 0.0
    %1063 = vmatpush1.msra.mxu0 0.0
    %1064 = vmatprep.subr.mxu0 0.0
    %1065 = vmatpush1.msra.mxu0 0.0
    %1066 = vmatprep.subr.mxu0 0.0
    %1067 = vmatpush1.msra.mxu0 0.0
    %1068 = vmatprep.subr.mxu0 0.0
    %1069 = vmatpush1.msra.mxu0 0.0
    %1070 = vmatprep.subr.mxu0 0.0
    %1071 = vmatpush1.msra.mxu0 0.0
    %1072 = vmatprep.subr.mxu0 0.0
    %1073 = vmatpush1.msra.mxu0 0.0
    %1074 = vmatprep.subr.mxu0 0.0
    %1075 = vmatpush1.msra.mxu0 %v1042
    %1076 = vmatprep.subr.mxu0 0.0
    %1077 = vmatpush1.msra.mxu0 %v1041
    %1078 = vmatprep.subr.mxu0 0.0
    %1079 = vmatpush2.msra.mxu0 0.0
    %1080 = vmatprep.subr.mxu0 0.0
    %1081 = vmatpush2.msra.mxu0 0.0
    %1082 = vmatprep.subr.mxu0 0.0
    %1083 = vmatpush2.msra.mxu0 0.0
    %1084 = vmatprep.subr.mxu0 0.0
    %1085 = vmatpush2.msra.mxu0 0.0
    %1086 = vmatprep.subr.mxu0 0.0
    %1087 = vmatpush2.msra.mxu0 0.0
    %1088 = vmatprep.subr.mxu0 0.0
    %1089 = vmatpush2.msra.mxu0 0.0
    %1090 = vmatprep.subr.mxu0 0.0
    %1091 = vmatpush2.msra.mxu0 0.0
    %1092 = vmatprep.subr.mxu0 0.0
    %1093 = vmatpush2.msra.mxu0 0.0
    %1094 = vmatprep.subr.mxu0 0.0
    %1095 = vmatpush2.msra.mxu0 0.0
    %1096 = vmatprep.subr.mxu0 0.0
    %1097 = vmatpush2.msra.mxu0 0.0
    %1098 = vmatprep.subr.mxu0 0.0
    %1099 = vmatpush2.msra.mxu0 0.0
    %1100 = vmatprep.subr.mxu0 0.0
    %1101 = vmatpush2.msra.mxu0 0.0
    %1102 = vmatprep.subr.mxu0 0.0
    %1103 = vmatpush2.msra.mxu0 0.0
    %1104 = vmatprep.subr.mxu0 0.0
    %1105 = vmatpush2.msra.mxu0 0.0
    %1106 = vmatprep.subr.mxu0 0.0
    %1107 = vmatpush2.msra.mxu0 0.0
    %1108 = vmatprep.subr.mxu0 0.0
    %1109 = vmatpush2.msra.mxu0 0.0
    %1110 = vmatprep.mubr.f32.mxu0 0.0
    %1111 = vmatmul.mubr.f32.gmra.mxu0 %v1044
    %v1112 = vpop.f32.mrf.mxu0
    %v1113 = vadd.f32 0.0, %v1112
    %v1114 = vpop.f32.mrf.mxu0
    %1115 = vdwg.mxu0
    %v1117 = vsel %vm275, %v1113, 0
    %1119 = vmatprep.subr.mxu0 0.0
    %1120 = vmatpush1.msra.mxu0 0.0
    %1121 = vmatprep.subr.mxu0 0.0
    %1122 = vmatpush1.msra.mxu0 0.0
    %1123 = vmatprep.subr.mxu0 0.0
    %1124 = vmatpush1.msra.mxu0 0.0
    %1125 = vmatprep.subr.mxu0 0.0
    %1126 = vmatpush1.msra.mxu0 0.0
    %1127 = vmatprep.subr.mxu0 0.0
    %1128 = vmatpush1.msra.mxu0 0.0
    %1129 = vmatprep.subr.mxu0 0.0
    %1130 = vmatpush1.msra.mxu0 0.0
    %1131 = vmatprep.subr.mxu0 0.0
    %1132 = vmatpush1.msra.mxu0 0.0
    %1133 = vmatprep.subr.mxu0 0.0
    %1134 = vmatpush1.msra.mxu0 0.0
    %1135 = vmatprep.subr.mxu0 0.0
    %1136 = vmatpush1.msra.mxu0 0.0
    %1137 = vmatprep.subr.mxu0 0.0
    %1138 = vmatpush1.msra.mxu0 0.0
    %1139 = vmatprep.subr.mxu0 0.0
    %1140 = vmatpush1.msra.mxu0 0.0
    %1141 = vmatprep.subr.mxu0 0.0
    %1142 = vmatpush1.msra.mxu0 0.0
    %1143 = vmatprep.subr.mxu0 0.0
    %1144 = vmatpush1.msra.mxu0 %v157
    %1145 = vmatprep.subr.mxu0 0.0
    %1146 = vmatpush1.msra.mxu0 %v156
    %1147 = vmatprep.subr.mxu0 0.0
    %1148 = vmatpush1.msra.mxu0 %v155
    %1149 = vmatprep.subr.mxu0 0.0
    %1150 = vmatpush1.msra.mxu0 %v154
    %1151 = vmatprep.subr.mxu0 0.0
    %1152 = vmatpush2.msra.mxu0 0.0
    %1153 = vmatprep.subr.mxu0 0.0
    %1154 = vmatpush2.msra.mxu0 0.0
    %1155 = vmatprep.subr.mxu0 0.0
    %1156 = vmatpush2.msra.mxu0 0.0
    %1157 = vmatprep.subr.mxu0 0.0
    %1158 = vmatpush2.msra.mxu0 0.0
    %1159 = vmatprep.subr.mxu0 0.0
    %1160 = vmatpush2.msra.mxu0 0.0
    %1161 = vmatprep.subr.mxu0 0.0
    %1162 = vmatpush2.msra.mxu0 0.0
    %1163 = vmatprep.subr.mxu0 0.0
    %1164 = vmatpush2.msra.mxu0 0.0
    %1165 = vmatprep.subr.mxu0 0.0
    %1166 = vmatpush2.msra.mxu0 0.0
    %1167 = vmatprep.subr.mxu0 0.0
    %1168 = vmatpush2.msra.mxu0 0.0
    %1169 = vmatprep.subr.mxu0 0.0
    %1170 = vmatpush2.msra.mxu0 0.0
    %1171 = vmatprep.subr.mxu0 0.0
    %1172 = vmatpush2.msra.mxu0 0.0
    %1173 = vmatprep.subr.mxu0 0.0
    %1174 = vmatpush2.msra.mxu0 0.0
    %1175 = vmatprep.subr.mxu0 0.0
    %1176 = vmatpush2.msra.mxu0 0.0
    %1177 = vmatprep.subr.mxu0 0.0
    %1178 = vmatpush2.msra.mxu0 0.0
    %1179 = vmatprep.subr.mxu0 0.0
    %1180 = vmatpush2.msra.mxu0 0.0
    %1181 = vmatprep.subr.mxu0 0.0
    %1182 = vmatpush2.msra.mxu0 0.0
    %1183 = vmatprep.mubr.f32.mxu0 0.0
    %1184 = vmatmul.mubr.f32.gmra.mxu0 %v1117
    %v1185 = vpop.f32.mrf.mxu0
    %v1186 = vadd.f32 0.0, %v1185
    %v1187 = vpop.f32.mrf.mxu0
    %1188 = vdwg.mxu0
    %v1190 = vsel %vm275, %v1186, 0
    %v1193 = vsel %vm275, %v158, 0
    %1195 = vmatprep.subr.mxu0 0.0
    %1196 = vmatpush1.xpose.msra.mxu0 0.0
    %1197 = vmatprep.subr.mxu0 0.0
    %1198 = vmatpush1.xpose.msra.mxu0 0.0
    %1199 = vmatprep.subr.mxu0 0.0
    %1200 = vmatpush1.xpose.msra.mxu0 0.0
    %1201 = vmatprep.subr.mxu0 0.0
    %1202 = vmatpush1.xpose.msra.mxu0 0.0
    %1203 = vmatprep.subr.mxu0 0.0
    %1204 = vmatpush1.xpose.msra.mxu0 0.0
    %1205 = vmatprep.subr.mxu0 0.0
    %1206 = vmatpush1.xpose.msra.mxu0 0.0
    %1207 = vmatprep.subr.mxu0 0.0
    %1208 = vmatpush1.xpose.msra.mxu0 0.0
    %1209 = vmatprep.subr.mxu0 0.0
    %1210 = vmatpush1.xpose.msra.mxu0 0.0
    %1211 = vmatprep.subr.mxu0 0.0
    %1212 = vmatpush1.xpose.msra.mxu0 0.0
    %1213 = vmatprep.subr.mxu0 0.0
    %1214 = vmatpush1.xpose.msra.mxu0 0.0
    %1215 = vmatprep.subr.mxu0 0.0
    %1216 = vmatpush1.xpose.msra.mxu0 0.0
    %1217 = vmatprep.subr.mxu0 0.0
    %1218 = vmatpush1.xpose.msra.mxu0 0.0
    %1219 = vmatprep.subr.mxu0 0.0
    %1220 = vmatpush1.xpose.msra.mxu0 0.0
    %1221 = vmatprep.subr.mxu0 0.0
    %1222 = vmatpush1.xpose.msra.mxu0 0.0
    %1223 = vmatprep.subr.mxu0 0.0
    %1224 = vmatpush1.xpose.msra.mxu0 0.0
    %1225 = vmatprep.subr.mxu0 0.0
    %1226 = vmatpush1.xpose.msra.mxu0 %v1193
    %1227 = vmatprep.subr.mxu0 0.0
    %1228 = vmatpush2.xpose.msra.mxu0 0.0
    %1229 = vmatprep.subr.mxu0 0.0
    %1230 = vmatpush2.xpose.msra.mxu0 0.0
    %1231 = vmatprep.subr.mxu0 0.0
    %1232 = vmatpush2.xpose.msra.mxu0 0.0
    %1233 = vmatprep.subr.mxu0 0.0
    %1234 = vmatpush2.xpose.msra.mxu0 0.0
    %1235 = vmatprep.subr.mxu0 0.0
    %1236 = vmatpush2.xpose.msra.mxu0 0.0
    %1237 = vmatprep.subr.mxu0 0.0
    %1238 = vmatpush2.xpose.msra.mxu0 0.0
    %1239 = vmatprep.subr.mxu0 0.0
    %1240 = vmatpush2.xpose.msra.mxu0 0.0
    %1241 = vmatprep.subr.mxu0 0.0
    %1242 = vmatpush2.xpose.msra.mxu0 0.0
    %1243 = vmatprep.subr.mxu0 0.0
    %1244 = vmatpush2.xpose.msra.mxu0 0.0
    %1245 = vmatprep.subr.mxu0 0.0
    %1246 = vmatpush2.xpose.msra.mxu0 0.0
    %1247 = vmatprep.subr.mxu0 0.0
    %1248 = vmatpush2.xpose.msra.mxu0 0.0
    %1249 = vmatprep.subr.mxu0 0.0
    %1250 = vmatpush2.xpose.msra.mxu0 0.0
    %1251 = vmatprep.subr.mxu0 0.0
    %1252 = vmatpush2.xpose.msra.mxu0 0.0
    %1253 = vmatprep.subr.mxu0 0.0
    %1254 = vmatpush2.xpose.msra.mxu0 0.0
    %1255 = vmatprep.subr.mxu0 0.0
    %1256 = vmatpush2.xpose.msra.mxu0 0.0
    %1257 = vmatprep.subr.mxu0 0.0
    %1258 = vmatpush2.xpose.msra.mxu0 0.0
    %1259 = vmatprep.mubr.f32.mxu0 0.0
    %1260 = vmatmul.mubr.f32.gmra.mxu0 %v1190
    %v1261 = vpop.f32.mrf.mxu0
    %v1262 = vadd.f32 0.0, %v1261
    %v1263 = vpop.f32.mrf.mxu0
    %1264 = vdwg.mxu0
    %v1266 = vsel %vm275, %v159, 0
    %1268 = vmatprep.subr.mxu0 0.0
    %1269 = vmatpush1.xpose.msra.mxu0 0.0
    %1270 = vmatprep.subr.mxu0 0.0
    %1271 = vmatpush1.xpose.msra.mxu0 0.0
    %1272 = vmatprep.subr.mxu0 0.0
    %1273 = vmatpush1.xpose.msra.mxu0 0.0
    %1274 = vmatprep.subr.mxu0 0.0
    %1275 = vmatpush1.xpose.msra.mxu0 0.0
    %1276 = vmatprep.subr.mxu0 0.0
    %1277 = vmatpush1.xpose.msra.mxu0 0.0
    %1278 = vmatprep.subr.mxu0 0.0
    %1279 = vmatpush1.xpose.msra.mxu0 0.0
    %1280 = vmatprep.subr.mxu0 0.0
    %1281 = vmatpush1.xpose.msra.mxu0 0.0
    %1282 = vmatprep.subr.mxu0 0.0
    %1283 = vmatpush1.xpose.msra.mxu0 0.0
    %1284 = vmatprep.subr.mxu0 0.0
    %1285 = vmatpush1.xpose.msra.mxu0 0.0
    %1286 = vmatprep.subr.mxu0 0.0
    %1287 = vmatpush1.xpose.msra.mxu0 0.0
    %1288 = vmatprep.subr.mxu0 0.0
    %1289 = vmatpush1.xpose.msra.mxu0 0.0
    %1290 = vmatprep.subr.mxu0 0.0
    %1291 = vmatpush1.xpose.msra.mxu0 0.0
    %1292 = vmatprep.subr.mxu0 0.0
    %1293 = vmatpush1.xpose.msra.mxu0 0.0
    %1294 = vmatprep.subr.mxu0 0.0
    %1295 = vmatpush1.xpose.msra.mxu0 0.0
    %1296 = vmatprep.subr.mxu0 0.0
    %1297 = vmatpush1.xpose.msra.mxu0 0.0
    %1298 = vmatprep.subr.mxu0 0.0
    %1299 = vmatpush1.xpose.msra.mxu0 %v1190
    %1300 = vmatprep.subr.mxu0 0.0
    %1301 = vmatpush2.xpose.msra.mxu0 0.0
    %1302 = vmatprep.subr.mxu0 0.0
    %1303 = vmatpush2.xpose.msra.mxu0 0.0
    %1304 = vmatprep.subr.mxu0 0.0
    %1305 = vmatpush2.xpose.msra.mxu0 0.0
    %1306 = vmatprep.subr.mxu0 0.0
    %1307 = vmatpush2.xpose.msra.mxu0 0.0
    %1308 = vmatprep.subr.mxu0 0.0
    %1309 = vmatpush2.xpose.msra.mxu0 0.0
    %1310 = vmatprep.subr.mxu0 0.0
    %1311 = vmatpush2.xpose.msra.mxu0 0.0
    %1312 = vmatprep.subr.mxu0 0.0
    %1313 = vmatpush2.xpose.msra.mxu0 0.0
    %1314 = vmatprep.subr.mxu0 0.0
    %1315 = vmatpush2.xpose.msra.mxu0 0.0
    %1316 = vmatprep.subr.mxu0 0.0
    %1317 = vmatpush2.xpose.msra.mxu0 0.0
    %1318 = vmatprep.subr.mxu0 0.0
    %1319 = vmatpush2.xpose.msra.mxu0 0.0
    %1320 = vmatprep.subr.mxu0 0.0
    %1321 = vmatpush2.xpose.msra.mxu0 0.0
    %1322 = vmatprep.subr.mxu0 0.0
    %1323 = vmatpush2.xpose.msra.mxu0 0.0
    %1324 = vmatprep.subr.mxu0 0.0
    %1325 = vmatpush2.xpose.msra.mxu0 0.0
    %1326 = vmatprep.subr.mxu0 0.0
    %1327 = vmatpush2.xpose.msra.mxu0 0.0
    %1328 = vmatprep.subr.mxu0 0.0
    %1329 = vmatpush2.xpose.msra.mxu0 0.0
    %1330 = vmatprep.subr.mxu0 0.0
    %1331 = vmatpush2.xpose.msra.mxu0 0.0
    %1332 = vmatprep.mubr.f32.mxu0 0.0
    %1333 = vmatmul.mubr.f32.gmra.mxu0 %v1266
    %v1334 = vpop.f32.mrf.mxu0
    %v1335 = vadd.f32 0.0, %v1334
    %v1336 = vpop.f32.mrf.mxu0
    %1337 = vdwg.mxu0
    %1339 = vset.pattern.permute.xlu0 0
    %1340 = vperm.xlu0 %1339, %v1262
    %v1341 = vpop.permute.xlu0 %1340
    %v1343 = vlaneseq
    %v1344 = vshrl.u32 %v1343, 7
    %v1345 = vsub.s32 0, %v1344
    %v1346 = vrot.slane %v1335, %v1345
    %v1347 = vadd.f32 %v1341, %v1346
    %vm1348 = vcmp.gt.f32.partialorder %v1347, 0.0
    %v1349 = vmul.f32 %v1347, 0.2
    %v1350 = vsel %vm1348, %v1347, %v1349
    %vm1351 = vcmp.gt.f32.partialorder %v186, 0.0
    %v1352 = vsel %vm1351, %v1350, -9e+15
    %v1353 = vsel %vm193, %v1352, -inf
    %1354 = vmax.xlane.f32.xlu0 %v1353
    %v1355 = vpop.xlane.xlu0 %1354
    %v1356 = vsub.f32 %v1352, %v1355
    %v1357 = vmul.f32 %v1356, 1.442695
    %v1358 = vpow.pop %v1357
    %v1359 = vsel %vm193, %v1358, 0.0
    %1360 = vadd.xlane.f32.xlu0 %v1359
    %v1361 = vpop.xlane.xlu0 %1360
    %v1362 = vrcp.pop %v1361
    %v1363 = vmul.f32 %v1358, %v1362
    %v1364 = vmul.f32 %v1186, %v129
    %1365 = vset.pattern.permute.xlu0 1
    %1366 = vperm.xlu0 %1365, %v1262
    %v1367 = vpop.permute.xlu0 %1366
    %v1369 = vlaneseq
    %v1370 = vshrl.u32 %v1369, 7
    %v1371 = vsub.s32 1, %v1370
    %v1372 = vrot.slane %v1335, %v1371
    %v1373 = vadd.f32 %v1367, %v1372
    %vm1374 = vcmp.gt.f32.partialorder %v1373, 0.0
    %v1375 = vmul.f32 %v1373, 0.2
    %v1376 = vsel %vm1374, %v1373, %v1375
    %v1377 = vsel %vm1351, %v1376, -9e+15
    %v1378 = vsel %vm193, %v1377, -inf
    %1379 = vmax.xlane.f32.xlu0 %v1378
    %v1380 = vpop.xlane.xlu0 %1379
    %v1381 = vsub.f32 %v1377, %v1380
    %v1382 = vmul.f32 %v1381, 1.442695
    %v1383 = vpow.pop %v1382
    %v1384 = vsel %vm193, %v1383, 0.0
    %1385 = vadd.xlane.f32.xlu0 %v1384
    %v1386 = vpop.xlane.xlu0 %1385
    %v1387 = vrcp.pop %v1386
    %v1388 = vmul.f32 %v1383, %v1387
    %v1389 = vmul.f32 %v1186, %v134
    %v1391 = vsel %vm193, %v1388, 0
    %1393 = vmatprep.subr.mxu0 0.0
    %1394 = vmatpush1.msra.mxu0 0.0
    %1395 = vmatprep.subr.mxu0 0.0
    %1396 = vmatpush1.msra.mxu0 0.0
    %1397 = vmatprep.subr.mxu0 0.0
    %1398 = vmatpush1.msra.mxu0 0.0
    %1399 = vmatprep.subr.mxu0 0.0
    %1400 = vmatpush1.msra.mxu0 0.0
    %1401 = vmatprep.subr.mxu0 0.0
    %1402 = vmatpush1.msra.mxu0 0.0
    %1403 = vmatprep.subr.mxu0 0.0
    %1404 = vmatpush1.msra.mxu0 0.0
    %1405 = vmatprep.subr.mxu0 0.0
    %1406 = vmatpush1.msra.mxu0 0.0
    %1407 = vmatprep.subr.mxu0 0.0
    %1408 = vmatpush1.msra.mxu0 0.0
    %1409 = vmatprep.subr.mxu0 0.0
    %1410 = vmatpush1.msra.mxu0 0.0
    %1411 = vmatprep.subr.mxu0 0.0
    %1412 = vmatpush1.msra.mxu0 0.0
    %1413 = vmatprep.subr.mxu0 0.0
    %1414 = vmatpush1.msra.mxu0 0.0
    %1415 = vmatprep.subr.mxu0 0.0
    %1416 = vmatpush1.msra.mxu0 0.0
    %1417 = vmatprep.subr.mxu0 0.0
    %1418 = vmatpush1.msra.mxu0 0.0
    %1419 = vmatprep.subr.mxu0 0.0
    %1420 = vmatpush1.msra.mxu0 0.0
    %1421 = vmatprep.subr.mxu0 0.0
    %1422 = vmatpush1.msra.mxu0 0.0
    %1423 = vmatprep.subr.mxu0 0.0
    %1424 = vmatpush1.msra.mxu0 %v1389
    %1425 = vmatprep.subr.mxu0 0.0
    %1426 = vmatpush2.msra.mxu0 0.0
    %1427 = vmatprep.subr.mxu0 0.0
    %1428 = vmatpush2.msra.mxu0 0.0
    %1429 = vmatprep.subr.mxu0 0.0
    %1430 = vmatpush2.msra.mxu0 0.0
    %1431 = vmatprep.subr.mxu0 0.0
    %1432 = vmatpush2.msra.mxu0 0.0
    %1433 = vmatprep.subr.mxu0 0.0
    %1434 = vmatpush2.msra.mxu0 0.0
    %1435 = vmatprep.subr.mxu0 0.0
    %1436 = vmatpush2.msra.mxu0 0.0
    %1437 = vmatprep.subr.mxu0 0.0
    %1438 = vmatpush2.msra.mxu0 0.0
    %1439 = vmatprep.subr.mxu0 0.0
    %1440 = vmatpush2.msra.mxu0 0.0
    %1441 = vmatprep.subr.mxu0 0.0
    %1442 = vmatpush2.msra.mxu0 0.0
    %1443 = vmatprep.subr.mxu0 0.0
    %1444 = vmatpush2.msra.mxu0 0.0
    %1445 = vmatprep.subr.mxu0 0.0
    %1446 = vmatpush2.msra.mxu0 0.0
    %1447 = vmatprep.subr.mxu0 0.0
    %1448 = vmatpush2.msra.mxu0 0.0
    %1449 = vmatprep.subr.mxu0 0.0
    %1450 = vmatpush2.msra.mxu0 0.0
    %1451 = vmatprep.subr.mxu0 0.0
    %1452 = vmatpush2.msra.mxu0 0.0
    %1453 = vmatprep.subr.mxu0 0.0
    %1454 = vmatpush2.msra.mxu0 0.0
    %1455 = vmatprep.subr.mxu0 0.0
    %1456 = vmatpush2.msra.mxu0 0.0
    %1457 = vmatprep.mubr.f32.mxu0 0.0
    %1458 = vmatmul.mubr.f32.gmra.mxu0 %v1391
    %v1459 = vpop.f32.mrf.mxu0
    %v1460 = vadd.f32 0.0, %v1459
    %v1461 = vpop.f32.mrf.mxu0
    %1462 = vdwg.mxu0
    %v1464 = vsel %vm193, %v1363, 0
    %1466 = vmatprep.subr.mxu0 0.0
    %1467 = vmatpush1.msra.mxu0 0.0
    %1468 = vmatprep.subr.mxu0 0.0
    %1469 = vmatpush1.msra.mxu0 0.0
    %1470 = vmatprep.subr.mxu0 0.0
    %1471 = vmatpush1.msra.mxu0 0.0
    %1472 = vmatprep.subr.mxu0 0.0
    %1473 = vmatpush1.msra.mxu0 0.0
    %1474 = vmatprep.subr.mxu0 0.0
    %1475 = vmatpush1.msra.mxu0 0.0
    %1476 = vmatprep.subr.mxu0 0.0
    %1477 = vmatpush1.msra.mxu0 0.0
    %1478 = vmatprep.subr.mxu0 0.0
    %1479 = vmatpush1.msra.mxu0 0.0
    %1480 = vmatprep.subr.mxu0 0.0
    %1481 = vmatpush1.msra.mxu0 0.0
    %1482 = vmatprep.subr.mxu0 0.0
    %1483 = vmatpush1.msra.mxu0 0.0
    %1484 = vmatprep.subr.mxu0 0.0
    %1485 = vmatpush1.msra.mxu0 0.0
    %1486 = vmatprep.subr.mxu0 0.0
    %1487 = vmatpush1.msra.mxu0 0.0
    %1488 = vmatprep.subr.mxu0 0.0
    %1489 = vmatpush1.msra.mxu0 0.0
    %1490 = vmatprep.subr.mxu0 0.0
    %1491 = vmatpush1.msra.mxu0 0.0
    %1492 = vmatprep.subr.mxu0 0.0
    %1493 = vmatpush1.msra.mxu0 0.0
    %1494 = vmatprep.subr.mxu0 0.0
    %1495 = vmatpush1.msra.mxu0 0.0
    %1496 = vmatprep.subr.mxu0 0.0
    %1497 = vmatpush1.msra.mxu0 %v1364
    %1498 = vmatprep.subr.mxu0 0.0
    %1499 = vmatpush2.msra.mxu0 0.0
    %1500 = vmatprep.subr.mxu0 0.0
    %1501 = vmatpush2.msra.mxu0 0.0
    %1502 = vmatprep.subr.mxu0 0.0
    %1503 = vmatpush2.msra.mxu0 0.0
    %1504 = vmatprep.subr.mxu0 0.0
    %1505 = vmatpush2.msra.mxu0 0.0
    %1506 = vmatprep.subr.mxu0 0.0
    %1507 = vmatpush2.msra.mxu0 0.0
    %1508 = vmatprep.subr.mxu0 0.0
    %1509 = vmatpush2.msra.mxu0 0.0
    %1510 = vmatprep.subr.mxu0 0.0
    %1511 = vmatpush2.msra.mxu0 0.0
    %1512 = vmatprep.subr.mxu0 0.0
    %1513 = vmatpush2.msra.mxu0 0.0
    %1514 = vmatprep.subr.mxu0 0.0
    %1515 = vmatpush2.msra.mxu0 0.0
    %1516 = vmatprep.subr.mxu0 0.0
    %1517 = vmatpush2.msra.mxu0 0.0
    %1518 = vmatprep.subr.mxu0 0.0
    %1519 = vmatpush2.msra.mxu0 0.0
    %1520 = vmatprep.subr.mxu0 0.0
    %1521 = vmatpush2.msra.mxu0 0.0
    %1522 = vmatprep.subr.mxu0 0.0
    %1523 = vmatpush2.msra.mxu0 0.0
    %1524 = vmatprep.subr.mxu0 0.0
    %1525 = vmatpush2.msra.mxu0 0.0
    %1526 = vmatprep.subr.mxu0 0.0
    %1527 = vmatpush2.msra.mxu0 0.0
    %1528 = vmatprep.subr.mxu0 0.0
    %1529 = vmatpush2.msra.mxu0 0.0
    %1530 = vmatprep.mubr.f32.mxu0 0.0
    %1531 = vmatmul.mubr.f32.gmra.mxu0 %v1464
    %v1532 = vpop.f32.mrf.mxu0
    %v1533 = vadd.f32 %v1460, %v1532
    %v1534 = vpop.f32.mrf.mxu0
    %1535 = vdwg.mxu0
    %1536 = vset.pattern.permute.xlu0 2
    %1537 = vperm.xlu0 %1536, %v1262
    %v1538 = vpop.permute.xlu0 %1537
    %v1540 = vlaneseq
    %v1541 = vshrl.u32 %v1540, 7
    %v1542 = vsub.s32 2, %v1541
    %v1543 = vrot.slane %v1335, %v1542
    %v1544 = vadd.f32 %v1538, %v1543
    %vm1545 = vcmp.gt.f32.partialorder %v1544, 0.0
    %v1546 = vmul.f32 %v1544, 0.2
    %v1547 = vsel %vm1545, %v1544, %v1546
    %v1548 = vsel %vm1351, %v1547, -9e+15
    %v1549 = vsel %vm193, %v1548, -inf
    %1550 = vmax.xlane.f32.xlu0 %v1549
    %v1551 = vpop.xlane.xlu0 %1550
    %v1552 = vsub.f32 %v1548, %v1551
    %v1553 = vmul.f32 %v1552, 1.442695
    %v1554 = vpow.pop %v1553
    %v1555 = vsel %vm193, %v1554, 0.0
    %1556 = vadd.xlane.f32.xlu0 %v1555
    %v1557 = vpop.xlane.xlu0 %1556
    %v1558 = vrcp.pop %v1557
    %v1559 = vmul.f32 %v1554, %v1558
    %v1560 = vmul.f32 %v1186, %v139
    %v1562 = vsel %vm193, %v1559, 0
    %1564 = vmatprep.subr.mxu0 0.0
    %1565 = vmatpush1.msra.mxu0 0.0
    %1566 = vmatprep.subr.mxu0 0.0
    %1567 = vmatpush1.msra.mxu0 0.0
    %1568 = vmatprep.subr.mxu0 0.0
    %1569 = vmatpush1.msra.mxu0 0.0
    %1570 = vmatprep.subr.mxu0 0.0
    %1571 = vmatpush1.msra.mxu0 0.0
    %1572 = vmatprep.subr.mxu0 0.0
    %1573 = vmatpush1.msra.mxu0 0.0
    %1574 = vmatprep.subr.mxu0 0.0
    %1575 = vmatpush1.msra.mxu0 0.0
    %1576 = vmatprep.subr.mxu0 0.0
    %1577 = vmatpush1.msra.mxu0 0.0
    %1578 = vmatprep.subr.mxu0 0.0
    %1579 = vmatpush1.msra.mxu0 0.0
    %1580 = vmatprep.subr.mxu0 0.0
    %1581 = vmatpush1.msra.mxu0 0.0
    %1582 = vmatprep.subr.mxu0 0.0
    %1583 = vmatpush1.msra.mxu0 0.0
    %1584 = vmatprep.subr.mxu0 0.0
    %1585 = vmatpush1.msra.mxu0 0.0
    %1586 = vmatprep.subr.mxu0 0.0
    %1587 = vmatpush1.msra.mxu0 0.0
    %1588 = vmatprep.subr.mxu0 0.0
    %1589 = vmatpush1.msra.mxu0 0.0
    %1590 = vmatprep.subr.mxu0 0.0
    %1591 = vmatpush1.msra.mxu0 0.0
    %1592 = vmatprep.subr.mxu0 0.0
    %1593 = vmatpush1.msra.mxu0 0.0
    %1594 = vmatprep.subr.mxu0 0.0
    %1595 = vmatpush1.msra.mxu0 %v1560
    %1596 = vmatprep.subr.mxu0 0.0
    %1597 = vmatpush2.msra.mxu0 0.0
    %1598 = vmatprep.subr.mxu0 0.0
    %1599 = vmatpush2.msra.mxu0 0.0
    %1600 = vmatprep.subr.mxu0 0.0
    %1601 = vmatpush2.msra.mxu0 0.0
    %1602 = vmatprep.subr.mxu0 0.0
    %1603 = vmatpush2.msra.mxu0 0.0
    %1604 = vmatprep.subr.mxu0 0.0
    %1605 = vmatpush2.msra.mxu0 0.0
    %1606 = vmatprep.subr.mxu0 0.0
    %1607 = vmatpush2.msra.mxu0 0.0
    %1608 = vmatprep.subr.mxu0 0.0
    %1609 = vmatpush2.msra.mxu0 0.0
    %1610 = vmatprep.subr.mxu0 0.0
    %1611 = vmatpush2.msra.mxu0 0.0
    %1612 = vmatprep.subr.mxu0 0.0
    %1613 = vmatpush2.msra.mxu0 0.0
    %1614 = vmatprep.subr.mxu0 0.0
    %1615 = vmatpush2.msra.mxu0 0.0
    %1616 = vmatprep.subr.mxu0 0.0
    %1617 = vmatpush2.msra.mxu0 0.0
    %1618 = vmatprep.subr.mxu0 0.0
    %1619 = vmatpush2.msra.mxu0 0.0
    %1620 = vmatprep.subr.mxu0 0.0
    %1621 = vmatpush2.msra.mxu0 0.0
    %1622 = vmatprep.subr.mxu0 0.0
    %1623 = vmatpush2.msra.mxu0 0.0
    %1624 = vmatprep.subr.mxu0 0.0
    %1625 = vmatpush2.msra.mxu0 0.0
    %1626 = vmatprep.subr.mxu0 0.0
    %1627 = vmatpush2.msra.mxu0 0.0
    %1628 = vmatprep.mubr.f32.mxu0 0.0
    %1629 = vmatmul.mubr.f32.gmra.mxu0 %v1562
    %v1630 = vpop.f32.mrf.mxu0
    %v1631 = vadd.f32 0.0, %v1630
    %v1632 = vpop.f32.mrf.mxu0
    %1633 = vdwg.mxu0
    %v1634 = vadd.f32 %v1533, %v1631
    %1635 = vset.pattern.permute.xlu0 3
    %1636 = vperm.xlu0 %1635, %v1262
    %v1637 = vpop.permute.xlu0 %1636
    %v1639 = vlaneseq
    %v1640 = vshrl.u32 %v1639, 7
    %v1641 = vsub.s32 3, %v1640
    %v1642 = vrot.slane %v1335, %v1641
    %v1643 = vadd.f32 %v1637, %v1642
    %vm1644 = vcmp.gt.f32.partialorder %v1643, 0.0
    %v1645 = vmul.f32 %v1643, 0.2
    %v1646 = vsel %vm1644, %v1643, %v1645
    %v1647 = vsel %vm1351, %v1646, -9e+15
    %v1648 = vsel %vm193, %v1647, -inf
    %1649 = vmax.xlane.f32.xlu0 %v1648
    %v1650 = vpop.xlane.xlu0 %1649
    %v1651 = vsub.f32 %v1647, %v1650
    %v1652 = vmul.f32 %v1651, 1.442695
    %v1653 = vpow.pop %v1652
    %v1654 = vsel %vm193, %v1653, 0.0
    %1655 = vadd.xlane.f32.xlu0 %v1654
    %v1656 = vpop.xlane.xlu0 %1655
    %v1657 = vrcp.pop %v1656
    %v1658 = vmul.f32 %v1653, %v1657
    %v1659 = vmul.f32 %v1186, %v144
    %v1661 = vsel %vm193, %v1658, 0
    %1663 = vmatprep.subr.mxu0 0.0
    %1664 = vmatpush1.msra.mxu0 0.0
    %1665 = vmatprep.subr.mxu0 0.0
    %1666 = vmatpush1.msra.mxu0 0.0
    %1667 = vmatprep.subr.mxu0 0.0
    %1668 = vmatpush1.msra.mxu0 0.0
    %1669 = vmatprep.subr.mxu0 0.0
    %1670 = vmatpush1.msra.mxu0 0.0
    %1671 = vmatprep.subr.mxu0 0.0
    %1672 = vmatpush1.msra.mxu0 0.0
    %1673 = vmatprep.subr.mxu0 0.0
    %1674 = vmatpush1.msra.mxu0 0.0
    %1675 = vmatprep.subr.mxu0 0.0
    %1676 = vmatpush1.msra.mxu0 0.0
    %1677 = vmatprep.subr.mxu0 0.0
    %1678 = vmatpush1.msra.mxu0 0.0
    %1679 = vmatprep.subr.mxu0 0.0
    %1680 = vmatpush1.msra.mxu0 0.0
    %1681 = vmatprep.subr.mxu0 0.0
    %1682 = vmatpush1.msra.mxu0 0.0
    %1683 = vmatprep.subr.mxu0 0.0
    %1684 = vmatpush1.msra.mxu0 0.0
    %1685 = vmatprep.subr.mxu0 0.0
    %1686 = vmatpush1.msra.mxu0 0.0
    %1687 = vmatprep.subr.mxu0 0.0
    %1688 = vmatpush1.msra.mxu0 0.0
    %1689 = vmatprep.subr.mxu0 0.0
    %1690 = vmatpush1.msra.mxu0 0.0
    %1691 = vmatprep.subr.mxu0 0.0
    %1692 = vmatpush1.msra.mxu0 0.0
    %1693 = vmatprep.subr.mxu0 0.0
    %1694 = vmatpush1.msra.mxu0 %v1659
    %1695 = vmatprep.subr.mxu0 0.0
    %1696 = vmatpush2.msra.mxu0 0.0
    %1697 = vmatprep.subr.mxu0 0.0
    %1698 = vmatpush2.msra.mxu0 0.0
    %1699 = vmatprep.subr.mxu0 0.0
    %1700 = vmatpush2.msra.mxu0 0.0
    %1701 = vmatprep.subr.mxu0 0.0
    %1702 = vmatpush2.msra.mxu0 0.0
    %1703 = vmatprep.subr.mxu0 0.0
    %1704 = vmatpush2.msra.mxu0 0.0
    %1705 = vmatprep.subr.mxu0 0.0
    %1706 = vmatpush2.msra.mxu0 0.0
    %1707 = vmatprep.subr.mxu0 0.0
    %1708 = vmatpush2.msra.mxu0 0.0
    %1709 = vmatprep.subr.mxu0 0.0
    %1710 = vmatpush2.msra.mxu0 0.0
    %1711 = vmatprep.subr.mxu0 0.0
    %1712 = vmatpush2.msra.mxu0 0.0
    %1713 = vmatprep.subr.mxu0 0.0
    %1714 = vmatpush2.msra.mxu0 0.0
    %1715 = vmatprep.subr.mxu0 0.0
    %1716 = vmatpush2.msra.mxu0 0.0
    %1717 = vmatprep.subr.mxu0 0.0
    %1718 = vmatpush2.msra.mxu0 0.0
    %1719 = vmatprep.subr.mxu0 0.0
    %1720 = vmatpush2.msra.mxu0 0.0
    %1721 = vmatprep.subr.mxu0 0.0
    %1722 = vmatpush2.msra.mxu0 0.0
    %1723 = vmatprep.subr.mxu0 0.0
    %1724 = vmatpush2.msra.mxu0 0.0
    %1725 = vmatprep.subr.mxu0 0.0
    %1726 = vmatpush2.msra.mxu0 0.0
    %1727 = vmatprep.mubr.f32.mxu0 0.0
    %1728 = vmatmul.mubr.f32.gmra.mxu0 %v1661
    %v1729 = vpop.f32.mrf.mxu0
    %v1730 = vadd.f32 0.0, %v1729
    %v1731 = vpop.f32.mrf.mxu0
    %1732 = vdwg.mxu0
    %v1733 = vadd.f32 %v1634, %v1730
    %vm1734 = vcmp.gt.f32.partialorder %v1733, 0.0
    %v1735 = vmin.f32 %v1733, 0.0
    %v1736 = vmul.f32 %v1735, 1.442695
    %v1737 = vpow.pop %v1736
    %v1738 = vsub.f32 %v1737, 1.0
    %v1739 = vsel %vm1734, %v1733, %v1738
    %v1741 = vsel %vm275, %v1739, 0
    %1743 = vmatprep.subr.mxu0 0.0
    %1744 = vmatpush1.msra.mxu0 0.0
    %1745 = vmatprep.subr.mxu0 0.0
    %1746 = vmatpush1.msra.mxu0 0.0
    %1747 = vmatprep.subr.mxu0 0.0
    %1748 = vmatpush1.msra.mxu0 0.0
    %1749 = vmatprep.subr.mxu0 0.0
    %1750 = vmatpush1.msra.mxu0 0.0
    %1751 = vmatprep.subr.mxu0 0.0
    %1752 = vmatpush1.msra.mxu0 0.0
    %1753 = vmatprep.subr.mxu0 0.0
    %1754 = vmatpush1.msra.mxu0 0.0
    %1755 = vmatprep.subr.mxu0 0.0
    %1756 = vmatpush1.msra.mxu0 0.0
    %1757 = vmatprep.subr.mxu0 0.0
    %1758 = vmatpush1.msra.mxu0 0.0
    %1759 = vmatprep.subr.mxu0 0.0
    %1760 = vmatpush1.msra.mxu0 0.0
    %1761 = vmatprep.subr.mxu0 0.0
    %1762 = vmatpush1.msra.mxu0 0.0
    %1763 = vmatprep.subr.mxu0 0.0
    %1764 = vmatpush1.msra.mxu0 0.0
    %1765 = vmatprep.subr.mxu0 0.0
    %1766 = vmatpush1.msra.mxu0 0.0
    %1767 = vmatprep.subr.mxu0 0.0
    %1768 = vmatpush1.msra.mxu0 %v163
    %1769 = vmatprep.subr.mxu0 0.0
    %1770 = vmatpush1.msra.mxu0 %v162
    %1771 = vmatprep.subr.mxu0 0.0
    %1772 = vmatpush1.msra.mxu0 %v161
    %1773 = vmatprep.subr.mxu0 0.0
    %1774 = vmatpush1.msra.mxu0 %v160
    %1775 = vmatprep.subr.mxu0 0.0
    %1776 = vmatpush2.msra.mxu0 0.0
    %1777 = vmatprep.subr.mxu0 0.0
    %1778 = vmatpush2.msra.mxu0 0.0
    %1779 = vmatprep.subr.mxu0 0.0
    %1780 = vmatpush2.msra.mxu0 0.0
    %1781 = vmatprep.subr.mxu0 0.0
    %1782 = vmatpush2.msra.mxu0 0.0
    %1783 = vmatprep.subr.mxu0 0.0
    %1784 = vmatpush2.msra.mxu0 0.0
    %1785 = vmatprep.subr.mxu0 0.0
    %1786 = vmatpush2.msra.mxu0 0.0
    %1787 = vmatprep.subr.mxu0 0.0
    %1788 = vmatpush2.msra.mxu0 0.0
    %1789 = vmatprep.subr.mxu0 0.0
    %1790 = vmatpush2.msra.mxu0 0.0
    %1791 = vmatprep.subr.mxu0 0.0
    %1792 = vmatpush2.msra.mxu0 0.0
    %1793 = vmatprep.subr.mxu0 0.0
    %1794 = vmatpush2.msra.mxu0 0.0
    %1795 = vmatprep.subr.mxu0 0.0
    %1796 = vmatpush2.msra.mxu0 0.0
    %1797 = vmatprep.subr.mxu0 0.0
    %1798 = vmatpush2.msra.mxu0 0.0
    %1799 = vmatprep.subr.mxu0 0.0
    %1800 = vmatpush2.msra.mxu0 0.0
    %1801 = vmatprep.subr.mxu0 0.0
    %1802 = vmatpush2.msra.mxu0 0.0
    %1803 = vmatprep.subr.mxu0 0.0
    %1804 = vmatpush2.msra.mxu0 0.0
    %1805 = vmatprep.subr.mxu0 0.0
    %1806 = vmatpush2.msra.mxu0 0.0
    %1807 = vmatprep.mubr.f32.mxu0 0.0
    %1808 = vmatmul.mubr.f32.gmra.mxu0 %v1741
    %v1809 = vpop.f32.mrf.mxu0
    %v1810 = vadd.f32 0.0, %v1809
    %v1811 = vpop.f32.mrf.mxu0
    %1812 = vdwg.mxu0
    %v1814 = vsel %vm275, %v1810, 0
    %v1817 = vsel %vm275, %v164, 0
    %1819 = vmatprep.subr.mxu0 0.0
    %1820 = vmatpush1.xpose.msra.mxu0 0.0
    %1821 = vmatprep.subr.mxu0 0.0
    %1822 = vmatpush1.xpose.msra.mxu0 0.0
    %1823 = vmatprep.subr.mxu0 0.0
    %1824 = vmatpush1.xpose.msra.mxu0 0.0
    %1825 = vmatprep.subr.mxu0 0.0
    %1826 = vmatpush1.xpose.msra.mxu0 0.0
    %1827 = vmatprep.subr.mxu0 0.0
    %1828 = vmatpush1.xpose.msra.mxu0 0.0
    %1829 = vmatprep.subr.mxu0 0.0
    %1830 = vmatpush1.xpose.msra.mxu0 0.0
    %1831 = vmatprep.subr.mxu0 0.0
    %1832 = vmatpush1.xpose.msra.mxu0 0.0
    %1833 = vmatprep.subr.mxu0 0.0
    %1834 = vmatpush1.xpose.msra.mxu0 0.0
    %1835 = vmatprep.subr.mxu0 0.0
    %1836 = vmatpush1.xpose.msra.mxu0 0.0
    %1837 = vmatprep.subr.mxu0 0.0
    %1838 = vmatpush1.xpose.msra.mxu0 0.0
    %1839 = vmatprep.subr.mxu0 0.0
    %1840 = vmatpush1.xpose.msra.mxu0 0.0
    %1841 = vmatprep.subr.mxu0 0.0
    %1842 = vmatpush1.xpose.msra.mxu0 0.0
    %1843 = vmatprep.subr.mxu0 0.0
    %1844 = vmatpush1.xpose.msra.mxu0 0.0
    %1845 = vmatprep.subr.mxu0 0.0
    %1846 = vmatpush1.xpose.msra.mxu0 0.0
    %1847 = vmatprep.subr.mxu0 0.0
    %1848 = vmatpush1.xpose.msra.mxu0 0.0
    %1849 = vmatprep.subr.mxu0 0.0
    %1850 = vmatpush1.xpose.msra.mxu0 %v1817
    %1851 = vmatprep.subr.mxu0 0.0
    %1852 = vmatpush2.xpose.msra.mxu0 0.0
    %1853 = vmatprep.subr.mxu0 0.0
    %1854 = vmatpush2.xpose.msra.mxu0 0.0
    %1855 = vmatprep.subr.mxu0 0.0
    %1856 = vmatpush2.xpose.msra.mxu0 0.0
    %1857 = vmatprep.subr.mxu0 0.0
    %1858 = vmatpush2.xpose.msra.mxu0 0.0
    %1859 = vmatprep.subr.mxu0 0.0
    %1860 = vmatpush2.xpose.msra.mxu0 0.0
    %1861 = vmatprep.subr.mxu0 0.0
    %1862 = vmatpush2.xpose.msra.mxu0 0.0
    %1863 = vmatprep.subr.mxu0 0.0
    %1864 = vmatpush2.xpose.msra.mxu0 0.0
    %1865 = vmatprep.subr.mxu0 0.0
    %1866 = vmatpush2.xpose.msra.mxu0 0.0
    %1867 = vmatprep.subr.mxu0 0.0
    %1868 = vmatpush2.xpose.msra.mxu0 0.0
    %1869 = vmatprep.subr.mxu0 0.0
    %1870 = vmatpush2.xpose.msra.mxu0 0.0
    %1871 = vmatprep.subr.mxu0 0.0
    %1872 = vmatpush2.xpose.msra.mxu0 0.0
    %1873 = vmatprep.subr.mxu0 0.0
    %1874 = vmatpush2.xpose.msra.mxu0 0.0
    %1875 = vmatprep.subr.mxu0 0.0
    %1876 = vmatpush2.xpose.msra.mxu0 0.0
    %1877 = vmatprep.subr.mxu0 0.0
    %1878 = vmatpush2.xpose.msra.mxu0 0.0
    %1879 = vmatprep.subr.mxu0 0.0
    %1880 = vmatpush2.xpose.msra.mxu0 0.0
    %1881 = vmatprep.subr.mxu0 0.0
    %1882 = vmatpush2.xpose.msra.mxu0 0.0
    %1883 = vmatprep.mubr.f32.mxu0 0.0
    %1884 = vmatmul.mubr.f32.gmra.mxu0 %v1814
    %v1885 = vpop.f32.mrf.mxu0
    %v1886 = vadd.f32 0.0, %v1885
    %v1887 = vpop.f32.mrf.mxu0
    %1888 = vdwg.mxu0
    %v1890 = vsel %vm275, %v165, 0
    %1892 = vmatprep.subr.mxu0 0.0
    %1893 = vmatpush1.xpose.msra.mxu0 0.0
    %1894 = vmatprep.subr.mxu0 0.0
    %1895 = vmatpush1.xpose.msra.mxu0 0.0
    %1896 = vmatprep.subr.mxu0 0.0
    %1897 = vmatpush1.xpose.msra.mxu0 0.0
    %1898 = vmatprep.subr.mxu0 0.0
    %1899 = vmatpush1.xpose.msra.mxu0 0.0
    %1900 = vmatprep.subr.mxu0 0.0
    %1901 = vmatpush1.xpose.msra.mxu0 0.0
    %1902 = vmatprep.subr.mxu0 0.0
    %1903 = vmatpush1.xpose.msra.mxu0 0.0
    %1904 = vmatprep.subr.mxu0 0.0
    %1905 = vmatpush1.xpose.msra.mxu0 0.0
    %1906 = vmatprep.subr.mxu0 0.0
    %1907 = vmatpush1.xpose.msra.mxu0 0.0
    %1908 = vmatprep.subr.mxu0 0.0
    %1909 = vmatpush1.xpose.msra.mxu0 0.0
    %1910 = vmatprep.subr.mxu0 0.0
    %1911 = vmatpush1.xpose.msra.mxu0 0.0
    %1912 = vmatprep.subr.mxu0 0.0
    %1913 = vmatpush1.xpose.msra.mxu0 0.0
    %1914 = vmatprep.subr.mxu0 0.0
    %1915 = vmatpush1.xpose.msra.mxu0 0.0
    %1916 = vmatprep.subr.mxu0 0.0
    %1917 = vmatpush1.xpose.msra.mxu0 0.0
    %1918 = vmatprep.subr.mxu0 0.0
    %1919 = vmatpush1.xpose.msra.mxu0 0.0
    %1920 = vmatprep.subr.mxu0 0.0
    %1921 = vmatpush1.xpose.msra.mxu0 0.0
    %1922 = vmatprep.subr.mxu0 0.0
    %1923 = vmatpush1.xpose.msra.mxu0 %v1814
    %1924 = vmatprep.subr.mxu0 0.0
    %1925 = vmatpush2.xpose.msra.mxu0 0.0
    %1926 = vmatprep.subr.mxu0 0.0
    %1927 = vmatpush2.xpose.msra.mxu0 0.0
    %1928 = vmatprep.subr.mxu0 0.0
    %1929 = vmatpush2.xpose.msra.mxu0 0.0
    %1930 = vmatprep.subr.mxu0 0.0
    %1931 = vmatpush2.xpose.msra.mxu0 0.0
    %1932 = vmatprep.subr.mxu0 0.0
    %1933 = vmatpush2.xpose.msra.mxu0 0.0
    %1934 = vmatprep.subr.mxu0 0.0
    %1935 = vmatpush2.xpose.msra.mxu0 0.0
    %1936 = vmatprep.subr.mxu0 0.0
    %1937 = vmatpush2.xpose.msra.mxu0 0.0
    %1938 = vmatprep.subr.mxu0 0.0
    %1939 = vmatpush2.xpose.msra.mxu0 0.0
    %1940 = vmatprep.subr.mxu0 0.0
    %1941 = vmatpush2.xpose.msra.mxu0 0.0
    %1942 = vmatprep.subr.mxu0 0.0
    %1943 = vmatpush2.xpose.msra.mxu0 0.0
    %1944 = vmatprep.subr.mxu0 0.0
    %1945 = vmatpush2.xpose.msra.mxu0 0.0
    %1946 = vmatprep.subr.mxu0 0.0
    %1947 = vmatpush2.xpose.msra.mxu0 0.0
    %1948 = vmatprep.subr.mxu0 0.0
    %1949 = vmatpush2.xpose.msra.mxu0 0.0
    %1950 = vmatprep.subr.mxu0 0.0
    %1951 = vmatpush2.xpose.msra.mxu0 0.0
    %1952 = vmatprep.subr.mxu0 0.0
    %1953 = vmatpush2.xpose.msra.mxu0 0.0
    %1954 = vmatprep.subr.mxu0 0.0
    %1955 = vmatpush2.xpose.msra.mxu0 0.0
    %1956 = vmatprep.mubr.f32.mxu0 0.0
    %1957 = vmatmul.mubr.f32.gmra.mxu0 %v1890
    %v1958 = vpop.f32.mrf.mxu0
    %v1959 = vadd.f32 0.0, %v1958
    %v1960 = vpop.f32.mrf.mxu0
    %1961 = vdwg.mxu0
    %1963 = vset.pattern.permute.xlu0 0
    %1964 = vperm.xlu0 %1963, %v1886
    %v1965 = vpop.permute.xlu0 %1964
    %v1967 = vlaneseq
    %v1968 = vshrl.u32 %v1967, 7
    %v1969 = vsub.s32 0, %v1968
    %v1970 = vrot.slane %v1959, %v1969
    %v1971 = vadd.f32 %v1965, %v1970
    %vm1972 = vcmp.gt.f32.partialorder %v1971, 0.0
    %v1973 = vmul.f32 %v1971, 0.2
    %v1974 = vsel %vm1972, %v1971, %v1973
    %v1975 = vsel %vm1351, %v1974, -9e+15
    %v1976 = vsel %vm193, %v1975, -inf
    %1977 = vmax.xlane.f32.xlu0 %v1976
    %v1978 = vpop.xlane.xlu0 %1977
    %v1979 = vsub.f32 %v1975, %v1978
    %v1980 = vmul.f32 %v1979, 1.442695
    %v1981 = vpow.pop %v1980
    %v1982 = vsel %vm193, %v1981, 0.0
    %1983 = vadd.xlane.f32.xlu0 %v1982
    %v1984 = vpop.xlane.xlu0 %1983
    %v1985 = vrcp.pop %v1984
    %v1986 = vmul.f32 %v1981, %v1985
    %v1987 = vmul.f32 %v1810, %v129
    %1988 = vset.pattern.permute.xlu0 1
    %1989 = vperm.xlu0 %1988, %v1886
    %v1990 = vpop.permute.xlu0 %1989
    %v1992 = vlaneseq
    %v1993 = vshrl.u32 %v1992, 7
    %v1994 = vsub.s32 1, %v1993
    %v1995 = vrot.slane %v1959, %v1994
    %v1996 = vadd.f32 %v1990, %v1995
    %vm1997 = vcmp.gt.f32.partialorder %v1996, 0.0
    %v1998 = vmul.f32 %v1996, 0.2
    %v1999 = vsel %vm1997, %v1996, %v1998
    %v2000 = vsel %vm1351, %v1999, -9e+15
    %v2001 = vsel %vm193, %v2000, -inf
    %2002 = vmax.xlane.f32.xlu0 %v2001
    %v2003 = vpop.xlane.xlu0 %2002
    %v2004 = vsub.f32 %v2000, %v2003
    %v2005 = vmul.f32 %v2004, 1.442695
    %v2006 = vpow.pop %v2005
    %v2007 = vsel %vm193, %v2006, 0.0
    %2008 = vadd.xlane.f32.xlu0 %v2007
    %v2009 = vpop.xlane.xlu0 %2008
    %v2010 = vrcp.pop %v2009
    %v2011 = vmul.f32 %v2006, %v2010
    %v2012 = vmul.f32 %v1810, %v134
    %v2014 = vsel %vm193, %v2011, 0
    %2016 = vmatprep.subr.mxu0 0.0
    %2017 = vmatpush1.msra.mxu0 0.0
    %2018 = vmatprep.subr.mxu0 0.0
    %2019 = vmatpush1.msra.mxu0 0.0
    %2020 = vmatprep.subr.mxu0 0.0
    %2021 = vmatpush1.msra.mxu0 0.0
    %2022 = vmatprep.subr.mxu0 0.0
    %2023 = vmatpush1.msra.mxu0 0.0
    %2024 = vmatprep.subr.mxu0 0.0
    %2025 = vmatpush1.msra.mxu0 0.0
    %2026 = vmatprep.subr.mxu0 0.0
    %2027 = vmatpush1.msra.mxu0 0.0
    %2028 = vmatprep.subr.mxu0 0.0
    %2029 = vmatpush1.msra.mxu0 0.0
    %2030 = vmatprep.subr.mxu0 0.0
    %2031 = vmatpush1.msra.mxu0 0.0
    %2032 = vmatprep.subr.mxu0 0.0
    %2033 = vmatpush1.msra.mxu0 0.0
    %2034 = vmatprep.subr.mxu0 0.0
    %2035 = vmatpush1.msra.mxu0 0.0
    %2036 = vmatprep.subr.mxu0 0.0
    %2037 = vmatpush1.msra.mxu0 0.0
    %2038 = vmatprep.subr.mxu0 0.0
    %2039 = vmatpush1.msra.mxu0 0.0
    %2040 = vmatprep.subr.mxu0 0.0
    %2041 = vmatpush1.msra.mxu0 0.0
    %2042 = vmatprep.subr.mxu0 0.0
    %2043 = vmatpush1.msra.mxu0 0.0
    %2044 = vmatprep.subr.mxu0 0.0
    %2045 = vmatpush1.msra.mxu0 0.0
    %2046 = vmatprep.subr.mxu0 0.0
    %2047 = vmatpush1.msra.mxu0 %v2012
    %2048 = vmatprep.subr.mxu0 0.0
    %2049 = vmatpush2.msra.mxu0 0.0
    %2050 = vmatprep.subr.mxu0 0.0
    %2051 = vmatpush2.msra.mxu0 0.0
    %2052 = vmatprep.subr.mxu0 0.0
    %2053 = vmatpush2.msra.mxu0 0.0
    %2054 = vmatprep.subr.mxu0 0.0
    %2055 = vmatpush2.msra.mxu0 0.0
    %2056 = vmatprep.subr.mxu0 0.0
    %2057 = vmatpush2.msra.mxu0 0.0
    %2058 = vmatprep.subr.mxu0 0.0
    %2059 = vmatpush2.msra.mxu0 0.0
    %2060 = vmatprep.subr.mxu0 0.0
    %2061 = vmatpush2.msra.mxu0 0.0
    %2062 = vmatprep.subr.mxu0 0.0
    %2063 = vmatpush2.msra.mxu0 0.0
    %2064 = vmatprep.subr.mxu0 0.0
    %2065 = vmatpush2.msra.mxu0 0.0
    %2066 = vmatprep.subr.mxu0 0.0
    %2067 = vmatpush2.msra.mxu0 0.0
    %2068 = vmatprep.subr.mxu0 0.0
    %2069 = vmatpush2.msra.mxu0 0.0
    %2070 = vmatprep.subr.mxu0 0.0
    %2071 = vmatpush2.msra.mxu0 0.0
    %2072 = vmatprep.subr.mxu0 0.0
    %2073 = vmatpush2.msra.mxu0 0.0
    %2074 = vmatprep.subr.mxu0 0.0
    %2075 = vmatpush2.msra.mxu0 0.0
    %2076 = vmatprep.subr.mxu0 0.0
    %2077 = vmatpush2.msra.mxu0 0.0
    %2078 = vmatprep.subr.mxu0 0.0
    %2079 = vmatpush2.msra.mxu0 0.0
    %2080 = vmatprep.mubr.f32.mxu0 0.0
    %2081 = vmatmul.mubr.f32.gmra.mxu0 %v2014
    %v2082 = vpop.f32.mrf.mxu0
    %v2083 = vadd.f32 0.0, %v2082
    %v2084 = vpop.f32.mrf.mxu0
    %2085 = vdwg.mxu0
    %v2087 = vsel %vm193, %v1986, 0
    %2089 = vmatprep.subr.mxu0 0.0
    %2090 = vmatpush1.msra.mxu0 0.0
    %2091 = vmatprep.subr.mxu0 0.0
    %2092 = vmatpush1.msra.mxu0 0.0
    %2093 = vmatprep.subr.mxu0 0.0
    %2094 = vmatpush1.msra.mxu0 0.0
    %2095 = vmatprep.subr.mxu0 0.0
    %2096 = vmatpush1.msra.mxu0 0.0
    %2097 = vmatprep.subr.mxu0 0.0
    %2098 = vmatpush1.msra.mxu0 0.0
    %2099 = vmatprep.subr.mxu0 0.0
    %2100 = vmatpush1.msra.mxu0 0.0
    %2101 = vmatprep.subr.mxu0 0.0
    %2102 = vmatpush1.msra.mxu0 0.0
    %2103 = vmatprep.subr.mxu0 0.0
    %2104 = vmatpush1.msra.mxu0 0.0
    %2105 = vmatprep.subr.mxu0 0.0
    %2106 = vmatpush1.msra.mxu0 0.0
    %2107 = vmatprep.subr.mxu0 0.0
    %2108 = vmatpush1.msra.mxu0 0.0
    %2109 = vmatprep.subr.mxu0 0.0
    %2110 = vmatpush1.msra.mxu0 0.0
    %2111 = vmatprep.subr.mxu0 0.0
    %2112 = vmatpush1.msra.mxu0 0.0
    %2113 = vmatprep.subr.mxu0 0.0
    %2114 = vmatpush1.msra.mxu0 0.0
    %2115 = vmatprep.subr.mxu0 0.0
    %2116 = vmatpush1.msra.mxu0 0.0
    %2117 = vmatprep.subr.mxu0 0.0
    %2118 = vmatpush1.msra.mxu0 0.0
    %2119 = vmatprep.subr.mxu0 0.0
    %2120 = vmatpush1.msra.mxu0 %v1987
    %2121 = vmatprep.subr.mxu0 0.0
    %2122 = vmatpush2.msra.mxu0 0.0
    %2123 = vmatprep.subr.mxu0 0.0
    %2124 = vmatpush2.msra.mxu0 0.0
    %2125 = vmatprep.subr.mxu0 0.0
    %2126 = vmatpush2.msra.mxu0 0.0
    %2127 = vmatprep.subr.mxu0 0.0
    %2128 = vmatpush2.msra.mxu0 0.0
    %2129 = vmatprep.subr.mxu0 0.0
    %2130 = vmatpush2.msra.mxu0 0.0
    %2131 = vmatprep.subr.mxu0 0.0
    %2132 = vmatpush2.msra.mxu0 0.0
    %2133 = vmatprep.subr.mxu0 0.0
    %2134 = vmatpush2.msra.mxu0 0.0
    %2135 = vmatprep.subr.mxu0 0.0
    %2136 = vmatpush2.msra.mxu0 0.0
    %2137 = vmatprep.subr.mxu0 0.0
    %2138 = vmatpush2.msra.mxu0 0.0
    %2139 = vmatprep.subr.mxu0 0.0
    %2140 = vmatpush2.msra.mxu0 0.0
    %2141 = vmatprep.subr.mxu0 0.0
    %2142 = vmatpush2.msra.mxu0 0.0
    %2143 = vmatprep.subr.mxu0 0.0
    %2144 = vmatpush2.msra.mxu0 0.0
    %2145 = vmatprep.subr.mxu0 0.0
    %2146 = vmatpush2.msra.mxu0 0.0
    %2147 = vmatprep.subr.mxu0 0.0
    %2148 = vmatpush2.msra.mxu0 0.0
    %2149 = vmatprep.subr.mxu0 0.0
    %2150 = vmatpush2.msra.mxu0 0.0
    %2151 = vmatprep.subr.mxu0 0.0
    %2152 = vmatpush2.msra.mxu0 0.0
    %2153 = vmatprep.mubr.f32.mxu0 0.0
    %2154 = vmatmul.mubr.f32.gmra.mxu0 %v2087
    %v2155 = vpop.f32.mrf.mxu0
    %v2156 = vadd.f32 %v2083, %v2155
    %v2157 = vpop.f32.mrf.mxu0
    %2158 = vdwg.mxu0
    %2159 = vset.pattern.permute.xlu0 2
    %2160 = vperm.xlu0 %2159, %v1886
    %v2161 = vpop.permute.xlu0 %2160
    %v2163 = vlaneseq
    %v2164 = vshrl.u32 %v2163, 7
    %v2165 = vsub.s32 2, %v2164
    %v2166 = vrot.slane %v1959, %v2165
    %v2167 = vadd.f32 %v2161, %v2166
    %vm2168 = vcmp.gt.f32.partialorder %v2167, 0.0
    %v2169 = vmul.f32 %v2167, 0.2
    %v2170 = vsel %vm2168, %v2167, %v2169
    %v2171 = vsel %vm1351, %v2170, -9e+15
    %v2172 = vsel %vm193, %v2171, -inf
    %2173 = vmax.xlane.f32.xlu0 %v2172
    %v2174 = vpop.xlane.xlu0 %2173
    %v2175 = vsub.f32 %v2171, %v2174
    %v2176 = vmul.f32 %v2175, 1.442695
    %v2177 = vpow.pop %v2176
    %v2178 = vsel %vm193, %v2177, 0.0
    %2179 = vadd.xlane.f32.xlu0 %v2178
    %v2180 = vpop.xlane.xlu0 %2179
    %v2181 = vrcp.pop %v2180
    %v2182 = vmul.f32 %v2177, %v2181
    %v2183 = vmul.f32 %v1810, %v139
    %v2185 = vsel %vm193, %v2182, 0
    %2187 = vmatprep.subr.mxu0 0.0
    %2188 = vmatpush1.msra.mxu0 0.0
    %2189 = vmatprep.subr.mxu0 0.0
    %2190 = vmatpush1.msra.mxu0 0.0
    %2191 = vmatprep.subr.mxu0 0.0
    %2192 = vmatpush1.msra.mxu0 0.0
    %2193 = vmatprep.subr.mxu0 0.0
    %2194 = vmatpush1.msra.mxu0 0.0
    %2195 = vmatprep.subr.mxu0 0.0
    %2196 = vmatpush1.msra.mxu0 0.0
    %2197 = vmatprep.subr.mxu0 0.0
    %2198 = vmatpush1.msra.mxu0 0.0
    %2199 = vmatprep.subr.mxu0 0.0
    %2200 = vmatpush1.msra.mxu0 0.0
    %2201 = vmatprep.subr.mxu0 0.0
    %2202 = vmatpush1.msra.mxu0 0.0
    %2203 = vmatprep.subr.mxu0 0.0
    %2204 = vmatpush1.msra.mxu0 0.0
    %2205 = vmatprep.subr.mxu0 0.0
    %2206 = vmatpush1.msra.mxu0 0.0
    %2207 = vmatprep.subr.mxu0 0.0
    %2208 = vmatpush1.msra.mxu0 0.0
    %2209 = vmatprep.subr.mxu0 0.0
    %2210 = vmatpush1.msra.mxu0 0.0
    %2211 = vmatprep.subr.mxu0 0.0
    %2212 = vmatpush1.msra.mxu0 0.0
    %2213 = vmatprep.subr.mxu0 0.0
    %2214 = vmatpush1.msra.mxu0 0.0
    %2215 = vmatprep.subr.mxu0 0.0
    %2216 = vmatpush1.msra.mxu0 0.0
    %2217 = vmatprep.subr.mxu0 0.0
    %2218 = vmatpush1.msra.mxu0 %v2183
    %2219 = vmatprep.subr.mxu0 0.0
    %2220 = vmatpush2.msra.mxu0 0.0
    %2221 = vmatprep.subr.mxu0 0.0
    %2222 = vmatpush2.msra.mxu0 0.0
    %2223 = vmatprep.subr.mxu0 0.0
    %2224 = vmatpush2.msra.mxu0 0.0
    %2225 = vmatprep.subr.mxu0 0.0
    %2226 = vmatpush2.msra.mxu0 0.0
    %2227 = vmatprep.subr.mxu0 0.0
    %2228 = vmatpush2.msra.mxu0 0.0
    %2229 = vmatprep.subr.mxu0 0.0
    %2230 = vmatpush2.msra.mxu0 0.0
    %2231 = vmatprep.subr.mxu0 0.0
    %2232 = vmatpush2.msra.mxu0 0.0
    %2233 = vmatprep.subr.mxu0 0.0
    %2234 = vmatpush2.msra.mxu0 0.0
    %2235 = vmatprep.subr.mxu0 0.0
    %2236 = vmatpush2.msra.mxu0 0.0
    %2237 = vmatprep.subr.mxu0 0.0
    %2238 = vmatpush2.msra.mxu0 0.0
    %2239 = vmatprep.subr.mxu0 0.0
    %2240 = vmatpush2.msra.mxu0 0.0
    %2241 = vmatprep.subr.mxu0 0.0
    %2242 = vmatpush2.msra.mxu0 0.0
    %2243 = vmatprep.subr.mxu0 0.0
    %2244 = vmatpush2.msra.mxu0 0.0
    %2245 = vmatprep.subr.mxu0 0.0
    %2246 = vmatpush2.msra.mxu0 0.0
    %2247 = vmatprep.subr.mxu0 0.0
    %2248 = vmatpush2.msra.mxu0 0.0
    %2249 = vmatprep.subr.mxu0 0.0
    %2250 = vmatpush2.msra.mxu0 0.0
    %2251 = vmatprep.mubr.f32.mxu0 0.0
    %2252 = vmatmul.mubr.f32.gmra.mxu0 %v2185
    %v2253 = vpop.f32.mrf.mxu0
    %v2254 = vadd.f32 0.0, %v2253
    %v2255 = vpop.f32.mrf.mxu0
    %2256 = vdwg.mxu0
    %v2257 = vadd.f32 %v2156, %v2254
    %2258 = vset.pattern.permute.xlu0 3
    %2259 = vperm.xlu0 %2258, %v1886
    %v2260 = vpop.permute.xlu0 %2259
    %v2262 = vlaneseq
    %v2263 = vshrl.u32 %v2262, 7
    %v2264 = vsub.s32 3, %v2263
    %v2265 = vrot.slane %v1959, %v2264
    %v2266 = vadd.f32 %v2260, %v2265
    %vm2267 = vcmp.gt.f32.partialorder %v2266, 0.0
    %v2268 = vmul.f32 %v2266, 0.2
    %v2269 = vsel %vm2267, %v2266, %v2268
    %v2270 = vsel %vm1351, %v2269, -9e+15
    %v2271 = vsel %vm193, %v2270, -inf
    %2272 = vmax.xlane.f32.xlu0 %v2271
    %v2273 = vpop.xlane.xlu0 %2272
    %v2274 = vsub.f32 %v2270, %v2273
    %v2275 = vmul.f32 %v2274, 1.442695
    %v2276 = vpow.pop %v2275
    %v2277 = vsel %vm193, %v2276, 0.0
    %2278 = vadd.xlane.f32.xlu0 %v2277
    %v2279 = vpop.xlane.xlu0 %2278
    %v2280 = vrcp.pop %v2279
    %v2281 = vmul.f32 %v2276, %v2280
    %v2282 = vmul.f32 %v1810, %v144
    %v2284 = vsel %vm193, %v2281, 0
    %2286 = vmatprep.subr.mxu0 0.0
    %2287 = vmatpush1.msra.mxu0 0.0
    %2288 = vmatprep.subr.mxu0 0.0
    %2289 = vmatpush1.msra.mxu0 0.0
    %2290 = vmatprep.subr.mxu0 0.0
    %2291 = vmatpush1.msra.mxu0 0.0
    %2292 = vmatprep.subr.mxu0 0.0
    %2293 = vmatpush1.msra.mxu0 0.0
    %2294 = vmatprep.subr.mxu0 0.0
    %2295 = vmatpush1.msra.mxu0 0.0
    %2296 = vmatprep.subr.mxu0 0.0
    %2297 = vmatpush1.msra.mxu0 0.0
    %2298 = vmatprep.subr.mxu0 0.0
    %2299 = vmatpush1.msra.mxu0 0.0
    %2300 = vmatprep.subr.mxu0 0.0
    %2301 = vmatpush1.msra.mxu0 0.0
    %2302 = vmatprep.subr.mxu0 0.0
    %2303 = vmatpush1.msra.mxu0 0.0
    %2304 = vmatprep.subr.mxu0 0.0
    %2305 = vmatpush1.msra.mxu0 0.0
    %2306 = vmatprep.subr.mxu0 0.0
    %2307 = vmatpush1.msra.mxu0 0.0
    %2308 = vmatprep.subr.mxu0 0.0
    %2309 = vmatpush1.msra.mxu0 0.0
    %2310 = vmatprep.subr.mxu0 0.0
    %2311 = vmatpush1.msra.mxu0 0.0
    %2312 = vmatprep.subr.mxu0 0.0
    %2313 = vmatpush1.msra.mxu0 0.0
    %2314 = vmatprep.subr.mxu0 0.0
    %2315 = vmatpush1.msra.mxu0 0.0
    %2316 = vmatprep.subr.mxu0 0.0
    %2317 = vmatpush1.msra.mxu0 %v2282
    %2318 = vmatprep.subr.mxu0 0.0
    %2319 = vmatpush2.msra.mxu0 0.0
    %2320 = vmatprep.subr.mxu0 0.0
    %2321 = vmatpush2.msra.mxu0 0.0
    %2322 = vmatprep.subr.mxu0 0.0
    %2323 = vmatpush2.msra.mxu0 0.0
    %2324 = vmatprep.subr.mxu0 0.0
    %2325 = vmatpush2.msra.mxu0 0.0
    %2326 = vmatprep.subr.mxu0 0.0
    %2327 = vmatpush2.msra.mxu0 0.0
    %2328 = vmatprep.subr.mxu0 0.0
    %2329 = vmatpush2.msra.mxu0 0.0
    %2330 = vmatprep.subr.mxu0 0.0
    %2331 = vmatpush2.msra.mxu0 0.0
    %2332 = vmatprep.subr.mxu0 0.0
    %2333 = vmatpush2.msra.mxu0 0.0
    %2334 = vmatprep.subr.mxu0 0.0
    %2335 = vmatpush2.msra.mxu0 0.0
    %2336 = vmatprep.subr.mxu0 0.0
    %2337 = vmatpush2.msra.mxu0 0.0
    %2338 = vmatprep.subr.mxu0 0.0
    %2339 = vmatpush2.msra.mxu0 0.0
    %2340 = vmatprep.subr.mxu0 0.0
    %2341 = vmatpush2.msra.mxu0 0.0
    %2342 = vmatprep.subr.mxu0 0.0
    %2343 = vmatpush2.msra.mxu0 0.0
    %2344 = vmatprep.subr.mxu0 0.0
    %2345 = vmatpush2.msra.mxu0 0.0
    %2346 = vmatprep.subr.mxu0 0.0
    %2347 = vmatpush2.msra.mxu0 0.0
    %2348 = vmatprep.subr.mxu0 0.0
    %2349 = vmatpush2.msra.mxu0 0.0
    %2350 = vmatprep.mubr.f32.mxu0 0.0
    %2351 = vmatmul.mubr.f32.gmra.mxu0 %v2284
    %v2352 = vpop.f32.mrf.mxu0
    %v2353 = vadd.f32 0.0, %v2352
    %v2354 = vpop.f32.mrf.mxu0
    %2355 = vdwg.mxu0
    %v2356 = vadd.f32 %v2257, %v2353
    %vm2357 = vcmp.gt.f32.partialorder %v2356, 0.0
    %v2358 = vmin.f32 %v2356, 0.0
    %v2359 = vmul.f32 %v2358, 1.442695
    %v2360 = vpow.pop %v2359
    %v2361 = vsub.f32 %v2360, 1.0
    %v2362 = vsel %vm2357, %v2356, %v2361
    %v2363 = vsel %vm275, %v2362, 0.0
    %v2364 = vrot.slane %v2363, 4
    %v2365 = vadd.f32 %v2363, %v2364
    %v2366 = vrot.slane %v2365, 2
    %v2367 = vadd.f32 %v2365, %v2366
    %v2368 = vrot.slane %v2367, 1
    %v2369 = vadd.f32 %v2367, %v2368
    %v2370 = vmul.f32 %v2369, 0.125
    %v2372 = vsel %vm275, %v2370, 0
    %2374 = vmatprep.subr.mxu0 0.0
    %2375 = vmatpush1.msra.mxu0 0.0
    %2376 = vmatprep.subr.mxu0 0.0
    %2377 = vmatpush1.msra.mxu0 0.0
    %2378 = vmatprep.subr.mxu0 0.0
    %2379 = vmatpush1.msra.mxu0 0.0
    %2380 = vmatprep.subr.mxu0 0.0
    %2381 = vmatpush1.msra.mxu0 0.0
    %2382 = vmatprep.subr.mxu0 0.0
    %2383 = vmatpush1.msra.mxu0 0.0
    %2384 = vmatprep.subr.mxu0 0.0
    %2385 = vmatpush1.msra.mxu0 0.0
    %2386 = vmatprep.subr.mxu0 0.0
    %2387 = vmatpush1.msra.mxu0 0.0
    %2388 = vmatprep.subr.mxu0 0.0
    %2389 = vmatpush1.msra.mxu0 0.0
    %2390 = vmatprep.subr.mxu0 0.0
    %2391 = vmatpush1.msra.mxu0 0.0
    %2392 = vmatprep.subr.mxu0 0.0
    %2393 = vmatpush1.msra.mxu0 0.0
    %2394 = vmatprep.subr.mxu0 0.0
    %2395 = vmatpush1.msra.mxu0 0.0
    %2396 = vmatprep.subr.mxu0 0.0
    %2397 = vmatpush1.msra.mxu0 0.0
    %2398 = vmatprep.subr.mxu0 0.0
    %2399 = vmatpush1.msra.mxu0 %v169
    %2400 = vmatprep.subr.mxu0 0.0
    %2401 = vmatpush1.msra.mxu0 %v168
    %2402 = vmatprep.subr.mxu0 0.0
    %2403 = vmatpush1.msra.mxu0 %v167
    %2404 = vmatprep.subr.mxu0 0.0
    %2405 = vmatpush1.msra.mxu0 %v166
    %2406 = vmatprep.subr.mxu0 0.0
    %2407 = vmatpush2.msra.mxu0 0.0
    %2408 = vmatprep.subr.mxu0 0.0
    %2409 = vmatpush2.msra.mxu0 0.0
    %2410 = vmatprep.subr.mxu0 0.0
    %2411 = vmatpush2.msra.mxu0 0.0
    %2412 = vmatprep.subr.mxu0 0.0
    %2413 = vmatpush2.msra.mxu0 0.0
    %2414 = vmatprep.subr.mxu0 0.0
    %2415 = vmatpush2.msra.mxu0 0.0
    %2416 = vmatprep.subr.mxu0 0.0
    %2417 = vmatpush2.msra.mxu0 0.0
    %2418 = vmatprep.subr.mxu0 0.0
    %2419 = vmatpush2.msra.mxu0 0.0
    %2420 = vmatprep.subr.mxu0 0.0
    %2421 = vmatpush2.msra.mxu0 0.0
    %2422 = vmatprep.subr.mxu0 0.0
    %2423 = vmatpush2.msra.mxu0 0.0
    %2424 = vmatprep.subr.mxu0 0.0
    %2425 = vmatpush2.msra.mxu0 0.0
    %2426 = vmatprep.subr.mxu0 0.0
    %2427 = vmatpush2.msra.mxu0 0.0
    %2428 = vmatprep.subr.mxu0 0.0
    %2429 = vmatpush2.msra.mxu0 0.0
    %2430 = vmatprep.subr.mxu0 0.0
    %2431 = vmatpush2.msra.mxu0 0.0
    %2432 = vmatprep.subr.mxu0 0.0
    %2433 = vmatpush2.msra.mxu0 0.0
    %2434 = vmatprep.subr.mxu0 0.0
    %2435 = vmatpush2.msra.mxu0 0.0
    %2436 = vmatprep.subr.mxu0 0.0
    %2437 = vmatpush2.msra.mxu0 0.0
    %2438 = vmatprep.mubr.f32.mxu0 0.0
    %2439 = vmatmul.mubr.f32.gmra.mxu0 %v2372
    %v2440 = vpop.f32.mrf.mxu0
    %v2441 = vadd.f32 0.0, %v2440
    %v2442 = vpop.f32.mrf.mxu0
    %2443 = vdwg.mxu0
    %v2445 = vsel %vm275, %v2362, 0
    %2447 = vmatprep.subr.mxu0 0.0
    %2448 = vmatpush1.msra.mxu0 0.0
    %2449 = vmatprep.subr.mxu0 0.0
    %2450 = vmatpush1.msra.mxu0 0.0
    %2451 = vmatprep.subr.mxu0 0.0
    %2452 = vmatpush1.msra.mxu0 0.0
    %2453 = vmatprep.subr.mxu0 0.0
    %2454 = vmatpush1.msra.mxu0 0.0
    %2455 = vmatprep.subr.mxu0 0.0
    %2456 = vmatpush1.msra.mxu0 0.0
    %2457 = vmatprep.subr.mxu0 0.0
    %2458 = vmatpush1.msra.mxu0 0.0
    %2459 = vmatprep.subr.mxu0 0.0
    %2460 = vmatpush1.msra.mxu0 0.0
    %2461 = vmatprep.subr.mxu0 0.0
    %2462 = vmatpush1.msra.mxu0 0.0
    %2463 = vmatprep.subr.mxu0 0.0
    %2464 = vmatpush1.msra.mxu0 0.0
    %2465 = vmatprep.subr.mxu0 0.0
    %2466 = vmatpush1.msra.mxu0 0.0
    %2467 = vmatprep.subr.mxu0 0.0
    %2468 = vmatpush1.msra.mxu0 0.0
    %2469 = vmatprep.subr.mxu0 0.0
    %2470 = vmatpush1.msra.mxu0 0.0
    %2471 = vmatprep.subr.mxu0 0.0
    %2472 = vmatpush1.msra.mxu0 %v173
    %2473 = vmatprep.subr.mxu0 0.0
    %2474 = vmatpush1.msra.mxu0 %v172
    %2475 = vmatprep.subr.mxu0 0.0
    %2476 = vmatpush1.msra.mxu0 %v171
    %2477 = vmatprep.subr.mxu0 0.0
    %2478 = vmatpush1.msra.mxu0 %v170
    %2479 = vmatprep.subr.mxu0 0.0
    %2480 = vmatpush2.msra.mxu0 0.0
    %2481 = vmatprep.subr.mxu0 0.0
    %2482 = vmatpush2.msra.mxu0 0.0
    %2483 = vmatprep.subr.mxu0 0.0
    %2484 = vmatpush2.msra.mxu0 0.0
    %2485 = vmatprep.subr.mxu0 0.0
    %2486 = vmatpush2.msra.mxu0 0.0
    %2487 = vmatprep.subr.mxu0 0.0
    %2488 = vmatpush2.msra.mxu0 0.0
    %2489 = vmatprep.subr.mxu0 0.0
    %2490 = vmatpush2.msra.mxu0 0.0
    %2491 = vmatprep.subr.mxu0 0.0
    %2492 = vmatpush2.msra.mxu0 0.0
    %2493 = vmatprep.subr.mxu0 0.0
    %2494 = vmatpush2.msra.mxu0 0.0
    %2495 = vmatprep.subr.mxu0 0.0
    %2496 = vmatpush2.msra.mxu0 0.0
    %2497 = vmatprep.subr.mxu0 0.0
    %2498 = vmatpush2.msra.mxu0 0.0
    %2499 = vmatprep.subr.mxu0 0.0
    %2500 = vmatpush2.msra.mxu0 0.0
    %2501 = vmatprep.subr.mxu0 0.0
    %2502 = vmatpush2.msra.mxu0 0.0
    %2503 = vmatprep.subr.mxu0 0.0
    %2504 = vmatpush2.msra.mxu0 0.0
    %2505 = vmatprep.subr.mxu0 0.0
    %2506 = vmatpush2.msra.mxu0 0.0
    %2507 = vmatprep.subr.mxu0 0.0
    %2508 = vmatpush2.msra.mxu0 0.0
    %2509 = vmatprep.subr.mxu0 0.0
    %2510 = vmatpush2.msra.mxu0 0.0
    %2511 = vmatprep.mubr.f32.mxu0 0.0
    %2512 = vmatmul.mubr.f32.gmra.mxu0 %v2445
    %v2513 = vpop.f32.mrf.mxu0
    %v2514 = vadd.f32 0.0, %v2513
    %v2515 = vpop.f32.mrf.mxu0
    %2516 = vdwg.mxu0
    %2517 = vmatprep.subr.mxu0 0.0
    %2518 = vmatpush1.msra.mxu0 0.0
    %2519 = vmatprep.subr.mxu0 0.0
    %2520 = vmatpush1.msra.mxu0 0.0
    %2521 = vmatprep.subr.mxu0 0.0
    %2522 = vmatpush1.msra.mxu0 0.0
    %2523 = vmatprep.subr.mxu0 0.0
    %2524 = vmatpush1.msra.mxu0 0.0
    %2525 = vmatprep.subr.mxu0 0.0
    %2526 = vmatpush1.msra.mxu0 0.0
    %2527 = vmatprep.subr.mxu0 0.0
    %2528 = vmatpush1.msra.mxu0 0.0
    %2529 = vmatprep.subr.mxu0 0.0
    %2530 = vmatpush1.msra.mxu0 0.0
    %2531 = vmatprep.subr.mxu0 0.0
    %2532 = vmatpush1.msra.mxu0 0.0
    %2533 = vmatprep.subr.mxu0 0.0
    %2534 = vmatpush1.msra.mxu0 0.0
    %2535 = vmatprep.subr.mxu0 0.0
    %2536 = vmatpush1.msra.mxu0 0.0
    %2537 = vmatprep.subr.mxu0 0.0
    %2538 = vmatpush1.msra.mxu0 0.0
    %2539 = vmatprep.subr.mxu0 0.0
    %2540 = vmatpush1.msra.mxu0 0.0
    %2541 = vmatprep.subr.mxu0 0.0
    %2542 = vmatpush1.msra.mxu0 %v177
    %2543 = vmatprep.subr.mxu0 0.0
    %2544 = vmatpush1.msra.mxu0 %v176
    %2545 = vmatprep.subr.mxu0 0.0
    %2546 = vmatpush1.msra.mxu0 %v175
    %2547 = vmatprep.subr.mxu0 0.0
    %2548 = vmatpush1.msra.mxu0 %v174
    %2549 = vmatprep.subr.mxu0 0.0
    %2550 = vmatpush2.msra.mxu0 0.0
    %2551 = vmatprep.subr.mxu0 0.0
    %2552 = vmatpush2.msra.mxu0 0.0
    %2553 = vmatprep.subr.mxu0 0.0
    %2554 = vmatpush2.msra.mxu0 0.0
    %2555 = vmatprep.subr.mxu0 0.0
    %2556 = vmatpush2.msra.mxu0 0.0
    %2557 = vmatprep.subr.mxu0 0.0
    %2558 = vmatpush2.msra.mxu0 0.0
    %2559 = vmatprep.subr.mxu0 0.0
    %2560 = vmatpush2.msra.mxu0 0.0
    %2561 = vmatprep.subr.mxu0 0.0
    %2562 = vmatpush2.msra.mxu0 0.0
    %2563 = vmatprep.subr.mxu0 0.0
    %2564 = vmatpush2.msra.mxu0 0.0
    %2565 = vmatprep.subr.mxu0 0.0
    %2566 = vmatpush2.msra.mxu0 0.0
    %2567 = vmatprep.subr.mxu0 0.0
    %2568 = vmatpush2.msra.mxu0 0.0
    %2569 = vmatprep.subr.mxu0 0.0
    %2570 = vmatpush2.msra.mxu0 0.0
    %2571 = vmatprep.subr.mxu0 0.0
    %2572 = vmatpush2.msra.mxu0 0.0
    %2573 = vmatprep.subr.mxu0 0.0
    %2574 = vmatpush2.msra.mxu0 0.0
    %2575 = vmatprep.subr.mxu0 0.0
    %2576 = vmatpush2.msra.mxu0 0.0
    %2577 = vmatprep.subr.mxu0 0.0
    %2578 = vmatpush2.msra.mxu0 0.0
    %2579 = vmatprep.subr.mxu0 0.0
    %2580 = vmatpush2.msra.mxu0 0.0
    %2581 = vmatprep.mubr.f32.mxu0 0.0
    %2582 = vmatmul.mubr.f32.gmra.mxu0 %v2445
    %v2583 = vpop.f32.mrf.mxu0
    %v2584 = vadd.f32 0.0, %v2583
    %v2585 = vpop.f32.mrf.mxu0
    %2586 = vdwg.mxu0
    %v2587 = vmul.f32 %v2441, %v129
    %v2589 = vsel %vm275, %v2587, 0
    %v2592 = vsel %vm275, %v2514, 0
    %2594 = vmatprep.subr.mxu0 0.0
    %2595 = vmatpush1.xpose.msra.mxu0 0.0
    %2596 = vmatprep.subr.mxu0 0.0
    %2597 = vmatpush1.xpose.msra.mxu0 0.0
    %2598 = vmatprep.subr.mxu0 0.0
    %2599 = vmatpush1.xpose.msra.mxu0 0.0
    %2600 = vmatprep.subr.mxu0 0.0
    %2601 = vmatpush1.xpose.msra.mxu0 0.0
    %2602 = vmatprep.subr.mxu0 0.0
    %2603 = vmatpush1.xpose.msra.mxu0 0.0
    %2604 = vmatprep.subr.mxu0 0.0
    %2605 = vmatpush1.xpose.msra.mxu0 0.0
    %2606 = vmatprep.subr.mxu0 0.0
    %2607 = vmatpush1.xpose.msra.mxu0 0.0
    %2608 = vmatprep.subr.mxu0 0.0
    %2609 = vmatpush1.xpose.msra.mxu0 0.0
    %2610 = vmatprep.subr.mxu0 0.0
    %2611 = vmatpush1.xpose.msra.mxu0 0.0
    %2612 = vmatprep.subr.mxu0 0.0
    %2613 = vmatpush1.xpose.msra.mxu0 0.0
    %2614 = vmatprep.subr.mxu0 0.0
    %2615 = vmatpush1.xpose.msra.mxu0 0.0
    %2616 = vmatprep.subr.mxu0 0.0
    %2617 = vmatpush1.xpose.msra.mxu0 0.0
    %2618 = vmatprep.subr.mxu0 0.0
    %2619 = vmatpush1.xpose.msra.mxu0 0.0
    %2620 = vmatprep.subr.mxu0 0.0
    %2621 = vmatpush1.xpose.msra.mxu0 0.0
    %2622 = vmatprep.subr.mxu0 0.0
    %2623 = vmatpush1.xpose.msra.mxu0 0.0
    %2624 = vmatprep.subr.mxu0 0.0
    %2625 = vmatpush1.xpose.msra.mxu0 %v2592
    %2626 = vmatprep.subr.mxu0 0.0
    %2627 = vmatpush2.xpose.msra.mxu0 0.0
    %2628 = vmatprep.subr.mxu0 0.0
    %2629 = vmatpush2.xpose.msra.mxu0 0.0
    %2630 = vmatprep.subr.mxu0 0.0
    %2631 = vmatpush2.xpose.msra.mxu0 0.0
    %2632 = vmatprep.subr.mxu0 0.0
    %2633 = vmatpush2.xpose.msra.mxu0 0.0
    %2634 = vmatprep.subr.mxu0 0.0
    %2635 = vmatpush2.xpose.msra.mxu0 0.0
    %2636 = vmatprep.subr.mxu0 0.0
    %2637 = vmatpush2.xpose.msra.mxu0 0.0
    %2638 = vmatprep.subr.mxu0 0.0
    %2639 = vmatpush2.xpose.msra.mxu0 0.0
    %2640 = vmatprep.subr.mxu0 0.0
    %2641 = vmatpush2.xpose.msra.mxu0 0.0
    %2642 = vmatprep.subr.mxu0 0.0
    %2643 = vmatpush2.xpose.msra.mxu0 0.0
    %2644 = vmatprep.subr.mxu0 0.0
    %2645 = vmatpush2.xpose.msra.mxu0 0.0
    %2646 = vmatprep.subr.mxu0 0.0
    %2647 = vmatpush2.xpose.msra.mxu0 0.0
    %2648 = vmatprep.subr.mxu0 0.0
    %2649 = vmatpush2.xpose.msra.mxu0 0.0
    %2650 = vmatprep.subr.mxu0 0.0
    %2651 = vmatpush2.xpose.msra.mxu0 0.0
    %2652 = vmatprep.subr.mxu0 0.0
    %2653 = vmatpush2.xpose.msra.mxu0 0.0
    %2654 = vmatprep.subr.mxu0 0.0
    %2655 = vmatpush2.xpose.msra.mxu0 0.0
    %2656 = vmatprep.subr.mxu0 0.0
    %2657 = vmatpush2.xpose.msra.mxu0 0.0
    %2658 = vmatprep.mubr.f32.mxu0 0.0
    %2659 = vmatmul.mubr.f32.gmra.mxu0 %v2589
    %v2660 = vpop.f32.mrf.mxu0
    %v2661 = vadd.f32 0.0, %v2660
    %v2662 = vpop.f32.mrf.mxu0
    %2663 = vdwg.mxu0
    %v2664 = vmul.f32 %v2661, 0.35355338
    %vm2665 = vcmask 57344
    %v2666 = vsel %vm2665, %v2664, -inf
    %2667 = vmax.xlane.f32.xlu0 %v2666
    %v2668 = vpop.xlane.xlu0 %2667
    %v2669 = vsub.f32 %v2664, %v2668
    %v2670 = vmul.f32 %v2669, 1.442695
    %v2671 = vpow.pop %v2670
    %v2672 = vsel %vm2665, %v2671, 0.0
    %2673 = vadd.xlane.f32.xlu0 %v2672
    %v2674 = vpop.xlane.xlu0 %2673
    %v2675 = vrcp.pop %v2674
    %v2676 = vmul.f32 %v2671, %v2675
    %v2677 = vmul.f32 %v2584, %v129
    %v2678 = vmul.f32 %v2441, %v134
    %v2680 = vsel %vm275, %v2678, 0
    %2682 = vmatprep.subr.mxu0 0.0
    %2683 = vmatpush1.xpose.msra.mxu0 0.0
    %2684 = vmatprep.subr.mxu0 0.0
    %2685 = vmatpush1.xpose.msra.mxu0 0.0
    %2686 = vmatprep.subr.mxu0 0.0
    %2687 = vmatpush1.xpose.msra.mxu0 0.0
    %2688 = vmatprep.subr.mxu0 0.0
    %2689 = vmatpush1.xpose.msra.mxu0 0.0
    %2690 = vmatprep.subr.mxu0 0.0
    %2691 = vmatpush1.xpose.msra.mxu0 0.0
    %2692 = vmatprep.subr.mxu0 0.0
    %2693 = vmatpush1.xpose.msra.mxu0 0.0
    %2694 = vmatprep.subr.mxu0 0.0
    %2695 = vmatpush1.xpose.msra.mxu0 0.0
    %2696 = vmatprep.subr.mxu0 0.0
    %2697 = vmatpush1.xpose.msra.mxu0 0.0
    %2698 = vmatprep.subr.mxu0 0.0
    %2699 = vmatpush1.xpose.msra.mxu0 0.0
    %2700 = vmatprep.subr.mxu0 0.0
    %2701 = vmatpush1.xpose.msra.mxu0 0.0
    %2702 = vmatprep.subr.mxu0 0.0
    %2703 = vmatpush1.xpose.msra.mxu0 0.0
    %2704 = vmatprep.subr.mxu0 0.0
    %2705 = vmatpush1.xpose.msra.mxu0 0.0
    %2706 = vmatprep.subr.mxu0 0.0
    %2707 = vmatpush1.xpose.msra.mxu0 0.0
    %2708 = vmatprep.subr.mxu0 0.0
    %2709 = vmatpush1.xpose.msra.mxu0 0.0
    %2710 = vmatprep.subr.mxu0 0.0
    %2711 = vmatpush1.xpose.msra.mxu0 0.0
    %2712 = vmatprep.subr.mxu0 0.0
    %2713 = vmatpush1.xpose.msra.mxu0 %v2592
    %2714 = vmatprep.subr.mxu0 0.0
    %2715 = vmatpush2.xpose.msra.mxu0 0.0
    %2716 = vmatprep.subr.mxu0 0.0
    %2717 = vmatpush2.xpose.msra.mxu0 0.0
    %2718 = vmatprep.subr.mxu0 0.0
    %2719 = vmatpush2.xpose.msra.mxu0 0.0
    %2720 = vmatprep.subr.mxu0 0.0
    %2721 = vmatpush2.xpose.msra.mxu0 0.0
    %2722 = vmatprep.subr.mxu0 0.0
    %2723 = vmatpush2.xpose.msra.mxu0 0.0
    %2724 = vmatprep.subr.mxu0 0.0
    %2725 = vmatpush2.xpose.msra.mxu0 0.0
    %2726 = vmatprep.subr.mxu0 0.0
    %2727 = vmatpush2.xpose.msra.mxu0 0.0
    %2728 = vmatprep.subr.mxu0 0.0
    %2729 = vmatpush2.xpose.msra.mxu0 0.0
    %2730 = vmatprep.subr.mxu0 0.0
    %2731 = vmatpush2.xpose.msra.mxu0 0.0
    %2732 = vmatprep.subr.mxu0 0.0
    %2733 = vmatpush2.xpose.msra.mxu0 0.0
    %2734 = vmatprep.subr.mxu0 0.0
    %2735 = vmatpush2.xpose.msra.mxu0 0.0
    %2736 = vmatprep.subr.mxu0 0.0
    %2737 = vmatpush2.xpose.msra.mxu0 0.0
    %2738 = vmatprep.subr.mxu0 0.0
    %2739 = vmatpush2.xpose.msra.mxu0 0.0
    %2740 = vmatprep.subr.mxu0 0.0
    %2741 = vmatpush2.xpose.msra.mxu0 0.0
    %2742 = vmatprep.subr.mxu0 0.0
    %2743 = vmatpush2.xpose.msra.mxu0 0.0
    %2744 = vmatprep.subr.mxu0 0.0
    %2745 = vmatpush2.xpose.msra.mxu0 0.0
    %2746 = vmatprep.mubr.f32.mxu0 0.0
    %2747 = vmatmul.mubr.f32.gmra.mxu0 %v2680
    %v2748 = vpop.f32.mrf.mxu0
    %v2749 = vadd.f32 0.0, %v2748
    %v2750 = vpop.f32.mrf.mxu0
    %2751 = vdwg.mxu0
    %v2752 = vmul.f32 %v2749, 0.35355338
    %v2753 = vsel %vm2665, %v2752, -inf
    %2754 = vmax.xlane.f32.xlu0 %v2753
    %v2755 = vpop.xlane.xlu0 %2754
    %v2756 = vsub.f32 %v2752, %v2755
    %v2757 = vmul.f32 %v2756, 1.442695
    %v2758 = vpow.pop %v2757
    %v2759 = vsel %vm2665, %v2758, 0.0
    %2760 = vadd.xlane.f32.xlu0 %v2759
    %v2761 = vpop.xlane.xlu0 %2760
    %v2762 = vrcp.pop %v2761
    %v2763 = vmul.f32 %v2758, %v2762
    %v2764 = vmul.f32 %v2584, %v134
    %v2766 = vsel %vm193, %v2763, 0
    %2768 = vmatprep.subr.mxu0 0.0
    %2769 = vmatpush1.msra.mxu0 0.0
    %2770 = vmatprep.subr.mxu0 0.0
    %2771 = vmatpush1.msra.mxu0 0.0
    %2772 = vmatprep.subr.mxu0 0.0
    %2773 = vmatpush1.msra.mxu0 0.0
    %2774 = vmatprep.subr.mxu0 0.0
    %2775 = vmatpush1.msra.mxu0 0.0
    %2776 = vmatprep.subr.mxu0 0.0
    %2777 = vmatpush1.msra.mxu0 0.0
    %2778 = vmatprep.subr.mxu0 0.0
    %2779 = vmatpush1.msra.mxu0 0.0
    %2780 = vmatprep.subr.mxu0 0.0
    %2781 = vmatpush1.msra.mxu0 0.0
    %2782 = vmatprep.subr.mxu0 0.0
    %2783 = vmatpush1.msra.mxu0 0.0
    %2784 = vmatprep.subr.mxu0 0.0
    %2785 = vmatpush1.msra.mxu0 0.0
    %2786 = vmatprep.subr.mxu0 0.0
    %2787 = vmatpush1.msra.mxu0 0.0
    %2788 = vmatprep.subr.mxu0 0.0
    %2789 = vmatpush1.msra.mxu0 0.0
    %2790 = vmatprep.subr.mxu0 0.0
    %2791 = vmatpush1.msra.mxu0 0.0
    %2792 = vmatprep.subr.mxu0 0.0
    %2793 = vmatpush1.msra.mxu0 0.0
    %2794 = vmatprep.subr.mxu0 0.0
    %2795 = vmatpush1.msra.mxu0 0.0
    %2796 = vmatprep.subr.mxu0 0.0
    %2797 = vmatpush1.msra.mxu0 0.0
    %2798 = vmatprep.subr.mxu0 0.0
    %2799 = vmatpush1.msra.mxu0 %v2764
    %2800 = vmatprep.subr.mxu0 0.0
    %2801 = vmatpush2.msra.mxu0 0.0
    %2802 = vmatprep.subr.mxu0 0.0
    %2803 = vmatpush2.msra.mxu0 0.0
    %2804 = vmatprep.subr.mxu0 0.0
    %2805 = vmatpush2.msra.mxu0 0.0
    %2806 = vmatprep.subr.mxu0 0.0
    %2807 = vmatpush2.msra.mxu0 0.0
    %2808 = vmatprep.subr.mxu0 0.0
    %2809 = vmatpush2.msra.mxu0 0.0
    %2810 = vmatprep.subr.mxu0 0.0
    %2811 = vmatpush2.msra.mxu0 0.0
    %2812 = vmatprep.subr.mxu0 0.0
    %2813 = vmatpush2.msra.mxu0 0.0
    %2814 = vmatprep.subr.mxu0 0.0
    %2815 = vmatpush2.msra.mxu0 0.0
    %2816 = vmatprep.subr.mxu0 0.0
    %2817 = vmatpush2.msra.mxu0 0.0
    %2818 = vmatprep.subr.mxu0 0.0
    %2819 = vmatpush2.msra.mxu0 0.0
    %2820 = vmatprep.subr.mxu0 0.0
    %2821 = vmatpush2.msra.mxu0 0.0
    %2822 = vmatprep.subr.mxu0 0.0
    %2823 = vmatpush2.msra.mxu0 0.0
    %2824 = vmatprep.subr.mxu0 0.0
    %2825 = vmatpush2.msra.mxu0 0.0
    %2826 = vmatprep.subr.mxu0 0.0
    %2827 = vmatpush2.msra.mxu0 0.0
    %2828 = vmatprep.subr.mxu0 0.0
    %2829 = vmatpush2.msra.mxu0 0.0
    %2830 = vmatprep.subr.mxu0 0.0
    %2831 = vmatpush2.msra.mxu0 0.0
    %2832 = vmatprep.mubr.f32.mxu0 0.0
    %2833 = vmatmul.mubr.f32.gmra.mxu0 %v2766
    %v2834 = vpop.f32.mrf.mxu0
    %v2835 = vadd.f32 0.0, %v2834
    %v2836 = vpop.f32.mrf.mxu0
    %2837 = vdwg.mxu0
    %v2839 = vsel %vm193, %v2676, 0
    %2841 = vmatprep.subr.mxu0 0.0
    %2842 = vmatpush1.msra.mxu0 0.0
    %2843 = vmatprep.subr.mxu0 0.0
    %2844 = vmatpush1.msra.mxu0 0.0
    %2845 = vmatprep.subr.mxu0 0.0
    %2846 = vmatpush1.msra.mxu0 0.0
    %2847 = vmatprep.subr.mxu0 0.0
    %2848 = vmatpush1.msra.mxu0 0.0
    %2849 = vmatprep.subr.mxu0 0.0
    %2850 = vmatpush1.msra.mxu0 0.0
    %2851 = vmatprep.subr.mxu0 0.0
    %2852 = vmatpush1.msra.mxu0 0.0
    %2853 = vmatprep.subr.mxu0 0.0
    %2854 = vmatpush1.msra.mxu0 0.0
    %2855 = vmatprep.subr.mxu0 0.0
    %2856 = vmatpush1.msra.mxu0 0.0
    %2857 = vmatprep.subr.mxu0 0.0
    %2858 = vmatpush1.msra.mxu0 0.0
    %2859 = vmatprep.subr.mxu0 0.0
    %2860 = vmatpush1.msra.mxu0 0.0
    %2861 = vmatprep.subr.mxu0 0.0
    %2862 = vmatpush1.msra.mxu0 0.0
    %2863 = vmatprep.subr.mxu0 0.0
    %2864 = vmatpush1.msra.mxu0 0.0
    %2865 = vmatprep.subr.mxu0 0.0
    %2866 = vmatpush1.msra.mxu0 0.0
    %2867 = vmatprep.subr.mxu0 0.0
    %2868 = vmatpush1.msra.mxu0 0.0
    %2869 = vmatprep.subr.mxu0 0.0
    %2870 = vmatpush1.msra.mxu0 0.0
    %2871 = vmatprep.subr.mxu0 0.0
    %2872 = vmatpush1.msra.mxu0 %v2677
    %2873 = vmatprep.subr.mxu0 0.0
    %2874 = vmatpush2.msra.mxu0 0.0
    %2875 = vmatprep.subr.mxu0 0.0
    %2876 = vmatpush2.msra.mxu0 0.0
    %2877 = vmatprep.subr.mxu0 0.0
    %2878 = vmatpush2.msra.mxu0 0.0
    %2879 = vmatprep.subr.mxu0 0.0
    %2880 = vmatpush2.msra.mxu0 0.0
    %2881 = vmatprep.subr.mxu0 0.0
    %2882 = vmatpush2.msra.mxu0 0.0
    %2883 = vmatprep.subr.mxu0 0.0
    %2884 = vmatpush2.msra.mxu0 0.0
    %2885 = vmatprep.subr.mxu0 0.0
    %2886 = vmatpush2.msra.mxu0 0.0
    %2887 = vmatprep.subr.mxu0 0.0
    %2888 = vmatpush2.msra.mxu0 0.0
    %2889 = vmatprep.subr.mxu0 0.0
    %2890 = vmatpush2.msra.mxu0 0.0
    %2891 = vmatprep.subr.mxu0 0.0
    %2892 = vmatpush2.msra.mxu0 0.0
    %2893 = vmatprep.subr.mxu0 0.0
    %2894 = vmatpush2.msra.mxu0 0.0
    %2895 = vmatprep.subr.mxu0 0.0
    %2896 = vmatpush2.msra.mxu0 0.0
    %2897 = vmatprep.subr.mxu0 0.0
    %2898 = vmatpush2.msra.mxu0 0.0
    %2899 = vmatprep.subr.mxu0 0.0
    %2900 = vmatpush2.msra.mxu0 0.0
    %2901 = vmatprep.subr.mxu0 0.0
    %2902 = vmatpush2.msra.mxu0 0.0
    %2903 = vmatprep.subr.mxu0 0.0
    %2904 = vmatpush2.msra.mxu0 0.0
    %2905 = vmatprep.mubr.f32.mxu0 0.0
    %2906 = vmatmul.mubr.f32.gmra.mxu0 %v2839
    %v2907 = vpop.f32.mrf.mxu0
    %v2908 = vadd.f32 %v2835, %v2907
    %v2909 = vpop.f32.mrf.mxu0
    %2910 = vdwg.mxu0
    %v2911 = vmul.f32 %v2441, %v139
    %v2913 = vsel %vm275, %v2911, 0
    %2915 = vmatprep.subr.mxu0 0.0
    %2916 = vmatpush1.xpose.msra.mxu0 0.0
    %2917 = vmatprep.subr.mxu0 0.0
    %2918 = vmatpush1.xpose.msra.mxu0 0.0
    %2919 = vmatprep.subr.mxu0 0.0
    %2920 = vmatpush1.xpose.msra.mxu0 0.0
    %2921 = vmatprep.subr.mxu0 0.0
    %2922 = vmatpush1.xpose.msra.mxu0 0.0
    %2923 = vmatprep.subr.mxu0 0.0
    %2924 = vmatpush1.xpose.msra.mxu0 0.0
    %2925 = vmatprep.subr.mxu0 0.0
    %2926 = vmatpush1.xpose.msra.mxu0 0.0
    %2927 = vmatprep.subr.mxu0 0.0
    %2928 = vmatpush1.xpose.msra.mxu0 0.0
    %2929 = vmatprep.subr.mxu0 0.0
    %2930 = vmatpush1.xpose.msra.mxu0 0.0
    %2931 = vmatprep.subr.mxu0 0.0
    %2932 = vmatpush1.xpose.msra.mxu0 0.0
    %2933 = vmatprep.subr.mxu0 0.0
    %2934 = vmatpush1.xpose.msra.mxu0 0.0
    %2935 = vmatprep.subr.mxu0 0.0
    %2936 = vmatpush1.xpose.msra.mxu0 0.0
    %2937 = vmatprep.subr.mxu0 0.0
    %2938 = vmatpush1.xpose.msra.mxu0 0.0
    %2939 = vmatprep.subr.mxu0 0.0
    %2940 = vmatpush1.xpose.msra.mxu0 0.0
    %2941 = vmatprep.subr.mxu0 0.0
    %2942 = vmatpush1.xpose.msra.mxu0 0.0
    %2943 = vmatprep.subr.mxu0 0.0
    %2944 = vmatpush1.xpose.msra.mxu0 0.0
    %2945 = vmatprep.subr.mxu0 0.0
    %2946 = vmatpush1.xpose.msra.mxu0 %v2592
    %2947 = vmatprep.subr.mxu0 0.0
    %2948 = vmatpush2.xpose.msra.mxu0 0.0
    %2949 = vmatprep.subr.mxu0 0.0
    %2950 = vmatpush2.xpose.msra.mxu0 0.0
    %2951 = vmatprep.subr.mxu0 0.0
    %2952 = vmatpush2.xpose.msra.mxu0 0.0
    %2953 = vmatprep.subr.mxu0 0.0
    %2954 = vmatpush2.xpose.msra.mxu0 0.0
    %2955 = vmatprep.subr.mxu0 0.0
    %2956 = vmatpush2.xpose.msra.mxu0 0.0
    %2957 = vmatprep.subr.mxu0 0.0
    %2958 = vmatpush2.xpose.msra.mxu0 0.0
    %2959 = vmatprep.subr.mxu0 0.0
    %2960 = vmatpush2.xpose.msra.mxu0 0.0
    %2961 = vmatprep.subr.mxu0 0.0
    %2962 = vmatpush2.xpose.msra.mxu0 0.0
    %2963 = vmatprep.subr.mxu0 0.0
    %2964 = vmatpush2.xpose.msra.mxu0 0.0
    %2965 = vmatprep.subr.mxu0 0.0
    %2966 = vmatpush2.xpose.msra.mxu0 0.0
    %2967 = vmatprep.subr.mxu0 0.0
    %2968 = vmatpush2.xpose.msra.mxu0 0.0
    %2969 = vmatprep.subr.mxu0 0.0
    %2970 = vmatpush2.xpose.msra.mxu0 0.0
    %2971 = vmatprep.subr.mxu0 0.0
    %2972 = vmatpush2.xpose.msra.mxu0 0.0
    %2973 = vmatprep.subr.mxu0 0.0
    %2974 = vmatpush2.xpose.msra.mxu0 0.0
    %2975 = vmatprep.subr.mxu0 0.0
    %2976 = vmatpush2.xpose.msra.mxu0 0.0
    %2977 = vmatprep.subr.mxu0 0.0
    %2978 = vmatpush2.xpose.msra.mxu0 0.0
    %2979 = vmatprep.mubr.f32.mxu0 0.0
    %2980 = vmatmul.mubr.f32.gmra.mxu0 %v2913
    %v2981 = vpop.f32.mrf.mxu0
    %v2982 = vadd.f32 0.0, %v2981
    %v2983 = vpop.f32.mrf.mxu0
    %2984 = vdwg.mxu0
    %v2985 = vmul.f32 %v2982, 0.35355338
    %v2986 = vsel %vm2665, %v2985, -inf
    %2987 = vmax.xlane.f32.xlu0 %v2986
    %v2988 = vpop.xlane.xlu0 %2987
    %v2989 = vsub.f32 %v2985, %v2988
    %v2990 = vmul.f32 %v2989, 1.442695
    %v2991 = vpow.pop %v2990
    %v2992 = vsel %vm2665, %v2991, 0.0
    %2993 = vadd.xlane.f32.xlu0 %v2992
    %v2994 = vpop.xlane.xlu0 %2993
    %v2995 = vrcp.pop %v2994
    %v2996 = vmul.f32 %v2991, %v2995
    %v2997 = vmul.f32 %v2584, %v139
    %v2999 = vsel %vm193, %v2996, 0
    %3001 = vmatprep.subr.mxu0 0.0
    %3002 = vmatpush1.msra.mxu0 0.0
    %3003 = vmatprep.subr.mxu0 0.0
    %3004 = vmatpush1.msra.mxu0 0.0
    %3005 = vmatprep.subr.mxu0 0.0
    %3006 = vmatpush1.msra.mxu0 0.0
    %3007 = vmatprep.subr.mxu0 0.0
    %3008 = vmatpush1.msra.mxu0 0.0
    %3009 = vmatprep.subr.mxu0 0.0
    %3010 = vmatpush1.msra.mxu0 0.0
    %3011 = vmatprep.subr.mxu0 0.0
    %3012 = vmatpush1.msra.mxu0 0.0
    %3013 = vmatprep.subr.mxu0 0.0
    %3014 = vmatpush1.msra.mxu0 0.0
    %3015 = vmatprep.subr.mxu0 0.0
    %3016 = vmatpush1.msra.mxu0 0.0
    %3017 = vmatprep.subr.mxu0 0.0
    %3018 = vmatpush1.msra.mxu0 0.0
    %3019 = vmatprep.subr.mxu0 0.0
    %3020 = vmatpush1.msra.mxu0 0.0
    %3021 = vmatprep.subr.mxu0 0.0
    %3022 = vmatpush1.msra.mxu0 0.0
    %3023 = vmatprep.subr.mxu0 0.0
    %3024 = vmatpush1.msra.mxu0 0.0
    %3025 = vmatprep.subr.mxu0 0.0
    %3026 = vmatpush1.msra.mxu0 0.0
    %3027 = vmatprep.subr.mxu0 0.0
    %3028 = vmatpush1.msra.mxu0 0.0
    %3029 = vmatprep.subr.mxu0 0.0
    %3030 = vmatpush1.msra.mxu0 0.0
    %3031 = vmatprep.subr.mxu0 0.0
    %3032 = vmatpush1.msra.mxu0 %v2997
    %3033 = vmatprep.subr.mxu0 0.0
    %3034 = vmatpush2.msra.mxu0 0.0
    %3035 = vmatprep.subr.mxu0 0.0
    %3036 = vmatpush2.msra.mxu0 0.0
    %3037 = vmatprep.subr.mxu0 0.0
    %3038 = vmatpush2.msra.mxu0 0.0
    %3039 = vmatprep.subr.mxu0 0.0
    %3040 = vmatpush2.msra.mxu0 0.0
    %3041 = vmatprep.subr.mxu0 0.0
    %3042 = vmatpush2.msra.mxu0 0.0
    %3043 = vmatprep.subr.mxu0 0.0
    %3044 = vmatpush2.msra.mxu0 0.0
    %3045 = vmatprep.subr.mxu0 0.0
    %3046 = vmatpush2.msra.mxu0 0.0
    %3047 = vmatprep.subr.mxu0 0.0
    %3048 = vmatpush2.msra.mxu0 0.0
    %3049 = vmatprep.subr.mxu0 0.0
    %3050 = vmatpush2.msra.mxu0 0.0
    %3051 = vmatprep.subr.mxu0 0.0
    %3052 = vmatpush2.msra.mxu0 0.0
    %3053 = vmatprep.subr.mxu0 0.0
    %3054 = vmatpush2.msra.mxu0 0.0
    %3055 = vmatprep.subr.mxu0 0.0
    %3056 = vmatpush2.msra.mxu0 0.0
    %3057 = vmatprep.subr.mxu0 0.0
    %3058 = vmatpush2.msra.mxu0 0.0
    %3059 = vmatprep.subr.mxu0 0.0
    %3060 = vmatpush2.msra.mxu0 0.0
    %3061 = vmatprep.subr.mxu0 0.0
    %3062 = vmatpush2.msra.mxu0 0.0
    %3063 = vmatprep.subr.mxu0 0.0
    %3064 = vmatpush2.msra.mxu0 0.0
    %3065 = vmatprep.mubr.f32.mxu0 0.0
    %3066 = vmatmul.mubr.f32.gmra.mxu0 %v2999
    %v3067 = vpop.f32.mrf.mxu0
    %v3068 = vadd.f32 0.0, %v3067
    %v3069 = vpop.f32.mrf.mxu0
    %3070 = vdwg.mxu0
    %v3071 = vadd.f32 %v2908, %v3068
    %v3072 = vmul.f32 %v2441, %v144
    %v3074 = vsel %vm275, %v3072, 0
    %3076 = vmatprep.subr.mxu0 0.0
    %3077 = vmatpush1.xpose.msra.mxu0 0.0
    %3078 = vmatprep.subr.mxu0 0.0
    %3079 = vmatpush1.xpose.msra.mxu0 0.0
    %3080 = vmatprep.subr.mxu0 0.0
    %3081 = vmatpush1.xpose.msra.mxu0 0.0
    %3082 = vmatprep.subr.mxu0 0.0
    %3083 = vmatpush1.xpose.msra.mxu0 0.0
    %3084 = vmatprep.subr.mxu0 0.0
    %3085 = vmatpush1.xpose.msra.mxu0 0.0
    %3086 = vmatprep.subr.mxu0 0.0
    %3087 = vmatpush1.xpose.msra.mxu0 0.0
    %3088 = vmatprep.subr.mxu0 0.0
    %3089 = vmatpush1.xpose.msra.mxu0 0.0
    %3090 = vmatprep.subr.mxu0 0.0
    %3091 = vmatpush1.xpose.msra.mxu0 0.0
    %3092 = vmatprep.subr.mxu0 0.0
    %3093 = vmatpush1.xpose.msra.mxu0 0.0
    %3094 = vmatprep.subr.mxu0 0.0
    %3095 = vmatpush1.xpose.msra.mxu0 0.0
    %3096 = vmatprep.subr.mxu0 0.0
    %3097 = vmatpush1.xpose.msra.mxu0 0.0
    %3098 = vmatprep.subr.mxu0 0.0
    %3099 = vmatpush1.xpose.msra.mxu0 0.0
    %3100 = vmatprep.subr.mxu0 0.0
    %3101 = vmatpush1.xpose.msra.mxu0 0.0
    %3102 = vmatprep.subr.mxu0 0.0
    %3103 = vmatpush1.xpose.msra.mxu0 0.0
    %3104 = vmatprep.subr.mxu0 0.0
    %3105 = vmatpush1.xpose.msra.mxu0 0.0
    %3106 = vmatprep.subr.mxu0 0.0
    %3107 = vmatpush1.xpose.msra.mxu0 %v2592
    %3108 = vmatprep.subr.mxu0 0.0
    %3109 = vmatpush2.xpose.msra.mxu0 0.0
    %3110 = vmatprep.subr.mxu0 0.0
    %3111 = vmatpush2.xpose.msra.mxu0 0.0
    %3112 = vmatprep.subr.mxu0 0.0
    %3113 = vmatpush2.xpose.msra.mxu0 0.0
    %3114 = vmatprep.subr.mxu0 0.0
    %3115 = vmatpush2.xpose.msra.mxu0 0.0
    %3116 = vmatprep.subr.mxu0 0.0
    %3117 = vmatpush2.xpose.msra.mxu0 0.0
    %3118 = vmatprep.subr.mxu0 0.0
    %3119 = vmatpush2.xpose.msra.mxu0 0.0
    %3120 = vmatprep.subr.mxu0 0.0
    %3121 = vmatpush2.xpose.msra.mxu0 0.0
    %3122 = vmatprep.subr.mxu0 0.0
    %3123 = vmatpush2.xpose.msra.mxu0 0.0
    %3124 = vmatprep.subr.mxu0 0.0
    %3125 = vmatpush2.xpose.msra.mxu0 0.0
    %3126 = vmatprep.subr.mxu0 0.0
    %3127 = vmatpush2.xpose.msra.mxu0 0.0
    %3128 = vmatprep.subr.mxu0 0.0
    %3129 = vmatpush2.xpose.msra.mxu0 0.0
    %3130 = vmatprep.subr.mxu0 0.0
    %3131 = vmatpush2.xpose.msra.mxu0 0.0
    %3132 = vmatprep.subr.mxu0 0.0
    %3133 = vmatpush2.xpose.msra.mxu0 0.0
    %3134 = vmatprep.subr.mxu0 0.0
    %3135 = vmatpush2.xpose.msra.mxu0 0.0
    %3136 = vmatprep.subr.mxu0 0.0
    %3137 = vmatpush2.xpose.msra.mxu0 0.0
    %3138 = vmatprep.subr.mxu0 0.0
    %3139 = vmatpush2.xpose.msra.mxu0 0.0
    %3140 = vmatprep.mubr.f32.mxu0 0.0
    %3141 = vmatmul.mubr.f32.gmra.mxu0 %v3074
    %v3142 = vpop.f32.mrf.mxu0
    %v3143 = vadd.f32 0.0, %v3142
    %v3144 = vpop.f32.mrf.mxu0
    %3145 = vdwg.mxu0
    %v3146 = vmul.f32 %v3143, 0.35355338
    %v3147 = vsel %vm2665, %v3146, -inf
    %3148 = vmax.xlane.f32.xlu0 %v3147
    %v3149 = vpop.xlane.xlu0 %3148
    %v3150 = vsub.f32 %v3146, %v3149
    %v3151 = vmul.f32 %v3150, 1.442695
    %v3152 = vpow.pop %v3151
    %v3153 = vsel %vm2665, %v3152, 0.0
    %3154 = vadd.xlane.f32.xlu0 %v3153
    %v3155 = vpop.xlane.xlu0 %3154
    %v3156 = vrcp.pop %v3155
    %v3157 = vmul.f32 %v3152, %v3156
    %v3158 = vmul.f32 %v2584, %v144
    %v3160 = vsel %vm193, %v3157, 0
    %3162 = vmatprep.subr.mxu0 0.0
    %3163 = vmatpush1.msra.mxu0 0.0
    %3164 = vmatprep.subr.mxu0 0.0
    %3165 = vmatpush1.msra.mxu0 0.0
    %3166 = vmatprep.subr.mxu0 0.0
    %3167 = vmatpush1.msra.mxu0 0.0
    %3168 = vmatprep.subr.mxu0 0.0
    %3169 = vmatpush1.msra.mxu0 0.0
    %3170 = vmatprep.subr.mxu0 0.0
    %3171 = vmatpush1.msra.mxu0 0.0
    %3172 = vmatprep.subr.mxu0 0.0
    %3173 = vmatpush1.msra.mxu0 0.0
    %3174 = vmatprep.subr.mxu0 0.0
    %3175 = vmatpush1.msra.mxu0 0.0
    %3176 = vmatprep.subr.mxu0 0.0
    %3177 = vmatpush1.msra.mxu0 0.0
    %3178 = vmatprep.subr.mxu0 0.0
    %3179 = vmatpush1.msra.mxu0 0.0
    %3180 = vmatprep.subr.mxu0 0.0
    %3181 = vmatpush1.msra.mxu0 0.0
    %3182 = vmatprep.subr.mxu0 0.0
    %3183 = vmatpush1.msra.mxu0 0.0
    %3184 = vmatprep.subr.mxu0 0.0
    %3185 = vmatpush1.msra.mxu0 0.0
    %3186 = vmatprep.subr.mxu0 0.0
    %3187 = vmatpush1.msra.mxu0 0.0
    %3188 = vmatprep.subr.mxu0 0.0
    %3189 = vmatpush1.msra.mxu0 0.0
    %3190 = vmatprep.subr.mxu0 0.0
    %3191 = vmatpush1.msra.mxu0 0.0
    %3192 = vmatprep.subr.mxu0 0.0
    %3193 = vmatpush1.msra.mxu0 %v3158
    %3194 = vmatprep.subr.mxu0 0.0
    %3195 = vmatpush2.msra.mxu0 0.0
    %3196 = vmatprep.subr.mxu0 0.0
    %3197 = vmatpush2.msra.mxu0 0.0
    %3198 = vmatprep.subr.mxu0 0.0
    %3199 = vmatpush2.msra.mxu0 0.0
    %3200 = vmatprep.subr.mxu0 0.0
    %3201 = vmatpush2.msra.mxu0 0.0
    %3202 = vmatprep.subr.mxu0 0.0
    %3203 = vmatpush2.msra.mxu0 0.0
    %3204 = vmatprep.subr.mxu0 0.0
    %3205 = vmatpush2.msra.mxu0 0.0
    %3206 = vmatprep.subr.mxu0 0.0
    %3207 = vmatpush2.msra.mxu0 0.0
    %3208 = vmatprep.subr.mxu0 0.0
    %3209 = vmatpush2.msra.mxu0 0.0
    %3210 = vmatprep.subr.mxu0 0.0
    %3211 = vmatpush2.msra.mxu0 0.0
    %3212 = vmatprep.subr.mxu0 0.0
    %3213 = vmatpush2.msra.mxu0 0.0
    %3214 = vmatprep.subr.mxu0 0.0
    %3215 = vmatpush2.msra.mxu0 0.0
    %3216 = vmatprep.subr.mxu0 0.0
    %3217 = vmatpush2.msra.mxu0 0.0
    %3218 = vmatprep.subr.mxu0 0.0
    %3219 = vmatpush2.msra.mxu0 0.0
    %3220 = vmatprep.subr.mxu0 0.0
    %3221 = vmatpush2.msra.mxu0 0.0
    %3222 = vmatprep.subr.mxu0 0.0
    %3223 = vmatpush2.msra.mxu0 0.0
    %3224 = vmatprep.subr.mxu0 0.0
    %3225 = vmatpush2.msra.mxu0 0.0
    %3226 = vmatprep.mubr.f32.mxu0 0.0
    %3227 = vmatmul.mubr.f32.gmra.mxu0 %v3160
    %v3228 = vpop.f32.mrf.mxu0
    %v3229 = vadd.f32 0.0, %v3228
    %v3230 = vpop.f32.mrf.mxu0
    %3231 = vdwg.mxu0
    %v3232 = vadd.f32 %v3071, %v3229
    %v3234 = vsel %vm275, %v3232, 0
    %3236 = vmatprep.subr.mxu0 0.0
    %3237 = vmatpush1.msra.mxu0 0.0
    %3238 = vmatprep.subr.mxu0 0.0
    %3239 = vmatpush1.msra.mxu0 0.0
    %3240 = vmatprep.subr.mxu0 0.0
    %3241 = vmatpush1.msra.mxu0 0.0
    %3242 = vmatprep.subr.mxu0 0.0
    %3243 = vmatpush1.msra.mxu0 0.0
    %3244 = vmatprep.subr.mxu0 0.0
    %3245 = vmatpush1.msra.mxu0 0.0
    %3246 = vmatprep.subr.mxu0 0.0
    %3247 = vmatpush1.msra.mxu0 0.0
    %3248 = vmatprep.subr.mxu0 0.0
    %3249 = vmatpush1.msra.mxu0 0.0
    %3250 = vmatprep.subr.mxu0 0.0
    %3251 = vmatpush1.msra.mxu0 0.0
    %3252 = vmatprep.subr.mxu0 0.0
    %3253 = vmatpush1.msra.mxu0 0.0
    %3254 = vmatprep.subr.mxu0 0.0
    %3255 = vmatpush1.msra.mxu0 0.0
    %3256 = vmatprep.subr.mxu0 0.0
    %3257 = vmatpush1.msra.mxu0 0.0
    %3258 = vmatprep.subr.mxu0 0.0
    %3259 = vmatpush1.msra.mxu0 0.0
    %3260 = vmatprep.subr.mxu0 0.0
    %3261 = vmatpush1.msra.mxu0 %v181
    %3262 = vmatprep.subr.mxu0 0.0
    %3263 = vmatpush1.msra.mxu0 %v180
    %3264 = vmatprep.subr.mxu0 0.0
    %3265 = vmatpush1.msra.mxu0 %v179
    %3266 = vmatprep.subr.mxu0 0.0
    %3267 = vmatpush1.msra.mxu0 %v178
    %3268 = vmatprep.subr.mxu0 0.0
    %3269 = vmatpush2.msra.mxu0 0.0
    %3270 = vmatprep.subr.mxu0 0.0
    %3271 = vmatpush2.msra.mxu0 0.0
    %3272 = vmatprep.subr.mxu0 0.0
    %3273 = vmatpush2.msra.mxu0 0.0
    %3274 = vmatprep.subr.mxu0 0.0
    %3275 = vmatpush2.msra.mxu0 0.0
    %3276 = vmatprep.subr.mxu0 0.0
    %3277 = vmatpush2.msra.mxu0 0.0
    %3278 = vmatprep.subr.mxu0 0.0
    %3279 = vmatpush2.msra.mxu0 0.0
    %3280 = vmatprep.subr.mxu0 0.0
    %3281 = vmatpush2.msra.mxu0 0.0
    %3282 = vmatprep.subr.mxu0 0.0
    %3283 = vmatpush2.msra.mxu0 0.0
    %3284 = vmatprep.subr.mxu0 0.0
    %3285 = vmatpush2.msra.mxu0 0.0
    %3286 = vmatprep.subr.mxu0 0.0
    %3287 = vmatpush2.msra.mxu0 0.0
    %3288 = vmatprep.subr.mxu0 0.0
    %3289 = vmatpush2.msra.mxu0 0.0
    %3290 = vmatprep.subr.mxu0 0.0
    %3291 = vmatpush2.msra.mxu0 0.0
    %3292 = vmatprep.subr.mxu0 0.0
    %3293 = vmatpush2.msra.mxu0 0.0
    %3294 = vmatprep.subr.mxu0 0.0
    %3295 = vmatpush2.msra.mxu0 0.0
    %3296 = vmatprep.subr.mxu0 0.0
    %3297 = vmatpush2.msra.mxu0 0.0
    %3298 = vmatprep.subr.mxu0 0.0
    %3299 = vmatpush2.msra.mxu0 0.0
    %3300 = vmatprep.mubr.f32.mxu0 0.0
    %3301 = vmatmul.mubr.f32.gmra.mxu0 %v3234
    %v3302 = vpop.f32.mrf.mxu0
    %v3303 = vadd.f32 0.0, %v3302
    %v3304 = vpop.f32.mrf.mxu0
    %3305 = vdwg.mxu0
    %v3307 = vsel %vm275, %v3303, 0
    %3309 = vmatprep.subr.mxu0 0.0
    %3310 = vmatpush1.xpose.msra.mxu0 0.0
    %3311 = vmatprep.subr.mxu0 0.0
    %3312 = vmatpush1.xpose.msra.mxu0 0.0
    %3313 = vmatprep.subr.mxu0 0.0
    %3314 = vmatpush1.xpose.msra.mxu0 0.0
    %3315 = vmatprep.subr.mxu0 0.0
    %3316 = vmatpush1.xpose.msra.mxu0 0.0
    %3317 = vmatprep.subr.mxu0 0.0
    %3318 = vmatpush1.xpose.msra.mxu0 0.0
    %3319 = vmatprep.subr.mxu0 0.0
    %3320 = vmatpush1.xpose.msra.mxu0 0.0
    %3321 = vmatprep.subr.mxu0 0.0
    %3322 = vmatpush1.xpose.msra.mxu0 0.0
    %3323 = vmatprep.subr.mxu0 0.0
    %3324 = vmatpush1.xpose.msra.mxu0 0.0
    %3325 = vmatprep.subr.mxu0 0.0
    %3326 = vmatpush1.xpose.msra.mxu0 0.0
    %3327 = vmatprep.subr.mxu0 0.0
    %3328 = vmatpush1.xpose.msra.mxu0 0.0
    %3329 = vmatprep.subr.mxu0 0.0
    %3330 = vmatpush1.xpose.msra.mxu0 0.0
    %3331 = vmatprep.subr.mxu0 0.0
    %3332 = vmatpush1.xpose.msra.mxu0 0.0
    %3333 = vmatprep.subr.mxu0 0.0
    %3334 = vmatpush1.xpose.msra.mxu0 0.0
    %3335 = vmatprep.subr.mxu0 0.0
    %3336 = vmatpush1.xpose.msra.mxu0 0.0
    %3337 = vmatprep.subr.mxu0 0.0
    %3338 = vmatpush1.xpose.msra.mxu0 0.0
    %3339 = vmatprep.subr.mxu0 0.0
    %3340 = vmatpush1.xpose.msra.mxu0 %v2445
    %3341 = vmatprep.subr.mxu0 0.0
    %3342 = vmatpush2.xpose.msra.mxu0 0.0
    %3343 = vmatprep.subr.mxu0 0.0
    %3344 = vmatpush2.xpose.msra.mxu0 0.0
    %3345 = vmatprep.subr.mxu0 0.0
    %3346 = vmatpush2.xpose.msra.mxu0 0.0
    %3347 = vmatprep.subr.mxu0 0.0
    %3348 = vmatpush2.xpose.msra.mxu0 0.0
    %3349 = vmatprep.subr.mxu0 0.0
    %3350 = vmatpush2.xpose.msra.mxu0 0.0
    %3351 = vmatprep.subr.mxu0 0.0
    %3352 = vmatpush2.xpose.msra.mxu0 0.0
    %3353 = vmatprep.subr.mxu0 0.0
    %3354 = vmatpush2.xpose.msra.mxu0 0.0
    %3355 = vmatprep.subr.mxu0 0.0
    %3356 = vmatpush2.xpose.msra.mxu0 0.0
    %3357 = vmatprep.subr.mxu0 0.0
    %3358 = vmatpush2.xpose.msra.mxu0 0.0
    %3359 = vmatprep.subr.mxu0 0.0
    %3360 = vmatpush2.xpose.msra.mxu0 0.0
    %3361 = vmatprep.subr.mxu0 0.0
    %3362 = vmatpush2.xpose.msra.mxu0 0.0
    %3363 = vmatprep.subr.mxu0 0.0
    %3364 = vmatpush2.xpose.msra.mxu0 0.0
    %3365 = vmatprep.subr.mxu0 0.0
    %3366 = vmatpush2.xpose.msra.mxu0 0.0
    %3367 = vmatprep.subr.mxu0 0.0
    %3368 = vmatpush2.xpose.msra.mxu0 0.0
    %3369 = vmatprep.subr.mxu0 0.0
    %3370 = vmatpush2.xpose.msra.mxu0 0.0
    %3371 = vmatprep.subr.mxu0 0.0
    %3372 = vmatpush2.xpose.msra.mxu0 0.0
    %3373 = vmatprep.mubr.f32.mxu0 0.0
    %3374 = vmatmul.mubr.f32.gmra.mxu0 %v3307
    %v3375 = vpop.f32.mrf.mxu0
    %v3376 = vadd.f32 0.0, %v3375
    %v3377 = vpop.f32.mrf.mxu0
    %3378 = vdwg.mxu0
    %v3379 = vmul.f32 %v3376, 0.35355338
    %3380 = vst.msk [vmem:[#allocation11] sm:$0xff] %vm275, %v1739
    %3381 = vst.msk [vmem:[%s19] sm:$0x1] %vm2665, %v3379
    %s3382 = scalar_lea.vmem %s0, 16
    %v3383 = vld [vmem:[%s3382] sm:$0xff]
    %v3384 = vld [vmem:[%s3382 + $0x8] sm:$0xff]
    %s3385 = scalar_lea.vmem %s1, 16
    %v3386 = vld [vmem:[%s3385] sm:$0xff]
    %v3387 = vld [vmem:[%s3385 + $0x8] sm:$0xff]
    %s3388 = scalar_lea.vmem %s2, 8
    %v3389 = vld [vmem:[%s3388] sm:$0xff]
    %v3391 = vsel %vm193, %v3383, 0
    %v3394 = vsel %vm193, %v3384, 0
    %3396 = vmatprep.subr.mxu0 0.0
    %3397 = vmatpush1.msra.mxu0 0.0
    %3398 = vmatprep.subr.mxu0 0.0
    %3399 = vmatpush1.msra.mxu0 0.0
    %3400 = vmatprep.subr.mxu0 0.0
    %3401 = vmatpush1.msra.mxu0 0.0
    %3402 = vmatprep.subr.mxu0 0.0
    %3403 = vmatpush1.msra.mxu0 0.0
    %3404 = vmatprep.subr.mxu0 0.0
    %3405 = vmatpush1.msra.mxu0 0.0
    %3406 = vmatprep.subr.mxu0 0.0
    %3407 = vmatpush1.msra.mxu0 0.0
    %3408 = vmatprep.subr.mxu0 0.0
    %3409 = vmatpush1.msra.mxu0 0.0
    %3410 = vmatprep.subr.mxu0 0.0
    %3411 = vmatpush1.msra.mxu0 0.0
    %3412 = vmatprep.subr.mxu0 0.0
    %3413 = vmatpush1.msra.mxu0 0.0
    %3414 = vmatprep.subr.mxu0 0.0
    %3415 = vmatpush1.msra.mxu0 0.0
    %3416 = vmatprep.subr.mxu0 0.0
    %3417 = vmatpush1.msra.mxu0 0.0
    %3418 = vmatprep.subr.mxu0 0.0
    %3419 = vmatpush1.msra.mxu0 0.0
    %3420 = vmatprep.subr.mxu0 0.0
    %3421 = vmatpush1.msra.mxu0 0.0
    %3422 = vmatprep.subr.mxu0 0.0
    %3423 = vmatpush1.msra.mxu0 0.0
    %3424 = vmatprep.subr.mxu0 0.0
    %3425 = vmatpush1.msra.mxu0 0.0
    %3426 = vmatprep.subr.mxu0 0.0
    %3427 = vmatpush1.msra.mxu0 %v145
    %3428 = vmatprep.subr.mxu0 0.0
    %3429 = vmatpush2.msra.mxu0 0.0
    %3430 = vmatprep.subr.mxu0 0.0
    %3431 = vmatpush2.msra.mxu0 0.0
    %3432 = vmatprep.subr.mxu0 0.0
    %3433 = vmatpush2.msra.mxu0 0.0
    %3434 = vmatprep.subr.mxu0 0.0
    %3435 = vmatpush2.msra.mxu0 0.0
    %3436 = vmatprep.subr.mxu0 0.0
    %3437 = vmatpush2.msra.mxu0 0.0
    %3438 = vmatprep.subr.mxu0 0.0
    %3439 = vmatpush2.msra.mxu0 0.0
    %3440 = vmatprep.subr.mxu0 0.0
    %3441 = vmatpush2.msra.mxu0 0.0
    %3442 = vmatprep.subr.mxu0 0.0
    %3443 = vmatpush2.msra.mxu0 0.0
    %3444 = vmatprep.subr.mxu0 0.0
    %3445 = vmatpush2.msra.mxu0 0.0
    %3446 = vmatprep.subr.mxu0 0.0
    %3447 = vmatpush2.msra.mxu0 0.0
    %3448 = vmatprep.subr.mxu0 0.0
    %3449 = vmatpush2.msra.mxu0 0.0
    %3450 = vmatprep.subr.mxu0 0.0
    %3451 = vmatpush2.msra.mxu0 0.0
    %3452 = vmatprep.subr.mxu0 0.0
    %3453 = vmatpush2.msra.mxu0 0.0
    %3454 = vmatprep.subr.mxu0 0.0
    %3455 = vmatpush2.msra.mxu0 0.0
    %3456 = vmatprep.subr.mxu0 0.0
    %3457 = vmatpush2.msra.mxu0 0.0
    %3458 = vmatprep.subr.mxu0 0.0
    %3459 = vmatpush2.msra.mxu0 0.0
    %3460 = vmatprep.mubr.f32.mxu0 0.0
    %3461 = vmatmul.mubr.f32.gmra.mxu0 %v3391
    %v3462 = vpop.f32.mrf.mxu0
    %v3463 = vadd.f32 %v191, %v3462
    %v3464 = vpop.f32.mrf.mxu0
    %3465 = vmatprep.mubr.f32.mxu0 0.0
    %3466 = vmatmul.mubr.f32.gmra.mxu0 %v3394
    %v3467 = vpop.f32.mrf.mxu0
    %v3468 = vadd.f32 %v191, %v3467
    %v3469 = vpop.f32.mrf.mxu0
    %3470 = vdwg.mxu0
    %v3472 = vsel %vm275, %v3463, 0
    %v3475 = vsel %vm275, %v3468, 0
    %3477 = vmatprep.subr.mxu0 0.0
    %3478 = vmatpush1.msra.mxu0 0.0
    %3479 = vmatprep.subr.mxu0 0.0
    %3480 = vmatpush1.msra.mxu0 0.0
    %3481 = vmatprep.subr.mxu0 0.0
    %3482 = vmatpush1.msra.mxu0 0.0
    %3483 = vmatprep.subr.mxu0 0.0
    %3484 = vmatpush1.msra.mxu0 0.0
    %3485 = vmatprep.subr.mxu0 0.0
    %3486 = vmatpush1.msra.mxu0 0.0
    %3487 = vmatprep.subr.mxu0 0.0
    %3488 = vmatpush1.msra.mxu0 0.0
    %3489 = vmatprep.subr.mxu0 0.0
    %3490 = vmatpush1.msra.mxu0 0.0
    %3491 = vmatprep.subr.mxu0 0.0
    %3492 = vmatpush1.msra.mxu0 0.0
    %3493 = vmatprep.subr.mxu0 0.0
    %3494 = vmatpush1.msra.mxu0 0.0
    %3495 = vmatprep.subr.mxu0 0.0
    %3496 = vmatpush1.msra.mxu0 0.0
    %3497 = vmatprep.subr.mxu0 0.0
    %3498 = vmatpush1.msra.mxu0 0.0
    %3499 = vmatprep.subr.mxu0 0.0
    %3500 = vmatpush1.msra.mxu0 0.0
    %3501 = vmatprep.subr.mxu0 0.0
    %3502 = vmatpush1.msra.mxu0 %v151
    %3503 = vmatprep.subr.mxu0 0.0
    %3504 = vmatpush1.msra.mxu0 %v150
    %3505 = vmatprep.subr.mxu0 0.0
    %3506 = vmatpush1.msra.mxu0 %v149
    %3507 = vmatprep.subr.mxu0 0.0
    %3508 = vmatpush1.msra.mxu0 %v148
    %3509 = vmatprep.subr.mxu0 0.0
    %3510 = vmatpush2.msra.mxu0 0.0
    %3511 = vmatprep.subr.mxu0 0.0
    %3512 = vmatpush2.msra.mxu0 0.0
    %3513 = vmatprep.subr.mxu0 0.0
    %3514 = vmatpush2.msra.mxu0 0.0
    %3515 = vmatprep.subr.mxu0 0.0
    %3516 = vmatpush2.msra.mxu0 0.0
    %3517 = vmatprep.subr.mxu0 0.0
    %3518 = vmatpush2.msra.mxu0 0.0
    %3519 = vmatprep.subr.mxu0 0.0
    %3520 = vmatpush2.msra.mxu0 0.0
    %3521 = vmatprep.subr.mxu0 0.0
    %3522 = vmatpush2.msra.mxu0 0.0
    %3523 = vmatprep.subr.mxu0 0.0
    %3524 = vmatpush2.msra.mxu0 0.0
    %3525 = vmatprep.subr.mxu0 0.0
    %3526 = vmatpush2.msra.mxu0 0.0
    %3527 = vmatprep.subr.mxu0 0.0
    %3528 = vmatpush2.msra.mxu0 0.0
    %3529 = vmatprep.subr.mxu0 0.0
    %3530 = vmatpush2.msra.mxu0 0.0
    %3531 = vmatprep.subr.mxu0 0.0
    %3532 = vmatpush2.msra.mxu0 0.0
    %3533 = vmatprep.subr.mxu0 0.0
    %3534 = vmatpush2.msra.mxu0 0.0
    %3535 = vmatprep.subr.mxu0 0.0
    %3536 = vmatpush2.msra.mxu0 0.0
    %3537 = vmatprep.subr.mxu0 0.0
    %3538 = vmatpush2.msra.mxu0 0.0
    %3539 = vmatprep.subr.mxu0 0.0
    %3540 = vmatpush2.msra.mxu0 0.0
    %3541 = vmatprep.mubr.f32.mxu0 0.0
    %3542 = vmatmul.mubr.f32.gmra.mxu0 %v3472
    %v3543 = vpop.f32.mrf.mxu0
    %v3544 = vadd.f32 0.0, %v3543
    %v3545 = vpop.f32.mrf.mxu0
    %3546 = vmatprep.mubr.f32.mxu0 0.0
    %3547 = vmatmul.mubr.f32.gmra.mxu0 %v3475
    %v3548 = vpop.f32.mrf.mxu0
    %v3549 = vadd.f32 0.0, %v3548
    %v3550 = vpop.f32.mrf.mxu0
    %3551 = vdwg.mxu0
    %v3553 = vsel %vm275, %v3544, 0
    %v3556 = vsel %vm275, %v3549, 0
    %3558 = vmatprep.subr.mxu0 0.0
    %3559 = vmatpush1.xpose.msra.mxu0 0.0
    %3560 = vmatprep.subr.mxu0 0.0
    %3561 = vmatpush1.xpose.msra.mxu0 0.0
    %3562 = vmatprep.subr.mxu0 0.0
    %3563 = vmatpush1.xpose.msra.mxu0 0.0
    %3564 = vmatprep.subr.mxu0 0.0
    %3565 = vmatpush1.xpose.msra.mxu0 0.0
    %3566 = vmatprep.subr.mxu0 0.0
    %3567 = vmatpush1.xpose.msra.mxu0 0.0
    %3568 = vmatprep.subr.mxu0 0.0
    %3569 = vmatpush1.xpose.msra.mxu0 0.0
    %3570 = vmatprep.subr.mxu0 0.0
    %3571 = vmatpush1.xpose.msra.mxu0 0.0
    %3572 = vmatprep.subr.mxu0 0.0
    %3573 = vmatpush1.xpose.msra.mxu0 0.0
    %3574 = vmatprep.subr.mxu0 0.0
    %3575 = vmatpush1.xpose.msra.mxu0 0.0
    %3576 = vmatprep.subr.mxu0 0.0
    %3577 = vmatpush1.xpose.msra.mxu0 0.0
    %3578 = vmatprep.subr.mxu0 0.0
    %3579 = vmatpush1.xpose.msra.mxu0 0.0
    %3580 = vmatprep.subr.mxu0 0.0
    %3581 = vmatpush1.xpose.msra.mxu0 0.0
    %3582 = vmatprep.subr.mxu0 0.0
    %3583 = vmatpush1.xpose.msra.mxu0 0.0
    %3584 = vmatprep.subr.mxu0 0.0
    %3585 = vmatpush1.xpose.msra.mxu0 0.0
    %3586 = vmatprep.subr.mxu0 0.0
    %3587 = vmatpush1.xpose.msra.mxu0 0.0
    %3588 = vmatprep.subr.mxu0 0.0
    %3589 = vmatpush1.xpose.msra.mxu0 %v364
    %3590 = vmatprep.subr.mxu0 0.0
    %3591 = vmatpush2.xpose.msra.mxu0 0.0
    %3592 = vmatprep.subr.mxu0 0.0
    %3593 = vmatpush2.xpose.msra.mxu0 0.0
    %3594 = vmatprep.subr.mxu0 0.0
    %3595 = vmatpush2.xpose.msra.mxu0 0.0
    %3596 = vmatprep.subr.mxu0 0.0
    %3597 = vmatpush2.xpose.msra.mxu0 0.0
    %3598 = vmatprep.subr.mxu0 0.0
    %3599 = vmatpush2.xpose.msra.mxu0 0.0
    %3600 = vmatprep.subr.mxu0 0.0
    %3601 = vmatpush2.xpose.msra.mxu0 0.0
    %3602 = vmatprep.subr.mxu0 0.0
    %3603 = vmatpush2.xpose.msra.mxu0 0.0
    %3604 = vmatprep.subr.mxu0 0.0
    %3605 = vmatpush2.xpose.msra.mxu0 0.0
    %3606 = vmatprep.subr.mxu0 0.0
    %3607 = vmatpush2.xpose.msra.mxu0 0.0
    %3608 = vmatprep.subr.mxu0 0.0
    %3609 = vmatpush2.xpose.msra.mxu0 0.0
    %3610 = vmatprep.subr.mxu0 0.0
    %3611 = vmatpush2.xpose.msra.mxu0 0.0
    %3612 = vmatprep.subr.mxu0 0.0
    %3613 = vmatpush2.xpose.msra.mxu0 0.0
    %3614 = vmatprep.subr.mxu0 0.0
    %3615 = vmatpush2.xpose.msra.mxu0 0.0
    %3616 = vmatprep.subr.mxu0 0.0
    %3617 = vmatpush2.xpose.msra.mxu0 0.0
    %3618 = vmatprep.subr.mxu0 0.0
    %3619 = vmatpush2.xpose.msra.mxu0 0.0
    %3620 = vmatprep.subr.mxu0 0.0
    %3621 = vmatpush2.xpose.msra.mxu0 0.0
    %3622 = vmatprep.mubr.f32.mxu0 0.0
    %3623 = vmatmul.mubr.f32.gmra.mxu0 %v3553
    %v3624 = vpop.f32.mrf.mxu0
    %v3625 = vadd.f32 0.0, %v3624
    %v3626 = vpop.f32.mrf.mxu0
    %3627 = vmatprep.mubr.f32.mxu0 0.0
    %3628 = vmatmul.mubr.f32.gmra.mxu0 %v3556
    %v3629 = vpop.f32.mrf.mxu0
    %v3630 = vadd.f32 0.0, %v3629
    %v3631 = vpop.f32.mrf.mxu0
    %3632 = vdwg.mxu0
    %3633 = vmatprep.subr.mxu0 0.0
    %3634 = vmatpush1.xpose.msra.mxu0 0.0
    %3635 = vmatprep.subr.mxu0 0.0
    %3636 = vmatpush1.xpose.msra.mxu0 0.0
    %3637 = vmatprep.subr.mxu0 0.0
    %3638 = vmatpush1.xpose.msra.mxu0 0.0
    %3639 = vmatprep.subr.mxu0 0.0
    %3640 = vmatpush1.xpose.msra.mxu0 0.0
    %3641 = vmatprep.subr.mxu0 0.0
    %3642 = vmatpush1.xpose.msra.mxu0 0.0
    %3643 = vmatprep.subr.mxu0 0.0
    %3644 = vmatpush1.xpose.msra.mxu0 0.0
    %3645 = vmatprep.subr.mxu0 0.0
    %3646 = vmatpush1.xpose.msra.mxu0 0.0
    %3647 = vmatprep.subr.mxu0 0.0
    %3648 = vmatpush1.xpose.msra.mxu0 0.0
    %3649 = vmatprep.subr.mxu0 0.0
    %3650 = vmatpush1.xpose.msra.mxu0 0.0
    %3651 = vmatprep.subr.mxu0 0.0
    %3652 = vmatpush1.xpose.msra.mxu0 0.0
    %3653 = vmatprep.subr.mxu0 0.0
    %3654 = vmatpush1.xpose.msra.mxu0 0.0
    %3655 = vmatprep.subr.mxu0 0.0
    %3656 = vmatpush1.xpose.msra.mxu0 0.0
    %3657 = vmatprep.subr.mxu0 0.0
    %3658 = vmatpush1.xpose.msra.mxu0 0.0
    %3659 = vmatprep.subr.mxu0 0.0
    %3660 = vmatpush1.xpose.msra.mxu0 0.0
    %3661 = vmatprep.subr.mxu0 0.0
    %3662 = vmatpush1.xpose.msra.mxu0 %v3556
    %3663 = vmatprep.subr.mxu0 0.0
    %3664 = vmatpush1.xpose.msra.mxu0 %v3553
    %3665 = vmatprep.subr.mxu0 0.0
    %3666 = vmatpush2.xpose.msra.mxu0 0.0
    %3667 = vmatprep.subr.mxu0 0.0
    %3668 = vmatpush2.xpose.msra.mxu0 0.0
    %3669 = vmatprep.subr.mxu0 0.0
    %3670 = vmatpush2.xpose.msra.mxu0 0.0
    %3671 = vmatprep.subr.mxu0 0.0
    %3672 = vmatpush2.xpose.msra.mxu0 0.0
    %3673 = vmatprep.subr.mxu0 0.0
    %3674 = vmatpush2.xpose.msra.mxu0 0.0
    %3675 = vmatprep.subr.mxu0 0.0
    %3676 = vmatpush2.xpose.msra.mxu0 0.0
    %3677 = vmatprep.subr.mxu0 0.0
    %3678 = vmatpush2.xpose.msra.mxu0 0.0
    %3679 = vmatprep.subr.mxu0 0.0
    %3680 = vmatpush2.xpose.msra.mxu0 0.0
    %3681 = vmatprep.subr.mxu0 0.0
    %3682 = vmatpush2.xpose.msra.mxu0 0.0
    %3683 = vmatprep.subr.mxu0 0.0
    %3684 = vmatpush2.xpose.msra.mxu0 0.0
    %3685 = vmatprep.subr.mxu0 0.0
    %3686 = vmatpush2.xpose.msra.mxu0 0.0
    %3687 = vmatprep.subr.mxu0 0.0
    %3688 = vmatpush2.xpose.msra.mxu0 0.0
    %3689 = vmatprep.subr.mxu0 0.0
    %3690 = vmatpush2.xpose.msra.mxu0 0.0
    %3691 = vmatprep.subr.mxu0 0.0
    %3692 = vmatpush2.xpose.msra.mxu0 0.0
    %3693 = vmatprep.subr.mxu0 0.0
    %3694 = vmatpush2.xpose.msra.mxu0 0.0
    %3695 = vmatprep.subr.mxu0 0.0
    %3696 = vmatpush2.xpose.msra.mxu0 0.0
    %3697 = vmatprep.mubr.f32.mxu0 0.0
    %3698 = vmatmul.mubr.f32.gmra.mxu0 %v442
    %v3699 = vpop.f32.mrf.mxu0
    %v3700 = vadd.f32 0.0, %v3699
    %v3701 = vpop.f32.mrf.mxu0
    %3702 = vdwg.mxu0
    %3704 = vset.pattern.permute.xlu0 0
    %3705 = vperm.xlu0 %3704, %v3625
    %v3706 = vpop.permute.xlu0 %3705
    %3709 = vset.pattern.permute.xlu0 0
    %3710 = vperm.xlu0 %3709, %v3630
    %v3711 = vpop.permute.xlu0 %3710
    %v3713 = vlaneseq
    %v3714 = vshrl.u32 %v3713, 7
    %v3715 = vsub.s32 0, %v3714
    %v3716 = vrot.slane %v3700, %v3715
    %v3717 = vadd.f32 %v3706, %v3716
    %v3718 = vadd.f32 %v3711, %v3716
    %vm3719 = vcmp.gt.f32.partialorder %v3717, 0.0
    %vm3720 = vcmp.gt.f32.partialorder %v3718, 0.0
    %v3721 = vmul.f32 %v3717, 0.2
    %v3722 = vmul.f32 %v3718, 0.2
    %v3723 = vsel %vm3719, %v3717, %v3721
    %v3724 = vsel %vm3720, %v3718, %v3722
    %vm3725 = vcmp.gt.f32.partialorder %v3386, 0.0
    %vm3726 = vcmp.gt.f32.partialorder %v3387, 0.0
    %v3727 = vsel %vm3725, %v3723, -9e+15
    %v3728 = vsel %vm3726, %v3724, -9e+15
    %v3729 = vsel %vm540, %v3727, -inf
    %3730 = vmax.xlane.f32.xlu0 %v3729
    %v3731 = vpop.xlane.xlu0 %3730
    %v3732 = vsel %vm540, %v3728, -inf
    %3733 = vmax.xlane.f32.xlu0 %v3732
    %v3734 = vpop.xlane.xlu0 %3733
    %v3735 = vsub.f32 %v3727, %v3731
    %v3736 = vsub.f32 %v3728, %v3734
    %v3737 = vmul.f32 %v3735, 1.442695
    %v3738 = vpow.pop %v3737
    %v3739 = vmul.f32 %v3736, 1.442695
    %v3740 = vpow.pop %v3739
    %v3741 = vsel %vm540, %v3738, 0.0
    %3742 = vadd.xlane.f32.xlu0 %v3741
    %v3743 = vpop.xlane.xlu0 %3742
    %v3744 = vsel %vm540, %v3740, 0.0
    %3745 = vadd.xlane.f32.xlu0 %v3744
    %v3746 = vpop.xlane.xlu0 %3745
    %v3747 = vrcp.pop %v3743
    %v3748 = vrcp.pop %v3746
    %v3749 = vmul.f32 %v3738, %v3747
    %v3750 = vmul.f32 %v3740, %v3748
    %v3751 = vmul.f32 %v3544, %v129
    %v3752 = vmul.f32 %v3549, %v129
    %3753 = vset.pattern.permute.xlu0 1
    %3754 = vperm.xlu0 %3753, %v3625
    %v3755 = vpop.permute.xlu0 %3754
    %3757 = vset.pattern.permute.xlu0 1
    %3758 = vperm.xlu0 %3757, %v3630
    %v3759 = vpop.permute.xlu0 %3758
    %v3761 = vlaneseq
    %v3762 = vshrl.u32 %v3761, 7
    %v3763 = vsub.s32 1, %v3762
    %v3764 = vrot.slane %v3700, %v3763
    %v3765 = vadd.f32 %v3755, %v3764
    %v3766 = vadd.f32 %v3759, %v3764
    %vm3767 = vcmp.gt.f32.partialorder %v3765, 0.0
    %vm3768 = vcmp.gt.f32.partialorder %v3766, 0.0
    %v3769 = vmul.f32 %v3765, 0.2
    %v3770 = vmul.f32 %v3766, 0.2
    %v3771 = vsel %vm3767, %v3765, %v3769
    %v3772 = vsel %vm3768, %v3766, %v3770
    %v3773 = vsel %vm3725, %v3771, -9e+15
    %v3774 = vsel %vm3726, %v3772, -9e+15
    %v3775 = vsel %vm540, %v3773, -inf
    %3776 = vmax.xlane.f32.xlu0 %v3775
    %v3777 = vpop.xlane.xlu0 %3776
    %v3778 = vsel %vm540, %v3774, -inf
    %3779 = vmax.xlane.f32.xlu0 %v3778
    %v3780 = vpop.xlane.xlu0 %3779
    %v3781 = vsub.f32 %v3773, %v3777
    %v3782 = vsub.f32 %v3774, %v3780
    %v3783 = vmul.f32 %v3781, 1.442695
    %v3784 = vpow.pop %v3783
    %v3785 = vmul.f32 %v3782, 1.442695
    %v3786 = vpow.pop %v3785
    %v3787 = vsel %vm540, %v3784, 0.0
    %3788 = vadd.xlane.f32.xlu0 %v3787
    %v3789 = vpop.xlane.xlu0 %3788
    %v3790 = vsel %vm540, %v3786, 0.0
    %3791 = vadd.xlane.f32.xlu0 %v3790
    %v3792 = vpop.xlane.xlu0 %3791
    %v3793 = vrcp.pop %v3789
    %v3794 = vrcp.pop %v3792
    %v3795 = vmul.f32 %v3784, %v3793
    %v3796 = vmul.f32 %v3786, %v3794
    %v3797 = vmul.f32 %v3544, %v134
    %v3798 = vmul.f32 %v3549, %v134
    %v3800 = vsel %vm540, %v3795, 0
    %v3803 = vsel %vm540, %v3796, 0
    %3805 = vmatprep.subr.mxu0 0.0
    %3806 = vmatpush1.msra.mxu0 0.0
    %3807 = vmatprep.subr.mxu0 0.0
    %3808 = vmatpush1.msra.mxu0 0.0
    %3809 = vmatprep.subr.mxu0 0.0
    %3810 = vmatpush1.msra.mxu0 0.0
    %3811 = vmatprep.subr.mxu0 0.0
    %3812 = vmatpush1.msra.mxu0 0.0
    %3813 = vmatprep.subr.mxu0 0.0
    %3814 = vmatpush1.msra.mxu0 0.0
    %3815 = vmatprep.subr.mxu0 0.0
    %3816 = vmatpush1.msra.mxu0 0.0
    %3817 = vmatprep.subr.mxu0 0.0
    %3818 = vmatpush1.msra.mxu0 0.0
    %3819 = vmatprep.subr.mxu0 0.0
    %3820 = vmatpush1.msra.mxu0 0.0
    %3821 = vmatprep.subr.mxu0 0.0
    %3822 = vmatpush1.msra.mxu0 0.0
    %3823 = vmatprep.subr.mxu0 0.0
    %3824 = vmatpush1.msra.mxu0 0.0
    %3825 = vmatprep.subr.mxu0 0.0
    %3826 = vmatpush1.msra.mxu0 0.0
    %3827 = vmatprep.subr.mxu0 0.0
    %3828 = vmatpush1.msra.mxu0 0.0
    %3829 = vmatprep.subr.mxu0 0.0
    %3830 = vmatpush1.msra.mxu0 0.0
    %3831 = vmatprep.subr.mxu0 0.0
    %3832 = vmatpush1.msra.mxu0 0.0
    %3833 = vmatprep.subr.mxu0 0.0
    %3834 = vmatpush1.msra.mxu0 %v3798
    %3835 = vmatprep.subr.mxu0 0.0
    %3836 = vmatpush1.msra.mxu0 %v3797
    %3837 = vmatprep.subr.mxu0 0.0
    %3838 = vmatpush2.msra.mxu0 0.0
    %3839 = vmatprep.subr.mxu0 0.0
    %3840 = vmatpush2.msra.mxu0 0.0
    %3841 = vmatprep.subr.mxu0 0.0
    %3842 = vmatpush2.msra.mxu0 0.0
    %3843 = vmatprep.subr.mxu0 0.0
    %3844 = vmatpush2.msra.mxu0 0.0
    %3845 = vmatprep.subr.mxu0 0.0
    %3846 = vmatpush2.msra.mxu0 0.0
    %3847 = vmatprep.subr.mxu0 0.0
    %3848 = vmatpush2.msra.mxu0 0.0
    %3849 = vmatprep.subr.mxu0 0.0
    %3850 = vmatpush2.msra.mxu0 0.0
    %3851 = vmatprep.subr.mxu0 0.0
    %3852 = vmatpush2.msra.mxu0 0.0
    %3853 = vmatprep.subr.mxu0 0.0
    %3854 = vmatpush2.msra.mxu0 0.0
    %3855 = vmatprep.subr.mxu0 0.0
    %3856 = vmatpush2.msra.mxu0 0.0
    %3857 = vmatprep.subr.mxu0 0.0
    %3858 = vmatpush2.msra.mxu0 0.0
    %3859 = vmatprep.subr.mxu0 0.0
    %3860 = vmatpush2.msra.mxu0 0.0
    %3861 = vmatprep.subr.mxu0 0.0
    %3862 = vmatpush2.msra.mxu0 0.0
    %3863 = vmatprep.subr.mxu0 0.0
    %3864 = vmatpush2.msra.mxu0 0.0
    %3865 = vmatprep.subr.mxu0 0.0
    %3866 = vmatpush2.msra.mxu0 0.0
    %3867 = vmatprep.subr.mxu0 0.0
    %3868 = vmatpush2.msra.mxu0 0.0
    %3869 = vmatprep.mubr.f32.mxu0 0.0
    %3870 = vmatmul.mubr.f32.gmra.mxu0 %v3800
    %v3871 = vpop.f32.mrf.mxu0
    %v3872 = vadd.f32 0.0, %v3871
    %v3873 = vpop.f32.mrf.mxu0
    %3874 = vmatprep.mubr.f32.mxu0 0.0
    %3875 = vmatmul.mubr.f32.gmra.mxu0 %v3803
    %v3876 = vpop.f32.mrf.mxu0
    %v3877 = vadd.f32 0.0, %v3876
    %v3878 = vpop.f32.mrf.mxu0
    %3879 = vdwg.mxu0
    %v3881 = vsel %vm540, %v3749, 0
    %v3884 = vsel %vm540, %v3750, 0
    %3886 = vmatprep.subr.mxu0 0.0
    %3887 = vmatpush1.msra.mxu0 0.0
    %3888 = vmatprep.subr.mxu0 0.0
    %3889 = vmatpush1.msra.mxu0 0.0
    %3890 = vmatprep.subr.mxu0 0.0
    %3891 = vmatpush1.msra.mxu0 0.0
    %3892 = vmatprep.subr.mxu0 0.0
    %3893 = vmatpush1.msra.mxu0 0.0
    %3894 = vmatprep.subr.mxu0 0.0
    %3895 = vmatpush1.msra.mxu0 0.0
    %3896 = vmatprep.subr.mxu0 0.0
    %3897 = vmatpush1.msra.mxu0 0.0
    %3898 = vmatprep.subr.mxu0 0.0
    %3899 = vmatpush1.msra.mxu0 0.0
    %3900 = vmatprep.subr.mxu0 0.0
    %3901 = vmatpush1.msra.mxu0 0.0
    %3902 = vmatprep.subr.mxu0 0.0
    %3903 = vmatpush1.msra.mxu0 0.0
    %3904 = vmatprep.subr.mxu0 0.0
    %3905 = vmatpush1.msra.mxu0 0.0
    %3906 = vmatprep.subr.mxu0 0.0
    %3907 = vmatpush1.msra.mxu0 0.0
    %3908 = vmatprep.subr.mxu0 0.0
    %3909 = vmatpush1.msra.mxu0 0.0
    %3910 = vmatprep.subr.mxu0 0.0
    %3911 = vmatpush1.msra.mxu0 0.0
    %3912 = vmatprep.subr.mxu0 0.0
    %3913 = vmatpush1.msra.mxu0 0.0
    %3914 = vmatprep.subr.mxu0 0.0
    %3915 = vmatpush1.msra.mxu0 %v3752
    %3916 = vmatprep.subr.mxu0 0.0
    %3917 = vmatpush1.msra.mxu0 %v3751
    %3918 = vmatprep.subr.mxu0 0.0
    %3919 = vmatpush2.msra.mxu0 0.0
    %3920 = vmatprep.subr.mxu0 0.0
    %3921 = vmatpush2.msra.mxu0 0.0
    %3922 = vmatprep.subr.mxu0 0.0
    %3923 = vmatpush2.msra.mxu0 0.0
    %3924 = vmatprep.subr.mxu0 0.0
    %3925 = vmatpush2.msra.mxu0 0.0
    %3926 = vmatprep.subr.mxu0 0.0
    %3927 = vmatpush2.msra.mxu0 0.0
    %3928 = vmatprep.subr.mxu0 0.0
    %3929 = vmatpush2.msra.mxu0 0.0
    %3930 = vmatprep.subr.mxu0 0.0
    %3931 = vmatpush2.msra.mxu0 0.0
    %3932 = vmatprep.subr.mxu0 0.0
    %3933 = vmatpush2.msra.mxu0 0.0
    %3934 = vmatprep.subr.mxu0 0.0
    %3935 = vmatpush2.msra.mxu0 0.0
    %3936 = vmatprep.subr.mxu0 0.0
    %3937 = vmatpush2.msra.mxu0 0.0
    %3938 = vmatprep.subr.mxu0 0.0
    %3939 = vmatpush2.msra.mxu0 0.0
    %3940 = vmatprep.subr.mxu0 0.0
    %3941 = vmatpush2.msra.mxu0 0.0
    %3942 = vmatprep.subr.mxu0 0.0
    %3943 = vmatpush2.msra.mxu0 0.0
    %3944 = vmatprep.subr.mxu0 0.0
    %3945 = vmatpush2.msra.mxu0 0.0
    %3946 = vmatprep.subr.mxu0 0.0
    %3947 = vmatpush2.msra.mxu0 0.0
    %3948 = vmatprep.subr.mxu0 0.0
    %3949 = vmatpush2.msra.mxu0 0.0
    %3950 = vmatprep.mubr.f32.mxu0 0.0
    %3951 = vmatmul.mubr.f32.gmra.mxu0 %v3881
    %v3952 = vpop.f32.mrf.mxu0
    %v3953 = vadd.f32 %v3872, %v3952
    %v3954 = vpop.f32.mrf.mxu0
    %3955 = vmatprep.mubr.f32.mxu0 0.0
    %3956 = vmatmul.mubr.f32.gmra.mxu0 %v3884
    %v3957 = vpop.f32.mrf.mxu0
    %v3958 = vadd.f32 %v3877, %v3957
    %v3959 = vpop.f32.mrf.mxu0
    %3960 = vdwg.mxu0
    %3961 = vset.pattern.permute.xlu0 2
    %3962 = vperm.xlu0 %3961, %v3625
    %v3963 = vpop.permute.xlu0 %3962
    %3965 = vset.pattern.permute.xlu0 2
    %3966 = vperm.xlu0 %3965, %v3630
    %v3967 = vpop.permute.xlu0 %3966
    %v3969 = vlaneseq
    %v3970 = vshrl.u32 %v3969, 7
    %v3971 = vsub.s32 2, %v3970
    %v3972 = vrot.slane %v3700, %v3971
    %v3973 = vadd.f32 %v3963, %v3972
    %v3974 = vadd.f32 %v3967, %v3972
    %vm3975 = vcmp.gt.f32.partialorder %v3973, 0.0
    %vm3976 = vcmp.gt.f32.partialorder %v3974, 0.0
    %v3977 = vmul.f32 %v3973, 0.2
    %v3978 = vmul.f32 %v3974, 0.2
    %v3979 = vsel %vm3975, %v3973, %v3977
    %v3980 = vsel %vm3976, %v3974, %v3978
    %v3981 = vsel %vm3725, %v3979, -9e+15
    %v3982 = vsel %vm3726, %v3980, -9e+15
    %v3983 = vsel %vm540, %v3981, -inf
    %3984 = vmax.xlane.f32.xlu0 %v3983
    %v3985 = vpop.xlane.xlu0 %3984
    %v3986 = vsel %vm540, %v3982, -inf
    %3987 = vmax.xlane.f32.xlu0 %v3986
    %v3988 = vpop.xlane.xlu0 %3987
    %v3989 = vsub.f32 %v3981, %v3985
    %v3990 = vsub.f32 %v3982, %v3988
    %v3991 = vmul.f32 %v3989, 1.442695
    %v3992 = vpow.pop %v3991
    %v3993 = vmul.f32 %v3990, 1.442695
    %v3994 = vpow.pop %v3993
    %v3995 = vsel %vm540, %v3992, 0.0
    %3996 = vadd.xlane.f32.xlu0 %v3995
    %v3997 = vpop.xlane.xlu0 %3996
    %v3998 = vsel %vm540, %v3994, 0.0
    %3999 = vadd.xlane.f32.xlu0 %v3998
    %v4000 = vpop.xlane.xlu0 %3999
    %v4001 = vrcp.pop %v3997
    %v4002 = vrcp.pop %v4000
    %v4003 = vmul.f32 %v3992, %v4001
    %v4004 = vmul.f32 %v3994, %v4002
    %v4005 = vmul.f32 %v3544, %v139
    %v4006 = vmul.f32 %v3549, %v139
    %v4008 = vsel %vm540, %v4003, 0
    %v4011 = vsel %vm540, %v4004, 0
    %4013 = vmatprep.subr.mxu0 0.0
    %4014 = vmatpush1.msra.mxu0 0.0
    %4015 = vmatprep.subr.mxu0 0.0
    %4016 = vmatpush1.msra.mxu0 0.0
    %4017 = vmatprep.subr.mxu0 0.0
    %4018 = vmatpush1.msra.mxu0 0.0
    %4019 = vmatprep.subr.mxu0 0.0
    %4020 = vmatpush1.msra.mxu0 0.0
    %4021 = vmatprep.subr.mxu0 0.0
    %4022 = vmatpush1.msra.mxu0 0.0
    %4023 = vmatprep.subr.mxu0 0.0
    %4024 = vmatpush1.msra.mxu0 0.0
    %4025 = vmatprep.subr.mxu0 0.0
    %4026 = vmatpush1.msra.mxu0 0.0
    %4027 = vmatprep.subr.mxu0 0.0
    %4028 = vmatpush1.msra.mxu0 0.0
    %4029 = vmatprep.subr.mxu0 0.0
    %4030 = vmatpush1.msra.mxu0 0.0
    %4031 = vmatprep.subr.mxu0 0.0
    %4032 = vmatpush1.msra.mxu0 0.0
    %4033 = vmatprep.subr.mxu0 0.0
    %4034 = vmatpush1.msra.mxu0 0.0
    %4035 = vmatprep.subr.mxu0 0.0
    %4036 = vmatpush1.msra.mxu0 0.0
    %4037 = vmatprep.subr.mxu0 0.0
    %4038 = vmatpush1.msra.mxu0 0.0
    %4039 = vmatprep.subr.mxu0 0.0
    %4040 = vmatpush1.msra.mxu0 0.0
    %4041 = vmatprep.subr.mxu0 0.0
    %4042 = vmatpush1.msra.mxu0 %v4006
    %4043 = vmatprep.subr.mxu0 0.0
    %4044 = vmatpush1.msra.mxu0 %v4005
    %4045 = vmatprep.subr.mxu0 0.0
    %4046 = vmatpush2.msra.mxu0 0.0
    %4047 = vmatprep.subr.mxu0 0.0
    %4048 = vmatpush2.msra.mxu0 0.0
    %4049 = vmatprep.subr.mxu0 0.0
    %4050 = vmatpush2.msra.mxu0 0.0
    %4051 = vmatprep.subr.mxu0 0.0
    %4052 = vmatpush2.msra.mxu0 0.0
    %4053 = vmatprep.subr.mxu0 0.0
    %4054 = vmatpush2.msra.mxu0 0.0
    %4055 = vmatprep.subr.mxu0 0.0
    %4056 = vmatpush2.msra.mxu0 0.0
    %4057 = vmatprep.subr.mxu0 0.0
    %4058 = vmatpush2.msra.mxu0 0.0
    %4059 = vmatprep.subr.mxu0 0.0
    %4060 = vmatpush2.msra.mxu0 0.0
    %4061 = vmatprep.subr.mxu0 0.0
    %4062 = vmatpush2.msra.mxu0 0.0
    %4063 = vmatprep.subr.mxu0 0.0
    %4064 = vmatpush2.msra.mxu0 0.0
    %4065 = vmatprep.subr.mxu0 0.0
    %4066 = vmatpush2.msra.mxu0 0.0
    %4067 = vmatprep.subr.mxu0 0.0
    %4068 = vmatpush2.msra.mxu0 0.0
    %4069 = vmatprep.subr.mxu0 0.0
    %4070 = vmatpush2.msra.mxu0 0.0
    %4071 = vmatprep.subr.mxu0 0.0
    %4072 = vmatpush2.msra.mxu0 0.0
    %4073 = vmatprep.subr.mxu0 0.0
    %4074 = vmatpush2.msra.mxu0 0.0
    %4075 = vmatprep.subr.mxu0 0.0
    %4076 = vmatpush2.msra.mxu0 0.0
    %4077 = vmatprep.mubr.f32.mxu0 0.0
    %4078 = vmatmul.mubr.f32.gmra.mxu0 %v4008
    %v4079 = vpop.f32.mrf.mxu0
    %v4080 = vadd.f32 0.0, %v4079
    %v4081 = vpop.f32.mrf.mxu0
    %4082 = vmatprep.mubr.f32.mxu0 0.0
    %4083 = vmatmul.mubr.f32.gmra.mxu0 %v4011
    %v4084 = vpop.f32.mrf.mxu0
    %v4085 = vadd.f32 0.0, %v4084
    %v4086 = vpop.f32.mrf.mxu0
    %4087 = vdwg.mxu0
    %v4088 = vadd.f32 %v3953, %v4080
    %v4089 = vadd.f32 %v3958, %v4085
    %4090 = vset.pattern.permute.xlu0 3
    %4091 = vperm.xlu0 %4090, %v3625
    %v4092 = vpop.permute.xlu0 %4091
    %4094 = vset.pattern.permute.xlu0 3
    %4095 = vperm.xlu0 %4094, %v3630
    %v4096 = vpop.permute.xlu0 %4095
    %v4098 = vlaneseq
    %v4099 = vshrl.u32 %v4098, 7
    %v4100 = vsub.s32 3, %v4099
    %v4101 = vrot.slane %v3700, %v4100
    %v4102 = vadd.f32 %v4092, %v4101
    %v4103 = vadd.f32 %v4096, %v4101
    %vm4104 = vcmp.gt.f32.partialorder %v4102, 0.0
    %vm4105 = vcmp.gt.f32.partialorder %v4103, 0.0
    %v4106 = vmul.f32 %v4102, 0.2
    %v4107 = vmul.f32 %v4103, 0.2
    %v4108 = vsel %vm4104, %v4102, %v4106
    %v4109 = vsel %vm4105, %v4103, %v4107
    %v4110 = vsel %vm3725, %v4108, -9e+15
    %v4111 = vsel %vm3726, %v4109, -9e+15
    %v4112 = vsel %vm540, %v4110, -inf
    %4113 = vmax.xlane.f32.xlu0 %v4112
    %v4114 = vpop.xlane.xlu0 %4113
    %v4115 = vsel %vm540, %v4111, -inf
    %4116 = vmax.xlane.f32.xlu0 %v4115
    %v4117 = vpop.xlane.xlu0 %4116
    %v4118 = vsub.f32 %v4110, %v4114
    %v4119 = vsub.f32 %v4111, %v4117
    %v4120 = vmul.f32 %v4118, 1.442695
    %v4121 = vpow.pop %v4120
    %v4122 = vmul.f32 %v4119, 1.442695
    %v4123 = vpow.pop %v4122
    %v4124 = vsel %vm540, %v4121, 0.0
    %4125 = vadd.xlane.f32.xlu0 %v4124
    %v4126 = vpop.xlane.xlu0 %4125
    %v4127 = vsel %vm540, %v4123, 0.0
    %4128 = vadd.xlane.f32.xlu0 %v4127
    %v4129 = vpop.xlane.xlu0 %4128
    %v4130 = vrcp.pop %v4126
    %v4131 = vrcp.pop %v4129
    %v4132 = vmul.f32 %v4121, %v4130
    %v4133 = vmul.f32 %v4123, %v4131
    %v4134 = vmul.f32 %v3544, %v144
    %v4135 = vmul.f32 %v3549, %v144
    %v4137 = vsel %vm540, %v4132, 0
    %v4140 = vsel %vm540, %v4133, 0
    %4142 = vmatprep.subr.mxu0 0.0
    %4143 = vmatpush1.msra.mxu0 0.0
    %4144 = vmatprep.subr.mxu0 0.0
    %4145 = vmatpush1.msra.mxu0 0.0
    %4146 = vmatprep.subr.mxu0 0.0
    %4147 = vmatpush1.msra.mxu0 0.0
    %4148 = vmatprep.subr.mxu0 0.0
    %4149 = vmatpush1.msra.mxu0 0.0
    %4150 = vmatprep.subr.mxu0 0.0
    %4151 = vmatpush1.msra.mxu0 0.0
    %4152 = vmatprep.subr.mxu0 0.0
    %4153 = vmatpush1.msra.mxu0 0.0
    %4154 = vmatprep.subr.mxu0 0.0
    %4155 = vmatpush1.msra.mxu0 0.0
    %4156 = vmatprep.subr.mxu0 0.0
    %4157 = vmatpush1.msra.mxu0 0.0
    %4158 = vmatprep.subr.mxu0 0.0
    %4159 = vmatpush1.msra.mxu0 0.0
    %4160 = vmatprep.subr.mxu0 0.0
    %4161 = vmatpush1.msra.mxu0 0.0
    %4162 = vmatprep.subr.mxu0 0.0
    %4163 = vmatpush1.msra.mxu0 0.0
    %4164 = vmatprep.subr.mxu0 0.0
    %4165 = vmatpush1.msra.mxu0 0.0
    %4166 = vmatprep.subr.mxu0 0.0
    %4167 = vmatpush1.msra.mxu0 0.0
    %4168 = vmatprep.subr.mxu0 0.0
    %4169 = vmatpush1.msra.mxu0 0.0
    %4170 = vmatprep.subr.mxu0 0.0
    %4171 = vmatpush1.msra.mxu0 %v4135
    %4172 = vmatprep.subr.mxu0 0.0
    %4173 = vmatpush1.msra.mxu0 %v4134
    %4174 = vmatprep.subr.mxu0 0.0
    %4175 = vmatpush2.msra.mxu0 0.0
    %4176 = vmatprep.subr.mxu0 0.0
    %4177 = vmatpush2.msra.mxu0 0.0
    %4178 = vmatprep.subr.mxu0 0.0
    %4179 = vmatpush2.msra.mxu0 0.0
    %4180 = vmatprep.subr.mxu0 0.0
    %4181 = vmatpush2.msra.mxu0 0.0
    %4182 = vmatprep.subr.mxu0 0.0
    %4183 = vmatpush2.msra.mxu0 0.0
    %4184 = vmatprep.subr.mxu0 0.0
    %4185 = vmatpush2.msra.mxu0 0.0
    %4186 = vmatprep.subr.mxu0 0.0
    %4187 = vmatpush2.msra.mxu0 0.0
    %4188 = vmatprep.subr.mxu0 0.0
    %4189 = vmatpush2.msra.mxu0 0.0
    %4190 = vmatprep.subr.mxu0 0.0
    %4191 = vmatpush2.msra.mxu0 0.0
    %4192 = vmatprep.subr.mxu0 0.0
    %4193 = vmatpush2.msra.mxu0 0.0
    %4194 = vmatprep.subr.mxu0 0.0
    %4195 = vmatpush2.msra.mxu0 0.0
    %4196 = vmatprep.subr.mxu0 0.0
    %4197 = vmatpush2.msra.mxu0 0.0
    %4198 = vmatprep.subr.mxu0 0.0
    %4199 = vmatpush2.msra.mxu0 0.0
    %4200 = vmatprep.subr.mxu0 0.0
    %4201 = vmatpush2.msra.mxu0 0.0
    %4202 = vmatprep.subr.mxu0 0.0
    %4203 = vmatpush2.msra.mxu0 0.0
    %4204 = vmatprep.subr.mxu0 0.0
    %4205 = vmatpush2.msra.mxu0 0.0
    %4206 = vmatprep.mubr.f32.mxu0 0.0
    %4207 = vmatmul.mubr.f32.gmra.mxu0 %v4137
    %v4208 = vpop.f32.mrf.mxu0
    %v4209 = vadd.f32 0.0, %v4208
    %v4210 = vpop.f32.mrf.mxu0
    %4211 = vmatprep.mubr.f32.mxu0 0.0
    %4212 = vmatmul.mubr.f32.gmra.mxu0 %v4140
    %v4213 = vpop.f32.mrf.mxu0
    %v4214 = vadd.f32 0.0, %v4213
    %v4215 = vpop.f32.mrf.mxu0
    %4216 = vdwg.mxu0
    %v4217 = vadd.f32 %v4088, %v4209
    %v4218 = vadd.f32 %v4089, %v4214
    %vm4219 = vcmp.gt.f32.partialorder %v4217, 0.0
    %vm4220 = vcmp.gt.f32.partialorder %v4218, 0.0
    %v4221 = vmin.f32 %v4217, 0.0
    %v4222 = vmin.f32 %v4218, 0.0
    %v4223 = vmul.f32 %v4221, 1.442695
    %v4224 = vpow.pop %v4223
    %v4225 = vmul.f32 %v4222, 1.442695
    %v4226 = vpow.pop %v4225
    %v4227 = vsub.f32 %v4224, 1.0
    %v4228 = vsub.f32 %v4226, 1.0
    %v4229 = vsel %vm4219, %v4217, %v4227
    %v4230 = vsel %vm4220, %v4218, %v4228
    %4231 = vmatprep.subr.mxu0 0.0
    %4232 = vmatpush1.msra.mxu0 0.0
    %4233 = vmatprep.subr.mxu0 0.0
    %4234 = vmatpush1.msra.mxu0 0.0
    %4235 = vmatprep.subr.mxu0 0.0
    %4236 = vmatpush1.msra.mxu0 0.0
    %4237 = vmatprep.subr.mxu0 0.0
    %4238 = vmatpush1.msra.mxu0 0.0
    %4239 = vmatprep.subr.mxu0 0.0
    %4240 = vmatpush1.msra.mxu0 0.0
    %4241 = vmatprep.subr.mxu0 0.0
    %4242 = vmatpush1.msra.mxu0 0.0
    %4243 = vmatprep.subr.mxu0 0.0
    %4244 = vmatpush1.msra.mxu0 0.0
    %4245 = vmatprep.subr.mxu0 0.0
    %4246 = vmatpush1.msra.mxu0 0.0
    %4247 = vmatprep.subr.mxu0 0.0
    %4248 = vmatpush1.msra.mxu0 0.0
    %4249 = vmatprep.subr.mxu0 0.0
    %4250 = vmatpush1.msra.mxu0 0.0
    %4251 = vmatprep.subr.mxu0 0.0
    %4252 = vmatpush1.msra.mxu0 0.0
    %4253 = vmatprep.subr.mxu0 0.0
    %4254 = vmatpush1.msra.mxu0 0.0
    %4255 = vmatprep.subr.mxu0 0.0
    %4256 = vmatpush1.msra.mxu0 0.0
    %4257 = vmatprep.subr.mxu0 0.0
    %4258 = vmatpush1.msra.mxu0 0.0
    %4259 = vmatprep.subr.mxu0 0.0
    %4260 = vmatpush1.msra.mxu0 %v4230
    %4261 = vmatprep.subr.mxu0 0.0
    %4262 = vmatpush1.msra.mxu0 %v4229
    %4263 = vmatprep.subr.mxu0 0.0
    %4264 = vmatpush2.msra.mxu0 0.0
    %4265 = vmatprep.subr.mxu0 0.0
    %4266 = vmatpush2.msra.mxu0 0.0
    %4267 = vmatprep.subr.mxu0 0.0
    %4268 = vmatpush2.msra.mxu0 0.0
    %4269 = vmatprep.subr.mxu0 0.0
    %4270 = vmatpush2.msra.mxu0 0.0
    %4271 = vmatprep.subr.mxu0 0.0
    %4272 = vmatpush2.msra.mxu0 0.0
    %4273 = vmatprep.subr.mxu0 0.0
    %4274 = vmatpush2.msra.mxu0 0.0
    %4275 = vmatprep.subr.mxu0 0.0
    %4276 = vmatpush2.msra.mxu0 0.0
    %4277 = vmatprep.subr.mxu0 0.0
    %4278 = vmatpush2.msra.mxu0 0.0
    %4279 = vmatprep.subr.mxu0 0.0
    %4280 = vmatpush2.msra.mxu0 0.0
    %4281 = vmatprep.subr.mxu0 0.0
    %4282 = vmatpush2.msra.mxu0 0.0
    %4283 = vmatprep.subr.mxu0 0.0
    %4284 = vmatpush2.msra.mxu0 0.0
    %4285 = vmatprep.subr.mxu0 0.0
    %4286 = vmatpush2.msra.mxu0 0.0
    %4287 = vmatprep.subr.mxu0 0.0
    %4288 = vmatpush2.msra.mxu0 0.0
    %4289 = vmatprep.subr.mxu0 0.0
    %4290 = vmatpush2.msra.mxu0 0.0
    %4291 = vmatprep.subr.mxu0 0.0
    %4292 = vmatpush2.msra.mxu0 0.0
    %4293 = vmatprep.subr.mxu0 0.0
    %4294 = vmatpush2.msra.mxu0 0.0
    %4295 = vmatprep.mubr.f32.mxu0 0.0
    %4296 = vmatmul.mubr.f32.gmra.mxu0 %v1044
    %v4297 = vpop.f32.mrf.mxu0
    %v4298 = vadd.f32 0.0, %v4297
    %v4299 = vpop.f32.mrf.mxu0
    %4300 = vdwg.mxu0
    %v4302 = vsel %vm275, %v4298, 0
    %4304 = vmatprep.subr.mxu0 0.0
    %4305 = vmatpush1.msra.mxu0 0.0
    %4306 = vmatprep.subr.mxu0 0.0
    %4307 = vmatpush1.msra.mxu0 0.0
    %4308 = vmatprep.subr.mxu0 0.0
    %4309 = vmatpush1.msra.mxu0 0.0
    %4310 = vmatprep.subr.mxu0 0.0
    %4311 = vmatpush1.msra.mxu0 0.0
    %4312 = vmatprep.subr.mxu0 0.0
    %4313 = vmatpush1.msra.mxu0 0.0
    %4314 = vmatprep.subr.mxu0 0.0
    %4315 = vmatpush1.msra.mxu0 0.0
    %4316 = vmatprep.subr.mxu0 0.0
    %4317 = vmatpush1.msra.mxu0 0.0
    %4318 = vmatprep.subr.mxu0 0.0
    %4319 = vmatpush1.msra.mxu0 0.0
    %4320 = vmatprep.subr.mxu0 0.0
    %4321 = vmatpush1.msra.mxu0 0.0
    %4322 = vmatprep.subr.mxu0 0.0
    %4323 = vmatpush1.msra.mxu0 0.0
    %4324 = vmatprep.subr.mxu0 0.0
    %4325 = vmatpush1.msra.mxu0 0.0
    %4326 = vmatprep.subr.mxu0 0.0
    %4327 = vmatpush1.msra.mxu0 0.0
    %4328 = vmatprep.subr.mxu0 0.0
    %4329 = vmatpush1.msra.mxu0 %v157
    %4330 = vmatprep.subr.mxu0 0.0
    %4331 = vmatpush1.msra.mxu0 %v156
    %4332 = vmatprep.subr.mxu0 0.0
    %4333 = vmatpush1.msra.mxu0 %v155
    %4334 = vmatprep.subr.mxu0 0.0
    %4335 = vmatpush1.msra.mxu0 %v154
    %4336 = vmatprep.subr.mxu0 0.0
    %4337 = vmatpush2.msra.mxu0 0.0
    %4338 = vmatprep.subr.mxu0 0.0
    %4339 = vmatpush2.msra.mxu0 0.0
    %4340 = vmatprep.subr.mxu0 0.0
    %4341 = vmatpush2.msra.mxu0 0.0
    %4342 = vmatprep.subr.mxu0 0.0
    %4343 = vmatpush2.msra.mxu0 0.0
    %4344 = vmatprep.subr.mxu0 0.0
    %4345 = vmatpush2.msra.mxu0 0.0
    %4346 = vmatprep.subr.mxu0 0.0
    %4347 = vmatpush2.msra.mxu0 0.0
    %4348 = vmatprep.subr.mxu0 0.0
    %4349 = vmatpush2.msra.mxu0 0.0
    %4350 = vmatprep.subr.mxu0 0.0
    %4351 = vmatpush2.msra.mxu0 0.0
    %4352 = vmatprep.subr.mxu0 0.0
    %4353 = vmatpush2.msra.mxu0 0.0
    %4354 = vmatprep.subr.mxu0 0.0
    %4355 = vmatpush2.msra.mxu0 0.0
    %4356 = vmatprep.subr.mxu0 0.0
    %4357 = vmatpush2.msra.mxu0 0.0
    %4358 = vmatprep.subr.mxu0 0.0
    %4359 = vmatpush2.msra.mxu0 0.0
    %4360 = vmatprep.subr.mxu0 0.0
    %4361 = vmatpush2.msra.mxu0 0.0
    %4362 = vmatprep.subr.mxu0 0.0
    %4363 = vmatpush2.msra.mxu0 0.0
    %4364 = vmatprep.subr.mxu0 0.0
    %4365 = vmatpush2.msra.mxu0 0.0
    %4366 = vmatprep.subr.mxu0 0.0
    %4367 = vmatpush2.msra.mxu0 0.0
    %4368 = vmatprep.mubr.f32.mxu0 0.0
    %4369 = vmatmul.mubr.f32.gmra.mxu0 %v4302
    %v4370 = vpop.f32.mrf.mxu0
    %v4371 = vadd.f32 0.0, %v4370
    %v4372 = vpop.f32.mrf.mxu0
    %4373 = vdwg.mxu0
    %v4375 = vsel %vm275, %v4371, 0
    %4377 = vmatprep.subr.mxu0 0.0
    %4378 = vmatpush1.xpose.msra.mxu0 0.0
    %4379 = vmatprep.subr.mxu0 0.0
    %4380 = vmatpush1.xpose.msra.mxu0 0.0
    %4381 = vmatprep.subr.mxu0 0.0
    %4382 = vmatpush1.xpose.msra.mxu0 0.0
    %4383 = vmatprep.subr.mxu0 0.0
    %4384 = vmatpush1.xpose.msra.mxu0 0.0
    %4385 = vmatprep.subr.mxu0 0.0
    %4386 = vmatpush1.xpose.msra.mxu0 0.0
    %4387 = vmatprep.subr.mxu0 0.0
    %4388 = vmatpush1.xpose.msra.mxu0 0.0
    %4389 = vmatprep.subr.mxu0 0.0
    %4390 = vmatpush1.xpose.msra.mxu0 0.0
    %4391 = vmatprep.subr.mxu0 0.0
    %4392 = vmatpush1.xpose.msra.mxu0 0.0
    %4393 = vmatprep.subr.mxu0 0.0
    %4394 = vmatpush1.xpose.msra.mxu0 0.0
    %4395 = vmatprep.subr.mxu0 0.0
    %4396 = vmatpush1.xpose.msra.mxu0 0.0
    %4397 = vmatprep.subr.mxu0 0.0
    %4398 = vmatpush1.xpose.msra.mxu0 0.0
    %4399 = vmatprep.subr.mxu0 0.0
    %4400 = vmatpush1.xpose.msra.mxu0 0.0
    %4401 = vmatprep.subr.mxu0 0.0
    %4402 = vmatpush1.xpose.msra.mxu0 0.0
    %4403 = vmatprep.subr.mxu0 0.0
    %4404 = vmatpush1.xpose.msra.mxu0 0.0
    %4405 = vmatprep.subr.mxu0 0.0
    %4406 = vmatpush1.xpose.msra.mxu0 0.0
    %4407 = vmatprep.subr.mxu0 0.0
    %4408 = vmatpush1.xpose.msra.mxu0 %v1193
    %4409 = vmatprep.subr.mxu0 0.0
    %4410 = vmatpush2.xpose.msra.mxu0 0.0
    %4411 = vmatprep.subr.mxu0 0.0
    %4412 = vmatpush2.xpose.msra.mxu0 0.0
    %4413 = vmatprep.subr.mxu0 0.0
    %4414 = vmatpush2.xpose.msra.mxu0 0.0
    %4415 = vmatprep.subr.mxu0 0.0
    %4416 = vmatpush2.xpose.msra.mxu0 0.0
    %4417 = vmatprep.subr.mxu0 0.0
    %4418 = vmatpush2.xpose.msra.mxu0 0.0
    %4419 = vmatprep.subr.mxu0 0.0
    %4420 = vmatpush2.xpose.msra.mxu0 0.0
    %4421 = vmatprep.subr.mxu0 0.0
    %4422 = vmatpush2.xpose.msra.mxu0 0.0
    %4423 = vmatprep.subr.mxu0 0.0
    %4424 = vmatpush2.xpose.msra.mxu0 0.0
    %4425 = vmatprep.subr.mxu0 0.0
    %4426 = vmatpush2.xpose.msra.mxu0 0.0
    %4427 = vmatprep.subr.mxu0 0.0
    %4428 = vmatpush2.xpose.msra.mxu0 0.0
    %4429 = vmatprep.subr.mxu0 0.0
    %4430 = vmatpush2.xpose.msra.mxu0 0.0
    %4431 = vmatprep.subr.mxu0 0.0
    %4432 = vmatpush2.xpose.msra.mxu0 0.0
    %4433 = vmatprep.subr.mxu0 0.0
    %4434 = vmatpush2.xpose.msra.mxu0 0.0
    %4435 = vmatprep.subr.mxu0 0.0
    %4436 = vmatpush2.xpose.msra.mxu0 0.0
    %4437 = vmatprep.subr.mxu0 0.0
    %4438 = vmatpush2.xpose.msra.mxu0 0.0
    %4439 = vmatprep.subr.mxu0 0.0
    %4440 = vmatpush2.xpose.msra.mxu0 0.0
    %4441 = vmatprep.mubr.f32.mxu0 0.0
    %4442 = vmatmul.mubr.f32.gmra.mxu0 %v4375
    %v4443 = vpop.f32.mrf.mxu0
    %v4444 = vadd.f32 0.0, %v4443
    %v4445 = vpop.f32.mrf.mxu0
    %4446 = vdwg.mxu0
    %4447 = vmatprep.subr.mxu0 0.0
    %4448 = vmatpush1.xpose.msra.mxu0 0.0
    %4449 = vmatprep.subr.mxu0 0.0
    %4450 = vmatpush1.xpose.msra.mxu0 0.0
    %4451 = vmatprep.subr.mxu0 0.0
    %4452 = vmatpush1.xpose.msra.mxu0 0.0
    %4453 = vmatprep.subr.mxu0 0.0
    %4454 = vmatpush1.xpose.msra.mxu0 0.0
    %4455 = vmatprep.subr.mxu0 0.0
    %4456 = vmatpush1.xpose.msra.mxu0 0.0
    %4457 = vmatprep.subr.mxu0 0.0
    %4458 = vmatpush1.xpose.msra.mxu0 0.0
    %4459 = vmatprep.subr.mxu0 0.0
    %4460 = vmatpush1.xpose.msra.mxu0 0.0
    %4461 = vmatprep.subr.mxu0 0.0
    %4462 = vmatpush1.xpose.msra.mxu0 0.0
    %4463 = vmatprep.subr.mxu0 0.0
    %4464 = vmatpush1.xpose.msra.mxu0 0.0
    %4465 = vmatprep.subr.mxu0 0.0
    %4466 = vmatpush1.xpose.msra.mxu0 0.0
    %4467 = vmatprep.subr.mxu0 0.0
    %4468 = vmatpush1.xpose.msra.mxu0 0.0
    %4469 = vmatprep.subr.mxu0 0.0
    %4470 = vmatpush1.xpose.msra.mxu0 0.0
    %4471 = vmatprep.subr.mxu0 0.0
    %4472 = vmatpush1.xpose.msra.mxu0 0.0
    %4473 = vmatprep.subr.mxu0 0.0
    %4474 = vmatpush1.xpose.msra.mxu0 0.0
    %4475 = vmatprep.subr.mxu0 0.0
    %4476 = vmatpush1.xpose.msra.mxu0 0.0
    %4477 = vmatprep.subr.mxu0 0.0
    %4478 = vmatpush1.xpose.msra.mxu0 %v4375
    %4479 = vmatprep.subr.mxu0 0.0
    %4480 = vmatpush2.xpose.msra.mxu0 0.0
    %4481 = vmatprep.subr.mxu0 0.0
    %4482 = vmatpush2.xpose.msra.mxu0 0.0
    %4483 = vmatprep.subr.mxu0 0.0
    %4484 = vmatpush2.xpose.msra.mxu0 0.0
    %4485 = vmatprep.subr.mxu0 0.0
    %4486 = vmatpush2.xpose.msra.mxu0 0.0
    %4487 = vmatprep.subr.mxu0 0.0
    %4488 = vmatpush2.xpose.msra.mxu0 0.0
    %4489 = vmatprep.subr.mxu0 0.0
    %4490 = vmatpush2.xpose.msra.mxu0 0.0
    %4491 = vmatprep.subr.mxu0 0.0
    %4492 = vmatpush2.xpose.msra.mxu0 0.0
    %4493 = vmatprep.subr.mxu0 0.0
    %4494 = vmatpush2.xpose.msra.mxu0 0.0
    %4495 = vmatprep.subr.mxu0 0.0
    %4496 = vmatpush2.xpose.msra.mxu0 0.0
    %4497 = vmatprep.subr.mxu0 0.0
    %4498 = vmatpush2.xpose.msra.mxu0 0.0
    %4499 = vmatprep.subr.mxu0 0.0
    %4500 = vmatpush2.xpose.msra.mxu0 0.0
    %4501 = vmatprep.subr.mxu0 0.0
    %4502 = vmatpush2.xpose.msra.mxu0 0.0
    %4503 = vmatprep.subr.mxu0 0.0
    %4504 = vmatpush2.xpose.msra.mxu0 0.0
    %4505 = vmatprep.subr.mxu0 0.0
    %4506 = vmatpush2.xpose.msra.mxu0 0.0
    %4507 = vmatprep.subr.mxu0 0.0
    %4508 = vmatpush2.xpose.msra.mxu0 0.0
    %4509 = vmatprep.subr.mxu0 0.0
    %4510 = vmatpush2.xpose.msra.mxu0 0.0
    %4511 = vmatprep.mubr.f32.mxu0 0.0
    %4512 = vmatmul.mubr.f32.gmra.mxu0 %v1266
    %v4513 = vpop.f32.mrf.mxu0
    %v4514 = vadd.f32 0.0, %v4513
    %v4515 = vpop.f32.mrf.mxu0
    %4516 = vdwg.mxu0
    %4518 = vset.pattern.permute.xlu0 0
    %4519 = vperm.xlu0 %4518, %v4444
    %v4520 = vpop.permute.xlu0 %4519
    %v4522 = vlaneseq
    %v4523 = vshrl.u32 %v4522, 7
    %v4524 = vsub.s32 0, %v4523
    %v4525 = vrot.slane %v4514, %v4524
    %v4526 = vadd.f32 %v4520, %v4525
    %vm4527 = vcmp.gt.f32.partialorder %v4526, 0.0
    %v4528 = vmul.f32 %v4526, 0.2
    %v4529 = vsel %vm4527, %v4526, %v4528
    %vm4530 = vcmp.gt.f32.partialorder %v3389, 0.0
    %v4531 = vsel %vm4530, %v4529, -9e+15
    %v4532 = vsel %vm193, %v4531, -inf
    %4533 = vmax.xlane.f32.xlu0 %v4532
    %v4534 = vpop.xlane.xlu0 %4533
    %v4535 = vsub.f32 %v4531, %v4534
    %v4536 = vmul.f32 %v4535, 1.442695
    %v4537 = vpow.pop %v4536
    %v4538 = vsel %vm193, %v4537, 0.0
    %4539 = vadd.xlane.f32.xlu0 %v4538
    %v4540 = vpop.xlane.xlu0 %4539
    %v4541 = vrcp.pop %v4540
    %v4542 = vmul.f32 %v4537, %v4541
    %v4543 = vmul.f32 %v4371, %v129
    %4544 = vset.pattern.permute.xlu0 1
    %4545 = vperm.xlu0 %4544, %v4444
    %v4546 = vpop.permute.xlu0 %4545
    %v4548 = vlaneseq
    %v4549 = vshrl.u32 %v4548, 7
    %v4550 = vsub.s32 1, %v4549
    %v4551 = vrot.slane %v4514, %v4550
    %v4552 = vadd.f32 %v4546, %v4551
    %vm4553 = vcmp.gt.f32.partialorder %v4552, 0.0
    %v4554 = vmul.f32 %v4552, 0.2
    %v4555 = vsel %vm4553, %v4552, %v4554
    %v4556 = vsel %vm4530, %v4555, -9e+15
    %v4557 = vsel %vm193, %v4556, -inf
    %4558 = vmax.xlane.f32.xlu0 %v4557
    %v4559 = vpop.xlane.xlu0 %4558
    %v4560 = vsub.f32 %v4556, %v4559
    %v4561 = vmul.f32 %v4560, 1.442695
    %v4562 = vpow.pop %v4561
    %v4563 = vsel %vm193, %v4562, 0.0
    %4564 = vadd.xlane.f32.xlu0 %v4563
    %v4565 = vpop.xlane.xlu0 %4564
    %v4566 = vrcp.pop %v4565
    %v4567 = vmul.f32 %v4562, %v4566
    %v4568 = vmul.f32 %v4371, %v134
    %v4570 = vsel %vm193, %v4567, 0
    %4572 = vmatprep.subr.mxu0 0.0
    %4573 = vmatpush1.msra.mxu0 0.0
    %4574 = vmatprep.subr.mxu0 0.0
    %4575 = vmatpush1.msra.mxu0 0.0
    %4576 = vmatprep.subr.mxu0 0.0
    %4577 = vmatpush1.msra.mxu0 0.0
    %4578 = vmatprep.subr.mxu0 0.0
    %4579 = vmatpush1.msra.mxu0 0.0
    %4580 = vmatprep.subr.mxu0 0.0
    %4581 = vmatpush1.msra.mxu0 0.0
    %4582 = vmatprep.subr.mxu0 0.0
    %4583 = vmatpush1.msra.mxu0 0.0
    %4584 = vmatprep.subr.mxu0 0.0
    %4585 = vmatpush1.msra.mxu0 0.0
    %4586 = vmatprep.subr.mxu0 0.0
    %4587 = vmatpush1.msra.mxu0 0.0
    %4588 = vmatprep.subr.mxu0 0.0
    %4589 = vmatpush1.msra.mxu0 0.0
    %4590 = vmatprep.subr.mxu0 0.0
    %4591 = vmatpush1.msra.mxu0 0.0
    %4592 = vmatprep.subr.mxu0 0.0
    %4593 = vmatpush1.msra.mxu0 0.0
    %4594 = vmatprep.subr.mxu0 0.0
    %4595 = vmatpush1.msra.mxu0 0.0
    %4596 = vmatprep.subr.mxu0 0.0
    %4597 = vmatpush1.msra.mxu0 0.0
    %4598 = vmatprep.subr.mxu0 0.0
    %4599 = vmatpush1.msra.mxu0 0.0
    %4600 = vmatprep.subr.mxu0 0.0
    %4601 = vmatpush1.msra.mxu0 0.0
    %4602 = vmatprep.subr.mxu0 0.0
    %4603 = vmatpush1.msra.mxu0 %v4568
    %4604 = vmatprep.subr.mxu0 0.0
    %4605 = vmatpush2.msra.mxu0 0.0
    %4606 = vmatprep.subr.mxu0 0.0
    %4607 = vmatpush2.msra.mxu0 0.0
    %4608 = vmatprep.subr.mxu0 0.0
    %4609 = vmatpush2.msra.mxu0 0.0
    %4610 = vmatprep.subr.mxu0 0.0
    %4611 = vmatpush2.msra.mxu0 0.0
    %4612 = vmatprep.subr.mxu0 0.0
    %4613 = vmatpush2.msra.mxu0 0.0
    %4614 = vmatprep.subr.mxu0 0.0
    %4615 = vmatpush2.msra.mxu0 0.0
    %4616 = vmatprep.subr.mxu0 0.0
    %4617 = vmatpush2.msra.mxu0 0.0
    %4618 = vmatprep.subr.mxu0 0.0
    %4619 = vmatpush2.msra.mxu0 0.0
    %4620 = vmatprep.subr.mxu0 0.0
    %4621 = vmatpush2.msra.mxu0 0.0
    %4622 = vmatprep.subr.mxu0 0.0
    %4623 = vmatpush2.msra.mxu0 0.0
    %4624 = vmatprep.subr.mxu0 0.0
    %4625 = vmatpush2.msra.mxu0 0.0
    %4626 = vmatprep.subr.mxu0 0.0
    %4627 = vmatpush2.msra.mxu0 0.0
    %4628 = vmatprep.subr.mxu0 0.0
    %4629 = vmatpush2.msra.mxu0 0.0
    %4630 = vmatprep.subr.mxu0 0.0
    %4631 = vmatpush2.msra.mxu0 0.0
    %4632 = vmatprep.subr.mxu0 0.0
    %4633 = vmatpush2.msra.mxu0 0.0
    %4634 = vmatprep.subr.mxu0 0.0
    %4635 = vmatpush2.msra.mxu0 0.0
    %4636 = vmatprep.mubr.f32.mxu0 0.0
    %4637 = vmatmul.mubr.f32.gmra.mxu0 %v4570
    %v4638 = vpop.f32.mrf.mxu0
    %v4639 = vadd.f32 0.0, %v4638
    %v4640 = vpop.f32.mrf.mxu0
    %4641 = vdwg.mxu0
    %v4643 = vsel %vm193, %v4542, 0
    %4645 = vmatprep.subr.mxu0 0.0
    %4646 = vmatpush1.msra.mxu0 0.0
    %4647 = vmatprep.subr.mxu0 0.0
    %4648 = vmatpush1.msra.mxu0 0.0
    %4649 = vmatprep.subr.mxu0 0.0
    %4650 = vmatpush1.msra.mxu0 0.0
    %4651 = vmatprep.subr.mxu0 0.0
    %4652 = vmatpush1.msra.mxu0 0.0
    %4653 = vmatprep.subr.mxu0 0.0
    %4654 = vmatpush1.msra.mxu0 0.0
    %4655 = vmatprep.subr.mxu0 0.0
    %4656 = vmatpush1.msra.mxu0 0.0
    %4657 = vmatprep.subr.mxu0 0.0
    %4658 = vmatpush1.msra.mxu0 0.0
    %4659 = vmatprep.subr.mxu0 0.0
    %4660 = vmatpush1.msra.mxu0 0.0
    %4661 = vmatprep.subr.mxu0 0.0
    %4662 = vmatpush1.msra.mxu0 0.0
    %4663 = vmatprep.subr.mxu0 0.0
    %4664 = vmatpush1.msra.mxu0 0.0
    %4665 = vmatprep.subr.mxu0 0.0
    %4666 = vmatpush1.msra.mxu0 0.0
    %4667 = vmatprep.subr.mxu0 0.0
    %4668 = vmatpush1.msra.mxu0 0.0
    %4669 = vmatprep.subr.mxu0 0.0
    %4670 = vmatpush1.msra.mxu0 0.0
    %4671 = vmatprep.subr.mxu0 0.0
    %4672 = vmatpush1.msra.mxu0 0.0
    %4673 = vmatprep.subr.mxu0 0.0
    %4674 = vmatpush1.msra.mxu0 0.0
    %4675 = vmatprep.subr.mxu0 0.0
    %4676 = vmatpush1.msra.mxu0 %v4543
    %4677 = vmatprep.subr.mxu0 0.0
    %4678 = vmatpush2.msra.mxu0 0.0
    %4679 = vmatprep.subr.mxu0 0.0
    %4680 = vmatpush2.msra.mxu0 0.0
    %4681 = vmatprep.subr.mxu0 0.0
    %4682 = vmatpush2.msra.mxu0 0.0
    %4683 = vmatprep.subr.mxu0 0.0
    %4684 = vmatpush2.msra.mxu0 0.0
    %4685 = vmatprep.subr.mxu0 0.0
    %4686 = vmatpush2.msra.mxu0 0.0
    %4687 = vmatprep.subr.mxu0 0.0
    %4688 = vmatpush2.msra.mxu0 0.0
    %4689 = vmatprep.subr.mxu0 0.0
    %4690 = vmatpush2.msra.mxu0 0.0
    %4691 = vmatprep.subr.mxu0 0.0
    %4692 = vmatpush2.msra.mxu0 0.0
    %4693 = vmatprep.subr.mxu0 0.0
    %4694 = vmatpush2.msra.mxu0 0.0
    %4695 = vmatprep.subr.mxu0 0.0
    %4696 = vmatpush2.msra.mxu0 0.0
    %4697 = vmatprep.subr.mxu0 0.0
    %4698 = vmatpush2.msra.mxu0 0.0
    %4699 = vmatprep.subr.mxu0 0.0
    %4700 = vmatpush2.msra.mxu0 0.0
    %4701 = vmatprep.subr.mxu0 0.0
    %4702 = vmatpush2.msra.mxu0 0.0
    %4703 = vmatprep.subr.mxu0 0.0
    %4704 = vmatpush2.msra.mxu0 0.0
    %4705 = vmatprep.subr.mxu0 0.0
    %4706 = vmatpush2.msra.mxu0 0.0
    %4707 = vmatprep.subr.mxu0 0.0
    %4708 = vmatpush2.msra.mxu0 0.0
    %4709 = vmatprep.mubr.f32.mxu0 0.0
    %4710 = vmatmul.mubr.f32.gmra.mxu0 %v4643
    %v4711 = vpop.f32.mrf.mxu0
    %v4712 = vadd.f32 %v4639, %v4711
    %v4713 = vpop.f32.mrf.mxu0
    %4714 = vdwg.mxu0
    %4715 = vset.pattern.permute.xlu0 2
    %4716 = vperm.xlu0 %4715, %v4444
    %v4717 = vpop.permute.xlu0 %4716
    %v4719 = vlaneseq
    %v4720 = vshrl.u32 %v4719, 7
    %v4721 = vsub.s32 2, %v4720
    %v4722 = vrot.slane %v4514, %v4721
    %v4723 = vadd.f32 %v4717, %v4722
    %vm4724 = vcmp.gt.f32.partialorder %v4723, 0.0
    %v4725 = vmul.f32 %v4723, 0.2
    %v4726 = vsel %vm4724, %v4723, %v4725
    %v4727 = vsel %vm4530, %v4726, -9e+15
    %v4728 = vsel %vm193, %v4727, -inf
    %4729 = vmax.xlane.f32.xlu0 %v4728
    %v4730 = vpop.xlane.xlu0 %4729
    %v4731 = vsub.f32 %v4727, %v4730
    %v4732 = vmul.f32 %v4731, 1.442695
    %v4733 = vpow.pop %v4732
    %v4734 = vsel %vm193, %v4733, 0.0
    %4735 = vadd.xlane.f32.xlu0 %v4734
    %v4736 = vpop.xlane.xlu0 %4735
    %v4737 = vrcp.pop %v4736
    %v4738 = vmul.f32 %v4733, %v4737
    %v4739 = vmul.f32 %v4371, %v139
    %v4741 = vsel %vm193, %v4738, 0
    %4743 = vmatprep.subr.mxu0 0.0
    %4744 = vmatpush1.msra.mxu0 0.0
    %4745 = vmatprep.subr.mxu0 0.0
    %4746 = vmatpush1.msra.mxu0 0.0
    %4747 = vmatprep.subr.mxu0 0.0
    %4748 = vmatpush1.msra.mxu0 0.0
    %4749 = vmatprep.subr.mxu0 0.0
    %4750 = vmatpush1.msra.mxu0 0.0
    %4751 = vmatprep.subr.mxu0 0.0
    %4752 = vmatpush1.msra.mxu0 0.0
    %4753 = vmatprep.subr.mxu0 0.0
    %4754 = vmatpush1.msra.mxu0 0.0
    %4755 = vmatprep.subr.mxu0 0.0
    %4756 = vmatpush1.msra.mxu0 0.0
    %4757 = vmatprep.subr.mxu0 0.0
    %4758 = vmatpush1.msra.mxu0 0.0
    %4759 = vmatprep.subr.mxu0 0.0
    %4760 = vmatpush1.msra.mxu0 0.0
    %4761 = vmatprep.subr.mxu0 0.0
    %4762 = vmatpush1.msra.mxu0 0.0
    %4763 = vmatprep.subr.mxu0 0.0
    %4764 = vmatpush1.msra.mxu0 0.0
    %4765 = vmatprep.subr.mxu0 0.0
    %4766 = vmatpush1.msra.mxu0 0.0
    %4767 = vmatprep.subr.mxu0 0.0
    %4768 = vmatpush1.msra.mxu0 0.0
    %4769 = vmatprep.subr.mxu0 0.0
    %4770 = vmatpush1.msra.mxu0 0.0
    %4771 = vmatprep.subr.mxu0 0.0
    %4772 = vmatpush1.msra.mxu0 0.0
    %4773 = vmatprep.subr.mxu0 0.0
    %4774 = vmatpush1.msra.mxu0 %v4739
    %4775 = vmatprep.subr.mxu0 0.0
    %4776 = vmatpush2.msra.mxu0 0.0
    %4777 = vmatprep.subr.mxu0 0.0
    %4778 = vmatpush2.msra.mxu0 0.0
    %4779 = vmatprep.subr.mxu0 0.0
    %4780 = vmatpush2.msra.mxu0 0.0
    %4781 = vmatprep.subr.mxu0 0.0
    %4782 = vmatpush2.msra.mxu0 0.0
    %4783 = vmatprep.subr.mxu0 0.0
    %4784 = vmatpush2.msra.mxu0 0.0
    %4785 = vmatprep.subr.mxu0 0.0
    %4786 = vmatpush2.msra.mxu0 0.0
    %4787 = vmatprep.subr.mxu0 0.0
    %4788 = vmatpush2.msra.mxu0 0.0
    %4789 = vmatprep.subr.mxu0 0.0
    %4790 = vmatpush2.msra.mxu0 0.0
    %4791 = vmatprep.subr.mxu0 0.0
    %4792 = vmatpush2.msra.mxu0 0.0
    %4793 = vmatprep.subr.mxu0 0.0
    %4794 = vmatpush2.msra.mxu0 0.0
    %4795 = vmatprep.subr.mxu0 0.0
    %4796 = vmatpush2.msra.mxu0 0.0
    %4797 = vmatprep.subr.mxu0 0.0
    %4798 = vmatpush2.msra.mxu0 0.0
    %4799 = vmatprep.subr.mxu0 0.0
    %4800 = vmatpush2.msra.mxu0 0.0
    %4801 = vmatprep.subr.mxu0 0.0
    %4802 = vmatpush2.msra.mxu0 0.0
    %4803 = vmatprep.subr.mxu0 0.0
    %4804 = vmatpush2.msra.mxu0 0.0
    %4805 = vmatprep.subr.mxu0 0.0
    %4806 = vmatpush2.msra.mxu0 0.0
    %4807 = vmatprep.mubr.f32.mxu0 0.0
    %4808 = vmatmul.mubr.f32.gmra.mxu0 %v4741
    %v4809 = vpop.f32.mrf.mxu0
    %v4810 = vadd.f32 0.0, %v4809
    %v4811 = vpop.f32.mrf.mxu0
    %4812 = vdwg.mxu0
    %v4813 = vadd.f32 %v4712, %v4810
    %4814 = vset.pattern.permute.xlu0 3
    %4815 = vperm.xlu0 %4814, %v4444
    %v4816 = vpop.permute.xlu0 %4815
    %v4818 = vlaneseq
    %v4819 = vshrl.u32 %v4818, 7
    %v4820 = vsub.s32 3, %v4819
    %v4821 = vrot.slane %v4514, %v4820
    %v4822 = vadd.f32 %v4816, %v4821
    %vm4823 = vcmp.gt.f32.partialorder %v4822, 0.0
    %v4824 = vmul.f32 %v4822, 0.2
    %v4825 = vsel %vm4823, %v4822, %v4824
    %v4826 = vsel %vm4530, %v4825, -9e+15
    %v4827 = vsel %vm193, %v4826, -inf
    %4828 = vmax.xlane.f32.xlu0 %v4827
    %v4829 = vpop.xlane.xlu0 %4828
    %v4830 = vsub.f32 %v4826, %v4829
    %v4831 = vmul.f32 %v4830, 1.442695
    %v4832 = vpow.pop %v4831
    %v4833 = vsel %vm193, %v4832, 0.0
    %4834 = vadd.xlane.f32.xlu0 %v4833
    %v4835 = vpop.xlane.xlu0 %4834
    %v4836 = vrcp.pop %v4835
    %v4837 = vmul.f32 %v4832, %v4836
    %v4838 = vmul.f32 %v4371, %v144
    %v4840 = vsel %vm193, %v4837, 0
    %4842 = vmatprep.subr.mxu0 0.0
    %4843 = vmatpush1.msra.mxu0 0.0
    %4844 = vmatprep.subr.mxu0 0.0
    %4845 = vmatpush1.msra.mxu0 0.0
    %4846 = vmatprep.subr.mxu0 0.0
    %4847 = vmatpush1.msra.mxu0 0.0
    %4848 = vmatprep.subr.mxu0 0.0
    %4849 = vmatpush1.msra.mxu0 0.0
    %4850 = vmatprep.subr.mxu0 0.0
    %4851 = vmatpush1.msra.mxu0 0.0
    %4852 = vmatprep.subr.mxu0 0.0
    %4853 = vmatpush1.msra.mxu0 0.0
    %4854 = vmatprep.subr.mxu0 0.0
    %4855 = vmatpush1.msra.mxu0 0.0
    %4856 = vmatprep.subr.mxu0 0.0
    %4857 = vmatpush1.msra.mxu0 0.0
    %4858 = vmatprep.subr.mxu0 0.0
    %4859 = vmatpush1.msra.mxu0 0.0
    %4860 = vmatprep.subr.mxu0 0.0
    %4861 = vmatpush1.msra.mxu0 0.0
    %4862 = vmatprep.subr.mxu0 0.0
    %4863 = vmatpush1.msra.mxu0 0.0
    %4864 = vmatprep.subr.mxu0 0.0
    %4865 = vmatpush1.msra.mxu0 0.0
    %4866 = vmatprep.subr.mxu0 0.0
    %4867 = vmatpush1.msra.mxu0 0.0
    %4868 = vmatprep.subr.mxu0 0.0
    %4869 = vmatpush1.msra.mxu0 0.0
    %4870 = vmatprep.subr.mxu0 0.0
    %4871 = vmatpush1.msra.mxu0 0.0
    %4872 = vmatprep.subr.mxu0 0.0
    %4873 = vmatpush1.msra.mxu0 %v4838
    %4874 = vmatprep.subr.mxu0 0.0
    %4875 = vmatpush2.msra.mxu0 0.0
    %4876 = vmatprep.subr.mxu0 0.0
    %4877 = vmatpush2.msra.mxu0 0.0
    %4878 = vmatprep.subr.mxu0 0.0
    %4879 = vmatpush2.msra.mxu0 0.0
    %4880 = vmatprep.subr.mxu0 0.0
    %4881 = vmatpush2.msra.mxu0 0.0
    %4882 = vmatprep.subr.mxu0 0.0
    %4883 = vmatpush2.msra.mxu0 0.0
    %4884 = vmatprep.subr.mxu0 0.0
    %4885 = vmatpush2.msra.mxu0 0.0
    %4886 = vmatprep.subr.mxu0 0.0
    %4887 = vmatpush2.msra.mxu0 0.0
    %4888 = vmatprep.subr.mxu0 0.0
    %4889 = vmatpush2.msra.mxu0 0.0
    %4890 = vmatprep.subr.mxu0 0.0
    %4891 = vmatpush2.msra.mxu0 0.0
    %4892 = vmatprep.subr.mxu0 0.0
    %4893 = vmatpush2.msra.mxu0 0.0
    %4894 = vmatprep.subr.mxu0 0.0
    %4895 = vmatpush2.msra.mxu0 0.0
    %4896 = vmatprep.subr.mxu0 0.0
    %4897 = vmatpush2.msra.mxu0 0.0
    %4898 = vmatprep.subr.mxu0 0.0
    %4899 = vmatpush2.msra.mxu0 0.0
    %4900 = vmatprep.subr.mxu0 0.0
    %4901 = vmatpush2.msra.mxu0 0.0
    %4902 = vmatprep.subr.mxu0 0.0
    %4903 = vmatpush2.msra.mxu0 0.0
    %4904 = vmatprep.subr.mxu0 0.0
    %4905 = vmatpush2.msra.mxu0 0.0
    %4906 = vmatprep.mubr.f32.mxu0 0.0
    %4907 = vmatmul.mubr.f32.gmra.mxu0 %v4840
    %v4908 = vpop.f32.mrf.mxu0
    %v4909 = vadd.f32 0.0, %v4908
    %v4910 = vpop.f32.mrf.mxu0
    %4911 = vdwg.mxu0
    %v4912 = vadd.f32 %v4813, %v4909
    %vm4913 = vcmp.gt.f32.partialorder %v4912, 0.0
    %v4914 = vmin.f32 %v4912, 0.0
    %v4915 = vmul.f32 %v4914, 1.442695
    %v4916 = vpow.pop %v4915
    %v4917 = vsub.f32 %v4916, 1.0
    %v4918 = vsel %vm4913, %v4912, %v4917
    %v4920 = vsel %vm275, %v4918, 0
    %4922 = vmatprep.subr.mxu0 0.0
    %4923 = vmatpush1.msra.mxu0 0.0
    %4924 = vmatprep.subr.mxu0 0.0
    %4925 = vmatpush1.msra.mxu0 0.0
    %4926 = vmatprep.subr.mxu0 0.0
    %4927 = vmatpush1.msra.mxu0 0.0
    %4928 = vmatprep.subr.mxu0 0.0
    %4929 = vmatpush1.msra.mxu0 0.0
    %4930 = vmatprep.subr.mxu0 0.0
    %4931 = vmatpush1.msra.mxu0 0.0
    %4932 = vmatprep.subr.mxu0 0.0
    %4933 = vmatpush1.msra.mxu0 0.0
    %4934 = vmatprep.subr.mxu0 0.0
    %4935 = vmatpush1.msra.mxu0 0.0
    %4936 = vmatprep.subr.mxu0 0.0
    %4937 = vmatpush1.msra.mxu0 0.0
    %4938 = vmatprep.subr.mxu0 0.0
    %4939 = vmatpush1.msra.mxu0 0.0
    %4940 = vmatprep.subr.mxu0 0.0
    %4941 = vmatpush1.msra.mxu0 0.0
    %4942 = vmatprep.subr.mxu0 0.0
    %4943 = vmatpush1.msra.mxu0 0.0
    %4944 = vmatprep.subr.mxu0 0.0
    %4945 = vmatpush1.msra.mxu0 0.0
    %4946 = vmatprep.subr.mxu0 0.0
    %4947 = vmatpush1.msra.mxu0 %v163
    %4948 = vmatprep.subr.mxu0 0.0
    %4949 = vmatpush1.msra.mxu0 %v162
    %4950 = vmatprep.subr.mxu0 0.0
    %4951 = vmatpush1.msra.mxu0 %v161
    %4952 = vmatprep.subr.mxu0 0.0
    %4953 = vmatpush1.msra.mxu0 %v160
    %4954 = vmatprep.subr.mxu0 0.0
    %4955 = vmatpush2.msra.mxu0 0.0
    %4956 = vmatprep.subr.mxu0 0.0
    %4957 = vmatpush2.msra.mxu0 0.0
    %4958 = vmatprep.subr.mxu0 0.0
    %4959 = vmatpush2.msra.mxu0 0.0
    %4960 = vmatprep.subr.mxu0 0.0
    %4961 = vmatpush2.msra.mxu0 0.0
    %4962 = vmatprep.subr.mxu0 0.0
    %4963 = vmatpush2.msra.mxu0 0.0
    %4964 = vmatprep.subr.mxu0 0.0
    %4965 = vmatpush2.msra.mxu0 0.0
    %4966 = vmatprep.subr.mxu0 0.0
    %4967 = vmatpush2.msra.mxu0 0.0
    %4968 = vmatprep.subr.mxu0 0.0
    %4969 = vmatpush2.msra.mxu0 0.0
    %4970 = vmatprep.subr.mxu0 0.0
    %4971 = vmatpush2.msra.mxu0 0.0
    %4972 = vmatprep.subr.mxu0 0.0
    %4973 = vmatpush2.msra.mxu0 0.0
    %4974 = vmatprep.subr.mxu0 0.0
    %4975 = vmatpush2.msra.mxu0 0.0
    %4976 = vmatprep.subr.mxu0 0.0
    %4977 = vmatpush2.msra.mxu0 0.0
    %4978 = vmatprep.subr.mxu0 0.0
    %4979 = vmatpush2.msra.mxu0 0.0
    %4980 = vmatprep.subr.mxu0 0.0
    %4981 = vmatpush2.msra.mxu0 0.0
    %4982 = vmatprep.subr.mxu0 0.0
    %4983 = vmatpush2.msra.mxu0 0.0
    %4984 = vmatprep.subr.mxu0 0.0
    %4985 = vmatpush2.msra.mxu0 0.0
    %4986 = vmatprep.mubr.f32.mxu0 0.0
    %4987 = vmatmul.mubr.f32.gmra.mxu0 %v4920
    %v4988 = vpop.f32.mrf.mxu0
    %v4989 = vadd.f32 0.0, %v4988
    %v4990 = vpop.f32.mrf.mxu0
    %4991 = vdwg.mxu0
    %v4993 = vsel %vm275, %v4989, 0
    %4995 = vmatprep.subr.mxu0 0.0
    %4996 = vmatpush1.xpose.msra.mxu0 0.0
    %4997 = vmatprep.subr.mxu0 0.0
    %4998 = vmatpush1.xpose.msra.mxu0 0.0
    %4999 = vmatprep.subr.mxu0 0.0
    %5000 = vmatpush1.xpose.msra.mxu0 0.0
    %5001 = vmatprep.subr.mxu0 0.0
    %5002 = vmatpush1.xpose.msra.mxu0 0.0
    %5003 = vmatprep.subr.mxu0 0.0
    %5004 = vmatpush1.xpose.msra.mxu0 0.0
    %5005 = vmatprep.subr.mxu0 0.0
    %5006 = vmatpush1.xpose.msra.mxu0 0.0
    %5007 = vmatprep.subr.mxu0 0.0
    %5008 = vmatpush1.xpose.msra.mxu0 0.0
    %5009 = vmatprep.subr.mxu0 0.0
    %5010 = vmatpush1.xpose.msra.mxu0 0.0
    %5011 = vmatprep.subr.mxu0 0.0
    %5012 = vmatpush1.xpose.msra.mxu0 0.0
    %5013 = vmatprep.subr.mxu0 0.0
    %5014 = vmatpush1.xpose.msra.mxu0 0.0
    %5015 = vmatprep.subr.mxu0 0.0
    %5016 = vmatpush1.xpose.msra.mxu0 0.0
    %5017 = vmatprep.subr.mxu0 0.0
    %5018 = vmatpush1.xpose.msra.mxu0 0.0
    %5019 = vmatprep.subr.mxu0 0.0
    %5020 = vmatpush1.xpose.msra.mxu0 0.0
    %5021 = vmatprep.subr.mxu0 0.0
    %5022 = vmatpush1.xpose.msra.mxu0 0.0
    %5023 = vmatprep.subr.mxu0 0.0
    %5024 = vmatpush1.xpose.msra.mxu0 0.0
    %5025 = vmatprep.subr.mxu0 0.0
    %5026 = vmatpush1.xpose.msra.mxu0 %v1817
    %5027 = vmatprep.subr.mxu0 0.0
    %5028 = vmatpush2.xpose.msra.mxu0 0.0
    %5029 = vmatprep.subr.mxu0 0.0
    %5030 = vmatpush2.xpose.msra.mxu0 0.0
    %5031 = vmatprep.subr.mxu0 0.0
    %5032 = vmatpush2.xpose.msra.mxu0 0.0
    %5033 = vmatprep.subr.mxu0 0.0
    %5034 = vmatpush2.xpose.msra.mxu0 0.0
    %5035 = vmatprep.subr.mxu0 0.0
    %5036 = vmatpush2.xpose.msra.mxu0 0.0
    %5037 = vmatprep.subr.mxu0 0.0
    %5038 = vmatpush2.xpose.msra.mxu0 0.0
    %5039 = vmatprep.subr.mxu0 0.0
    %5040 = vmatpush2.xpose.msra.mxu0 0.0
    %5041 = vmatprep.subr.mxu0 0.0
    %5042 = vmatpush2.xpose.msra.mxu0 0.0
    %5043 = vmatprep.subr.mxu0 0.0
    %5044 = vmatpush2.xpose.msra.mxu0 0.0
    %5045 = vmatprep.subr.mxu0 0.0
    %5046 = vmatpush2.xpose.msra.mxu0 0.0
    %5047 = vmatprep.subr.mxu0 0.0
    %5048 = vmatpush2.xpose.msra.mxu0 0.0
    %5049 = vmatprep.subr.mxu0 0.0
    %5050 = vmatpush2.xpose.msra.mxu0 0.0
    %5051 = vmatprep.subr.mxu0 0.0
    %5052 = vmatpush2.xpose.msra.mxu0 0.0
    %5053 = vmatprep.subr.mxu0 0.0
    %5054 = vmatpush2.xpose.msra.mxu0 0.0
    %5055 = vmatprep.subr.mxu0 0.0
    %5056 = vmatpush2.xpose.msra.mxu0 0.0
    %5057 = vmatprep.subr.mxu0 0.0
    %5058 = vmatpush2.xpose.msra.mxu0 0.0
    %5059 = vmatprep.mubr.f32.mxu0 0.0
    %5060 = vmatmul.mubr.f32.gmra.mxu0 %v4993
    %v5061 = vpop.f32.mrf.mxu0
    %v5062 = vadd.f32 0.0, %v5061
    %v5063 = vpop.f32.mrf.mxu0
    %5064 = vdwg.mxu0
    %5065 = vmatprep.subr.mxu0 0.0
    %5066 = vmatpush1.xpose.msra.mxu0 0.0
    %5067 = vmatprep.subr.mxu0 0.0
    %5068 = vmatpush1.xpose.msra.mxu0 0.0
    %5069 = vmatprep.subr.mxu0 0.0
    %5070 = vmatpush1.xpose.msra.mxu0 0.0
    %5071 = vmatprep.subr.mxu0 0.0
    %5072 = vmatpush1.xpose.msra.mxu0 0.0
    %5073 = vmatprep.subr.mxu0 0.0
    %5074 = vmatpush1.xpose.msra.mxu0 0.0
    %5075 = vmatprep.subr.mxu0 0.0
    %5076 = vmatpush1.xpose.msra.mxu0 0.0
    %5077 = vmatprep.subr.mxu0 0.0
    %5078 = vmatpush1.xpose.msra.mxu0 0.0
    %5079 = vmatprep.subr.mxu0 0.0
    %5080 = vmatpush1.xpose.msra.mxu0 0.0
    %5081 = vmatprep.subr.mxu0 0.0
    %5082 = vmatpush1.xpose.msra.mxu0 0.0
    %5083 = vmatprep.subr.mxu0 0.0
    %5084 = vmatpush1.xpose.msra.mxu0 0.0
    %5085 = vmatprep.subr.mxu0 0.0
    %5086 = vmatpush1.xpose.msra.mxu0 0.0
    %5087 = vmatprep.subr.mxu0 0.0
    %5088 = vmatpush1.xpose.msra.mxu0 0.0
    %5089 = vmatprep.subr.mxu0 0.0
    %5090 = vmatpush1.xpose.msra.mxu0 0.0
    %5091 = vmatprep.subr.mxu0 0.0
    %5092 = vmatpush1.xpose.msra.mxu0 0.0
    %5093 = vmatprep.subr.mxu0 0.0
    %5094 = vmatpush1.xpose.msra.mxu0 0.0
    %5095 = vmatprep.subr.mxu0 0.0
    %5096 = vmatpush1.xpose.msra.mxu0 %v4993
    %5097 = vmatprep.subr.mxu0 0.0
    %5098 = vmatpush2.xpose.msra.mxu0 0.0
    %5099 = vmatprep.subr.mxu0 0.0
    %5100 = vmatpush2.xpose.msra.mxu0 0.0
    %5101 = vmatprep.subr.mxu0 0.0
    %5102 = vmatpush2.xpose.msra.mxu0 0.0
    %5103 = vmatprep.subr.mxu0 0.0
    %5104 = vmatpush2.xpose.msra.mxu0 0.0
    %5105 = vmatprep.subr.mxu0 0.0
    %5106 = vmatpush2.xpose.msra.mxu0 0.0
    %5107 = vmatprep.subr.mxu0 0.0
    %5108 = vmatpush2.xpose.msra.mxu0 0.0
    %5109 = vmatprep.subr.mxu0 0.0
    %5110 = vmatpush2.xpose.msra.mxu0 0.0
    %5111 = vmatprep.subr.mxu0 0.0
    %5112 = vmatpush2.xpose.msra.mxu0 0.0
    %5113 = vmatprep.subr.mxu0 0.0
    %5114 = vmatpush2.xpose.msra.mxu0 0.0
    %5115 = vmatprep.subr.mxu0 0.0
    %5116 = vmatpush2.xpose.msra.mxu0 0.0
    %5117 = vmatprep.subr.mxu0 0.0
    %5118 = vmatpush2.xpose.msra.mxu0 0.0
    %5119 = vmatprep.subr.mxu0 0.0
    %5120 = vmatpush2.xpose.msra.mxu0 0.0
    %5121 = vmatprep.subr.mxu0 0.0
    %5122 = vmatpush2.xpose.msra.mxu0 0.0
    %5123 = vmatprep.subr.mxu0 0.0
    %5124 = vmatpush2.xpose.msra.mxu0 0.0
    %5125 = vmatprep.subr.mxu0 0.0
    %5126 = vmatpush2.xpose.msra.mxu0 0.0
    %5127 = vmatprep.subr.mxu0 0.0
    %5128 = vmatpush2.xpose.msra.mxu0 0.0
    %5129 = vmatprep.mubr.f32.mxu0 0.0
    %5130 = vmatmul.mubr.f32.gmra.mxu0 %v1890
    %v5131 = vpop.f32.mrf.mxu0
    %v5132 = vadd.f32 0.0, %v5131
    %v5133 = vpop.f32.mrf.mxu0
    %5134 = vdwg.mxu0
    %5136 = vset.pattern.permute.xlu0 0
    %5137 = vperm.xlu0 %5136, %v5062
    %v5138 = vpop.permute.xlu0 %5137
    %v5140 = vlaneseq
    %v5141 = vshrl.u32 %v5140, 7
    %v5142 = vsub.s32 0, %v5141
    %v5143 = vrot.slane %v5132, %v5142
    %v5144 = vadd.f32 %v5138, %v5143
    %vm5145 = vcmp.gt.f32.partialorder %v5144, 0.0
    %v5146 = vmul.f32 %v5144, 0.2
    %v5147 = vsel %vm5145, %v5144, %v5146
    %v5148 = vsel %vm4530, %v5147, -9e+15
    %v5149 = vsel %vm193, %v5148, -inf
    %5150 = vmax.xlane.f32.xlu0 %v5149
    %v5151 = vpop.xlane.xlu0 %5150
    %v5152 = vsub.f32 %v5148, %v5151
    %v5153 = vmul.f32 %v5152, 1.442695
    %v5154 = vpow.pop %v5153
    %v5155 = vsel %vm193, %v5154, 0.0
    %5156 = vadd.xlane.f32.xlu0 %v5155
    %v5157 = vpop.xlane.xlu0 %5156
    %v5158 = vrcp.pop %v5157
    %v5159 = vmul.f32 %v5154, %v5158
    %v5160 = vmul.f32 %v4989, %v129
    %5161 = vset.pattern.permute.xlu0 1
    %5162 = vperm.xlu0 %5161, %v5062
    %v5163 = vpop.permute.xlu0 %5162
    %v5165 = vlaneseq
    %v5166 = vshrl.u32 %v5165, 7
    %v5167 = vsub.s32 1, %v5166
    %v5168 = vrot.slane %v5132, %v5167
    %v5169 = vadd.f32 %v5163, %v5168
    %vm5170 = vcmp.gt.f32.partialorder %v5169, 0.0
    %v5171 = vmul.f32 %v5169, 0.2
    %v5172 = vsel %vm5170, %v5169, %v5171
    %v5173 = vsel %vm4530, %v5172, -9e+15
    %v5174 = vsel %vm193, %v5173, -inf
    %5175 = vmax.xlane.f32.xlu0 %v5174
    %v5176 = vpop.xlane.xlu0 %5175
    %v5177 = vsub.f32 %v5173, %v5176
    %v5178 = vmul.f32 %v5177, 1.442695
    %v5179 = vpow.pop %v5178
    %v5180 = vsel %vm193, %v5179, 0.0
    %5181 = vadd.xlane.f32.xlu0 %v5180
    %v5182 = vpop.xlane.xlu0 %5181
    %v5183 = vrcp.pop %v5182
    %v5184 = vmul.f32 %v5179, %v5183
    %v5185 = vmul.f32 %v4989, %v134
    %v5187 = vsel %vm193, %v5184, 0
    %5189 = vmatprep.subr.mxu0 0.0
    %5190 = vmatpush1.msra.mxu0 0.0
    %5191 = vmatprep.subr.mxu0 0.0
    %5192 = vmatpush1.msra.mxu0 0.0
    %5193 = vmatprep.subr.mxu0 0.0
    %5194 = vmatpush1.msra.mxu0 0.0
    %5195 = vmatprep.subr.mxu0 0.0
    %5196 = vmatpush1.msra.mxu0 0.0
    %5197 = vmatprep.subr.mxu0 0.0
    %5198 = vmatpush1.msra.mxu0 0.0
    %5199 = vmatprep.subr.mxu0 0.0
    %5200 = vmatpush1.msra.mxu0 0.0
    %5201 = vmatprep.subr.mxu0 0.0
    %5202 = vmatpush1.msra.mxu0 0.0
    %5203 = vmatprep.subr.mxu0 0.0
    %5204 = vmatpush1.msra.mxu0 0.0
    %5205 = vmatprep.subr.mxu0 0.0
    %5206 = vmatpush1.msra.mxu0 0.0
    %5207 = vmatprep.subr.mxu0 0.0
    %5208 = vmatpush1.msra.mxu0 0.0
    %5209 = vmatprep.subr.mxu0 0.0
    %5210 = vmatpush1.msra.mxu0 0.0
    %5211 = vmatprep.subr.mxu0 0.0
    %5212 = vmatpush1.msra.mxu0 0.0
    %5213 = vmatprep.subr.mxu0 0.0
    %5214 = vmatpush1.msra.mxu0 0.0
    %5215 = vmatprep.subr.mxu0 0.0
    %5216 = vmatpush1.msra.mxu0 0.0
    %5217 = vmatprep.subr.mxu0 0.0
    %5218 = vmatpush1.msra.mxu0 0.0
    %5219 = vmatprep.subr.mxu0 0.0
    %5220 = vmatpush1.msra.mxu0 %v5185
    %5221 = vmatprep.subr.mxu0 0.0
    %5222 = vmatpush2.msra.mxu0 0.0
    %5223 = vmatprep.subr.mxu0 0.0
    %5224 = vmatpush2.msra.mxu0 0.0
    %5225 = vmatprep.subr.mxu0 0.0
    %5226 = vmatpush2.msra.mxu0 0.0
    %5227 = vmatprep.subr.mxu0 0.0
    %5228 = vmatpush2.msra.mxu0 0.0
    %5229 = vmatprep.subr.mxu0 0.0
    %5230 = vmatpush2.msra.mxu0 0.0
    %5231 = vmatprep.subr.mxu0 0.0
    %5232 = vmatpush2.msra.mxu0 0.0
    %5233 = vmatprep.subr.mxu0 0.0
    %5234 = vmatpush2.msra.mxu0 0.0
    %5235 = vmatprep.subr.mxu0 0.0
    %5236 = vmatpush2.msra.mxu0 0.0
    %5237 = vmatprep.subr.mxu0 0.0
    %5238 = vmatpush2.msra.mxu0 0.0
    %5239 = vmatprep.subr.mxu0 0.0
    %5240 = vmatpush2.msra.mxu0 0.0
    %5241 = vmatprep.subr.mxu0 0.0
    %5242 = vmatpush2.msra.mxu0 0.0
    %5243 = vmatprep.subr.mxu0 0.0
    %5244 = vmatpush2.msra.mxu0 0.0
    %5245 = vmatprep.subr.mxu0 0.0
    %5246 = vmatpush2.msra.mxu0 0.0
    %5247 = vmatprep.subr.mxu0 0.0
    %5248 = vmatpush2.msra.mxu0 0.0
    %5249 = vmatprep.subr.mxu0 0.0
    %5250 = vmatpush2.msra.mxu0 0.0
    %5251 = vmatprep.subr.mxu0 0.0
    %5252 = vmatpush2.msra.mxu0 0.0
    %5253 = vmatprep.mubr.f32.mxu0 0.0
    %5254 = vmatmul.mubr.f32.gmra.mxu0 %v5187
    %v5255 = vpop.f32.mrf.mxu0
    %v5256 = vadd.f32 0.0, %v5255
    %v5257 = vpop.f32.mrf.mxu0
    %5258 = vdwg.mxu0
    %v5260 = vsel %vm193, %v5159, 0
    %5262 = vmatprep.subr.mxu0 0.0
    %5263 = vmatpush1.msra.mxu0 0.0
    %5264 = vmatprep.subr.mxu0 0.0
    %5265 = vmatpush1.msra.mxu0 0.0
    %5266 = vmatprep.subr.mxu0 0.0
    %5267 = vmatpush1.msra.mxu0 0.0
    %5268 = vmatprep.subr.mxu0 0.0
    %5269 = vmatpush1.msra.mxu0 0.0
    %5270 = vmatprep.subr.mxu0 0.0
    %5271 = vmatpush1.msra.mxu0 0.0
    %5272 = vmatprep.subr.mxu0 0.0
    %5273 = vmatpush1.msra.mxu0 0.0
    %5274 = vmatprep.subr.mxu0 0.0
    %5275 = vmatpush1.msra.mxu0 0.0
    %5276 = vmatprep.subr.mxu0 0.0
    %5277 = vmatpush1.msra.mxu0 0.0
    %5278 = vmatprep.subr.mxu0 0.0
    %5279 = vmatpush1.msra.mxu0 0.0
    %5280 = vmatprep.subr.mxu0 0.0
    %5281 = vmatpush1.msra.mxu0 0.0
    %5282 = vmatprep.subr.mxu0 0.0
    %5283 = vmatpush1.msra.mxu0 0.0
    %5284 = vmatprep.subr.mxu0 0.0
    %5285 = vmatpush1.msra.mxu0 0.0
    %5286 = vmatprep.subr.mxu0 0.0
    %5287 = vmatpush1.msra.mxu0 0.0
    %5288 = vmatprep.subr.mxu0 0.0
    %5289 = vmatpush1.msra.mxu0 0.0
    %5290 = vmatprep.subr.mxu0 0.0
    %5291 = vmatpush1.msra.mxu0 0.0
    %5292 = vmatprep.subr.mxu0 0.0
    %5293 = vmatpush1.msra.mxu0 %v5160
    %5294 = vmatprep.subr.mxu0 0.0
    %5295 = vmatpush2.msra.mxu0 0.0
    %5296 = vmatprep.subr.mxu0 0.0
    %5297 = vmatpush2.msra.mxu0 0.0
    %5298 = vmatprep.subr.mxu0 0.0
    %5299 = vmatpush2.msra.mxu0 0.0
    %5300 = vmatprep.subr.mxu0 0.0
    %5301 = vmatpush2.msra.mxu0 0.0
    %5302 = vmatprep.subr.mxu0 0.0
    %5303 = vmatpush2.msra.mxu0 0.0
    %5304 = vmatprep.subr.mxu0 0.0
    %5305 = vmatpush2.msra.mxu0 0.0
    %5306 = vmatprep.subr.mxu0 0.0
    %5307 = vmatpush2.msra.mxu0 0.0
    %5308 = vmatprep.subr.mxu0 0.0
    %5309 = vmatpush2.msra.mxu0 0.0
    %5310 = vmatprep.subr.mxu0 0.0
    %5311 = vmatpush2.msra.mxu0 0.0
    %5312 = vmatprep.subr.mxu0 0.0
    %5313 = vmatpush2.msra.mxu0 0.0
    %5314 = vmatprep.subr.mxu0 0.0
    %5315 = vmatpush2.msra.mxu0 0.0
    %5316 = vmatprep.subr.mxu0 0.0
    %5317 = vmatpush2.msra.mxu0 0.0
    %5318 = vmatprep.subr.mxu0 0.0
    %5319 = vmatpush2.msra.mxu0 0.0
    %5320 = vmatprep.subr.mxu0 0.0
    %5321 = vmatpush2.msra.mxu0 0.0
    %5322 = vmatprep.subr.mxu0 0.0
    %5323 = vmatpush2.msra.mxu0 0.0
    %5324 = vmatprep.subr.mxu0 0.0
    %5325 = vmatpush2.msra.mxu0 0.0
    %5326 = vmatprep.mubr.f32.mxu0 0.0
    %5327 = vmatmul.mubr.f32.gmra.mxu0 %v5260
    %v5328 = vpop.f32.mrf.mxu0
    %v5329 = vadd.f32 %v5256, %v5328
    %v5330 = vpop.f32.mrf.mxu0
    %5331 = vdwg.mxu0
    %5332 = vset.pattern.permute.xlu0 2
    %5333 = vperm.xlu0 %5332, %v5062
    %v5334 = vpop.permute.xlu0 %5333
    %v5336 = vlaneseq
    %v5337 = vshrl.u32 %v5336, 7
    %v5338 = vsub.s32 2, %v5337
    %v5339 = vrot.slane %v5132, %v5338
    %v5340 = vadd.f32 %v5334, %v5339
    %vm5341 = vcmp.gt.f32.partialorder %v5340, 0.0
    %v5342 = vmul.f32 %v5340, 0.2
    %v5343 = vsel %vm5341, %v5340, %v5342
    %v5344 = vsel %vm4530, %v5343, -9e+15
    %v5345 = vsel %vm193, %v5344, -inf
    %5346 = vmax.xlane.f32.xlu0 %v5345
    %v5347 = vpop.xlane.xlu0 %5346
    %v5348 = vsub.f32 %v5344, %v5347
    %v5349 = vmul.f32 %v5348, 1.442695
    %v5350 = vpow.pop %v5349
    %v5351 = vsel %vm193, %v5350, 0.0
    %5352 = vadd.xlane.f32.xlu0 %v5351
    %v5353 = vpop.xlane.xlu0 %5352
    %v5354 = vrcp.pop %v5353
    %v5355 = vmul.f32 %v5350, %v5354
    %v5356 = vmul.f32 %v4989, %v139
    %v5358 = vsel %vm193, %v5355, 0
    %5360 = vmatprep.subr.mxu0 0.0
    %5361 = vmatpush1.msra.mxu0 0.0
    %5362 = vmatprep.subr.mxu0 0.0
    %5363 = vmatpush1.msra.mxu0 0.0
    %5364 = vmatprep.subr.mxu0 0.0
    %5365 = vmatpush1.msra.mxu0 0.0
    %5366 = vmatprep.subr.mxu0 0.0
    %5367 = vmatpush1.msra.mxu0 0.0
    %5368 = vmatprep.subr.mxu0 0.0
    %5369 = vmatpush1.msra.mxu0 0.0
    %5370 = vmatprep.subr.mxu0 0.0
    %5371 = vmatpush1.msra.mxu0 0.0
    %5372 = vmatprep.subr.mxu0 0.0
    %5373 = vmatpush1.msra.mxu0 0.0
    %5374 = vmatprep.subr.mxu0 0.0
    %5375 = vmatpush1.msra.mxu0 0.0
    %5376 = vmatprep.subr.mxu0 0.0
    %5377 = vmatpush1.msra.mxu0 0.0
    %5378 = vmatprep.subr.mxu0 0.0
    %5379 = vmatpush1.msra.mxu0 0.0
    %5380 = vmatprep.subr.mxu0 0.0
    %5381 = vmatpush1.msra.mxu0 0.0
    %5382 = vmatprep.subr.mxu0 0.0
    %5383 = vmatpush1.msra.mxu0 0.0
    %5384 = vmatprep.subr.mxu0 0.0
    %5385 = vmatpush1.msra.mxu0 0.0
    %5386 = vmatprep.subr.mxu0 0.0
    %5387 = vmatpush1.msra.mxu0 0.0
    %5388 = vmatprep.subr.mxu0 0.0
    %5389 = vmatpush1.msra.mxu0 0.0
    %5390 = vmatprep.subr.mxu0 0.0
    %5391 = vmatpush1.msra.mxu0 %v5356
    %5392 = vmatprep.subr.mxu0 0.0
    %5393 = vmatpush2.msra.mxu0 0.0
    %5394 = vmatprep.subr.mxu0 0.0
    %5395 = vmatpush2.msra.mxu0 0.0
    %5396 = vmatprep.subr.mxu0 0.0
    %5397 = vmatpush2.msra.mxu0 0.0
    %5398 = vmatprep.subr.mxu0 0.0
    %5399 = vmatpush2.msra.mxu0 0.0
    %5400 = vmatprep.subr.mxu0 0.0
    %5401 = vmatpush2.msra.mxu0 0.0
    %5402 = vmatprep.subr.mxu0 0.0
    %5403 = vmatpush2.msra.mxu0 0.0
    %5404 = vmatprep.subr.mxu0 0.0
    %5405 = vmatpush2.msra.mxu0 0.0
    %5406 = vmatprep.subr.mxu0 0.0
    %5407 = vmatpush2.msra.mxu0 0.0
    %5408 = vmatprep.subr.mxu0 0.0
    %5409 = vmatpush2.msra.mxu0 0.0
    %5410 = vmatprep.subr.mxu0 0.0
    %5411 = vmatpush2.msra.mxu0 0.0
    %5412 = vmatprep.subr.mxu0 0.0
    %5413 = vmatpush2.msra.mxu0 0.0
    %5414 = vmatprep.subr.mxu0 0.0
    %5415 = vmatpush2.msra.mxu0 0.0
    %5416 = vmatprep.subr.mxu0 0.0
    %5417 = vmatpush2.msra.mxu0 0.0
    %5418 = vmatprep.subr.mxu0 0.0
    %5419 = vmatpush2.msra.mxu0 0.0
    %5420 = vmatprep.subr.mxu0 0.0
    %5421 = vmatpush2.msra.mxu0 0.0
    %5422 = vmatprep.subr.mxu0 0.0
    %5423 = vmatpush2.msra.mxu0 0.0
    %5424 = vmatprep.mubr.f32.mxu0 0.0
    %5425 = vmatmul.mubr.f32.gmra.mxu0 %v5358
    %v5426 = vpop.f32.mrf.mxu0
    %v5427 = vadd.f32 0.0, %v5426
    %v5428 = vpop.f32.mrf.mxu0
    %5429 = vdwg.mxu0
    %v5430 = vadd.f32 %v5329, %v5427
    %5431 = vset.pattern.permute.xlu0 3
    %5432 = vperm.xlu0 %5431, %v5062
    %v5433 = vpop.permute.xlu0 %5432
    %v5435 = vlaneseq
    %v5436 = vshrl.u32 %v5435, 7
    %v5437 = vsub.s32 3, %v5436
    %v5438 = vrot.slane %v5132, %v5437
    %v5439 = vadd.f32 %v5433, %v5438
    %vm5440 = vcmp.gt.f32.partialorder %v5439, 0.0
    %v5441 = vmul.f32 %v5439, 0.2
    %v5442 = vsel %vm5440, %v5439, %v5441
    %v5443 = vsel %vm4530, %v5442, -9e+15
    %v5444 = vsel %vm193, %v5443, -inf
    %5445 = vmax.xlane.f32.xlu0 %v5444
    %v5446 = vpop.xlane.xlu0 %5445
    %v5447 = vsub.f32 %v5443, %v5446
    %v5448 = vmul.f32 %v5447, 1.442695
    %v5449 = vpow.pop %v5448
    %v5450 = vsel %vm193, %v5449, 0.0
    %5451 = vadd.xlane.f32.xlu0 %v5450
    %v5452 = vpop.xlane.xlu0 %5451
    %v5453 = vrcp.pop %v5452
    %v5454 = vmul.f32 %v5449, %v5453
    %v5455 = vmul.f32 %v4989, %v144
    %v5457 = vsel %vm193, %v5454, 0
    %5459 = vmatprep.subr.mxu0 0.0
    %5460 = vmatpush1.msra.mxu0 0.0
    %5461 = vmatprep.subr.mxu0 0.0
    %5462 = vmatpush1.msra.mxu0 0.0
    %5463 = vmatprep.subr.mxu0 0.0
    %5464 = vmatpush1.msra.mxu0 0.0
    %5465 = vmatprep.subr.mxu0 0.0
    %5466 = vmatpush1.msra.mxu0 0.0
    %5467 = vmatprep.subr.mxu0 0.0
    %5468 = vmatpush1.msra.mxu0 0.0
    %5469 = vmatprep.subr.mxu0 0.0
    %5470 = vmatpush1.msra.mxu0 0.0
    %5471 = vmatprep.subr.mxu0 0.0
    %5472 = vmatpush1.msra.mxu0 0.0
    %5473 = vmatprep.subr.mxu0 0.0
    %5474 = vmatpush1.msra.mxu0 0.0
    %5475 = vmatprep.subr.mxu0 0.0
    %5476 = vmatpush1.msra.mxu0 0.0
    %5477 = vmatprep.subr.mxu0 0.0
    %5478 = vmatpush1.msra.mxu0 0.0
    %5479 = vmatprep.subr.mxu0 0.0
    %5480 = vmatpush1.msra.mxu0 0.0
    %5481 = vmatprep.subr.mxu0 0.0
    %5482 = vmatpush1.msra.mxu0 0.0
    %5483 = vmatprep.subr.mxu0 0.0
    %5484 = vmatpush1.msra.mxu0 0.0
    %5485 = vmatprep.subr.mxu0 0.0
    %5486 = vmatpush1.msra.mxu0 0.0
    %5487 = vmatprep.subr.mxu0 0.0
    %5488 = vmatpush1.msra.mxu0 0.0
    %5489 = vmatprep.subr.mxu0 0.0
    %5490 = vmatpush1.msra.mxu0 %v5455
    %5491 = vmatprep.subr.mxu0 0.0
    %5492 = vmatpush2.msra.mxu0 0.0
    %5493 = vmatprep.subr.mxu0 0.0
    %5494 = vmatpush2.msra.mxu0 0.0
    %5495 = vmatprep.subr.mxu0 0.0
    %5496 = vmatpush2.msra.mxu0 0.0
    %5497 = vmatprep.subr.mxu0 0.0
    %5498 = vmatpush2.msra.mxu0 0.0
    %5499 = vmatprep.subr.mxu0 0.0
    %5500 = vmatpush2.msra.mxu0 0.0
    %5501 = vmatprep.subr.mxu0 0.0
    %5502 = vmatpush2.msra.mxu0 0.0
    %5503 = vmatprep.subr.mxu0 0.0
    %5504 = vmatpush2.msra.mxu0 0.0
    %5505 = vmatprep.subr.mxu0 0.0
    %5506 = vmatpush2.msra.mxu0 0.0
    %5507 = vmatprep.subr.mxu0 0.0
    %5508 = vmatpush2.msra.mxu0 0.0
    %5509 = vmatprep.subr.mxu0 0.0
    %5510 = vmatpush2.msra.mxu0 0.0
    %5511 = vmatprep.subr.mxu0 0.0
    %5512 = vmatpush2.msra.mxu0 0.0
    %5513 = vmatprep.subr.mxu0 0.0
    %5514 = vmatpush2.msra.mxu0 0.0
    %5515 = vmatprep.subr.mxu0 0.0
    %5516 = vmatpush2.msra.mxu0 0.0
    %5517 = vmatprep.subr.mxu0 0.0
    %5518 = vmatpush2.msra.mxu0 0.0
    %5519 = vmatprep.subr.mxu0 0.0
    %5520 = vmatpush2.msra.mxu0 0.0
    %5521 = vmatprep.subr.mxu0 0.0
    %5522 = vmatpush2.msra.mxu0 0.0
    %5523 = vmatprep.mubr.f32.mxu0 0.0
    %5524 = vmatmul.mubr.f32.gmra.mxu0 %v5457
    %v5525 = vpop.f32.mrf.mxu0
    %v5526 = vadd.f32 0.0, %v5525
    %v5527 = vpop.f32.mrf.mxu0
    %5528 = vdwg.mxu0
    %v5529 = vadd.f32 %v5430, %v5526
    %vm5530 = vcmp.gt.f32.partialorder %v5529, 0.0
    %v5531 = vmin.f32 %v5529, 0.0
    %v5532 = vmul.f32 %v5531, 1.442695
    %v5533 = vpow.pop %v5532
    %v5534 = vsub.f32 %v5533, 1.0
    %v5535 = vsel %vm5530, %v5529, %v5534
    %v5536 = vsel %vm275, %v5535, 0.0
    %v5537 = vrot.slane %v5536, 4
    %v5538 = vadd.f32 %v5536, %v5537
    %v5539 = vrot.slane %v5538, 2
    %v5540 = vadd.f32 %v5538, %v5539
    %v5541 = vrot.slane %v5540, 1
    %v5542 = vadd.f32 %v5540, %v5541
    %v5543 = vmul.f32 %v5542, 0.125
    %v5545 = vsel %vm275, %v5543, 0
    %5547 = vmatprep.subr.mxu0 0.0
    %5548 = vmatpush1.msra.mxu0 0.0
    %5549 = vmatprep.subr.mxu0 0.0
    %5550 = vmatpush1.msra.mxu0 0.0
    %5551 = vmatprep.subr.mxu0 0.0
    %5552 = vmatpush1.msra.mxu0 0.0
    %5553 = vmatprep.subr.mxu0 0.0
    %5554 = vmatpush1.msra.mxu0 0.0
    %5555 = vmatprep.subr.mxu0 0.0
    %5556 = vmatpush1.msra.mxu0 0.0
    %5557 = vmatprep.subr.mxu0 0.0
    %5558 = vmatpush1.msra.mxu0 0.0
    %5559 = vmatprep.subr.mxu0 0.0
    %5560 = vmatpush1.msra.mxu0 0.0
    %5561 = vmatprep.subr.mxu0 0.0
    %5562 = vmatpush1.msra.mxu0 0.0
    %5563 = vmatprep.subr.mxu0 0.0
    %5564 = vmatpush1.msra.mxu0 0.0
    %5565 = vmatprep.subr.mxu0 0.0
    %5566 = vmatpush1.msra.mxu0 0.0
    %5567 = vmatprep.subr.mxu0 0.0
    %5568 = vmatpush1.msra.mxu0 0.0
    %5569 = vmatprep.subr.mxu0 0.0
    %5570 = vmatpush1.msra.mxu0 0.0
    %5571 = vmatprep.subr.mxu0 0.0
    %5572 = vmatpush1.msra.mxu0 %v169
    %5573 = vmatprep.subr.mxu0 0.0
    %5574 = vmatpush1.msra.mxu0 %v168
    %5575 = vmatprep.subr.mxu0 0.0
    %5576 = vmatpush1.msra.mxu0 %v167
    %5577 = vmatprep.subr.mxu0 0.0
    %5578 = vmatpush1.msra.mxu0 %v166
    %5579 = vmatprep.subr.mxu0 0.0
    %5580 = vmatpush2.msra.mxu0 0.0
    %5581 = vmatprep.subr.mxu0 0.0
    %5582 = vmatpush2.msra.mxu0 0.0
    %5583 = vmatprep.subr.mxu0 0.0
    %5584 = vmatpush2.msra.mxu0 0.0
    %5585 = vmatprep.subr.mxu0 0.0
    %5586 = vmatpush2.msra.mxu0 0.0
    %5587 = vmatprep.subr.mxu0 0.0
    %5588 = vmatpush2.msra.mxu0 0.0
    %5589 = vmatprep.subr.mxu0 0.0
    %5590 = vmatpush2.msra.mxu0 0.0
    %5591 = vmatprep.subr.mxu0 0.0
    %5592 = vmatpush2.msra.mxu0 0.0
    %5593 = vmatprep.subr.mxu0 0.0
    %5594 = vmatpush2.msra.mxu0 0.0
    %5595 = vmatprep.subr.mxu0 0.0
    %5596 = vmatpush2.msra.mxu0 0.0
    %5597 = vmatprep.subr.mxu0 0.0
    %5598 = vmatpush2.msra.mxu0 0.0
    %5599 = vmatprep.subr.mxu0 0.0
    %5600 = vmatpush2.msra.mxu0 0.0
    %5601 = vmatprep.subr.mxu0 0.0
    %5602 = vmatpush2.msra.mxu0 0.0
    %5603 = vmatprep.subr.mxu0 0.0
    %5604 = vmatpush2.msra.mxu0 0.0
    %5605 = vmatprep.subr.mxu0 0.0
    %5606 = vmatpush2.msra.mxu0 0.0
    %5607 = vmatprep.subr.mxu0 0.0
    %5608 = vmatpush2.msra.mxu0 0.0
    %5609 = vmatprep.subr.mxu0 0.0
    %5610 = vmatpush2.msra.mxu0 0.0
    %5611 = vmatprep.mubr.f32.mxu0 0.0
    %5612 = vmatmul.mubr.f32.gmra.mxu0 %v5545
    %v5613 = vpop.f32.mrf.mxu0
    %v5614 = vadd.f32 0.0, %v5613
    %v5615 = vpop.f32.mrf.mxu0
    %5616 = vdwg.mxu0
    %v5618 = vsel %vm275, %v5535, 0
    %5620 = vmatprep.subr.mxu0 0.0
    %5621 = vmatpush1.msra.mxu0 0.0
    %5622 = vmatprep.subr.mxu0 0.0
    %5623 = vmatpush1.msra.mxu0 0.0
    %5624 = vmatprep.subr.mxu0 0.0
    %5625 = vmatpush1.msra.mxu0 0.0
    %5626 = vmatprep.subr.mxu0 0.0
    %5627 = vmatpush1.msra.mxu0 0.0
    %5628 = vmatprep.subr.mxu0 0.0
    %5629 = vmatpush1.msra.mxu0 0.0
    %5630 = vmatprep.subr.mxu0 0.0
    %5631 = vmatpush1.msra.mxu0 0.0
    %5632 = vmatprep.subr.mxu0 0.0
    %5633 = vmatpush1.msra.mxu0 0.0
    %5634 = vmatprep.subr.mxu0 0.0
    %5635 = vmatpush1.msra.mxu0 0.0
    %5636 = vmatprep.subr.mxu0 0.0
    %5637 = vmatpush1.msra.mxu0 0.0
    %5638 = vmatprep.subr.mxu0 0.0
    %5639 = vmatpush1.msra.mxu0 0.0
    %5640 = vmatprep.subr.mxu0 0.0
    %5641 = vmatpush1.msra.mxu0 0.0
    %5642 = vmatprep.subr.mxu0 0.0
    %5643 = vmatpush1.msra.mxu0 0.0
    %5644 = vmatprep.subr.mxu0 0.0
    %5645 = vmatpush1.msra.mxu0 %v173
    %5646 = vmatprep.subr.mxu0 0.0
    %5647 = vmatpush1.msra.mxu0 %v172
    %5648 = vmatprep.subr.mxu0 0.0
    %5649 = vmatpush1.msra.mxu0 %v171
    %5650 = vmatprep.subr.mxu0 0.0
    %5651 = vmatpush1.msra.mxu0 %v170
    %5652 = vmatprep.subr.mxu0 0.0
    %5653 = vmatpush2.msra.mxu0 0.0
    %5654 = vmatprep.subr.mxu0 0.0
    %5655 = vmatpush2.msra.mxu0 0.0
    %5656 = vmatprep.subr.mxu0 0.0
    %5657 = vmatpush2.msra.mxu0 0.0
    %5658 = vmatprep.subr.mxu0 0.0
    %5659 = vmatpush2.msra.mxu0 0.0
    %5660 = vmatprep.subr.mxu0 0.0
    %5661 = vmatpush2.msra.mxu0 0.0
    %5662 = vmatprep.subr.mxu0 0.0
    %5663 = vmatpush2.msra.mxu0 0.0
    %5664 = vmatprep.subr.mxu0 0.0
    %5665 = vmatpush2.msra.mxu0 0.0
    %5666 = vmatprep.subr.mxu0 0.0
    %5667 = vmatpush2.msra.mxu0 0.0
    %5668 = vmatprep.subr.mxu0 0.0
    %5669 = vmatpush2.msra.mxu0 0.0
    %5670 = vmatprep.subr.mxu0 0.0
    %5671 = vmatpush2.msra.mxu0 0.0
    %5672 = vmatprep.subr.mxu0 0.0
    %5673 = vmatpush2.msra.mxu0 0.0
    %5674 = vmatprep.subr.mxu0 0.0
    %5675 = vmatpush2.msra.mxu0 0.0
    %5676 = vmatprep.subr.mxu0 0.0
    %5677 = vmatpush2.msra.mxu0 0.0
    %5678 = vmatprep.subr.mxu0 0.0
    %5679 = vmatpush2.msra.mxu0 0.0
    %5680 = vmatprep.subr.mxu0 0.0
    %5681 = vmatpush2.msra.mxu0 0.0
    %5682 = vmatprep.subr.mxu0 0.0
    %5683 = vmatpush2.msra.mxu0 0.0
    %5684 = vmatprep.mubr.f32.mxu0 0.0
    %5685 = vmatmul.mubr.f32.gmra.mxu0 %v5618
    %v5686 = vpop.f32.mrf.mxu0
    %v5687 = vadd.f32 0.0, %v5686
    %v5688 = vpop.f32.mrf.mxu0
    %5689 = vdwg.mxu0
    %5690 = vmatprep.subr.mxu0 0.0
    %5691 = vmatpush1.msra.mxu0 0.0
    %5692 = vmatprep.subr.mxu0 0.0
    %5693 = vmatpush1.msra.mxu0 0.0
    %5694 = vmatprep.subr.mxu0 0.0
    %5695 = vmatpush1.msra.mxu0 0.0
    %5696 = vmatprep.subr.mxu0 0.0
    %5697 = vmatpush1.msra.mxu0 0.0
    %5698 = vmatprep.subr.mxu0 0.0
    %5699 = vmatpush1.msra.mxu0 0.0
    %5700 = vmatprep.subr.mxu0 0.0
    %5701 = vmatpush1.msra.mxu0 0.0
    %5702 = vmatprep.subr.mxu0 0.0
    %5703 = vmatpush1.msra.mxu0 0.0
    %5704 = vmatprep.subr.mxu0 0.0
    %5705 = vmatpush1.msra.mxu0 0.0
    %5706 = vmatprep.subr.mxu0 0.0
    %5707 = vmatpush1.msra.mxu0 0.0
    %5708 = vmatprep.subr.mxu0 0.0
    %5709 = vmatpush1.msra.mxu0 0.0
    %5710 = vmatprep.subr.mxu0 0.0
    %5711 = vmatpush1.msra.mxu0 0.0
    %5712 = vmatprep.subr.mxu0 0.0
    %5713 = vmatpush1.msra.mxu0 0.0
    %5714 = vmatprep.subr.mxu0 0.0
    %5715 = vmatpush1.msra.mxu0 %v177
    %5716 = vmatprep.subr.mxu0 0.0
    %5717 = vmatpush1.msra.mxu0 %v176
    %5718 = vmatprep.subr.mxu0 0.0
    %5719 = vmatpush1.msra.mxu0 %v175
    %5720 = vmatprep.subr.mxu0 0.0
    %5721 = vmatpush1.msra.mxu0 %v174
    %5722 = vmatprep.subr.mxu0 0.0
    %5723 = vmatpush2.msra.mxu0 0.0
    %5724 = vmatprep.subr.mxu0 0.0
    %5725 = vmatpush2.msra.mxu0 0.0
    %5726 = vmatprep.subr.mxu0 0.0
    %5727 = vmatpush2.msra.mxu0 0.0
    %5728 = vmatprep.subr.mxu0 0.0
    %5729 = vmatpush2.msra.mxu0 0.0
    %5730 = vmatprep.subr.mxu0 0.0
    %5731 = vmatpush2.msra.mxu0 0.0
    %5732 = vmatprep.subr.mxu0 0.0
    %5733 = vmatpush2.msra.mxu0 0.0
    %5734 = vmatprep.subr.mxu0 0.0
    %5735 = vmatpush2.msra.mxu0 0.0
    %5736 = vmatprep.subr.mxu0 0.0
    %5737 = vmatpush2.msra.mxu0 0.0
    %5738 = vmatprep.subr.mxu0 0.0
    %5739 = vmatpush2.msra.mxu0 0.0
    %5740 = vmatprep.subr.mxu0 0.0
    %5741 = vmatpush2.msra.mxu0 0.0
    %5742 = vmatprep.subr.mxu0 0.0
    %5743 = vmatpush2.msra.mxu0 0.0
    %5744 = vmatprep.subr.mxu0 0.0
    %5745 = vmatpush2.msra.mxu0 0.0
    %5746 = vmatprep.subr.mxu0 0.0
    %5747 = vmatpush2.msra.mxu0 0.0
    %5748 = vmatprep.subr.mxu0 0.0
    %5749 = vmatpush2.msra.mxu0 0.0
    %5750 = vmatprep.subr.mxu0 0.0
    %5751 = vmatpush2.msra.mxu0 0.0
    %5752 = vmatprep.subr.mxu0 0.0
    %5753 = vmatpush2.msra.mxu0 0.0
    %5754 = vmatprep.mubr.f32.mxu0 0.0
    %5755 = vmatmul.mubr.f32.gmra.mxu0 %v5618
    %v5756 = vpop.f32.mrf.mxu0
    %v5757 = vadd.f32 0.0, %v5756
    %v5758 = vpop.f32.mrf.mxu0
    %5759 = vdwg.mxu0
    %v5760 = vmul.f32 %v5614, %v129
    %v5762 = vsel %vm275, %v5760, 0
    %v5765 = vsel %vm275, %v5687, 0
    %5767 = vmatprep.subr.mxu0 0.0
    %5768 = vmatpush1.xpose.msra.mxu0 0.0
    %5769 = vmatprep.subr.mxu0 0.0
    %5770 = vmatpush1.xpose.msra.mxu0 0.0
    %5771 = vmatprep.subr.mxu0 0.0
    %5772 = vmatpush1.xpose.msra.mxu0 0.0
    %5773 = vmatprep.subr.mxu0 0.0
    %5774 = vmatpush1.xpose.msra.mxu0 0.0
    %5775 = vmatprep.subr.mxu0 0.0
    %5776 = vmatpush1.xpose.msra.mxu0 0.0
    %5777 = vmatprep.subr.mxu0 0.0
    %5778 = vmatpush1.xpose.msra.mxu0 0.0
    %5779 = vmatprep.subr.mxu0 0.0
    %5780 = vmatpush1.xpose.msra.mxu0 0.0
    %5781 = vmatprep.subr.mxu0 0.0
    %5782 = vmatpush1.xpose.msra.mxu0 0.0
    %5783 = vmatprep.subr.mxu0 0.0
    %5784 = vmatpush1.xpose.msra.mxu0 0.0
    %5785 = vmatprep.subr.mxu0 0.0
    %5786 = vmatpush1.xpose.msra.mxu0 0.0
    %5787 = vmatprep.subr.mxu0 0.0
    %5788 = vmatpush1.xpose.msra.mxu0 0.0
    %5789 = vmatprep.subr.mxu0 0.0
    %5790 = vmatpush1.xpose.msra.mxu0 0.0
    %5791 = vmatprep.subr.mxu0 0.0
    %5792 = vmatpush1.xpose.msra.mxu0 0.0
    %5793 = vmatprep.subr.mxu0 0.0
    %5794 = vmatpush1.xpose.msra.mxu0 0.0
    %5795 = vmatprep.subr.mxu0 0.0
    %5796 = vmatpush1.xpose.msra.mxu0 0.0
    %5797 = vmatprep.subr.mxu0 0.0
    %5798 = vmatpush1.xpose.msra.mxu0 %v5765
    %5799 = vmatprep.subr.mxu0 0.0
    %5800 = vmatpush2.xpose.msra.mxu0 0.0
    %5801 = vmatprep.subr.mxu0 0.0
    %5802 = vmatpush2.xpose.msra.mxu0 0.0
    %5803 = vmatprep.subr.mxu0 0.0
    %5804 = vmatpush2.xpose.msra.mxu0 0.0
    %5805 = vmatprep.subr.mxu0 0.0
    %5806 = vmatpush2.xpose.msra.mxu0 0.0
    %5807 = vmatprep.subr.mxu0 0.0
    %5808 = vmatpush2.xpose.msra.mxu0 0.0
    %5809 = vmatprep.subr.mxu0 0.0
    %5810 = vmatpush2.xpose.msra.mxu0 0.0
    %5811 = vmatprep.subr.mxu0 0.0
    %5812 = vmatpush2.xpose.msra.mxu0 0.0
    %5813 = vmatprep.subr.mxu0 0.0
    %5814 = vmatpush2.xpose.msra.mxu0 0.0
    %5815 = vmatprep.subr.mxu0 0.0
    %5816 = vmatpush2.xpose.msra.mxu0 0.0
    %5817 = vmatprep.subr.mxu0 0.0
    %5818 = vmatpush2.xpose.msra.mxu0 0.0
    %5819 = vmatprep.subr.mxu0 0.0
    %5820 = vmatpush2.xpose.msra.mxu0 0.0
    %5821 = vmatprep.subr.mxu0 0.0
    %5822 = vmatpush2.xpose.msra.mxu0 0.0
    %5823 = vmatprep.subr.mxu0 0.0
    %5824 = vmatpush2.xpose.msra.mxu0 0.0
    %5825 = vmatprep.subr.mxu0 0.0
    %5826 = vmatpush2.xpose.msra.mxu0 0.0
    %5827 = vmatprep.subr.mxu0 0.0
    %5828 = vmatpush2.xpose.msra.mxu0 0.0
    %5829 = vmatprep.subr.mxu0 0.0
    %5830 = vmatpush2.xpose.msra.mxu0 0.0
    %5831 = vmatprep.mubr.f32.mxu0 0.0
    %5832 = vmatmul.mubr.f32.gmra.mxu0 %v5762
    %v5833 = vpop.f32.mrf.mxu0
    %v5834 = vadd.f32 0.0, %v5833
    %v5835 = vpop.f32.mrf.mxu0
    %5836 = vdwg.mxu0
    %v5837 = vmul.f32 %v5834, 0.35355338
    %v5838 = vsel %vm2665, %v5837, -inf
    %5839 = vmax.xlane.f32.xlu0 %v5838
    %v5840 = vpop.xlane.xlu0 %5839
    %v5841 = vsub.f32 %v5837, %v5840
    %v5842 = vmul.f32 %v5841, 1.442695
    %v5843 = vpow.pop %v5842
    %v5844 = vsel %vm2665, %v5843, 0.0
    %5845 = vadd.xlane.f32.xlu0 %v5844
    %v5846 = vpop.xlane.xlu0 %5845
    %v5847 = vrcp.pop %v5846
    %v5848 = vmul.f32 %v5843, %v5847
    %v5849 = vmul.f32 %v5757, %v129
    %v5850 = vmul.f32 %v5614, %v134
    %v5852 = vsel %vm275, %v5850, 0
    %5854 = vmatprep.subr.mxu0 0.0
    %5855 = vmatpush1.xpose.msra.mxu0 0.0
    %5856 = vmatprep.subr.mxu0 0.0
    %5857 = vmatpush1.xpose.msra.mxu0 0.0
    %5858 = vmatprep.subr.mxu0 0.0
    %5859 = vmatpush1.xpose.msra.mxu0 0.0
    %5860 = vmatprep.subr.mxu0 0.0
    %5861 = vmatpush1.xpose.msra.mxu0 0.0
    %5862 = vmatprep.subr.mxu0 0.0
    %5863 = vmatpush1.xpose.msra.mxu0 0.0
    %5864 = vmatprep.subr.mxu0 0.0
    %5865 = vmatpush1.xpose.msra.mxu0 0.0
    %5866 = vmatprep.subr.mxu0 0.0
    %5867 = vmatpush1.xpose.msra.mxu0 0.0
    %5868 = vmatprep.subr.mxu0 0.0
    %5869 = vmatpush1.xpose.msra.mxu0 0.0
    %5870 = vmatprep.subr.mxu0 0.0
    %5871 = vmatpush1.xpose.msra.mxu0 0.0
    %5872 = vmatprep.subr.mxu0 0.0
    %5873 = vmatpush1.xpose.msra.mxu0 0.0
    %5874 = vmatprep.subr.mxu0 0.0
    %5875 = vmatpush1.xpose.msra.mxu0 0.0
    %5876 = vmatprep.subr.mxu0 0.0
    %5877 = vmatpush1.xpose.msra.mxu0 0.0
    %5878 = vmatprep.subr.mxu0 0.0
    %5879 = vmatpush1.xpose.msra.mxu0 0.0
    %5880 = vmatprep.subr.mxu0 0.0
    %5881 = vmatpush1.xpose.msra.mxu0 0.0
    %5882 = vmatprep.subr.mxu0 0.0
    %5883 = vmatpush1.xpose.msra.mxu0 0.0
    %5884 = vmatprep.subr.mxu0 0.0
    %5885 = vmatpush1.xpose.msra.mxu0 %v5765
    %5886 = vmatprep.subr.mxu0 0.0
    %5887 = vmatpush2.xpose.msra.mxu0 0.0
    %5888 = vmatprep.subr.mxu0 0.0
    %5889 = vmatpush2.xpose.msra.mxu0 0.0
    %5890 = vmatprep.subr.mxu0 0.0
    %5891 = vmatpush2.xpose.msra.mxu0 0.0
    %5892 = vmatprep.subr.mxu0 0.0
    %5893 = vmatpush2.xpose.msra.mxu0 0.0
    %5894 = vmatprep.subr.mxu0 0.0
    %5895 = vmatpush2.xpose.msra.mxu0 0.0
    %5896 = vmatprep.subr.mxu0 0.0
    %5897 = vmatpush2.xpose.msra.mxu0 0.0
    %5898 = vmatprep.subr.mxu0 0.0
    %5899 = vmatpush2.xpose.msra.mxu0 0.0
    %5900 = vmatprep.subr.mxu0 0.0
    %5901 = vmatpush2.xpose.msra.mxu0 0.0
    %5902 = vmatprep.subr.mxu0 0.0
    %5903 = vmatpush2.xpose.msra.mxu0 0.0
    %5904 = vmatprep.subr.mxu0 0.0
    %5905 = vmatpush2.xpose.msra.mxu0 0.0
    %5906 = vmatprep.subr.mxu0 0.0
    %5907 = vmatpush2.xpose.msra.mxu0 0.0
    %5908 = vmatprep.subr.mxu0 0.0
    %5909 = vmatpush2.xpose.msra.mxu0 0.0
    %5910 = vmatprep.subr.mxu0 0.0
    %5911 = vmatpush2.xpose.msra.mxu0 0.0
    %5912 = vmatprep.subr.mxu0 0.0
    %5913 = vmatpush2.xpose.msra.mxu0 0.0
    %5914 = vmatprep.subr.mxu0 0.0
    %5915 = vmatpush2.xpose.msra.mxu0 0.0
    %5916 = vmatprep.subr.mxu0 0.0
    %5917 = vmatpush2.xpose.msra.mxu0 0.0
    %5918 = vmatprep.mubr.f32.mxu0 0.0
    %5919 = vmatmul.mubr.f32.gmra.mxu0 %v5852
    %v5920 = vpop.f32.mrf.mxu0
    %v5921 = vadd.f32 0.0, %v5920
    %v5922 = vpop.f32.mrf.mxu0
    %5923 = vdwg.mxu0
    %v5924 = vmul.f32 %v5921, 0.35355338
    %v5925 = vsel %vm2665, %v5924, -inf
    %5926 = vmax.xlane.f32.xlu0 %v5925
    %v5927 = vpop.xlane.xlu0 %5926
    %v5928 = vsub.f32 %v5924, %v5927
    %v5929 = vmul.f32 %v5928, 1.442695
    %v5930 = vpow.pop %v5929
    %v5931 = vsel %vm2665, %v5930, 0.0
    %5932 = vadd.xlane.f32.xlu0 %v5931
    %v5933 = vpop.xlane.xlu0 %5932
    %v5934 = vrcp.pop %v5933
    %v5935 = vmul.f32 %v5930, %v5934
    %v5936 = vmul.f32 %v5757, %v134
    %v5938 = vsel %vm193, %v5935, 0
    %5940 = vmatprep.subr.mxu0 0.0
    %5941 = vmatpush1.msra.mxu0 0.0
    %5942 = vmatprep.subr.mxu0 0.0
    %5943 = vmatpush1.msra.mxu0 0.0
    %5944 = vmatprep.subr.mxu0 0.0
    %5945 = vmatpush1.msra.mxu0 0.0
    %5946 = vmatprep.subr.mxu0 0.0
    %5947 = vmatpush1.msra.mxu0 0.0
    %5948 = vmatprep.subr.mxu0 0.0
    %5949 = vmatpush1.msra.mxu0 0.0
    %5950 = vmatprep.subr.mxu0 0.0
    %5951 = vmatpush1.msra.mxu0 0.0
    %5952 = vmatprep.subr.mxu0 0.0
    %5953 = vmatpush1.msra.mxu0 0.0
    %5954 = vmatprep.subr.mxu0 0.0
    %5955 = vmatpush1.msra.mxu0 0.0
    %5956 = vmatprep.subr.mxu0 0.0
    %5957 = vmatpush1.msra.mxu0 0.0
    %5958 = vmatprep.subr.mxu0 0.0
    %5959 = vmatpush1.msra.mxu0 0.0
    %5960 = vmatprep.subr.mxu0 0.0
    %5961 = vmatpush1.msra.mxu0 0.0
    %5962 = vmatprep.subr.mxu0 0.0
    %5963 = vmatpush1.msra.mxu0 0.0
    %5964 = vmatprep.subr.mxu0 0.0
    %5965 = vmatpush1.msra.mxu0 0.0
    %5966 = vmatprep.subr.mxu0 0.0
    %5967 = vmatpush1.msra.mxu0 0.0
    %5968 = vmatprep.subr.mxu0 0.0
    %5969 = vmatpush1.msra.mxu0 0.0
    %5970 = vmatprep.subr.mxu0 0.0
    %5971 = vmatpush1.msra.mxu0 %v5936
    %5972 = vmatprep.subr.mxu0 0.0
    %5973 = vmatpush2.msra.mxu0 0.0
    %5974 = vmatprep.subr.mxu0 0.0
    %5975 = vmatpush2.msra.mxu0 0.0
    %5976 = vmatprep.subr.mxu0 0.0
    %5977 = vmatpush2.msra.mxu0 0.0
    %5978 = vmatprep.subr.mxu0 0.0
    %5979 = vmatpush2.msra.mxu0 0.0
    %5980 = vmatprep.subr.mxu0 0.0
    %5981 = vmatpush2.msra.mxu0 0.0
    %5982 = vmatprep.subr.mxu0 0.0
    %5983 = vmatpush2.msra.mxu0 0.0
    %5984 = vmatprep.subr.mxu0 0.0
    %5985 = vmatpush2.msra.mxu0 0.0
    %5986 = vmatprep.subr.mxu0 0.0
    %5987 = vmatpush2.msra.mxu0 0.0
    %5988 = vmatprep.subr.mxu0 0.0
    %5989 = vmatpush2.msra.mxu0 0.0
    %5990 = vmatprep.subr.mxu0 0.0
    %5991 = vmatpush2.msra.mxu0 0.0
    %5992 = vmatprep.subr.mxu0 0.0
    %5993 = vmatpush2.msra.mxu0 0.0
    %5994 = vmatprep.subr.mxu0 0.0
    %5995 = vmatpush2.msra.mxu0 0.0
    %5996 = vmatprep.subr.mxu0 0.0
    %5997 = vmatpush2.msra.mxu0 0.0
    %5998 = vmatprep.subr.mxu0 0.0
    %5999 = vmatpush2.msra.mxu0 0.0
    %6000 = vmatprep.subr.mxu0 0.0
    %6001 = vmatpush2.msra.mxu0 0.0
    %6002 = vmatprep.subr.mxu0 0.0
    %6003 = vmatpush2.msra.mxu0 0.0
    %6004 = vmatprep.mubr.f32.mxu0 0.0
    %6005 = vmatmul.mubr.f32.gmra.mxu0 %v5938
    %v6006 = vpop.f32.mrf.mxu0
    %v6007 = vadd.f32 0.0, %v6006
    %v6008 = vpop.f32.mrf.mxu0
    %6009 = vdwg.mxu0
    %v6011 = vsel %vm193, %v5848, 0
    %6013 = vmatprep.subr.mxu0 0.0
    %6014 = vmatpush1.msra.mxu0 0.0
    %6015 = vmatprep.subr.mxu0 0.0
    %6016 = vmatpush1.msra.mxu0 0.0
    %6017 = vmatprep.subr.mxu0 0.0
    %6018 = vmatpush1.msra.mxu0 0.0
    %6019 = vmatprep.subr.mxu0 0.0
    %6020 = vmatpush1.msra.mxu0 0.0
    %6021 = vmatprep.subr.mxu0 0.0
    %6022 = vmatpush1.msra.mxu0 0.0
    %6023 = vmatprep.subr.mxu0 0.0
    %6024 = vmatpush1.msra.mxu0 0.0
    %6025 = vmatprep.subr.mxu0 0.0
    %6026 = vmatpush1.msra.mxu0 0.0
    %6027 = vmatprep.subr.mxu0 0.0
    %6028 = vmatpush1.msra.mxu0 0.0
    %6029 = vmatprep.subr.mxu0 0.0
    %6030 = vmatpush1.msra.mxu0 0.0
    %6031 = vmatprep.subr.mxu0 0.0
    %6032 = vmatpush1.msra.mxu0 0.0
    %6033 = vmatprep.subr.mxu0 0.0
    %6034 = vmatpush1.msra.mxu0 0.0
    %6035 = vmatprep.subr.mxu0 0.0
    %6036 = vmatpush1.msra.mxu0 0.0
    %6037 = vmatprep.subr.mxu0 0.0
    %6038 = vmatpush1.msra.mxu0 0.0
    %6039 = vmatprep.subr.mxu0 0.0
    %6040 = vmatpush1.msra.mxu0 0.0
    %6041 = vmatprep.subr.mxu0 0.0
    %6042 = vmatpush1.msra.mxu0 0.0
    %6043 = vmatprep.subr.mxu0 0.0
    %6044 = vmatpush1.msra.mxu0 %v5849
    %6045 = vmatprep.subr.mxu0 0.0
    %6046 = vmatpush2.msra.mxu0 0.0
    %6047 = vmatprep.subr.mxu0 0.0
    %6048 = vmatpush2.msra.mxu0 0.0
    %6049 = vmatprep.subr.mxu0 0.0
    %6050 = vmatpush2.msra.mxu0 0.0
    %6051 = vmatprep.subr.mxu0 0.0
    %6052 = vmatpush2.msra.mxu0 0.0
    %6053 = vmatprep.subr.mxu0 0.0
    %6054 = vmatpush2.msra.mxu0 0.0
    %6055 = vmatprep.subr.mxu0 0.0
    %6056 = vmatpush2.msra.mxu0 0.0
    %6057 = vmatprep.subr.mxu0 0.0
    %6058 = vmatpush2.msra.mxu0 0.0
    %6059 = vmatprep.subr.mxu0 0.0
    %6060 = vmatpush2.msra.mxu0 0.0
    %6061 = vmatprep.subr.mxu0 0.0
    %6062 = vmatpush2.msra.mxu0 0.0
    %6063 = vmatprep.subr.mxu0 0.0
    %6064 = vmatpush2.msra.mxu0 0.0
    %6065 = vmatprep.subr.mxu0 0.0
    %6066 = vmatpush2.msra.mxu0 0.0
    %6067 = vmatprep.subr.mxu0 0.0
    %6068 = vmatpush2.msra.mxu0 0.0
    %6069 = vmatprep.subr.mxu0 0.0
    %6070 = vmatpush2.msra.mxu0 0.0
    %6071 = vmatprep.subr.mxu0 0.0
    %6072 = vmatpush2.msra.mxu0 0.0
    %6073 = vmatprep.subr.mxu0 0.0
    %6074 = vmatpush2.msra.mxu0 0.0
    %6075 = vmatprep.subr.mxu0 0.0
    %6076 = vmatpush2.msra.mxu0 0.0
    %6077 = vmatprep.mubr.f32.mxu0 0.0
    %6078 = vmatmul.mubr.f32.gmra.mxu0 %v6011
    %v6079 = vpop.f32.mrf.mxu0
    %v6080 = vadd.f32 %v6007, %v6079
    %v6081 = vpop.f32.mrf.mxu0
    %6082 = vdwg.mxu0
    %v6083 = vmul.f32 %v5614, %v139
    %v6085 = vsel %vm275, %v6083, 0
    %6087 = vmatprep.subr.mxu0 0.0
    %6088 = vmatpush1.xpose.msra.mxu0 0.0
    %6089 = vmatprep.subr.mxu0 0.0
    %6090 = vmatpush1.xpose.msra.mxu0 0.0
    %6091 = vmatprep.subr.mxu0 0.0
    %6092 = vmatpush1.xpose.msra.mxu0 0.0
    %6093 = vmatprep.subr.mxu0 0.0
    %6094 = vmatpush1.xpose.msra.mxu0 0.0
    %6095 = vmatprep.subr.mxu0 0.0
    %6096 = vmatpush1.xpose.msra.mxu0 0.0
    %6097 = vmatprep.subr.mxu0 0.0
    %6098 = vmatpush1.xpose.msra.mxu0 0.0
    %6099 = vmatprep.subr.mxu0 0.0
    %6100 = vmatpush1.xpose.msra.mxu0 0.0
    %6101 = vmatprep.subr.mxu0 0.0
    %6102 = vmatpush1.xpose.msra.mxu0 0.0
    %6103 = vmatprep.subr.mxu0 0.0
    %6104 = vmatpush1.xpose.msra.mxu0 0.0
    %6105 = vmatprep.subr.mxu0 0.0
    %6106 = vmatpush1.xpose.msra.mxu0 0.0
    %6107 = vmatprep.subr.mxu0 0.0
    %6108 = vmatpush1.xpose.msra.mxu0 0.0
    %6109 = vmatprep.subr.mxu0 0.0
    %6110 = vmatpush1.xpose.msra.mxu0 0.0
    %6111 = vmatprep.subr.mxu0 0.0
    %6112 = vmatpush1.xpose.msra.mxu0 0.0
    %6113 = vmatprep.subr.mxu0 0.0
    %6114 = vmatpush1.xpose.msra.mxu0 0.0
    %6115 = vmatprep.subr.mxu0 0.0
    %6116 = vmatpush1.xpose.msra.mxu0 0.0
    %6117 = vmatprep.subr.mxu0 0.0
    %6118 = vmatpush1.xpose.msra.mxu0 %v5765
    %6119 = vmatprep.subr.mxu0 0.0
    %6120 = vmatpush2.xpose.msra.mxu0 0.0
    %6121 = vmatprep.subr.mxu0 0.0
    %6122 = vmatpush2.xpose.msra.mxu0 0.0
    %6123 = vmatprep.subr.mxu0 0.0
    %6124 = vmatpush2.xpose.msra.mxu0 0.0
    %6125 = vmatprep.subr.mxu0 0.0
    %6126 = vmatpush2.xpose.msra.mxu0 0.0
    %6127 = vmatprep.subr.mxu0 0.0
    %6128 = vmatpush2.xpose.msra.mxu0 0.0
    %6129 = vmatprep.subr.mxu0 0.0
    %6130 = vmatpush2.xpose.msra.mxu0 0.0
    %6131 = vmatprep.subr.mxu0 0.0
    %6132 = vmatpush2.xpose.msra.mxu0 0.0
    %6133 = vmatprep.subr.mxu0 0.0
    %6134 = vmatpush2.xpose.msra.mxu0 0.0
    %6135 = vmatprep.subr.mxu0 0.0
    %6136 = vmatpush2.xpose.msra.mxu0 0.0
    %6137 = vmatprep.subr.mxu0 0.0
    %6138 = vmatpush2.xpose.msra.mxu0 0.0
    %6139 = vmatprep.subr.mxu0 0.0
    %6140 = vmatpush2.xpose.msra.mxu0 0.0
    %6141 = vmatprep.subr.mxu0 0.0
    %6142 = vmatpush2.xpose.msra.mxu0 0.0
    %6143 = vmatprep.subr.mxu0 0.0
    %6144 = vmatpush2.xpose.msra.mxu0 0.0
    %6145 = vmatprep.subr.mxu0 0.0
    %6146 = vmatpush2.xpose.msra.mxu0 0.0
    %6147 = vmatprep.subr.mxu0 0.0
    %6148 = vmatpush2.xpose.msra.mxu0 0.0
    %6149 = vmatprep.subr.mxu0 0.0
    %6150 = vmatpush2.xpose.msra.mxu0 0.0
    %6151 = vmatprep.mubr.f32.mxu0 0.0
    %6152 = vmatmul.mubr.f32.gmra.mxu0 %v6085
    %v6153 = vpop.f32.mrf.mxu0
    %v6154 = vadd.f32 0.0, %v6153
    %v6155 = vpop.f32.mrf.mxu0
    %6156 = vdwg.mxu0
    %v6157 = vmul.f32 %v6154, 0.35355338
    %v6158 = vsel %vm2665, %v6157, -inf
    %6159 = vmax.xlane.f32.xlu0 %v6158
    %v6160 = vpop.xlane.xlu0 %6159
    %v6161 = vsub.f32 %v6157, %v6160
    %v6162 = vmul.f32 %v6161, 1.442695
    %v6163 = vpow.pop %v6162
    %v6164 = vsel %vm2665, %v6163, 0.0
    %6165 = vadd.xlane.f32.xlu0 %v6164
    %v6166 = vpop.xlane.xlu0 %6165
    %v6167 = vrcp.pop %v6166
    %v6168 = vmul.f32 %v6163, %v6167
    %v6169 = vmul.f32 %v5757, %v139
    %v6171 = vsel %vm193, %v6168, 0
    %6173 = vmatprep.subr.mxu0 0.0
    %6174 = vmatpush1.msra.mxu0 0.0
    %6175 = vmatprep.subr.mxu0 0.0
    %6176 = vmatpush1.msra.mxu0 0.0
    %6177 = vmatprep.subr.mxu0 0.0
    %6178 = vmatpush1.msra.mxu0 0.0
    %6179 = vmatprep.subr.mxu0 0.0
    %6180 = vmatpush1.msra.mxu0 0.0
    %6181 = vmatprep.subr.mxu0 0.0
    %6182 = vmatpush1.msra.mxu0 0.0
    %6183 = vmatprep.subr.mxu0 0.0
    %6184 = vmatpush1.msra.mxu0 0.0
    %6185 = vmatprep.subr.mxu0 0.0
    %6186 = vmatpush1.msra.mxu0 0.0
    %6187 = vmatprep.subr.mxu0 0.0
    %6188 = vmatpush1.msra.mxu0 0.0
    %6189 = vmatprep.subr.mxu0 0.0
    %6190 = vmatpush1.msra.mxu0 0.0
    %6191 = vmatprep.subr.mxu0 0.0
    %6192 = vmatpush1.msra.mxu0 0.0
    %6193 = vmatprep.subr.mxu0 0.0
    %6194 = vmatpush1.msra.mxu0 0.0
    %6195 = vmatprep.subr.mxu0 0.0
    %6196 = vmatpush1.msra.mxu0 0.0
    %6197 = vmatprep.subr.mxu0 0.0
    %6198 = vmatpush1.msra.mxu0 0.0
    %6199 = vmatprep.subr.mxu0 0.0
    %6200 = vmatpush1.msra.mxu0 0.0
    %6201 = vmatprep.subr.mxu0 0.0
    %6202 = vmatpush1.msra.mxu0 0.0
    %6203 = vmatprep.subr.mxu0 0.0
    %6204 = vmatpush1.msra.mxu0 %v6169
    %6205 = vmatprep.subr.mxu0 0.0
    %6206 = vmatpush2.msra.mxu0 0.0
    %6207 = vmatprep.subr.mxu0 0.0
    %6208 = vmatpush2.msra.mxu0 0.0
    %6209 = vmatprep.subr.mxu0 0.0
    %6210 = vmatpush2.msra.mxu0 0.0
    %6211 = vmatprep.subr.mxu0 0.0
    %6212 = vmatpush2.msra.mxu0 0.0
    %6213 = vmatprep.subr.mxu0 0.0
    %6214 = vmatpush2.msra.mxu0 0.0
    %6215 = vmatprep.subr.mxu0 0.0
    %6216 = vmatpush2.msra.mxu0 0.0
    %6217 = vmatprep.subr.mxu0 0.0
    %6218 = vmatpush2.msra.mxu0 0.0
    %6219 = vmatprep.subr.mxu0 0.0
    %6220 = vmatpush2.msra.mxu0 0.0
    %6221 = vmatprep.subr.mxu0 0.0
    %6222 = vmatpush2.msra.mxu0 0.0
    %6223 = vmatprep.subr.mxu0 0.0
    %6224 = vmatpush2.msra.mxu0 0.0
    %6225 = vmatprep.subr.mxu0 0.0
    %6226 = vmatpush2.msra.mxu0 0.0
    %6227 = vmatprep.subr.mxu0 0.0
    %6228 = vmatpush2.msra.mxu0 0.0
    %6229 = vmatprep.subr.mxu0 0.0
    %6230 = vmatpush2.msra.mxu0 0.0
    %6231 = vmatprep.subr.mxu0 0.0
    %6232 = vmatpush2.msra.mxu0 0.0
    %6233 = vmatprep.subr.mxu0 0.0
    %6234 = vmatpush2.msra.mxu0 0.0
    %6235 = vmatprep.subr.mxu0 0.0
    %6236 = vmatpush2.msra.mxu0 0.0
    %6237 = vmatprep.mubr.f32.mxu0 0.0
    %6238 = vmatmul.mubr.f32.gmra.mxu0 %v6171
    %v6239 = vpop.f32.mrf.mxu0
    %v6240 = vadd.f32 0.0, %v6239
    %v6241 = vpop.f32.mrf.mxu0
    %6242 = vdwg.mxu0
    %v6243 = vadd.f32 %v6080, %v6240
    %v6244 = vmul.f32 %v5614, %v144
    %v6246 = vsel %vm275, %v6244, 0
    %6248 = vmatprep.subr.mxu0 0.0
    %6249 = vmatpush1.xpose.msra.mxu0 0.0
    %6250 = vmatprep.subr.mxu0 0.0
    %6251 = vmatpush1.xpose.msra.mxu0 0.0
    %6252 = vmatprep.subr.mxu0 0.0
    %6253 = vmatpush1.xpose.msra.mxu0 0.0
    %6254 = vmatprep.subr.mxu0 0.0
    %6255 = vmatpush1.xpose.msra.mxu0 0.0
    %6256 = vmatprep.subr.mxu0 0.0
    %6257 = vmatpush1.xpose.msra.mxu0 0.0
    %6258 = vmatprep.subr.mxu0 0.0
    %6259 = vmatpush1.xpose.msra.mxu0 0.0
    %6260 = vmatprep.subr.mxu0 0.0
    %6261 = vmatpush1.xpose.msra.mxu0 0.0
    %6262 = vmatprep.subr.mxu0 0.0
    %6263 = vmatpush1.xpose.msra.mxu0 0.0
    %6264 = vmatprep.subr.mxu0 0.0
    %6265 = vmatpush1.xpose.msra.mxu0 0.0
    %6266 = vmatprep.subr.mxu0 0.0
    %6267 = vmatpush1.xpose.msra.mxu0 0.0
    %6268 = vmatprep.subr.mxu0 0.0
    %6269 = vmatpush1.xpose.msra.mxu0 0.0
    %6270 = vmatprep.subr.mxu0 0.0
    %6271 = vmatpush1.xpose.msra.mxu0 0.0
    %6272 = vmatprep.subr.mxu0 0.0
    %6273 = vmatpush1.xpose.msra.mxu0 0.0
    %6274 = vmatprep.subr.mxu0 0.0
    %6275 = vmatpush1.xpose.msra.mxu0 0.0
    %6276 = vmatprep.subr.mxu0 0.0
    %6277 = vmatpush1.xpose.msra.mxu0 0.0
    %6278 = vmatprep.subr.mxu0 0.0
    %6279 = vmatpush1.xpose.msra.mxu0 %v5765
    %6280 = vmatprep.subr.mxu0 0.0
    %6281 = vmatpush2.xpose.msra.mxu0 0.0
    %6282 = vmatprep.subr.mxu0 0.0
    %6283 = vmatpush2.xpose.msra.mxu0 0.0
    %6284 = vmatprep.subr.mxu0 0.0
    %6285 = vmatpush2.xpose.msra.mxu0 0.0
    %6286 = vmatprep.subr.mxu0 0.0
    %6287 = vmatpush2.xpose.msra.mxu0 0.0
    %6288 = vmatprep.subr.mxu0 0.0
    %6289 = vmatpush2.xpose.msra.mxu0 0.0
    %6290 = vmatprep.subr.mxu0 0.0
    %6291 = vmatpush2.xpose.msra.mxu0 0.0
    %6292 = vmatprep.subr.mxu0 0.0
    %6293 = vmatpush2.xpose.msra.mxu0 0.0
    %6294 = vmatprep.subr.mxu0 0.0
    %6295 = vmatpush2.xpose.msra.mxu0 0.0
    %6296 = vmatprep.subr.mxu0 0.0
    %6297 = vmatpush2.xpose.msra.mxu0 0.0
    %6298 = vmatprep.subr.mxu0 0.0
    %6299 = vmatpush2.xpose.msra.mxu0 0.0
    %6300 = vmatprep.subr.mxu0 0.0
    %6301 = vmatpush2.xpose.msra.mxu0 0.0
    %6302 = vmatprep.subr.mxu0 0.0
    %6303 = vmatpush2.xpose.msra.mxu0 0.0
    %6304 = vmatprep.subr.mxu0 0.0
    %6305 = vmatpush2.xpose.msra.mxu0 0.0
    %6306 = vmatprep.subr.mxu0 0.0
    %6307 = vmatpush2.xpose.msra.mxu0 0.0
    %6308 = vmatprep.subr.mxu0 0.0
    %6309 = vmatpush2.xpose.msra.mxu0 0.0
    %6310 = vmatprep.subr.mxu0 0.0
    %6311 = vmatpush2.xpose.msra.mxu0 0.0
    %6312 = vmatprep.mubr.f32.mxu0 0.0
    %6313 = vmatmul.mubr.f32.gmra.mxu0 %v6246
    %v6314 = vpop.f32.mrf.mxu0
    %v6315 = vadd.f32 0.0, %v6314
    %v6316 = vpop.f32.mrf.mxu0
    %6317 = vdwg.mxu0
    %v6318 = vmul.f32 %v6315, 0.35355338
    %v6319 = vsel %vm2665, %v6318, -inf
    %6320 = vmax.xlane.f32.xlu0 %v6319
    %v6321 = vpop.xlane.xlu0 %6320
    %v6322 = vsub.f32 %v6318, %v6321
    %v6323 = vmul.f32 %v6322, 1.442695
    %v6324 = vpow.pop %v6323
    %v6325 = vsel %vm2665, %v6324, 0.0
    %6326 = vadd.xlane.f32.xlu0 %v6325
    %v6327 = vpop.xlane.xlu0 %6326
    %v6328 = vrcp.pop %v6327
    %v6329 = vmul.f32 %v6324, %v6328
    %v6330 = vmul.f32 %v5757, %v144
    %v6332 = vsel %vm193, %v6329, 0
    %6334 = vmatprep.subr.mxu0 0.0
    %6335 = vmatpush1.msra.mxu0 0.0
    %6336 = vmatprep.subr.mxu0 0.0
    %6337 = vmatpush1.msra.mxu0 0.0
    %6338 = vmatprep.subr.mxu0 0.0
    %6339 = vmatpush1.msra.mxu0 0.0
    %6340 = vmatprep.subr.mxu0 0.0
    %6341 = vmatpush1.msra.mxu0 0.0
    %6342 = vmatprep.subr.mxu0 0.0
    %6343 = vmatpush1.msra.mxu0 0.0
    %6344 = vmatprep.subr.mxu0 0.0
    %6345 = vmatpush1.msra.mxu0 0.0
    %6346 = vmatprep.subr.mxu0 0.0
    %6347 = vmatpush1.msra.mxu0 0.0
    %6348 = vmatprep.subr.mxu0 0.0
    %6349 = vmatpush1.msra.mxu0 0.0
    %6350 = vmatprep.subr.mxu0 0.0
    %6351 = vmatpush1.msra.mxu0 0.0
    %6352 = vmatprep.subr.mxu0 0.0
    %6353 = vmatpush1.msra.mxu0 0.0
    %6354 = vmatprep.subr.mxu0 0.0
    %6355 = vmatpush1.msra.mxu0 0.0
    %6356 = vmatprep.subr.mxu0 0.0
    %6357 = vmatpush1.msra.mxu0 0.0
    %6358 = vmatprep.subr.mxu0 0.0
    %6359 = vmatpush1.msra.mxu0 0.0
    %6360 = vmatprep.subr.mxu0 0.0
    %6361 = vmatpush1.msra.mxu0 0.0
    %6362 = vmatprep.subr.mxu0 0.0
    %6363 = vmatpush1.msra.mxu0 0.0
    %6364 = vmatprep.subr.mxu0 0.0
    %6365 = vmatpush1.msra.mxu0 %v6330
    %6366 = vmatprep.subr.mxu0 0.0
    %6367 = vmatpush2.msra.mxu0 0.0
    %6368 = vmatprep.subr.mxu0 0.0
    %6369 = vmatpush2.msra.mxu0 0.0
    %6370 = vmatprep.subr.mxu0 0.0
    %6371 = vmatpush2.msra.mxu0 0.0
    %6372 = vmatprep.subr.mxu0 0.0
    %6373 = vmatpush2.msra.mxu0 0.0
    %6374 = vmatprep.subr.mxu0 0.0
    %6375 = vmatpush2.msra.mxu0 0.0
    %6376 = vmatprep.subr.mxu0 0.0
    %6377 = vmatpush2.msra.mxu0 0.0
    %6378 = vmatprep.subr.mxu0 0.0
    %6379 = vmatpush2.msra.mxu0 0.0
    %6380 = vmatprep.subr.mxu0 0.0
    %6381 = vmatpush2.msra.mxu0 0.0
    %6382 = vmatprep.subr.mxu0 0.0
    %6383 = vmatpush2.msra.mxu0 0.0
    %6384 = vmatprep.subr.mxu0 0.0
    %6385 = vmatpush2.msra.mxu0 0.0
    %6386 = vmatprep.subr.mxu0 0.0
    %6387 = vmatpush2.msra.mxu0 0.0
    %6388 = vmatprep.subr.mxu0 0.0
    %6389 = vmatpush2.msra.mxu0 0.0
    %6390 = vmatprep.subr.mxu0 0.0
    %6391 = vmatpush2.msra.mxu0 0.0
    %6392 = vmatprep.subr.mxu0 0.0
    %6393 = vmatpush2.msra.mxu0 0.0
    %6394 = vmatprep.subr.mxu0 0.0
    %6395 = vmatpush2.msra.mxu0 0.0
    %6396 = vmatprep.subr.mxu0 0.0
    %6397 = vmatpush2.msra.mxu0 0.0
    %6398 = vmatprep.mubr.f32.mxu0 0.0
    %6399 = vmatmul.mubr.f32.gmra.mxu0 %v6332
    %v6400 = vpop.f32.mrf.mxu0
    %v6401 = vadd.f32 0.0, %v6400
    %v6402 = vpop.f32.mrf.mxu0
    %6403 = vdwg.mxu0
    %v6404 = vadd.f32 %v6243, %v6401
    %v6406 = vsel %vm275, %v6404, 0
    %6408 = vmatprep.subr.mxu0 0.0
    %6409 = vmatpush1.msra.mxu0 0.0
    %6410 = vmatprep.subr.mxu0 0.0
    %6411 = vmatpush1.msra.mxu0 0.0
    %6412 = vmatprep.subr.mxu0 0.0
    %6413 = vmatpush1.msra.mxu0 0.0
    %6414 = vmatprep.subr.mxu0 0.0
    %6415 = vmatpush1.msra.mxu0 0.0
    %6416 = vmatprep.subr.mxu0 0.0
    %6417 = vmatpush1.msra.mxu0 0.0
    %6418 = vmatprep.subr.mxu0 0.0
    %6419 = vmatpush1.msra.mxu0 0.0
    %6420 = vmatprep.subr.mxu0 0.0
    %6421 = vmatpush1.msra.mxu0 0.0
    %6422 = vmatprep.subr.mxu0 0.0
    %6423 = vmatpush1.msra.mxu0 0.0
    %6424 = vmatprep.subr.mxu0 0.0
    %6425 = vmatpush1.msra.mxu0 0.0
    %6426 = vmatprep.subr.mxu0 0.0
    %6427 = vmatpush1.msra.mxu0 0.0
    %6428 = vmatprep.subr.mxu0 0.0
    %6429 = vmatpush1.msra.mxu0 0.0
    %6430 = vmatprep.subr.mxu0 0.0
    %6431 = vmatpush1.msra.mxu0 0.0
    %6432 = vmatprep.subr.mxu0 0.0
    %6433 = vmatpush1.msra.mxu0 %v181
    %6434 = vmatprep.subr.mxu0 0.0
    %6435 = vmatpush1.msra.mxu0 %v180
    %6436 = vmatprep.subr.mxu0 0.0
    %6437 = vmatpush1.msra.mxu0 %v179
    %6438 = vmatprep.subr.mxu0 0.0
    %6439 = vmatpush1.msra.mxu0 %v178
    %6440 = vmatprep.subr.mxu0 0.0
    %6441 = vmatpush2.msra.mxu0 0.0
    %6442 = vmatprep.subr.mxu0 0.0
    %6443 = vmatpush2.msra.mxu0 0.0
    %6444 = vmatprep.subr.mxu0 0.0
    %6445 = vmatpush2.msra.mxu0 0.0
    %6446 = vmatprep.subr.mxu0 0.0
    %6447 = vmatpush2.msra.mxu0 0.0
    %6448 = vmatprep.subr.mxu0 0.0
    %6449 = vmatpush2.msra.mxu0 0.0
    %6450 = vmatprep.subr.mxu0 0.0
    %6451 = vmatpush2.msra.mxu0 0.0
    %6452 = vmatprep.subr.mxu0 0.0
    %6453 = vmatpush2.msra.mxu0 0.0
    %6454 = vmatprep.subr.mxu0 0.0
    %6455 = vmatpush2.msra.mxu0 0.0
    %6456 = vmatprep.subr.mxu0 0.0
    %6457 = vmatpush2.msra.mxu0 0.0
    %6458 = vmatprep.subr.mxu0 0.0
    %6459 = vmatpush2.msra.mxu0 0.0
    %6460 = vmatprep.subr.mxu0 0.0
    %6461 = vmatpush2.msra.mxu0 0.0
    %6462 = vmatprep.subr.mxu0 0.0
    %6463 = vmatpush2.msra.mxu0 0.0
    %6464 = vmatprep.subr.mxu0 0.0
    %6465 = vmatpush2.msra.mxu0 0.0
    %6466 = vmatprep.subr.mxu0 0.0
    %6467 = vmatpush2.msra.mxu0 0.0
    %6468 = vmatprep.subr.mxu0 0.0
    %6469 = vmatpush2.msra.mxu0 0.0
    %6470 = vmatprep.subr.mxu0 0.0
    %6471 = vmatpush2.msra.mxu0 0.0
    %6472 = vmatprep.mubr.f32.mxu0 0.0
    %6473 = vmatmul.mubr.f32.gmra.mxu0 %v6406
    %v6474 = vpop.f32.mrf.mxu0
    %v6475 = vadd.f32 0.0, %v6474
    %v6476 = vpop.f32.mrf.mxu0
    %6477 = vdwg.mxu0
    %v6479 = vsel %vm275, %v6475, 0
    %6481 = vmatprep.subr.mxu0 0.0
    %6482 = vmatpush1.xpose.msra.mxu0 0.0
    %6483 = vmatprep.subr.mxu0 0.0
    %6484 = vmatpush1.xpose.msra.mxu0 0.0
    %6485 = vmatprep.subr.mxu0 0.0
    %6486 = vmatpush1.xpose.msra.mxu0 0.0
    %6487 = vmatprep.subr.mxu0 0.0
    %6488 = vmatpush1.xpose.msra.mxu0 0.0
    %6489 = vmatprep.subr.mxu0 0.0
    %6490 = vmatpush1.xpose.msra.mxu0 0.0
    %6491 = vmatprep.subr.mxu0 0.0
    %6492 = vmatpush1.xpose.msra.mxu0 0.0
    %6493 = vmatprep.subr.mxu0 0.0
    %6494 = vmatpush1.xpose.msra.mxu0 0.0
    %6495 = vmatprep.subr.mxu0 0.0
    %6496 = vmatpush1.xpose.msra.mxu0 0.0
    %6497 = vmatprep.subr.mxu0 0.0
    %6498 = vmatpush1.xpose.msra.mxu0 0.0
    %6499 = vmatprep.subr.mxu0 0.0
    %6500 = vmatpush1.xpose.msra.mxu0 0.0
    %6501 = vmatprep.subr.mxu0 0.0
    %6502 = vmatpush1.xpose.msra.mxu0 0.0
    %6503 = vmatprep.subr.mxu0 0.0
    %6504 = vmatpush1.xpose.msra.mxu0 0.0
    %6505 = vmatprep.subr.mxu0 0.0
    %6506 = vmatpush1.xpose.msra.mxu0 0.0
    %6507 = vmatprep.subr.mxu0 0.0
    %6508 = vmatpush1.xpose.msra.mxu0 0.0
    %6509 = vmatprep.subr.mxu0 0.0
    %6510 = vmatpush1.xpose.msra.mxu0 0.0
    %6511 = vmatprep.subr.mxu0 0.0
    %6512 = vmatpush1.xpose.msra.mxu0 %v5618
    %6513 = vmatprep.subr.mxu0 0.0
    %6514 = vmatpush2.xpose.msra.mxu0 0.0
    %6515 = vmatprep.subr.mxu0 0.0
    %6516 = vmatpush2.xpose.msra.mxu0 0.0
    %6517 = vmatprep.subr.mxu0 0.0
    %6518 = vmatpush2.xpose.msra.mxu0 0.0
    %6519 = vmatprep.subr.mxu0 0.0
    %6520 = vmatpush2.xpose.msra.mxu0 0.0
    %6521 = vmatprep.subr.mxu0 0.0
    %6522 = vmatpush2.xpose.msra.mxu0 0.0
    %6523 = vmatprep.subr.mxu0 0.0
    %6524 = vmatpush2.xpose.msra.mxu0 0.0
    %6525 = vmatprep.subr.mxu0 0.0
    %6526 = vmatpush2.xpose.msra.mxu0 0.0
    %6527 = vmatprep.subr.mxu0 0.0
    %6528 = vmatpush2.xpose.msra.mxu0 0.0
    %6529 = vmatprep.subr.mxu0 0.0
    %6530 = vmatpush2.xpose.msra.mxu0 0.0
    %6531 = vmatprep.subr.mxu0 0.0
    %6532 = vmatpush2.xpose.msra.mxu0 0.0
    %6533 = vmatprep.subr.mxu0 0.0
    %6534 = vmatpush2.xpose.msra.mxu0 0.0
    %6535 = vmatprep.subr.mxu0 0.0
    %6536 = vmatpush2.xpose.msra.mxu0 0.0
    %6537 = vmatprep.subr.mxu0 0.0
    %6538 = vmatpush2.xpose.msra.mxu0 0.0
    %6539 = vmatprep.subr.mxu0 0.0
    %6540 = vmatpush2.xpose.msra.mxu0 0.0
    %6541 = vmatprep.subr.mxu0 0.0
    %6542 = vmatpush2.xpose.msra.mxu0 0.0
    %6543 = vmatprep.subr.mxu0 0.0
    %6544 = vmatpush2.xpose.msra.mxu0 0.0
    %6545 = vmatprep.mubr.f32.mxu0 0.0
    %6546 = vmatmul.mubr.f32.gmra.mxu0 %v6479
    %v6547 = vpop.f32.mrf.mxu0
    %v6548 = vadd.f32 0.0, %v6547
    %v6549 = vpop.f32.mrf.mxu0
    %6550 = vdwg.mxu0
    %v6551 = vmul.f32 %v6548, 0.35355338
    %s6552 = scalar_lea.vmem [#allocation11], 8
    %6553 = vst.msk [vmem:[%s6552] sm:$0xff] %vm275, %v4918
    %s6554 = scalar_lea.vmem %s19, 1
    %6555 = vst.msk [vmem:[%s6554] sm:$0x1] %vm2665, %v6551
    // Predicated region
    $region98: #{rllib_substation_forward.1} parent=1 // pred_check
      _
    $region99: #{rllib_substation_forward.1} parent=1 // pred_check_branch
      %6557 = sbr.rel (0) target = $region101
    $region100: #{rllib_substation_forward.1} parent=1 // pred_region
      _
    $region101: #{rllib_substation_forward.1} parent=1 // pred_fallthru
      _
    // Predicated region
    $region102: #{rllib_substation_forward.1} parent=1 // pred_check
      _
    $region103: #{rllib_substation_forward.1} parent=1 // pred_check_branch
      %6559 = sbr.rel (0) target = $region105
    $region104: #{rllib_substation_forward.1} parent=1 // pred_region
      %s6561 = ssub.s32 256, 256
      %6562 = vsyncadd [#allocation4], %s6561
      %s6563 = sshll.u32 [#allocation11], 4
      %s6564 = int_to_ptr.vmem [resolvable:$true] %s6563
      %6569 = dma.vmem_to_hbm [thread:$0]  %s6564, 256, %s20, [#allocation4], 128, 128, 8
    $region105: #{rllib_substation_forward.1} parent=1 // pred_fallthru
      _
    // Predicated region
    $region106: #{rllib_substation_forward.1} parent=1 // pred_check
      _
    $region107: #{rllib_substation_forward.1} parent=1 // pred_check_branch
      %6571 = sbr.rel (0) target = $region109
    $region108: #{rllib_substation_forward.1} parent=1 // pred_region
      _
    $region109: #{rllib_substation_forward.1} parent=1 // pred_fallthru
      _
    // Predicated region
    $region110: #{rllib_substation_forward.1} parent=1 // pred_check
      _
    $region111: #{rllib_substation_forward.1} parent=1 // pred_check_branch
      %6573 = sbr.rel (0) target = $region113
    $region112: #{rllib_substation_forward.1} parent=1 // pred_region
      %6574 = dma.done [#allocation4], 256
    $region113: #{rllib_substation_forward.1} parent=1 // pred_fallthru
      _
    %6575 = vsyncpa [#allocation3], 1
    %6576 = vsyncpa [#allocation6], 1
    %6577 = vsyncpa [#allocation9], 1
    %6578 = vsyncpa [#allocation4], 1

</llo_original>
